<compile_context>
chip_gen: v7x
topology: tpu7x:2x2x1
jax: 0.10.0
libtpu: 0.0.40
codegen_flags: <defaults>
</compile_context>

<pallas_src>
import math

import jax
import jax.numpy as jnp
from jax.experimental import pallas as pl
from jax.experimental.pallas import tpu as pltpu


# ----------------------------------------------------------------------------
# Fused forward kernel
# ----------------------------------------------------------------------------

def make_fused_kernel(num_lstm_layers, conv_kernel_sizes, num_heads):
    """biLSTM x L -> (Conv1d+ReLU[+BN]) x N -> MHA -> mean -> fc1 -> fc2."""
    num_convs = len(conv_kernel_sizes)

    def kernel(*refs):
        it = iter(refs)
        x_ref = next(it)
        lstm_refs = [(next(it), next(it), next(it)) for _ in range(num_lstm_layers)]
        conv_refs = []
        for ci in range(num_convs):
            if ci < num_convs - 1:
                conv_refs.append((next(it), next(it), next(it), next(it)))
            else:           # last conv: BN folded into wqkv/bqkv offline
                conv_refs.append((next(it), next(it), None, None))
        wqkv_ref, bqkv_ref = next(it), next(it)
        w1_ref, b1_ref, w2_ref, b2_ref = next(it), next(it), next(it), next(it)
        out_ref, wts_ref = next(it), next(it)
        lstm_bufs = [next(it) for _ in range(num_lstm_layers)]

        B, T, _ = x_ref.shape
        H = lstm_refs[0][1].shape[1]          # whh2: (2, H, 4H)

        # ------------- bidirectional LSTM stack (both dirs per unrolled step)
        for l, (wih_ref, whh_ref, b_ref) in enumerate(lstm_refs):
            xin = x_ref[...] if l == 0 else lstm_bufs[l - 1][...]   # (B, T, Din)
            Din = xin.shape[-1]
            # Hoisted input projection: all timesteps, both directions, one matmul.
            gx = (jnp.dot(xin.reshape(B * T, Din), wih_ref[...],
                          preferred_element_type=jnp.float32)
                  + b_ref[...]).reshape(B, T, 8 * H)
            whh2 = whh_ref[...]                                     # (2, H, 4H)
            h2 = jnp.zeros((2, B, H), jnp.float32)                  # [fwd, bwd] states
            c2 = jnp.zeros((2, B, H), jnp.float32)
            out_buf = lstm_bufs[l]
            for t in range(T):                 # static unroll (T small)
                # fwd consumes time t, bwd consumes time T-1-t, in the same step.
                gxd = jnp.stack([gx[:, t, 0:4 * H],
                                 gx[:, T - 1 - t, 4 * H:8 * H]], axis=0)  # (2,B,4H)
                gates = gxd + jnp.einsum('dbh,dhg->dbg', h2, whh2,
                                         preferred_element_type=jnp.float32)
                sig = jax.nn.sigmoid(gates)    # one EUP pass covers i, f, o
                i_g = sig[..., 0:H]
                f_g = sig[..., H:2 * H]
                o_g = sig[..., 3 * H:4 * H]
                g_g = jnp.tanh(gates[..., 2 * H:3 * H])
                c2 = f_g * c2 + i_g * g_g
                h2 = o_g * jnp.tanh(c2)
                out_buf[:, t, 0:H] = h2[0]              # forward output at t
                out_buf[:, T - 1 - t, H:2 * H] = h2[1]  # backward output at T-1-t
            # inter-layer LSTM dropout is a no-op in eval mode

        y = lstm_bufs[num_lstm_layers - 1][...]         # (B, T, 2H)

        # ------------- conv stack: Conv1d (per-tap matmuls) -> ReLU [-> BN] --
        for (cw_ref, cb_ref, cs_ref, csh_ref), K in zip(conv_refs, conv_kernel_sizes):
            Cin = y.shape[-1]
            Cout = cw_ref.shape[2]
            pad = K // 2                                 # 'same' length, odd K
            zp = jnp.zeros((B, pad, Cin), jnp.float32)
            yp = jnp.concatenate([zp, y, zp], axis=1)    # time-axis zero pad only
            z = cb_ref[...]                              # (1, Cout), broadcasts
            for k in range(K):                           # lane-aligned per-tap matmuls
                tap = yp[:, k:k + T, :].reshape(B * T, Cin)
                z = z + jnp.dot(tap, cw_ref[k], preferred_element_type=jnp.float32)
            z = jnp.maximum(z, 0.0)                      # ReLU
            if cs_ref is not None:                       # BN (eval) for non-last convs
                z = z * cs_ref[...] + csh_ref[...]
            y = z.reshape(B, T, Cout)

        # ------------- multi-head self-attention (fused QKV, mean∘PV fold) ---
        E = y.shape[-1]
        Dh = E // num_heads
        qkv = (jnp.dot(y.reshape(B * T, E), wqkv_ref[...],
                       preferred_element_type=jnp.float32) + bqkv_ref[...])
        qkv = qkv.reshape(B, T, 3 * E)                   # last BN + 1/sqrt(Dh) folded in
        q = qkv[:, :, 0:E]
        k_all = qkv[:, :, E:2 * E]
        v_all = qkv[:, :, 2 * E:3 * E]

        wsum = jnp.zeros((B, T, T), jnp.float32)
        hpre = b1_ref[...]                               # fc1 pre-act (Wo,bo folded in)
        for hh in range(num_heads):                      # static head loop, B-batched ops
            sl = slice(hh * Dh, (hh + 1) * Dh)
            qh, kh, vh = q[:, :, sl], k_all[:, :, sl], v_all[:, :, sl]   # (B,T,Dh)
            s = jnp.einsum('bqd,bkd->bqk', qh, kh,
                           preferred_element_type=jnp.float32)           # (B,T,T)
            s = s - jnp.max(s, axis=-1, keepdims=True)
            p = jnp.exp(s)
            p = p / jnp.sum(p, axis=-1, keepdims=True)   # exact: rows sum to 1
            wsum = wsum + p
            # mean over query positions commutes with P@V and the linear head
            pbar = jnp.mean(p, axis=1, keepdims=True)                    # (B,1,T)
            ctx_h = jnp.einsum('bqk,bkd->bqd', pbar, vh,
                               preferred_element_type=jnp.float32)[:, 0, :]  # (B,Dh)
            hpre = hpre + jnp.dot(ctx_h, w1_ref[hh * Dh:(hh + 1) * Dh, :],
                                  preferred_element_type=jnp.float32)
        # lane-dense single store of the head-averaged attention weights
        wts_ref[...] = (wsum * (1.0 / num_heads)).reshape(B, T * T)

        # ------------- head: (folded Wo->fc1) -> ReLU -> dropout(no-op) -> fc2
        hfc = jnp.maximum(hpre, 0.0)
        out_ref[...] = (jnp.dot(hfc, w2_ref[...], preferred_element_type=jnp.float32)
                        + b2_ref[...])

    return kernel


# ----------------------------------------------------------------------------
# Parameter init (deterministic, synthetic, pre-packed / pre-folded)
# ----------------------------------------------------------------------------

def _u(key, shape, lo=-0.1, hi=0.1):
    return jax.random.uniform(key, shape, jnp.float32, lo, hi)


def init_params(key, input_dim, hidden_dim, conv_channels, conv_kernel_sizes,
                num_heads, num_layers=2):
    for k in conv_kernel_sizes:
        assert k % 2 == 1, "padding=k//2 matches PyTorch 'same' only for odd kernels"
    keys = iter(jax.random.split(key, 64))
    H = hidden_dim
    params = {}

    # Bidirectional LSTM: fwd|bwd input weights concatenated (hoisted projection),
    # recurrent weights direction-stacked for the batched per-step dot.
    lstm = []
    din = input_dim
    for _ in range(num_layers):
        wih_f, wih_b = _u(next(keys), (din, 4 * H)), _u(next(keys), (din, 4 * H))
        whh_f, whh_b = _u(next(keys), (H, 4 * H)), _u(next(keys), (H, 4 * H))
        b_f, b_b = _u(next(keys), (1, 4 * H)), _u(next(keys), (1, 4 * H))  # b_ih+b_hh
        lstm.append(dict(wih=jnp.concatenate([wih_f, wih_b], axis=1),      # (din, 8H)
                         whh=jnp.stack([whh_f, whh_b], axis=0),            # (2, H, 4H)
                         bias=jnp.concatenate([b_f, b_b], axis=1)))        # (1, 8H)
        din = 2 * H
    params["lstm"] = lstm

    # Conv1d + ReLU + BatchNorm1d(eval): per-tap weights (K, Cin, Cout).
    eps = 1e-5
    convs = []
    cin = 2 * H
    for cout, k in zip(conv_channels, conv_kernel_sizes):
        w = _u(next(keys), (k, cin, cout))
        b = _u(next(keys), (1, cout))
        gamma = jax.random.uniform(next(keys), (1, cout), jnp.float32, 0.5, 1.5)
        beta = _u(next(keys), (1, cout))
        rmean = _u(next(keys), (1, cout))
        rvar = jax.random.uniform(next(keys), (1, cout), jnp.float32, 0.5, 1.5)
        scale = gamma / jnp.sqrt(rvar + eps)
        shift = beta - rmean * scale
        convs.append(dict(w=w, b=b, scale=scale, shift=shift, k=k))
        cin = cout
    params["conv"] = convs

    # MHA: fused QKV weight with the LAST BN (exact fold, no padding involved)
    # and 1/sqrt(head_dim) folded into the Q block.
    E = conv_channels[-1]
    qs = 1.0 / math.sqrt(E // num_heads)
    s_last, sh_last = convs[-1]["scale"], convs[-1]["shift"]        # (1, E)
    wq, wk, wv = (_u(next(keys), (E, E)) for _ in range(3))
    bq, bk, bv = (_u(next(keys), (1, E)) for _ in range(3))
    wqkv = jnp.concatenate([(s_last.T * wq) * qs, s_last.T * wk, s_last.T * wv], axis=1)
    bqkv = jnp.concatenate([(sh_last @ wq + bq) * qs, sh_last @ wk + bk,
                            sh_last @ wv + bv], axis=1)
    wo, bo = _u(next(keys), (E, E)), _u(next(keys), (1, E))
    w1, fb1 = _u(next(keys), (E, H)), _u(next(keys), (1, H))
    w2, b2 = _u(next(keys), (H, 1)), _u(next(keys), (1, 1))
    params["mha"] = dict(wqkv=wqkv, bqkv=bqkv)
    # mean -> Wo -> fc1 is purely linear: fold Wo/bo into fc1 offline (free).
    params["head"] = dict(w1=wo @ w1, b1=bo @ w1 + fb1, w2=w2, b2=b2)
    params["num_heads"] = num_heads
    return params


# ----------------------------------------------------------------------------
# Forward pass: ONE pallas_call, everything VMEM-resident
# ----------------------------------------------------------------------------

def forward(params, x):
    """x: (B, T, input_dim) float32. Returns (out (B,1), attn_weights (B,T,T))."""
    B, T, _ = x.shape
    num_layers = len(params["lstm"])
    num_convs = len(params["conv"])
    H2 = 2 * params["lstm"][0]["whh"].shape[1]
    conv_ks = [c["k"] for c in params["conv"]]
    kern = make_fused_kernel(num_layers, conv_ks, params["num_heads"])

    args = [x]
    for l in params["lstm"]:
        args += [l["wih"], l["whh"], l["bias"]]
    for i, c in enumerate(params["conv"]):
        args += [c["w"], c["b"]]
        if i < num_convs - 1:                # last BN is folded into wqkv/bqkv
            args += [c["scale"], c["shift"]]
    m, hd = params["mha"], params["head"]
    args += [m["wqkv"], m["bqkv"], hd["w1"], hd["b1"], hd["w2"], hd["b2"]]

    out, wts_flat = pl.pallas_call(
        kern,
        out_shape=(jax.ShapeDtypeStruct((B, 1), jnp.float32),
                   jax.ShapeDtypeStruct((B, T * T), jnp.float32)),
        scratch_shapes=[pltpu.VMEM((B, T, H2), jnp.float32)
                        for _ in range(num_layers)],
        compiler_params=pltpu.CompilerParams(vmem_limit_bytes=32 * 1024 * 1024),
    )(*args)
    return out, wts_flat.reshape(B, T, T)


# ----------------------------------------------------------------------------
# Main
# ----------------------------------------------------------------------------

if __name__ == "__main__":
    B, T = 2, 8
    input_dim, hidden_dim = 16, 32
    conv_channels, conv_kernel_sizes = [32, 16], [5, 3]
    num_heads = 4

    key = jax.random.PRNGKey(0)
    pkey, xkey = jax.random.split(key)
    params = init_params(pkey, input_dim, hidden_dim, conv_channels,
                         conv_kernel_sizes, num_heads)
    x = jax.random.normal(xkey, (B, T, input_dim), jnp.float32)

    out, attn_w = forward(params, x)
    out, attn_w = jax.block_until_ready((out, attn_w))

    assert out.shape == (B, 1), out.shape
    assert attn_w.shape == (B, T, T), attn_w.shape
    assert bool(jnp.all(jnp.isfinite(out))) and bool(jnp.all(jnp.isfinite(attn_w)))
    # attention weight rows sum to 1 (exact softmax divide kept on purpose)
    assert bool(jnp.allclose(attn_w.sum(-1), 1.0, atol=1e-5))
    print("KERNEL_OK")
</pallas_src>

<mosaic_0001>
module attributes {stable_mosaic.version = 11 : i64} {
  func.func @kernel(%arg0: memref<2x8x16xf32, #tpu.memory_space<vmem>>, %arg1: memref<16x256xf32, #tpu.memory_space<vmem>>, %arg2: memref<2x32x128xf32, #tpu.memory_space<vmem>>, %arg3: memref<1x256xf32, #tpu.memory_space<vmem>>, %arg4: memref<64x256xf32, #tpu.memory_space<vmem>>, %arg5: memref<2x32x128xf32, #tpu.memory_space<vmem>>, %arg6: memref<1x256xf32, #tpu.memory_space<vmem>>, %arg7: memref<5x64x32xf32, #tpu.memory_space<vmem>>, %arg8: memref<1x32xf32, #tpu.memory_space<vmem>>, %arg9: memref<1x32xf32, #tpu.memory_space<vmem>>, %arg10: memref<1x32xf32, #tpu.memory_space<vmem>>, %arg11: memref<3x32x16xf32, #tpu.memory_space<vmem>>, %arg12: memref<1x16xf32, #tpu.memory_space<vmem>>, %arg13: memref<16x48xf32, #tpu.memory_space<vmem>>, %arg14: memref<1x48xf32, #tpu.memory_space<vmem>>, %arg15: memref<16x32xf32, #tpu.memory_space<vmem>>, %arg16: memref<1x32xf32, #tpu.memory_space<vmem>>, %arg17: memref<32x1xf32, #tpu.memory_space<vmem>>, %arg18: memref<1x1xf32, #tpu.memory_space<vmem>>, %arg19: memref<2x1xf32, #tpu.memory_space<vmem>>, %arg20: memref<2x64xf32, #tpu.memory_space<vmem>>, %arg21: memref<2x8x64xf32, #tpu.memory_space<vmem>>, %arg22: memref<2x8x64xf32, #tpu.memory_space<vmem>>) attributes {dimension_semantics = [], scalar_prefetch = 0 : i64, scratch_operands = 2 : i64, tpu.core_type = #tpu.core_type<tc>} {
    %c0 = arith.constant 0 : index
    %c0_0 = arith.constant 0 : index
    %c0_1 = arith.constant 0 : index
    %0 = vector.load %arg0[%c0, %c0_0, %c0_1] : memref<2x8x16xf32, #tpu.memory_space<vmem>>, vector<2x8x16xf32>
    %1 = vector.shape_cast %0 : vector<2x8x16xf32> to vector<16x16xf32>
    %c0_2 = arith.constant 0 : index
    %c0_3 = arith.constant 0 : index
    %2 = vector.load %arg1[%c0_2, %c0_3] : memref<16x256xf32, #tpu.memory_space<vmem>>, vector<16x256xf32>
    %cst = arith.constant dense<0.000000e+00> : vector<16x256xf32>
    %3 = tpu.matmul %1, %2, %cst {dimension_numbers = #tpu.dot_dimension_numbers<[1], [0], [0], [1], [0, 0, 1, 1], [], []>} : vector<16x16xf32>, vector<16x256xf32>, vector<16x256xf32> -> vector<16x256xf32>
    %c0_4 = arith.constant 0 : index
    %c0_5 = arith.constant 0 : index
    %4 = vector.load %arg3[%c0_4, %c0_5] : memref<1x256xf32, #tpu.memory_space<vmem>>, vector<1x256xf32>
    %5 = vector.broadcast %4 : vector<1x256xf32> to vector<16x256xf32>
    %6 = arith.addf %3, %5 : vector<16x256xf32>
    %7 = vector.shape_cast %6 : vector<16x256xf32> to vector<2x8x256xf32>
    %c0_6 = arith.constant 0 : index
    %c0_7 = arith.constant 0 : index
    %c0_8 = arith.constant 0 : index
    %8 = vector.load %arg2[%c0_6, %c0_7, %c0_8] : memref<2x32x128xf32, #tpu.memory_space<vmem>>, vector<2x32x128xf32>
    %cst_9 = arith.constant 0.000000e+00 : f32
    %9 = vector.broadcast %cst_9 : f32 to vector<2x2x32xf32>
    %cst_10 = arith.constant 0.000000e+00 : f32
    %10 = vector.broadcast %cst_10 : f32 to vector<2x2x32xf32>
    %11 = vector.extract_strided_slice %7 {offsets = [0, 0, 0], sizes = [2, 1, 128], strides = [1, 1, 1]} : vector<2x8x256xf32> to vector<2x1x128xf32>
    %12 = vector.shape_cast %11 : vector<2x1x128xf32> to vector<2x128xf32>
    %13 = vector.extract_strided_slice %7 {offsets = [0, 7, 128], sizes = [2, 1, 128], strides = [1, 1, 1]} : vector<2x8x256xf32> to vector<2x1x128xf32>
    %14 = vector.shape_cast %13 : vector<2x1x128xf32> to vector<2x128xf32>
    %15 = vector.shape_cast %12 : vector<2x128xf32> to vector<1x2x128xf32>
    %16 = vector.shape_cast %14 : vector<2x128xf32> to vector<1x2x128xf32>
    %17 = tpu.concatenate %15, %16 in 0 : vector<1x2x128xf32>, vector<1x2x128xf32> -> vector<2x2x128xf32>
    "tpu.trace_start"() <{level = 10 : i32, message = "dbh,dhg->dbg"}> : () -> ()
    %cst_11 = arith.constant dense<0.000000e+00> : vector<2x2x128xf32>
    %18 = tpu.matmul %9, %8, %cst_11 {dimension_numbers = #tpu.dot_dimension_numbers<[2], [1], [1], [2], [0, 0, 0, 1, 1, 2], [0], [0]>} : vector<2x2x32xf32>, vector<2x32x128xf32>, vector<2x2x128xf32> -> vector<2x2x128xf32>
    "tpu.trace_stop"() : () -> ()
    %19 = arith.addf %17, %18 : vector<2x2x128xf32>
    %20 = arith.negf %19 : vector<2x2x128xf32>
    %21 = math.exp %20 : vector<2x2x128xf32>
    %cst_12 = arith.constant 1.000000e+00 : f32
    %22 = vector.broadcast %cst_12 : f32 to vector<2x2x128xf32>
    %23 = arith.addf %22, %21 : vector<2x2x128xf32>
    %24 = arith.divf %22, %23 : vector<2x2x128xf32>
    %25 = vector.extract_strided_slice %24 {offsets = [0, 0, 0], sizes = [2, 2, 32], strides = [1, 1, 1]} : vector<2x2x128xf32> to vector<2x2x32xf32>
    %26 = vector.extract_strided_slice %24 {offsets = [0, 0, 32], sizes = [2, 2, 32], strides = [1, 1, 1]} : vector<2x2x128xf32> to vector<2x2x32xf32>
    %27 = vector.extract_strided_slice %24 {offsets = [0, 0, 96], sizes = [2, 2, 32], strides = [1, 1, 1]} : vector<2x2x128xf32> to vector<2x2x32xf32>
    %28 = vector.extract_strided_slice %19 {offsets = [0, 0, 64], sizes = [2, 2, 32], strides = [1, 1, 1]} : vector<2x2x128xf32> to vector<2x2x32xf32>
    %29 = math.tanh %28 : vector<2x2x32xf32>
    %30 = arith.mulf %26, %10 : vector<2x2x32xf32>
    %31 = arith.mulf %25, %29 : vector<2x2x32xf32>
    %32 = arith.addf %30, %31 : vector<2x2x32xf32>
    %33 = math.tanh %32 : vector<2x2x32xf32>
    %34 = arith.mulf %27, %33 : vector<2x2x32xf32>
    %35 = vector.extract_strided_slice %34 {offsets = [0, 0, 0], sizes = [1, 2, 32], strides = [1, 1, 1]} : vector<2x2x32xf32> to vector<1x2x32xf32>
    %36 = vector.shape_cast %35 : vector<1x2x32xf32> to vector<2x32xf32>
    %c0_13 = arith.constant 0 : index
    %c0_14 = arith.constant 0 : index
    %c0_15 = arith.constant 0 : index
    %37 = vector.load %arg21[%c0_13, %c0_14, %c0_15] : memref<2x8x64xf32, #tpu.memory_space<vmem>>, vector<2x1x32xf32>
    %38 = vector.shape_cast %37 : vector<2x1x32xf32> to vector<2x32xf32>
    %39 = vector.shape_cast %36 : vector<2x32xf32> to vector<2x1x32xf32>
    tpu.vector_store %arg21[%c0_13, %c0_14, %c0_15], %39 {strides = array<i32>} : memref<2x8x64xf32, #tpu.memory_space<vmem>>, vector<2x1x32xf32>,
    %40 = vector.extract_strided_slice %34 {offsets = [1, 0, 0], sizes = [1, 2, 32], strides = [1, 1, 1]} : vector<2x2x32xf32> to vector<1x2x32xf32>
    %41 = vector.shape_cast %40 : vector<1x2x32xf32> to vector<2x32xf32>
    %c0_16 = arith.constant 0 : index
    %c7 = arith.constant 7 : index
    %c32 = arith.constant 32 : index
    %42 = vector.load %arg21[%c0_16, %c7, %c32] : memref<2x8x64xf32, #tpu.memory_space<vmem>>, vector<2x1x32xf32>
    %43 = vector.shape_cast %42 : vector<2x1x32xf32> to vector<2x32xf32>
    %44 = vector.shape_cast %41 : vector<2x32xf32> to vector<2x1x32xf32>
    tpu.vector_store %arg21[%c0_16, %c7, %c32], %44 {strides = array<i32>} : memref<2x8x64xf32, #tpu.memory_space<vmem>>, vector<2x1x32xf32>,
    %45 = vector.extract_strided_slice %7 {offsets = [0, 1, 0], sizes = [2, 1, 128], strides = [1, 1, 1]} : vector<2x8x256xf32> to vector<2x1x128xf32>
    %46 = vector.shape_cast %45 : vector<2x1x128xf32> to vector<2x128xf32>
    %47 = vector.extract_strided_slice %7 {offsets = [0, 6, 128], sizes = [2, 1, 128], strides = [1, 1, 1]} : vector<2x8x256xf32> to vector<2x1x128xf32>
    %48 = vector.shape_cast %47 : vector<2x1x128xf32> to vector<2x128xf32>
    %49 = vector.shape_cast %46 : vector<2x128xf32> to vector<1x2x128xf32>
    %50 = vector.shape_cast %48 : vector<2x128xf32> to vector<1x2x128xf32>
    %51 = tpu.concatenate %49, %50 in 0 : vector<1x2x128xf32>, vector<1x2x128xf32> -> vector<2x2x128xf32>
    "tpu.trace_start"() <{level = 10 : i32, message = "dbh,dhg->dbg"}> : () -> ()
    %cst_17 = arith.constant dense<0.000000e+00> : vector<2x2x128xf32>
    %52 = tpu.matmul %34, %8, %cst_17 {dimension_numbers = #tpu.dot_dimension_numbers<[2], [1], [1], [2], [0, 0, 0, 1, 1, 2], [0], [0]>} : vector<2x2x32xf32>, vector<2x32x128xf32>, vector<2x2x128xf32> -> vector<2x2x128xf32>
    "tpu.trace_stop"() : () -> ()
    %53 = arith.addf %51, %52 : vector<2x2x128xf32>
    %54 = arith.negf %53 : vector<2x2x128xf32>
    %55 = math.exp %54 : vector<2x2x128xf32>
    %cst_18 = arith.constant 1.000000e+00 : f32
    %56 = vector.broadcast %cst_18 : f32 to vector<2x2x128xf32>
    %57 = arith.addf %56, %55 : vector<2x2x128xf32>
    %58 = arith.divf %56, %57 : vector<2x2x128xf32>
    %59 = vector.extract_strided_slice %58 {offsets = [0, 0, 0], sizes = [2, 2, 32], strides = [1, 1, 1]} : vector<2x2x128xf32> to vector<2x2x32xf32>
    %60 = vector.extract_strided_slice %58 {offsets = [0, 0, 32], sizes = [2, 2, 32], strides = [1, 1, 1]} : vector<2x2x128xf32> to vector<2x2x32xf32>
    %61 = vector.extract_strided_slice %58 {offsets = [0, 0, 96], sizes = [2, 2, 32], strides = [1, 1, 1]} : vector<2x2x128xf32> to vector<2x2x32xf32>
    %62 = vector.extract_strided_slice %53 {offsets = [0, 0, 64], sizes = [2, 2, 32], strides = [1, 1, 1]} : vector<2x2x128xf32> to vector<2x2x32xf32>
    %63 = math.tanh %62 : vector<2x2x32xf32>
    %64 = arith.mulf %60, %32 : vector<2x2x32xf32>
    %65 = arith.mulf %59, %63 : vector<2x2x32xf32>
    %66 = arith.addf %64, %65 : vector<2x2x32xf32>
    %67 = math.tanh %66 : vector<2x2x32xf32>
    %68 = arith.mulf %61, %67 : vector<2x2x32xf32>
    %69 = vector.extract_strided_slice %68 {offsets = [0, 0, 0], sizes = [1, 2, 32], strides = [1, 1, 1]} : vector<2x2x32xf32> to vector<1x2x32xf32>
    %70 = vector.shape_cast %69 : vector<1x2x32xf32> to vector<2x32xf32>
    %c0_19 = arith.constant 0 : index
    %c1 = arith.constant 1 : index
    %c0_20 = arith.constant 0 : index
    %71 = vector.load %arg21[%c0_19, %c1, %c0_20] : memref<2x8x64xf32, #tpu.memory_space<vmem>>, vector<2x1x32xf32>
    %72 = vector.shape_cast %71 : vector<2x1x32xf32> to vector<2x32xf32>
    %73 = vector.shape_cast %70 : vector<2x32xf32> to vector<2x1x32xf32>
    tpu.vector_store %arg21[%c0_19, %c1, %c0_20], %73 {strides = array<i32>} : memref<2x8x64xf32, #tpu.memory_space<vmem>>, vector<2x1x32xf32>,
    %74 = vector.extract_strided_slice %68 {offsets = [1, 0, 0], sizes = [1, 2, 32], strides = [1, 1, 1]} : vector<2x2x32xf32> to vector<1x2x32xf32>
    %75 = vector.shape_cast %74 : vector<1x2x32xf32> to vector<2x32xf32>
    %c0_21 = arith.constant 0 : index
    %c6 = arith.constant 6 : index
    %c32_22 = arith.constant 32 : index
    %76 = vector.load %arg21[%c0_21, %c6, %c32_22] : memref<2x8x64xf32, #tpu.memory_space<vmem>>, vector<2x1x32xf32>
    %77 = vector.shape_cast %76 : vector<2x1x32xf32> to vector<2x32xf32>
    %78 = vector.shape_cast %75 : vector<2x32xf32> to vector<2x1x32xf32>
    tpu.vector_store %arg21[%c0_21, %c6, %c32_22], %78 {strides = array<i32>} : memref<2x8x64xf32, #tpu.memory_space<vmem>>, vector<2x1x32xf32>,
    %79 = vector.extract_strided_slice %7 {offsets = [0, 2, 0], sizes = [2, 1, 128], strides = [1, 1, 1]} : vector<2x8x256xf32> to vector<2x1x128xf32>
    %80 = vector.shape_cast %79 : vector<2x1x128xf32> to vector<2x128xf32>
    %81 = vector.extract_strided_slice %7 {offsets = [0, 5, 128], sizes = [2, 1, 128], strides = [1, 1, 1]} : vector<2x8x256xf32> to vector<2x1x128xf32>
    %82 = vector.shape_cast %81 : vector<2x1x128xf32> to vector<2x128xf32>
    %83 = vector.shape_cast %80 : vector<2x128xf32> to vector<1x2x128xf32>
    %84 = vector.shape_cast %82 : vector<2x128xf32> to vector<1x2x128xf32>
    %85 = tpu.concatenate %83, %84 in 0 : vector<1x2x128xf32>, vector<1x2x128xf32> -> vector<2x2x128xf32>
    "tpu.trace_start"() <{level = 10 : i32, message = "dbh,dhg->dbg"}> : () -> ()
    %cst_23 = arith.constant dense<0.000000e+00> : vector<2x2x128xf32>
    %86 = tpu.matmul %68, %8, %cst_23 {dimension_numbers = #tpu.dot_dimension_numbers<[2], [1], [1], [2], [0, 0, 0, 1, 1, 2], [0], [0]>} : vector<2x2x32xf32>, vector<2x32x128xf32>, vector<2x2x128xf32> -> vector<2x2x128xf32>
    "tpu.trace_stop"() : () -> ()
    %87 = arith.addf %85, %86 : vector<2x2x128xf32>
    %88 = arith.negf %87 : vector<2x2x128xf32>
    %89 = math.exp %88 : vector<2x2x128xf32>
    %cst_24 = arith.constant 1.000000e+00 : f32
    %90 = vector.broadcast %cst_24 : f32 to vector<2x2x128xf32>
    %91 = arith.addf %90, %89 : vector<2x2x128xf32>
    %92 = arith.divf %90, %91 : vector<2x2x128xf32>
    %93 = vector.extract_strided_slice %92 {offsets = [0, 0, 0], sizes = [2, 2, 32], strides = [1, 1, 1]} : vector<2x2x128xf32> to vector<2x2x32xf32>
    %94 = vector.extract_strided_slice %92 {offsets = [0, 0, 32], sizes = [2, 2, 32], strides = [1, 1, 1]} : vector<2x2x128xf32> to vector<2x2x32xf32>
    %95 = vector.extract_strided_slice %92 {offsets = [0, 0, 96], sizes = [2, 2, 32], strides = [1, 1, 1]} : vector<2x2x128xf32> to vector<2x2x32xf32>
    %96 = vector.extract_strided_slice %87 {offsets = [0, 0, 64], sizes = [2, 2, 32], strides = [1, 1, 1]} : vector<2x2x128xf32> to vector<2x2x32xf32>
    %97 = math.tanh %96 : vector<2x2x32xf32>
    %98 = arith.mulf %94, %66 : vector<2x2x32xf32>
    %99 = arith.mulf %93, %97 : vector<2x2x32xf32>
    %100 = arith.addf %98, %99 : vector<2x2x32xf32>
    %101 = math.tanh %100 : vector<2x2x32xf32>
    %102 = arith.mulf %95, %101 : vector<2x2x32xf32>
    %103 = vector.extract_strided_slice %102 {offsets = [0, 0, 0], sizes = [1, 2, 32], strides = [1, 1, 1]} : vector<2x2x32xf32> to vector<1x2x32xf32>
    %104 = vector.shape_cast %103 : vector<1x2x32xf32> to vector<2x32xf32>
    %c0_25 = arith.constant 0 : index
    %c2 = arith.constant 2 : index
    %c0_26 = arith.constant 0 : index
    %105 = vector.load %arg21[%c0_25, %c2, %c0_26] : memref<2x8x64xf32, #tpu.memory_space<vmem>>, vector<2x1x32xf32>
    %106 = vector.shape_cast %105 : vector<2x1x32xf32> to vector<2x32xf32>
    %107 = vector.shape_cast %104 : vector<2x32xf32> to vector<2x1x32xf32>
    tpu.vector_store %arg21[%c0_25, %c2, %c0_26], %107 {strides = array<i32>} : memref<2x8x64xf32, #tpu.memory_space<vmem>>, vector<2x1x32xf32>,
    %108 = vector.extract_strided_slice %102 {offsets = [1, 0, 0], sizes = [1, 2, 32], strides = [1, 1, 1]} : vector<2x2x32xf32> to vector<1x2x32xf32>
    %109 = vector.shape_cast %108 : vector<1x2x32xf32> to vector<2x32xf32>
    %c0_27 = arith.constant 0 : index
    %c5 = arith.constant 5 : index
    %c32_28 = arith.constant 32 : index
    %110 = vector.load %arg21[%c0_27, %c5, %c32_28] : memref<2x8x64xf32, #tpu.memory_space<vmem>>, vector<2x1x32xf32>
    %111 = vector.shape_cast %110 : vector<2x1x32xf32> to vector<2x32xf32>
    %112 = vector.shape_cast %109 : vector<2x32xf32> to vector<2x1x32xf32>
    tpu.vector_store %arg21[%c0_27, %c5, %c32_28], %112 {strides = array<i32>} : memref<2x8x64xf32, #tpu.memory_space<vmem>>, vector<2x1x32xf32>,
    %113 = vector.extract_strided_slice %7 {offsets = [0, 3, 0], sizes = [2, 1, 128], strides = [1, 1, 1]} : vector<2x8x256xf32> to vector<2x1x128xf32>
    %114 = vector.shape_cast %113 : vector<2x1x128xf32> to vector<2x128xf32>
    %115 = vector.extract_strided_slice %7 {offsets = [0, 4, 128], sizes = [2, 1, 128], strides = [1, 1, 1]} : vector<2x8x256xf32> to vector<2x1x128xf32>
    %116 = vector.shape_cast %115 : vector<2x1x128xf32> to vector<2x128xf32>
    %117 = vector.shape_cast %114 : vector<2x128xf32> to vector<1x2x128xf32>
    %118 = vector.shape_cast %116 : vector<2x128xf32> to vector<1x2x128xf32>
    %119 = tpu.concatenate %117, %118 in 0 : vector<1x2x128xf32>, vector<1x2x128xf32> -> vector<2x2x128xf32>
    "tpu.trace_start"() <{level = 10 : i32, message = "dbh,dhg->dbg"}> : () -> ()
    %cst_29 = arith.constant dense<0.000000e+00> : vector<2x2x128xf32>
    %120 = tpu.matmul %102, %8, %cst_29 {dimension_numbers = #tpu.dot_dimension_numbers<[2], [1], [1], [2], [0, 0, 0, 1, 1, 2], [0], [0]>} : vector<2x2x32xf32>, vector<2x32x128xf32>, vector<2x2x128xf32> -> vector<2x2x128xf32>
    "tpu.trace_stop"() : () -> ()
    %121 = arith.addf %119, %120 : vector<2x2x128xf32>
    %122 = arith.negf %121 : vector<2x2x128xf32>
    %123 = math.exp %122 : vector<2x2x128xf32>
    %cst_30 = arith.constant 1.000000e+00 : f32
    %124 = vector.broadcast %cst_30 : f32 to vector<2x2x128xf32>
    %125 = arith.addf %124, %123 : vector<2x2x128xf32>
    %126 = arith.divf %124, %125 : vector<2x2x128xf32>
    %127 = vector.extract_strided_slice %126 {offsets = [0, 0, 0], sizes = [2, 2, 32], strides = [1, 1, 1]} : vector<2x2x128xf32> to vector<2x2x32xf32>
    %128 = vector.extract_strided_slice %126 {offsets = [0, 0, 32], sizes = [2, 2, 32], strides = [1, 1, 1]} : vector<2x2x128xf32> to vector<2x2x32xf32>
    %129 = vector.extract_strided_slice %126 {offsets = [0, 0, 96], sizes = [2, 2, 32], strides = [1, 1, 1]} : vector<2x2x128xf32> to vector<2x2x32xf32>
    %130 = vector.extract_strided_slice %121 {offsets = [0, 0, 64], sizes = [2, 2, 32], strides = [1, 1, 1]} : vector<2x2x128xf32> to vector<2x2x32xf32>
    %131 = math.tanh %130 : vector<2x2x32xf32>
    %132 = arith.mulf %128, %100 : vector<2x2x32xf32>
    %133 = arith.mulf %127, %131 : vector<2x2x32xf32>
    %134 = arith.addf %132, %133 : vector<2x2x32xf32>
    %135 = math.tanh %134 : vector<2x2x32xf32>
    %136 = arith.mulf %129, %135 : vector<2x2x32xf32>
    %137 = vector.extract_strided_slice %136 {offsets = [0, 0, 0], sizes = [1, 2, 32], strides = [1, 1, 1]} : vector<2x2x32xf32> to vector<1x2x32xf32>
    %138 = vector.shape_cast %137 : vector<1x2x32xf32> to vector<2x32xf32>
    %c0_31 = arith.constant 0 : index
    %c3 = arith.constant 3 : index
    %c0_32 = arith.constant 0 : index
    %139 = vector.load %arg21[%c0_31, %c3, %c0_32] : memref<2x8x64xf32, #tpu.memory_space<vmem>>, vector<2x1x32xf32>
    %140 = vector.shape_cast %139 : vector<2x1x32xf32> to vector<2x32xf32>
    %141 = vector.shape_cast %138 : vector<2x32xf32> to vector<2x1x32xf32>
    tpu.vector_store %arg21[%c0_31, %c3, %c0_32], %141 {strides = array<i32>} : memref<2x8x64xf32, #tpu.memory_space<vmem>>, vector<2x1x32xf32>,
    %142 = vector.extract_strided_slice %136 {offsets = [1, 0, 0], sizes = [1, 2, 32], strides = [1, 1, 1]} : vector<2x2x32xf32> to vector<1x2x32xf32>
    %143 = vector.shape_cast %142 : vector<1x2x32xf32> to vector<2x32xf32>
    %c0_33 = arith.constant 0 : index
    %c4 = arith.constant 4 : index
    %c32_34 = arith.constant 32 : index
    %144 = vector.load %arg21[%c0_33, %c4, %c32_34] : memref<2x8x64xf32, #tpu.memory_space<vmem>>, vector<2x1x32xf32>
    %145 = vector.shape_cast %144 : vector<2x1x32xf32> to vector<2x32xf32>
    %146 = vector.shape_cast %143 : vector<2x32xf32> to vector<2x1x32xf32>
    tpu.vector_store %arg21[%c0_33, %c4, %c32_34], %146 {strides = array<i32>} : memref<2x8x64xf32, #tpu.memory_space<vmem>>, vector<2x1x32xf32>,
    %147 = vector.extract_strided_slice %7 {offsets = [0, 4, 0], sizes = [2, 1, 128], strides = [1, 1, 1]} : vector<2x8x256xf32> to vector<2x1x128xf32>
    %148 = vector.shape_cast %147 : vector<2x1x128xf32> to vector<2x128xf32>
    %149 = vector.extract_strided_slice %7 {offsets = [0, 3, 128], sizes = [2, 1, 128], strides = [1, 1, 1]} : vector<2x8x256xf32> to vector<2x1x128xf32>
    %150 = vector.shape_cast %149 : vector<2x1x128xf32> to vector<2x128xf32>
    %151 = vector.shape_cast %148 : vector<2x128xf32> to vector<1x2x128xf32>
    %152 = vector.shape_cast %150 : vector<2x128xf32> to vector<1x2x128xf32>
    %153 = tpu.concatenate %151, %152 in 0 : vector<1x2x128xf32>, vector<1x2x128xf32> -> vector<2x2x128xf32>
    "tpu.trace_start"() <{level = 10 : i32, message = "dbh,dhg->dbg"}> : () -> ()
    %cst_35 = arith.constant dense<0.000000e+00> : vector<2x2x128xf32>
    %154 = tpu.matmul %136, %8, %cst_35 {dimension_numbers = #tpu.dot_dimension_numbers<[2], [1], [1], [2], [0, 0, 0, 1, 1, 2], [0], [0]>} : vector<2x2x32xf32>, vector<2x32x128xf32>, vector<2x2x128xf32> -> vector<2x2x128xf32>
    "tpu.trace_stop"() : () -> ()
    %155 = arith.addf %153, %154 : vector<2x2x128xf32>
    %156 = arith.negf %155 : vector<2x2x128xf32>
    %157 = math.exp %156 : vector<2x2x128xf32>
    %cst_36 = arith.constant 1.000000e+00 : f32
    %158 = vector.broadcast %cst_36 : f32 to vector<2x2x128xf32>
    %159 = arith.addf %158, %157 : vector<2x2x128xf32>
    %160 = arith.divf %158, %159 : vector<2x2x128xf32>
    %161 = vector.extract_strided_slice %160 {offsets = [0, 0, 0], sizes = [2, 2, 32], strides = [1, 1, 1]} : vector<2x2x128xf32> to vector<2x2x32xf32>
    %162 = vector.extract_strided_slice %160 {offsets = [0, 0, 32], sizes = [2, 2, 32], strides = [1, 1, 1]} : vector<2x2x128xf32> to vector<2x2x32xf32>
    %163 = vector.extract_strided_slice %160 {offsets = [0, 0, 96], sizes = [2, 2, 32], strides = [1, 1, 1]} : vector<2x2x128xf32> to vector<2x2x32xf32>
    %164 = vector.extract_strided_slice %155 {offsets = [0, 0, 64], sizes = [2, 2, 32], strides = [1, 1, 1]} : vector<2x2x128xf32> to vector<2x2x32xf32>
    %165 = math.tanh %164 : vector<2x2x32xf32>
    %166 = arith.mulf %162, %134 : vector<2x2x32xf32>
    %167 = arith.mulf %161, %165 : vector<2x2x32xf32>
    %168 = arith.addf %166, %167 : vector<2x2x32xf32>
    %169 = math.tanh %168 : vector<2x2x32xf32>
    %170 = arith.mulf %163, %169 : vector<2x2x32xf32>
    %171 = vector.extract_strided_slice %170 {offsets = [0, 0, 0], sizes = [1, 2, 32], strides = [1, 1, 1]} : vector<2x2x32xf32> to vector<1x2x32xf32>
    %172 = vector.shape_cast %171 : vector<1x2x32xf32> to vector<2x32xf32>
    %c0_37 = arith.constant 0 : index
    %c4_38 = arith.constant 4 : index
    %c0_39 = arith.constant 0 : index
    %173 = vector.load %arg21[%c0_37, %c4_38, %c0_39] : memref<2x8x64xf32, #tpu.memory_space<vmem>>, vector<2x1x32xf32>
    %174 = vector.shape_cast %173 : vector<2x1x32xf32> to vector<2x32xf32>
    %175 = vector.shape_cast %172 : vector<2x32xf32> to vector<2x1x32xf32>
    tpu.vector_store %arg21[%c0_37, %c4_38, %c0_39], %175 {strides = array<i32>} : memref<2x8x64xf32, #tpu.memory_space<vmem>>, vector<2x1x32xf32>,
    %176 = vector.extract_strided_slice %170 {offsets = [1, 0, 0], sizes = [1, 2, 32], strides = [1, 1, 1]} : vector<2x2x32xf32> to vector<1x2x32xf32>
    %177 = vector.shape_cast %176 : vector<1x2x32xf32> to vector<2x32xf32>
    %c0_40 = arith.constant 0 : index
    %c3_41 = arith.constant 3 : index
    %c32_42 = arith.constant 32 : index
    %178 = vector.load %arg21[%c0_40, %c3_41, %c32_42] : memref<2x8x64xf32, #tpu.memory_space<vmem>>, vector<2x1x32xf32>
    %179 = vector.shape_cast %178 : vector<2x1x32xf32> to vector<2x32xf32>
    %180 = vector.shape_cast %177 : vector<2x32xf32> to vector<2x1x32xf32>
    tpu.vector_store %arg21[%c0_40, %c3_41, %c32_42], %180 {strides = array<i32>} : memref<2x8x64xf32, #tpu.memory_space<vmem>>, vector<2x1x32xf32>,
    %181 = vector.extract_strided_slice %7 {offsets = [0, 5, 0], sizes = [2, 1, 128], strides = [1, 1, 1]} : vector<2x8x256xf32> to vector<2x1x128xf32>
    %182 = vector.shape_cast %181 : vector<2x1x128xf32> to vector<2x128xf32>
    %183 = vector.extract_strided_slice %7 {offsets = [0, 2, 128], sizes = [2, 1, 128], strides = [1, 1, 1]} : vector<2x8x256xf32> to vector<2x1x128xf32>
    %184 = vector.shape_cast %183 : vector<2x1x128xf32> to vector<2x128xf32>
    %185 = vector.shape_cast %182 : vector<2x128xf32> to vector<1x2x128xf32>
    %186 = vector.shape_cast %184 : vector<2x128xf32> to vector<1x2x128xf32>
    %187 = tpu.concatenate %185, %186 in 0 : vector<1x2x128xf32>, vector<1x2x128xf32> -> vector<2x2x128xf32>
    "tpu.trace_start"() <{level = 10 : i32, message = "dbh,dhg->dbg"}> : () -> ()
    %cst_43 = arith.constant dense<0.000000e+00> : vector<2x2x128xf32>
    %188 = tpu.matmul %170, %8, %cst_43 {dimension_numbers = #tpu.dot_dimension_numbers<[2], [1], [1], [2], [0, 0, 0, 1, 1, 2], [0], [0]>} : vector<2x2x32xf32>, vector<2x32x128xf32>, vector<2x2x128xf32> -> vector<2x2x128xf32>
    "tpu.trace_stop"() : () -> ()
    %189 = arith.addf %187, %188 : vector<2x2x128xf32>
    %190 = arith.negf %189 : vector<2x2x128xf32>
    %191 = math.exp %190 : vector<2x2x128xf32>
    %cst_44 = arith.constant 1.000000e+00 : f32
    %192 = vector.broadcast %cst_44 : f32 to vector<2x2x128xf32>
    %193 = arith.addf %192, %191 : vector<2x2x128xf32>
    %194 = arith.divf %192, %193 : vector<2x2x128xf32>
    %195 = vector.extract_strided_slice %194 {offsets = [0, 0, 0], sizes = [2, 2, 32], strides = [1, 1, 1]} : vector<2x2x128xf32> to vector<2x2x32xf32>
    %196 = vector.extract_strided_slice %194 {offsets = [0, 0, 32], sizes = [2, 2, 32], strides = [1, 1, 1]} : vector<2x2x128xf32> to vector<2x2x32xf32>
    %197 = vector.extract_strided_slice %194 {offsets = [0, 0, 96], sizes = [2, 2, 32], strides = [1, 1, 1]} : vector<2x2x128xf32> to vector<2x2x32xf32>
    %198 = vector.extract_strided_slice %189 {offsets = [0, 0, 64], sizes = [2, 2, 32], strides = [1, 1, 1]} : vector<2x2x128xf32> to vector<2x2x32xf32>
    %199 = math.tanh %198 : vector<2x2x32xf32>
    %200 = arith.mulf %196, %168 : vector<2x2x32xf32>
    %201 = arith.mulf %195, %199 : vector<2x2x32xf32>
    %202 = arith.addf %200, %201 : vector<2x2x32xf32>
    %203 = math.tanh %202 : vector<2x2x32xf32>
    %204 = arith.mulf %197, %203 : vector<2x2x32xf32>
    %205 = vector.extract_strided_slice %204 {offsets = [0, 0, 0], sizes = [1, 2, 32], strides = [1, 1, 1]} : vector<2x2x32xf32> to vector<1x2x32xf32>
    %206 = vector.shape_cast %205 : vector<1x2x32xf32> to vector<2x32xf32>
    %c0_45 = arith.constant 0 : index
    %c5_46 = arith.constant 5 : index
    %c0_47 = arith.constant 0 : index
    %207 = vector.load %arg21[%c0_45, %c5_46, %c0_47] : memref<2x8x64xf32, #tpu.memory_space<vmem>>, vector<2x1x32xf32>
    %208 = vector.shape_cast %207 : vector<2x1x32xf32> to vector<2x32xf32>
    %209 = vector.shape_cast %206 : vector<2x32xf32> to vector<2x1x32xf32>
    tpu.vector_store %arg21[%c0_45, %c5_46, %c0_47], %209 {strides = array<i32>} : memref<2x8x64xf32, #tpu.memory_space<vmem>>, vector<2x1x32xf32>,
    %210 = vector.extract_strided_slice %204 {offsets = [1, 0, 0], sizes = [1, 2, 32], strides = [1, 1, 1]} : vector<2x2x32xf32> to vector<1x2x32xf32>
    %211 = vector.shape_cast %210 : vector<1x2x32xf32> to vector<2x32xf32>
    %c0_48 = arith.constant 0 : index
    %c2_49 = arith.constant 2 : index
    %c32_50 = arith.constant 32 : index
    %212 = vector.load %arg21[%c0_48, %c2_49, %c32_50] : memref<2x8x64xf32, #tpu.memory_space<vmem>>, vector<2x1x32xf32>
    %213 = vector.shape_cast %212 : vector<2x1x32xf32> to vector<2x32xf32>
    %214 = vector.shape_cast %211 : vector<2x32xf32> to vector<2x1x32xf32>
    tpu.vector_store %arg21[%c0_48, %c2_49, %c32_50], %214 {strides = array<i32>} : memref<2x8x64xf32, #tpu.memory_space<vmem>>, vector<2x1x32xf32>,
    %215 = vector.extract_strided_slice %7 {offsets = [0, 6, 0], sizes = [2, 1, 128], strides = [1, 1, 1]} : vector<2x8x256xf32> to vector<2x1x128xf32>
    %216 = vector.shape_cast %215 : vector<2x1x128xf32> to vector<2x128xf32>
    %217 = vector.extract_strided_slice %7 {offsets = [0, 1, 128], sizes = [2, 1, 128], strides = [1, 1, 1]} : vector<2x8x256xf32> to vector<2x1x128xf32>
    %218 = vector.shape_cast %217 : vector<2x1x128xf32> to vector<2x128xf32>
    %219 = vector.shape_cast %216 : vector<2x128xf32> to vector<1x2x128xf32>
    %220 = vector.shape_cast %218 : vector<2x128xf32> to vector<1x2x128xf32>
    %221 = tpu.concatenate %219, %220 in 0 : vector<1x2x128xf32>, vector<1x2x128xf32> -> vector<2x2x128xf32>
    "tpu.trace_start"() <{level = 10 : i32, message = "dbh,dhg->dbg"}> : () -> ()
    %cst_51 = arith.constant dense<0.000000e+00> : vector<2x2x128xf32>
    %222 = tpu.matmul %204, %8, %cst_51 {dimension_numbers = #tpu.dot_dimension_numbers<[2], [1], [1], [2], [0, 0, 0, 1, 1, 2], [0], [0]>} : vector<2x2x32xf32>, vector<2x32x128xf32>, vector<2x2x128xf32> -> vector<2x2x128xf32>
    "tpu.trace_stop"() : () -> ()
    %223 = arith.addf %221, %222 : vector<2x2x128xf32>
    %224 = arith.negf %223 : vector<2x2x128xf32>
    %225 = math.exp %224 : vector<2x2x128xf32>
    %cst_52 = arith.constant 1.000000e+00 : f32
    %226 = vector.broadcast %cst_52 : f32 to vector<2x2x128xf32>
    %227 = arith.addf %226, %225 : vector<2x2x128xf32>
    %228 = arith.divf %226, %227 : vector<2x2x128xf32>
    %229 = vector.extract_strided_slice %228 {offsets = [0, 0, 0], sizes = [2, 2, 32], strides = [1, 1, 1]} : vector<2x2x128xf32> to vector<2x2x32xf32>
    %230 = vector.extract_strided_slice %228 {offsets = [0, 0, 32], sizes = [2, 2, 32], strides = [1, 1, 1]} : vector<2x2x128xf32> to vector<2x2x32xf32>
    %231 = vector.extract_strided_slice %228 {offsets = [0, 0, 96], sizes = [2, 2, 32], strides = [1, 1, 1]} : vector<2x2x128xf32> to vector<2x2x32xf32>
    %232 = vector.extract_strided_slice %223 {offsets = [0, 0, 64], sizes = [2, 2, 32], strides = [1, 1, 1]} : vector<2x2x128xf32> to vector<2x2x32xf32>
    %233 = math.tanh %232 : vector<2x2x32xf32>
    %234 = arith.mulf %230, %202 : vector<2x2x32xf32>
    %235 = arith.mulf %229, %233 : vector<2x2x32xf32>
    %236 = arith.addf %234, %235 : vector<2x2x32xf32>
    %237 = math.tanh %236 : vector<2x2x32xf32>
    %238 = arith.mulf %231, %237 : vector<2x2x32xf32>
    %239 = vector.extract_strided_slice %238 {offsets = [0, 0, 0], sizes = [1, 2, 32], strides = [1, 1, 1]} : vector<2x2x32xf32> to vector<1x2x32xf32>
    %240 = vector.shape_cast %239 : vector<1x2x32xf32> to vector<2x32xf32>
    %c0_53 = arith.constant 0 : index
    %c6_54 = arith.constant 6 : index
    %c0_55 = arith.constant 0 : index
    %241 = vector.load %arg21[%c0_53, %c6_54, %c0_55] : memref<2x8x64xf32, #tpu.memory_space<vmem>>, vector<2x1x32xf32>
    %242 = vector.shape_cast %241 : vector<2x1x32xf32> to vector<2x32xf32>
    %243 = vector.shape_cast %240 : vector<2x32xf32> to vector<2x1x32xf32>
    tpu.vector_store %arg21[%c0_53, %c6_54, %c0_55], %243 {strides = array<i32>} : memref<2x8x64xf32, #tpu.memory_space<vmem>>, vector<2x1x32xf32>,
    %244 = vector.extract_strided_slice %238 {offsets = [1, 0, 0], sizes = [1, 2, 32], strides = [1, 1, 1]} : vector<2x2x32xf32> to vector<1x2x32xf32>
    %245 = vector.shape_cast %244 : vector<1x2x32xf32> to vector<2x32xf32>
    %c0_56 = arith.constant 0 : index
    %c1_57 = arith.constant 1 : index
    %c32_58 = arith.constant 32 : index
    %246 = vector.load %arg21[%c0_56, %c1_57, %c32_58] : memref<2x8x64xf32, #tpu.memory_space<vmem>>, vector<2x1x32xf32>
    %247 = vector.shape_cast %246 : vector<2x1x32xf32> to vector<2x32xf32>
    %248 = vector.shape_cast %245 : vector<2x32xf32> to vector<2x1x32xf32>
    tpu.vector_store %arg21[%c0_56, %c1_57, %c32_58], %248 {strides = array<i32>} : memref<2x8x64xf32, #tpu.memory_space<vmem>>, vector<2x1x32xf32>,
    %249 = vector.extract_strided_slice %7 {offsets = [0, 7, 0], sizes = [2, 1, 128], strides = [1, 1, 1]} : vector<2x8x256xf32> to vector<2x1x128xf32>
    %250 = vector.shape_cast %249 : vector<2x1x128xf32> to vector<2x128xf32>
    %251 = vector.extract_strided_slice %7 {offsets = [0, 0, 128], sizes = [2, 1, 128], strides = [1, 1, 1]} : vector<2x8x256xf32> to vector<2x1x128xf32>
    %252 = vector.shape_cast %251 : vector<2x1x128xf32> to vector<2x128xf32>
    %253 = vector.shape_cast %250 : vector<2x128xf32> to vector<1x2x128xf32>
    %254 = vector.shape_cast %252 : vector<2x128xf32> to vector<1x2x128xf32>
    %255 = tpu.concatenate %253, %254 in 0 : vector<1x2x128xf32>, vector<1x2x128xf32> -> vector<2x2x128xf32>
    "tpu.trace_start"() <{level = 10 : i32, message = "dbh,dhg->dbg"}> : () -> ()
    %cst_59 = arith.constant dense<0.000000e+00> : vector<2x2x128xf32>
    %256 = tpu.matmul %238, %8, %cst_59 {dimension_numbers = #tpu.dot_dimension_numbers<[2], [1], [1], [2], [0, 0, 0, 1, 1, 2], [0], [0]>} : vector<2x2x32xf32>, vector<2x32x128xf32>, vector<2x2x128xf32> -> vector<2x2x128xf32>
    "tpu.trace_stop"() : () -> ()
    %257 = arith.addf %255, %256 : vector<2x2x128xf32>
    %258 = arith.negf %257 : vector<2x2x128xf32>
    %259 = math.exp %258 : vector<2x2x128xf32>
    %cst_60 = arith.constant 1.000000e+00 : f32
    %260 = vector.broadcast %cst_60 : f32 to vector<2x2x128xf32>
    %261 = arith.addf %260, %259 : vector<2x2x128xf32>
    %262 = arith.divf %260, %261 : vector<2x2x128xf32>
    %263 = vector.extract_strided_slice %262 {offsets = [0, 0, 0], sizes = [2, 2, 32], strides = [1, 1, 1]} : vector<2x2x128xf32> to vector<2x2x32xf32>
    %264 = vector.extract_strided_slice %262 {offsets = [0, 0, 32], sizes = [2, 2, 32], strides = [1, 1, 1]} : vector<2x2x128xf32> to vector<2x2x32xf32>
    %265 = vector.extract_strided_slice %262 {offsets = [0, 0, 96], sizes = [2, 2, 32], strides = [1, 1, 1]} : vector<2x2x128xf32> to vector<2x2x32xf32>
    %266 = vector.extract_strided_slice %257 {offsets = [0, 0, 64], sizes = [2, 2, 32], strides = [1, 1, 1]} : vector<2x2x128xf32> to vector<2x2x32xf32>
    %267 = math.tanh %266 : vector<2x2x32xf32>
    %268 = arith.mulf %264, %236 : vector<2x2x32xf32>
    %269 = arith.mulf %263, %267 : vector<2x2x32xf32>
    %270 = arith.addf %268, %269 : vector<2x2x32xf32>
    %271 = math.tanh %270 : vector<2x2x32xf32>
    %272 = arith.mulf %265, %271 : vector<2x2x32xf32>
    %273 = vector.extract_strided_slice %272 {offsets = [0, 0, 0], sizes = [1, 2, 32], strides = [1, 1, 1]} : vector<2x2x32xf32> to vector<1x2x32xf32>
    %274 = vector.shape_cast %273 : vector<1x2x32xf32> to vector<2x32xf32>
    %c0_61 = arith.constant 0 : index
    %c7_62 = arith.constant 7 : index
    %c0_63 = arith.constant 0 : index
    %275 = vector.load %arg21[%c0_61, %c7_62, %c0_63] : memref<2x8x64xf32, #tpu.memory_space<vmem>>, vector<2x1x32xf32>
    %276 = vector.shape_cast %275 : vector<2x1x32xf32> to vector<2x32xf32>
    %277 = vector.shape_cast %274 : vector<2x32xf32> to vector<2x1x32xf32>
    tpu.vector_store %arg21[%c0_61, %c7_62, %c0_63], %277 {strides = array<i32>} : memref<2x8x64xf32, #tpu.memory_space<vmem>>, vector<2x1x32xf32>,
    %278 = vector.extract_strided_slice %272 {offsets = [1, 0, 0], sizes = [1, 2, 32], strides = [1, 1, 1]} : vector<2x2x32xf32> to vector<1x2x32xf32>
    %279 = vector.shape_cast %278 : vector<1x2x32xf32> to vector<2x32xf32>
    %c0_64 = arith.constant 0 : index
    %c0_65 = arith.constant 0 : index
    %c32_66 = arith.constant 32 : index
    %280 = vector.load %arg21[%c0_64, %c0_65, %c32_66] : memref<2x8x64xf32, #tpu.memory_space<vmem>>, vector<2x1x32xf32>
    %281 = vector.shape_cast %280 : vector<2x1x32xf32> to vector<2x32xf32>
    %282 = vector.shape_cast %279 : vector<2x32xf32> to vector<2x1x32xf32>
    tpu.vector_store %arg21[%c0_64, %c0_65, %c32_66], %282 {strides = array<i32>} : memref<2x8x64xf32, #tpu.memory_space<vmem>>, vector<2x1x32xf32>,
    %c0_67 = arith.constant 0 : index
    %c0_68 = arith.constant 0 : index
    %c0_69 = arith.constant 0 : index
    %283 = vector.load %arg21[%c0_67, %c0_68, %c0_69] : memref<2x8x64xf32, #tpu.memory_space<vmem>>, vector<2x8x64xf32>
    %284 = vector.shape_cast %283 : vector<2x8x64xf32> to vector<16x64xf32>
    %c0_70 = arith.constant 0 : index
    %c0_71 = arith.constant 0 : index
    %285 = vector.load %arg4[%c0_70, %c0_71] : memref<64x256xf32, #tpu.memory_space<vmem>>, vector<64x256xf32>
    %cst_72 = arith.constant dense<0.000000e+00> : vector<16x256xf32>
    %286 = tpu.matmul %284, %285, %cst_72 {dimension_numbers = #tpu.dot_dimension_numbers<[1], [0], [0], [1], [0, 0, 1, 1], [], []>} : vector<16x64xf32>, vector<64x256xf32>, vector<16x256xf32> -> vector<16x256xf32>
    %c0_73 = arith.constant 0 : index
    %c0_74 = arith.constant 0 : index
    %287 = vector.load %arg6[%c0_73, %c0_74] : memref<1x256xf32, #tpu.memory_space<vmem>>, vector<1x256xf32>
    %288 = vector.broadcast %287 : vector<1x256xf32> to vector<16x256xf32>
    %289 = arith.addf %286, %288 : vector<16x256xf32>
    %290 = vector.shape_cast %289 : vector<16x256xf32> to vector<2x8x256xf32>
    %c0_75 = arith.constant 0 : index
    %c0_76 = arith.constant 0 : index
    %c0_77 = arith.constant 0 : index
    %291 = vector.load %arg5[%c0_75, %c0_76, %c0_77] : memref<2x32x128xf32, #tpu.memory_space<vmem>>, vector<2x32x128xf32>
    %cst_78 = arith.constant 0.000000e+00 : f32
    %292 = vector.broadcast %cst_78 : f32 to vector<2x2x32xf32>
    %cst_79 = arith.constant 0.000000e+00 : f32
    %293 = vector.broadcast %cst_79 : f32 to vector<2x2x32xf32>
    %294 = vector.extract_strided_slice %290 {offsets = [0, 0, 0], sizes = [2, 1, 128], strides = [1, 1, 1]} : vector<2x8x256xf32> to vector<2x1x128xf32>
    %295 = vector.shape_cast %294 : vector<2x1x128xf32> to vector<2x128xf32>
    %296 = vector.extract_strided_slice %290 {offsets = [0, 7, 128], sizes = [2, 1, 128], strides = [1, 1, 1]} : vector<2x8x256xf32> to vector<2x1x128xf32>
    %297 = vector.shape_cast %296 : vector<2x1x128xf32> to vector<2x128xf32>
    %298 = vector.shape_cast %295 : vector<2x128xf32> to vector<1x2x128xf32>
    %299 = vector.shape_cast %297 : vector<2x128xf32> to vector<1x2x128xf32>
    %300 = tpu.concatenate %298, %299 in 0 : vector<1x2x128xf32>, vector<1x2x128xf32> -> vector<2x2x128xf32>
    "tpu.trace_start"() <{level = 10 : i32, message = "dbh,dhg->dbg"}> : () -> ()
    %cst_80 = arith.constant dense<0.000000e+00> : vector<2x2x128xf32>
    %301 = tpu.matmul %292, %291, %cst_80 {dimension_numbers = #tpu.dot_dimension_numbers<[2], [1], [1], [2], [0, 0, 0, 1, 1, 2], [0], [0]>} : vector<2x2x32xf32>, vector<2x32x128xf32>, vector<2x2x128xf32> -> vector<2x2x128xf32>
    "tpu.trace_stop"() : () -> ()
    %302 = arith.addf %300, %301 : vector<2x2x128xf32>
    %303 = arith.negf %302 : vector<2x2x128xf32>
    %304 = math.exp %303 : vector<2x2x128xf32>
    %cst_81 = arith.constant 1.000000e+00 : f32
    %305 = vector.broadcast %cst_81 : f32 to vector<2x2x128xf32>
    %306 = arith.addf %305, %304 : vector<2x2x128xf32>
    %307 = arith.divf %305, %306 : vector<2x2x128xf32>
    %308 = vector.extract_strided_slice %307 {offsets = [0, 0, 0], sizes = [2, 2, 32], strides = [1, 1, 1]} : vector<2x2x128xf32> to vector<2x2x32xf32>
    %309 = vector.extract_strided_slice %307 {offsets = [0, 0, 32], sizes = [2, 2, 32], strides = [1, 1, 1]} : vector<2x2x128xf32> to vector<2x2x32xf32>
    %310 = vector.extract_strided_slice %307 {offsets = [0, 0, 96], sizes = [2, 2, 32], strides = [1, 1, 1]} : vector<2x2x128xf32> to vector<2x2x32xf32>
    %311 = vector.extract_strided_slice %302 {offsets = [0, 0, 64], sizes = [2, 2, 32], strides = [1, 1, 1]} : vector<2x2x128xf32> to vector<2x2x32xf32>
    %312 = math.tanh %311 : vector<2x2x32xf32>
    %313 = arith.mulf %309, %293 : vector<2x2x32xf32>
    %314 = arith.mulf %308, %312 : vector<2x2x32xf32>
    %315 = arith.addf %313, %314 : vector<2x2x32xf32>
    %316 = math.tanh %315 : vector<2x2x32xf32>
    %317 = arith.mulf %310, %316 : vector<2x2x32xf32>
    %318 = vector.extract_strided_slice %317 {offsets = [0, 0, 0], sizes = [1, 2, 32], strides = [1, 1, 1]} : vector<2x2x32xf32> to vector<1x2x32xf32>
    %319 = vector.shape_cast %318 : vector<1x2x32xf32> to vector<2x32xf32>
    %c0_82 = arith.constant 0 : index
    %c0_83 = arith.constant 0 : index
    %c0_84 = arith.constant 0 : index
    %320 = vector.load %arg22[%c0_82, %c0_83, %c0_84] : memref<2x8x64xf32, #tpu.memory_space<vmem>>, vector<2x1x32xf32>
    %321 = vector.shape_cast %320 : vector<2x1x32xf32> to vector<2x32xf32>
    %322 = vector.shape_cast %319 : vector<2x32xf32> to vector<2x1x32xf32>
    tpu.vector_store %arg22[%c0_82, %c0_83, %c0_84], %322 {strides = array<i32>} : memref<2x8x64xf32, #tpu.memory_space<vmem>>, vector<2x1x32xf32>,
    %323 = vector.extract_strided_slice %317 {offsets = [1, 0, 0], sizes = [1, 2, 32], strides = [1, 1, 1]} : vector<2x2x32xf32> to vector<1x2x32xf32>
    %324 = vector.shape_cast %323 : vector<1x2x32xf32> to vector<2x32xf32>
    %c0_85 = arith.constant 0 : index
    %c7_86 = arith.constant 7 : index
    %c32_87 = arith.constant 32 : index
    %325 = vector.load %arg22[%c0_85, %c7_86, %c32_87] : memref<2x8x64xf32, #tpu.memory_space<vmem>>, vector<2x1x32xf32>
    %326 = vector.shape_cast %325 : vector<2x1x32xf32> to vector<2x32xf32>
    %327 = vector.shape_cast %324 : vector<2x32xf32> to vector<2x1x32xf32>
    tpu.vector_store %arg22[%c0_85, %c7_86, %c32_87], %327 {strides = array<i32>} : memref<2x8x64xf32, #tpu.memory_space<vmem>>, vector<2x1x32xf32>,
    %328 = vector.extract_strided_slice %290 {offsets = [0, 1, 0], sizes = [2, 1, 128], strides = [1, 1, 1]} : vector<2x8x256xf32> to vector<2x1x128xf32>
    %329 = vector.shape_cast %328 : vector<2x1x128xf32> to vector<2x128xf32>
    %330 = vector.extract_strided_slice %290 {offsets = [0, 6, 128], sizes = [2, 1, 128], strides = [1, 1, 1]} : vector<2x8x256xf32> to vector<2x1x128xf32>
    %331 = vector.shape_cast %330 : vector<2x1x128xf32> to vector<2x128xf32>
    %332 = vector.shape_cast %329 : vector<2x128xf32> to vector<1x2x128xf32>
    %333 = vector.shape_cast %331 : vector<2x128xf32> to vector<1x2x128xf32>
    %334 = tpu.concatenate %332, %333 in 0 : vector<1x2x128xf32>, vector<1x2x128xf32> -> vector<2x2x128xf32>
    "tpu.trace_start"() <{level = 10 : i32, message = "dbh,dhg->dbg"}> : () -> ()
    %cst_88 = arith.constant dense<0.000000e+00> : vector<2x2x128xf32>
    %335 = tpu.matmul %317, %291, %cst_88 {dimension_numbers = #tpu.dot_dimension_numbers<[2], [1], [1], [2], [0, 0, 0, 1, 1, 2], [0], [0]>} : vector<2x2x32xf32>, vector<2x32x128xf32>, vector<2x2x128xf32> -> vector<2x2x128xf32>
    "tpu.trace_stop"() : () -> ()
    %336 = arith.addf %334, %335 : vector<2x2x128xf32>
    %337 = arith.negf %336 : vector<2x2x128xf32>
    %338 = math.exp %337 : vector<2x2x128xf32>
    %cst_89 = arith.constant 1.000000e+00 : f32
    %339 = vector.broadcast %cst_89 : f32 to vector<2x2x128xf32>
    %340 = arith.addf %339, %338 : vector<2x2x128xf32>
    %341 = arith.divf %339, %340 : vector<2x2x128xf32>
    %342 = vector.extract_strided_slice %341 {offsets = [0, 0, 0], sizes = [2, 2, 32], strides = [1, 1, 1]} : vector<2x2x128xf32> to vector<2x2x32xf32>
    %343 = vector.extract_strided_slice %341 {offsets = [0, 0, 32], sizes = [2, 2, 32], strides = [1, 1, 1]} : vector<2x2x128xf32> to vector<2x2x32xf32>
    %344 = vector.extract_strided_slice %341 {offsets = [0, 0, 96], sizes = [2, 2, 32], strides = [1, 1, 1]} : vector<2x2x128xf32> to vector<2x2x32xf32>
    %345 = vector.extract_strided_slice %336 {offsets = [0, 0, 64], sizes = [2, 2, 32], strides = [1, 1, 1]} : vector<2x2x128xf32> to vector<2x2x32xf32>
    %346 = math.tanh %345 : vector<2x2x32xf32>
    %347 = arith.mulf %343, %315 : vector<2x2x32xf32>
    %348 = arith.mulf %342, %346 : vector<2x2x32xf32>
    %349 = arith.addf %347, %348 : vector<2x2x32xf32>
    %350 = math.tanh %349 : vector<2x2x32xf32>
    %351 = arith.mulf %344, %350 : vector<2x2x32xf32>
    %352 = vector.extract_strided_slice %351 {offsets = [0, 0, 0], sizes = [1, 2, 32], strides = [1, 1, 1]} : vector<2x2x32xf32> to vector<1x2x32xf32>
    %353 = vector.shape_cast %352 : vector<1x2x32xf32> to vector<2x32xf32>
    %c0_90 = arith.constant 0 : index
    %c1_91 = arith.constant 1 : index
    %c0_92 = arith.constant 0 : index
    %354 = vector.load %arg22[%c0_90, %c1_91, %c0_92] : memref<2x8x64xf32, #tpu.memory_space<vmem>>, vector<2x1x32xf32>
    %355 = vector.shape_cast %354 : vector<2x1x32xf32> to vector<2x32xf32>
    %356 = vector.shape_cast %353 : vector<2x32xf32> to vector<2x1x32xf32>
    tpu.vector_store %arg22[%c0_90, %c1_91, %c0_92], %356 {strides = array<i32>} : memref<2x8x64xf32, #tpu.memory_space<vmem>>, vector<2x1x32xf32>,
    %357 = vector.extract_strided_slice %351 {offsets = [1, 0, 0], sizes = [1, 2, 32], strides = [1, 1, 1]} : vector<2x2x32xf32> to vector<1x2x32xf32>
    %358 = vector.shape_cast %357 : vector<1x2x32xf32> to vector<2x32xf32>
    %c0_93 = arith.constant 0 : index
    %c6_94 = arith.constant 6 : index
    %c32_95 = arith.constant 32 : index
    %359 = vector.load %arg22[%c0_93, %c6_94, %c32_95] : memref<2x8x64xf32, #tpu.memory_space<vmem>>, vector<2x1x32xf32>
    %360 = vector.shape_cast %359 : vector<2x1x32xf32> to vector<2x32xf32>
    %361 = vector.shape_cast %358 : vector<2x32xf32> to vector<2x1x32xf32>
    tpu.vector_store %arg22[%c0_93, %c6_94, %c32_95], %361 {strides = array<i32>} : memref<2x8x64xf32, #tpu.memory_space<vmem>>, vector<2x1x32xf32>,
    %362 = vector.extract_strided_slice %290 {offsets = [0, 2, 0], sizes = [2, 1, 128], strides = [1, 1, 1]} : vector<2x8x256xf32> to vector<2x1x128xf32>
    %363 = vector.shape_cast %362 : vector<2x1x128xf32> to vector<2x128xf32>
    %364 = vector.extract_strided_slice %290 {offsets = [0, 5, 128], sizes = [2, 1, 128], strides = [1, 1, 1]} : vector<2x8x256xf32> to vector<2x1x128xf32>
    %365 = vector.shape_cast %364 : vector<2x1x128xf32> to vector<2x128xf32>
    %366 = vector.shape_cast %363 : vector<2x128xf32> to vector<1x2x128xf32>
    %367 = vector.shape_cast %365 : vector<2x128xf32> to vector<1x2x128xf32>
    %368 = tpu.concatenate %366, %367 in 0 : vector<1x2x128xf32>, vector<1x2x128xf32> -> vector<2x2x128xf32>
    "tpu.trace_start"() <{level = 10 : i32, message = "dbh,dhg->dbg"}> : () -> ()
    %cst_96 = arith.constant dense<0.000000e+00> : vector<2x2x128xf32>
    %369 = tpu.matmul %351, %291, %cst_96 {dimension_numbers = #tpu.dot_dimension_numbers<[2], [1], [1], [2], [0, 0, 0, 1, 1, 2], [0], [0]>} : vector<2x2x32xf32>, vector<2x32x128xf32>, vector<2x2x128xf32> -> vector<2x2x128xf32>
    "tpu.trace_stop"() : () -> ()
    %370 = arith.addf %368, %369 : vector<2x2x128xf32>
    %371 = arith.negf %370 : vector<2x2x128xf32>
    %372 = math.exp %371 : vector<2x2x128xf32>
    %cst_97 = arith.constant 1.000000e+00 : f32
    %373 = vector.broadcast %cst_97 : f32 to vector<2x2x128xf32>
    %374 = arith.addf %373, %372 : vector<2x2x128xf32>
    %375 = arith.divf %373, %374 : vector<2x2x128xf32>
    %376 = vector.extract_strided_slice %375 {offsets = [0, 0, 0], sizes = [2, 2, 32], strides = [1, 1, 1]} : vector<2x2x128xf32> to vector<2x2x32xf32>
    %377 = vector.extract_strided_slice %375 {offsets = [0, 0, 32], sizes = [2, 2, 32], strides = [1, 1, 1]} : vector<2x2x128xf32> to vector<2x2x32xf32>
    %378 = vector.extract_strided_slice %375 {offsets = [0, 0, 96], sizes = [2, 2, 32], strides = [1, 1, 1]} : vector<2x2x128xf32> to vector<2x2x32xf32>
    %379 = vector.extract_strided_slice %370 {offsets = [0, 0, 64], sizes = [2, 2, 32], strides = [1, 1, 1]} : vector<2x2x128xf32> to vector<2x2x32xf32>
    %380 = math.tanh %379 : vector<2x2x32xf32>
    %381 = arith.mulf %377, %349 : vector<2x2x32xf32>
    %382 = arith.mulf %376, %380 : vector<2x2x32xf32>
    %383 = arith.addf %381, %382 : vector<2x2x32xf32>
    %384 = math.tanh %383 : vector<2x2x32xf32>
    %385 = arith.mulf %378, %384 : vector<2x2x32xf32>
    %386 = vector.extract_strided_slice %385 {offsets = [0, 0, 0], sizes = [1, 2, 32], strides = [1, 1, 1]} : vector<2x2x32xf32> to vector<1x2x32xf32>
    %387 = vector.shape_cast %386 : vector<1x2x32xf32> to vector<2x32xf32>
    %c0_98 = arith.constant 0 : index
    %c2_99 = arith.constant 2 : index
    %c0_100 = arith.constant 0 : index
    %388 = vector.load %arg22[%c0_98, %c2_99, %c0_100] : memref<2x8x64xf32, #tpu.memory_space<vmem>>, vector<2x1x32xf32>
    %389 = vector.shape_cast %388 : vector<2x1x32xf32> to vector<2x32xf32>
    %390 = vector.shape_cast %387 : vector<2x32xf32> to vector<2x1x32xf32>
    tpu.vector_store %arg22[%c0_98, %c2_99, %c0_100], %390 {strides = array<i32>} : memref<2x8x64xf32, #tpu.memory_space<vmem>>, vector<2x1x32xf32>,
    %391 = vector.extract_strided_slice %385 {offsets = [1, 0, 0], sizes = [1, 2, 32], strides = [1, 1, 1]} : vector<2x2x32xf32> to vector<1x2x32xf32>
    %392 = vector.shape_cast %391 : vector<1x2x32xf32> to vector<2x32xf32>
    %c0_101 = arith.constant 0 : index
    %c5_102 = arith.constant 5 : index
    %c32_103 = arith.constant 32 : index
    %393 = vector.load %arg22[%c0_101, %c5_102, %c32_103] : memref<2x8x64xf32, #tpu.memory_space<vmem>>, vector<2x1x32xf32>
    %394 = vector.shape_cast %393 : vector<2x1x32xf32> to vector<2x32xf32>
    %395 = vector.shape_cast %392 : vector<2x32xf32> to vector<2x1x32xf32>
    tpu.vector_store %arg22[%c0_101, %c5_102, %c32_103], %395 {strides = array<i32>} : memref<2x8x64xf32, #tpu.memory_space<vmem>>, vector<2x1x32xf32>,
    %396 = vector.extract_strided_slice %290 {offsets = [0, 3, 0], sizes = [2, 1, 128], strides = [1, 1, 1]} : vector<2x8x256xf32> to vector<2x1x128xf32>
    %397 = vector.shape_cast %396 : vector<2x1x128xf32> to vector<2x128xf32>
    %398 = vector.extract_strided_slice %290 {offsets = [0, 4, 128], sizes = [2, 1, 128], strides = [1, 1, 1]} : vector<2x8x256xf32> to vector<2x1x128xf32>
    %399 = vector.shape_cast %398 : vector<2x1x128xf32> to vector<2x128xf32>
    %400 = vector.shape_cast %397 : vector<2x128xf32> to vector<1x2x128xf32>
    %401 = vector.shape_cast %399 : vector<2x128xf32> to vector<1x2x128xf32>
    %402 = tpu.concatenate %400, %401 in 0 : vector<1x2x128xf32>, vector<1x2x128xf32> -> vector<2x2x128xf32>
    "tpu.trace_start"() <{level = 10 : i32, message = "dbh,dhg->dbg"}> : () -> ()
    %cst_104 = arith.constant dense<0.000000e+00> : vector<2x2x128xf32>
    %403 = tpu.matmul %385, %291, %cst_104 {dimension_numbers = #tpu.dot_dimension_numbers<[2], [1], [1], [2], [0, 0, 0, 1, 1, 2], [0], [0]>} : vector<2x2x32xf32>, vector<2x32x128xf32>, vector<2x2x128xf32> -> vector<2x2x128xf32>
    "tpu.trace_stop"() : () -> ()
    %404 = arith.addf %402, %403 : vector<2x2x128xf32>
    %405 = arith.negf %404 : vector<2x2x128xf32>
    %406 = math.exp %405 : vector<2x2x128xf32>
    %cst_105 = arith.constant 1.000000e+00 : f32
    %407 = vector.broadcast %cst_105 : f32 to vector<2x2x128xf32>
    %408 = arith.addf %407, %406 : vector<2x2x128xf32>
    %409 = arith.divf %407, %408 : vector<2x2x128xf32>
    %410 = vector.extract_strided_slice %409 {offsets = [0, 0, 0], sizes = [2, 2, 32], strides = [1, 1, 1]} : vector<2x2x128xf32> to vector<2x2x32xf32>
    %411 = vector.extract_strided_slice %409 {offsets = [0, 0, 32], sizes = [2, 2, 32], strides = [1, 1, 1]} : vector<2x2x128xf32> to vector<2x2x32xf32>
    %412 = vector.extract_strided_slice %409 {offsets = [0, 0, 96], sizes = [2, 2, 32], strides = [1, 1, 1]} : vector<2x2x128xf32> to vector<2x2x32xf32>
    %413 = vector.extract_strided_slice %404 {offsets = [0, 0, 64], sizes = [2, 2, 32], strides = [1, 1, 1]} : vector<2x2x128xf32> to vector<2x2x32xf32>
    %414 = math.tanh %413 : vector<2x2x32xf32>
    %415 = arith.mulf %411, %383 : vector<2x2x32xf32>
    %416 = arith.mulf %410, %414 : vector<2x2x32xf32>
    %417 = arith.addf %415, %416 : vector<2x2x32xf32>
    %418 = math.tanh %417 : vector<2x2x32xf32>
    %419 = arith.mulf %412, %418 : vector<2x2x32xf32>
    %420 = vector.extract_strided_slice %419 {offsets = [0, 0, 0], sizes = [1, 2, 32], strides = [1, 1, 1]} : vector<2x2x32xf32> to vector<1x2x32xf32>
    %421 = vector.shape_cast %420 : vector<1x2x32xf32> to vector<2x32xf32>
    %c0_106 = arith.constant 0 : index
    %c3_107 = arith.constant 3 : index
    %c0_108 = arith.constant 0 : index
    %422 = vector.load %arg22[%c0_106, %c3_107, %c0_108] : memref<2x8x64xf32, #tpu.memory_space<vmem>>, vector<2x1x32xf32>
    %423 = vector.shape_cast %422 : vector<2x1x32xf32> to vector<2x32xf32>
    %424 = vector.shape_cast %421 : vector<2x32xf32> to vector<2x1x32xf32>
    tpu.vector_store %arg22[%c0_106, %c3_107, %c0_108], %424 {strides = array<i32>} : memref<2x8x64xf32, #tpu.memory_space<vmem>>, vector<2x1x32xf32>,
    %425 = vector.extract_strided_slice %419 {offsets = [1, 0, 0], sizes = [1, 2, 32], strides = [1, 1, 1]} : vector<2x2x32xf32> to vector<1x2x32xf32>
    %426 = vector.shape_cast %425 : vector<1x2x32xf32> to vector<2x32xf32>
    %c0_109 = arith.constant 0 : index
    %c4_110 = arith.constant 4 : index
    %c32_111 = arith.constant 32 : index
    %427 = vector.load %arg22[%c0_109, %c4_110, %c32_111] : memref<2x8x64xf32, #tpu.memory_space<vmem>>, vector<2x1x32xf32>
    %428 = vector.shape_cast %427 : vector<2x1x32xf32> to vector<2x32xf32>
    %429 = vector.shape_cast %426 : vector<2x32xf32> to vector<2x1x32xf32>
    tpu.vector_store %arg22[%c0_109, %c4_110, %c32_111], %429 {strides = array<i32>} : memref<2x8x64xf32, #tpu.memory_space<vmem>>, vector<2x1x32xf32>,
    %430 = vector.extract_strided_slice %290 {offsets = [0, 4, 0], sizes = [2, 1, 128], strides = [1, 1, 1]} : vector<2x8x256xf32> to vector<2x1x128xf32>
    %431 = vector.shape_cast %430 : vector<2x1x128xf32> to vector<2x128xf32>
    %432 = vector.extract_strided_slice %290 {offsets = [0, 3, 128], sizes = [2, 1, 128], strides = [1, 1, 1]} : vector<2x8x256xf32> to vector<2x1x128xf32>
    %433 = vector.shape_cast %432 : vector<2x1x128xf32> to vector<2x128xf32>
    %434 = vector.shape_cast %431 : vector<2x128xf32> to vector<1x2x128xf32>
    %435 = vector.shape_cast %433 : vector<2x128xf32> to vector<1x2x128xf32>
    %436 = tpu.concatenate %434, %435 in 0 : vector<1x2x128xf32>, vector<1x2x128xf32> -> vector<2x2x128xf32>
    "tpu.trace_start"() <{level = 10 : i32, message = "dbh,dhg->dbg"}> : () -> ()
    %cst_112 = arith.constant dense<0.000000e+00> : vector<2x2x128xf32>
    %437 = tpu.matmul %419, %291, %cst_112 {dimension_numbers = #tpu.dot_dimension_numbers<[2], [1], [1], [2], [0, 0, 0, 1, 1, 2], [0], [0]>} : vector<2x2x32xf32>, vector<2x32x128xf32>, vector<2x2x128xf32> -> vector<2x2x128xf32>
    "tpu.trace_stop"() : () -> ()
    %438 = arith.addf %436, %437 : vector<2x2x128xf32>
    %439 = arith.negf %438 : vector<2x2x128xf32>
    %440 = math.exp %439 : vector<2x2x128xf32>
    %cst_113 = arith.constant 1.000000e+00 : f32
    %441 = vector.broadcast %cst_113 : f32 to vector<2x2x128xf32>
    %442 = arith.addf %441, %440 : vector<2x2x128xf32>
    %443 = arith.divf %441, %442 : vector<2x2x128xf32>
    %444 = vector.extract_strided_slice %443 {offsets = [0, 0, 0], sizes = [2, 2, 32], strides = [1, 1, 1]} : vector<2x2x128xf32> to vector<2x2x32xf32>
    %445 = vector.extract_strided_slice %443 {offsets = [0, 0, 32], sizes = [2, 2, 32], strides = [1, 1, 1]} : vector<2x2x128xf32> to vector<2x2x32xf32>
    %446 = vector.extract_strided_slice %443 {offsets = [0, 0, 96], sizes = [2, 2, 32], strides = [1, 1, 1]} : vector<2x2x128xf32> to vector<2x2x32xf32>
    %447 = vector.extract_strided_slice %438 {offsets = [0, 0, 64], sizes = [2, 2, 32], strides = [1, 1, 1]} : vector<2x2x128xf32> to vector<2x2x32xf32>
    %448 = math.tanh %447 : vector<2x2x32xf32>
    %449 = arith.mulf %445, %417 : vector<2x2x32xf32>
    %450 = arith.mulf %444, %448 : vector<2x2x32xf32>
    %451 = arith.addf %449, %450 : vector<2x2x32xf32>
    %452 = math.tanh %451 : vector<2x2x32xf32>
    %453 = arith.mulf %446, %452 : vector<2x2x32xf32>
    %454 = vector.extract_strided_slice %453 {offsets = [0, 0, 0], sizes = [1, 2, 32], strides = [1, 1, 1]} : vector<2x2x32xf32> to vector<1x2x32xf32>
    %455 = vector.shape_cast %454 : vector<1x2x32xf32> to vector<2x32xf32>
    %c0_114 = arith.constant 0 : index
    %c4_115 = arith.constant 4 : index
    %c0_116 = arith.constant 0 : index
    %456 = vector.load %arg22[%c0_114, %c4_115, %c0_116] : memref<2x8x64xf32, #tpu.memory_space<vmem>>, vector<2x1x32xf32>
    %457 = vector.shape_cast %456 : vector<2x1x32xf32> to vector<2x32xf32>
    %458 = vector.shape_cast %455 : vector<2x32xf32> to vector<2x1x32xf32>
    tpu.vector_store %arg22[%c0_114, %c4_115, %c0_116], %458 {strides = array<i32>} : memref<2x8x64xf32, #tpu.memory_space<vmem>>, vector<2x1x32xf32>,
    %459 = vector.extract_strided_slice %453 {offsets = [1, 0, 0], sizes = [1, 2, 32], strides = [1, 1, 1]} : vector<2x2x32xf32> to vector<1x2x32xf32>
    %460 = vector.shape_cast %459 : vector<1x2x32xf32> to vector<2x32xf32>
    %c0_117 = arith.constant 0 : index
    %c3_118 = arith.constant 3 : index
    %c32_119 = arith.constant 32 : index
    %461 = vector.load %arg22[%c0_117, %c3_118, %c32_119] : memref<2x8x64xf32, #tpu.memory_space<vmem>>, vector<2x1x32xf32>
    %462 = vector.shape_cast %461 : vector<2x1x32xf32> to vector<2x32xf32>
    %463 = vector.shape_cast %460 : vector<2x32xf32> to vector<2x1x32xf32>
    tpu.vector_store %arg22[%c0_117, %c3_118, %c32_119], %463 {strides = array<i32>} : memref<2x8x64xf32, #tpu.memory_space<vmem>>, vector<2x1x32xf32>,
    %464 = vector.extract_strided_slice %290 {offsets = [0, 5, 0], sizes = [2, 1, 128], strides = [1, 1, 1]} : vector<2x8x256xf32> to vector<2x1x128xf32>
    %465 = vector.shape_cast %464 : vector<2x1x128xf32> to vector<2x128xf32>
    %466 = vector.extract_strided_slice %290 {offsets = [0, 2, 128], sizes = [2, 1, 128], strides = [1, 1, 1]} : vector<2x8x256xf32> to vector<2x1x128xf32>
    %467 = vector.shape_cast %466 : vector<2x1x128xf32> to vector<2x128xf32>
    %468 = vector.shape_cast %465 : vector<2x128xf32> to vector<1x2x128xf32>
    %469 = vector.shape_cast %467 : vector<2x128xf32> to vector<1x2x128xf32>
    %470 = tpu.concatenate %468, %469 in 0 : vector<1x2x128xf32>, vector<1x2x128xf32> -> vector<2x2x128xf32>
    "tpu.trace_start"() <{level = 10 : i32, message = "dbh,dhg->dbg"}> : () -> ()
    %cst_120 = arith.constant dense<0.000000e+00> : vector<2x2x128xf32>
    %471 = tpu.matmul %453, %291, %cst_120 {dimension_numbers = #tpu.dot_dimension_numbers<[2], [1], [1], [2], [0, 0, 0, 1, 1, 2], [0], [0]>} : vector<2x2x32xf32>, vector<2x32x128xf32>, vector<2x2x128xf32> -> vector<2x2x128xf32>
    "tpu.trace_stop"() : () -> ()
    %472 = arith.addf %470, %471 : vector<2x2x128xf32>
    %473 = arith.negf %472 : vector<2x2x128xf32>
    %474 = math.exp %473 : vector<2x2x128xf32>
    %cst_121 = arith.constant 1.000000e+00 : f32
    %475 = vector.broadcast %cst_121 : f32 to vector<2x2x128xf32>
    %476 = arith.addf %475, %474 : vector<2x2x128xf32>
    %477 = arith.divf %475, %476 : vector<2x2x128xf32>
    %478 = vector.extract_strided_slice %477 {offsets = [0, 0, 0], sizes = [2, 2, 32], strides = [1, 1, 1]} : vector<2x2x128xf32> to vector<2x2x32xf32>
    %479 = vector.extract_strided_slice %477 {offsets = [0, 0, 32], sizes = [2, 2, 32], strides = [1, 1, 1]} : vector<2x2x128xf32> to vector<2x2x32xf32>
    %480 = vector.extract_strided_slice %477 {offsets = [0, 0, 96], sizes = [2, 2, 32], strides = [1, 1, 1]} : vector<2x2x128xf32> to vector<2x2x32xf32>
    %481 = vector.extract_strided_slice %472 {offsets = [0, 0, 64], sizes = [2, 2, 32], strides = [1, 1, 1]} : vector<2x2x128xf32> to vector<2x2x32xf32>
    %482 = math.tanh %481 : vector<2x2x32xf32>
    %483 = arith.mulf %479, %451 : vector<2x2x32xf32>
    %484 = arith.mulf %478, %482 : vector<2x2x32xf32>
    %485 = arith.addf %483, %484 : vector<2x2x32xf32>
    %486 = math.tanh %485 : vector<2x2x32xf32>
    %487 = arith.mulf %480, %486 : vector<2x2x32xf32>
    %488 = vector.extract_strided_slice %487 {offsets = [0, 0, 0], sizes = [1, 2, 32], strides = [1, 1, 1]} : vector<2x2x32xf32> to vector<1x2x32xf32>
    %489 = vector.shape_cast %488 : vector<1x2x32xf32> to vector<2x32xf32>
    %c0_122 = arith.constant 0 : index
    %c5_123 = arith.constant 5 : index
    %c0_124 = arith.constant 0 : index
    %490 = vector.load %arg22[%c0_122, %c5_123, %c0_124] : memref<2x8x64xf32, #tpu.memory_space<vmem>>, vector<2x1x32xf32>
    %491 = vector.shape_cast %490 : vector<2x1x32xf32> to vector<2x32xf32>
    %492 = vector.shape_cast %489 : vector<2x32xf32> to vector<2x1x32xf32>
    tpu.vector_store %arg22[%c0_122, %c5_123, %c0_124], %492 {strides = array<i32>} : memref<2x8x64xf32, #tpu.memory_space<vmem>>, vector<2x1x32xf32>,
    %493 = vector.extract_strided_slice %487 {offsets = [1, 0, 0], sizes = [1, 2, 32], strides = [1, 1, 1]} : vector<2x2x32xf32> to vector<1x2x32xf32>
    %494 = vector.shape_cast %493 : vector<1x2x32xf32> to vector<2x32xf32>
    %c0_125 = arith.constant 0 : index
    %c2_126 = arith.constant 2 : index
    %c32_127 = arith.constant 32 : index
    %495 = vector.load %arg22[%c0_125, %c2_126, %c32_127] : memref<2x8x64xf32, #tpu.memory_space<vmem>>, vector<2x1x32xf32>
    %496 = vector.shape_cast %495 : vector<2x1x32xf32> to vector<2x32xf32>
    %497 = vector.shape_cast %494 : vector<2x32xf32> to vector<2x1x32xf32>
    tpu.vector_store %arg22[%c0_125, %c2_126, %c32_127], %497 {strides = array<i32>} : memref<2x8x64xf32, #tpu.memory_space<vmem>>, vector<2x1x32xf32>,
    %498 = vector.extract_strided_slice %290 {offsets = [0, 6, 0], sizes = [2, 1, 128], strides = [1, 1, 1]} : vector<2x8x256xf32> to vector<2x1x128xf32>
    %499 = vector.shape_cast %498 : vector<2x1x128xf32> to vector<2x128xf32>
    %500 = vector.extract_strided_slice %290 {offsets = [0, 1, 128], sizes = [2, 1, 128], strides = [1, 1, 1]} : vector<2x8x256xf32> to vector<2x1x128xf32>
    %501 = vector.shape_cast %500 : vector<2x1x128xf32> to vector<2x128xf32>
    %502 = vector.shape_cast %499 : vector<2x128xf32> to vector<1x2x128xf32>
    %503 = vector.shape_cast %501 : vector<2x128xf32> to vector<1x2x128xf32>
    %504 = tpu.concatenate %502, %503 in 0 : vector<1x2x128xf32>, vector<1x2x128xf32> -> vector<2x2x128xf32>
    "tpu.trace_start"() <{level = 10 : i32, message = "dbh,dhg->dbg"}> : () -> ()
    %cst_128 = arith.constant dense<0.000000e+00> : vector<2x2x128xf32>
    %505 = tpu.matmul %487, %291, %cst_128 {dimension_numbers = #tpu.dot_dimension_numbers<[2], [1], [1], [2], [0, 0, 0, 1, 1, 2], [0], [0]>} : vector<2x2x32xf32>, vector<2x32x128xf32>, vector<2x2x128xf32> -> vector<2x2x128xf32>
    "tpu.trace_stop"() : () -> ()
    %506 = arith.addf %504, %505 : vector<2x2x128xf32>
    %507 = arith.negf %506 : vector<2x2x128xf32>
    %508 = math.exp %507 : vector<2x2x128xf32>
    %cst_129 = arith.constant 1.000000e+00 : f32
    %509 = vector.broadcast %cst_129 : f32 to vector<2x2x128xf32>
    %510 = arith.addf %509, %508 : vector<2x2x128xf32>
    %511 = arith.divf %509, %510 : vector<2x2x128xf32>
    %512 = vector.extract_strided_slice %511 {offsets = [0, 0, 0], sizes = [2, 2, 32], strides = [1, 1, 1]} : vector<2x2x128xf32> to vector<2x2x32xf32>
    %513 = vector.extract_strided_slice %511 {offsets = [0, 0, 32], sizes = [2, 2, 32], strides = [1, 1, 1]} : vector<2x2x128xf32> to vector<2x2x32xf32>
    %514 = vector.extract_strided_slice %511 {offsets = [0, 0, 96], sizes = [2, 2, 32], strides = [1, 1, 1]} : vector<2x2x128xf32> to vector<2x2x32xf32>
    %515 = vector.extract_strided_slice %506 {offsets = [0, 0, 64], sizes = [2, 2, 32], strides = [1, 1, 1]} : vector<2x2x128xf32> to vector<2x2x32xf32>
    %516 = math.tanh %515 : vector<2x2x32xf32>
    %517 = arith.mulf %513, %485 : vector<2x2x32xf32>
    %518 = arith.mulf %512, %516 : vector<2x2x32xf32>
    %519 = arith.addf %517, %518 : vector<2x2x32xf32>
    %520 = math.tanh %519 : vector<2x2x32xf32>
    %521 = arith.mulf %514, %520 : vector<2x2x32xf32>
    %522 = vector.extract_strided_slice %521 {offsets = [0, 0, 0], sizes = [1, 2, 32], strides = [1, 1, 1]} : vector<2x2x32xf32> to vector<1x2x32xf32>
    %523 = vector.shape_cast %522 : vector<1x2x32xf32> to vector<2x32xf32>
    %c0_130 = arith.constant 0 : index
    %c6_131 = arith.constant 6 : index
    %c0_132 = arith.constant 0 : index
    %524 = vector.load %arg22[%c0_130, %c6_131, %c0_132] : memref<2x8x64xf32, #tpu.memory_space<vmem>>, vector<2x1x32xf32>
    %525 = vector.shape_cast %524 : vector<2x1x32xf32> to vector<2x32xf32>
    %526 = vector.shape_cast %523 : vector<2x32xf32> to vector<2x1x32xf32>
    tpu.vector_store %arg22[%c0_130, %c6_131, %c0_132], %526 {strides = array<i32>} : memref<2x8x64xf32, #tpu.memory_space<vmem>>, vector<2x1x32xf32>,
    %527 = vector.extract_strided_slice %521 {offsets = [1, 0, 0], sizes = [1, 2, 32], strides = [1, 1, 1]} : vector<2x2x32xf32> to vector<1x2x32xf32>
    %528 = vector.shape_cast %527 : vector<1x2x32xf32> to vector<2x32xf32>
    %c0_133 = arith.constant 0 : index
    %c1_134 = arith.constant 1 : index
    %c32_135 = arith.constant 32 : index
    %529 = vector.load %arg22[%c0_133, %c1_134, %c32_135] : memref<2x8x64xf32, #tpu.memory_space<vmem>>, vector<2x1x32xf32>
    %530 = vector.shape_cast %529 : vector<2x1x32xf32> to vector<2x32xf32>
    %531 = vector.shape_cast %528 : vector<2x32xf32> to vector<2x1x32xf32>
    tpu.vector_store %arg22[%c0_133, %c1_134, %c32_135], %531 {strides = array<i32>} : memref<2x8x64xf32, #tpu.memory_space<vmem>>, vector<2x1x32xf32>,
    %532 = vector.extract_strided_slice %290 {offsets = [0, 7, 0], sizes = [2, 1, 128], strides = [1, 1, 1]} : vector<2x8x256xf32> to vector<2x1x128xf32>
    %533 = vector.shape_cast %532 : vector<2x1x128xf32> to vector<2x128xf32>
    %534 = vector.extract_strided_slice %290 {offsets = [0, 0, 128], sizes = [2, 1, 128], strides = [1, 1, 1]} : vector<2x8x256xf32> to vector<2x1x128xf32>
    %535 = vector.shape_cast %534 : vector<2x1x128xf32> to vector<2x128xf32>
    %536 = vector.shape_cast %533 : vector<2x128xf32> to vector<1x2x128xf32>
    %537 = vector.shape_cast %535 : vector<2x128xf32> to vector<1x2x128xf32>
    %538 = tpu.concatenate %536, %537 in 0 : vector<1x2x128xf32>, vector<1x2x128xf32> -> vector<2x2x128xf32>
    "tpu.trace_start"() <{level = 10 : i32, message = "dbh,dhg->dbg"}> : () -> ()
    %cst_136 = arith.constant dense<0.000000e+00> : vector<2x2x128xf32>
    %539 = tpu.matmul %521, %291, %cst_136 {dimension_numbers = #tpu.dot_dimension_numbers<[2], [1], [1], [2], [0, 0, 0, 1, 1, 2], [0], [0]>} : vector<2x2x32xf32>, vector<2x32x128xf32>, vector<2x2x128xf32> -> vector<2x2x128xf32>
    "tpu.trace_stop"() : () -> ()
    %540 = arith.addf %538, %539 : vector<2x2x128xf32>
    %541 = arith.negf %540 : vector<2x2x128xf32>
    %542 = math.exp %541 : vector<2x2x128xf32>
    %cst_137 = arith.constant 1.000000e+00 : f32
    %543 = vector.broadcast %cst_137 : f32 to vector<2x2x128xf32>
    %544 = arith.addf %543, %542 : vector<2x2x128xf32>
    %545 = arith.divf %543, %544 : vector<2x2x128xf32>
    %546 = vector.extract_strided_slice %545 {offsets = [0, 0, 0], sizes = [2, 2, 32], strides = [1, 1, 1]} : vector<2x2x128xf32> to vector<2x2x32xf32>
    %547 = vector.extract_strided_slice %545 {offsets = [0, 0, 32], sizes = [2, 2, 32], strides = [1, 1, 1]} : vector<2x2x128xf32> to vector<2x2x32xf32>
    %548 = vector.extract_strided_slice %545 {offsets = [0, 0, 96], sizes = [2, 2, 32], strides = [1, 1, 1]} : vector<2x2x128xf32> to vector<2x2x32xf32>
    %549 = vector.extract_strided_slice %540 {offsets = [0, 0, 64], sizes = [2, 2, 32], strides = [1, 1, 1]} : vector<2x2x128xf32> to vector<2x2x32xf32>
    %550 = math.tanh %549 : vector<2x2x32xf32>
    %551 = arith.mulf %547, %519 : vector<2x2x32xf32>
    %552 = arith.mulf %546, %550 : vector<2x2x32xf32>
    %553 = arith.addf %551, %552 : vector<2x2x32xf32>
    %554 = math.tanh %553 : vector<2x2x32xf32>
    %555 = arith.mulf %548, %554 : vector<2x2x32xf32>
    %556 = vector.extract_strided_slice %555 {offsets = [0, 0, 0], sizes = [1, 2, 32], strides = [1, 1, 1]} : vector<2x2x32xf32> to vector<1x2x32xf32>
    %557 = vector.shape_cast %556 : vector<1x2x32xf32> to vector<2x32xf32>
    %c0_138 = arith.constant 0 : index
    %c7_139 = arith.constant 7 : index
    %c0_140 = arith.constant 0 : index
    %558 = vector.load %arg22[%c0_138, %c7_139, %c0_140] : memref<2x8x64xf32, #tpu.memory_space<vmem>>, vector<2x1x32xf32>
    %559 = vector.shape_cast %558 : vector<2x1x32xf32> to vector<2x32xf32>
    %560 = vector.shape_cast %557 : vector<2x32xf32> to vector<2x1x32xf32>
    tpu.vector_store %arg22[%c0_138, %c7_139, %c0_140], %560 {strides = array<i32>} : memref<2x8x64xf32, #tpu.memory_space<vmem>>, vector<2x1x32xf32>,
    %561 = vector.extract_strided_slice %555 {offsets = [1, 0, 0], sizes = [1, 2, 32], strides = [1, 1, 1]} : vector<2x2x32xf32> to vector<1x2x32xf32>
    %562 = vector.shape_cast %561 : vector<1x2x32xf32> to vector<2x32xf32>
    %c0_141 = arith.constant 0 : index
    %c0_142 = arith.constant 0 : index
    %c32_143 = arith.constant 32 : index
    %563 = vector.load %arg22[%c0_141, %c0_142, %c32_143] : memref<2x8x64xf32, #tpu.memory_space<vmem>>, vector<2x1x32xf32>
    %564 = vector.shape_cast %563 : vector<2x1x32xf32> to vector<2x32xf32>
    %565 = vector.shape_cast %562 : vector<2x32xf32> to vector<2x1x32xf32>
    tpu.vector_store %arg22[%c0_141, %c0_142, %c32_143], %565 {strides = array<i32>} : memref<2x8x64xf32, #tpu.memory_space<vmem>>, vector<2x1x32xf32>,
    %c0_144 = arith.constant 0 : index
    %c0_145 = arith.constant 0 : index
    %c0_146 = arith.constant 0 : index
    %566 = vector.load %arg22[%c0_144, %c0_145, %c0_146] : memref<2x8x64xf32, #tpu.memory_space<vmem>>, vector<2x8x64xf32>
    %cst_147 = arith.constant 0.000000e+00 : f32
    %567 = vector.broadcast %cst_147 : f32 to vector<2x2x64xf32>
    %568 = tpu.concatenate %567, %566, %567 in 1 : vector<2x2x64xf32>, vector<2x8x64xf32>, vector<2x2x64xf32> -> vector<2x12x64xf32>
    %c0_148 = arith.constant 0 : index
    %c0_149 = arith.constant 0 : index
    %569 = vector.load %arg8[%c0_148, %c0_149] : memref<1x32xf32, #tpu.memory_space<vmem>>, vector<1x32xf32>
    %570 = vector.extract_strided_slice %568 {offsets = [0, 0, 0], sizes = [2, 8, 64], strides = [1, 1, 1]} : vector<2x12x64xf32> to vector<2x8x64xf32>
    %571 = vector.shape_cast %570 : vector<2x8x64xf32> to vector<16x64xf32>
    %c0_150 = arith.constant 0 : index
    %c0_151 = arith.constant 0 : index
    %c0_152 = arith.constant 0 : index
    %572 = vector.load %arg7[%c0_150, %c0_151, %c0_152] : memref<5x64x32xf32, #tpu.memory_space<vmem>>, vector<1x64x32xf32>
    %573 = vector.shape_cast %572 : vector<1x64x32xf32> to vector<64x32xf32>
    %cst_153 = arith.constant dense<0.000000e+00> : vector<16x32xf32>
    %574 = tpu.matmul %571, %573, %cst_153 {dimension_numbers = #tpu.dot_dimension_numbers<[1], [0], [0], [1], [0, 0, 1, 1], [], []>} : vector<16x64xf32>, vector<64x32xf32>, vector<16x32xf32> -> vector<16x32xf32>
    %575 = vector.broadcast %569 : vector<1x32xf32> to vector<16x32xf32>
    %576 = arith.addf %575, %574 : vector<16x32xf32>
    %577 = vector.extract_strided_slice %568 {offsets = [0, 1, 0], sizes = [2, 8, 64], strides = [1, 1, 1]} : vector<2x12x64xf32> to vector<2x8x64xf32>
    %578 = vector.shape_cast %577 : vector<2x8x64xf32> to vector<16x64xf32>
    %c1_154 = arith.constant 1 : index
    %c0_155 = arith.constant 0 : index
    %c0_156 = arith.constant 0 : index
    %579 = vector.load %arg7[%c1_154, %c0_155, %c0_156] : memref<5x64x32xf32, #tpu.memory_space<vmem>>, vector<1x64x32xf32>
    %580 = vector.shape_cast %579 : vector<1x64x32xf32> to vector<64x32xf32>
    %cst_157 = arith.constant dense<0.000000e+00> : vector<16x32xf32>
    %581 = tpu.matmul %578, %580, %cst_157 {dimension_numbers = #tpu.dot_dimension_numbers<[1], [0], [0], [1], [0, 0, 1, 1], [], []>} : vector<16x64xf32>, vector<64x32xf32>, vector<16x32xf32> -> vector<16x32xf32>
    %582 = arith.addf %576, %581 : vector<16x32xf32>
    %583 = vector.extract_strided_slice %568 {offsets = [0, 2, 0], sizes = [2, 8, 64], strides = [1, 1, 1]} : vector<2x12x64xf32> to vector<2x8x64xf32>
    %584 = vector.shape_cast %583 : vector<2x8x64xf32> to vector<16x64xf32>
    %c2_158 = arith.constant 2 : index
    %c0_159 = arith.constant 0 : index
    %c0_160 = arith.constant 0 : index
    %585 = vector.load %arg7[%c2_158, %c0_159, %c0_160] : memref<5x64x32xf32, #tpu.memory_space<vmem>>, vector<1x64x32xf32>
    %586 = vector.shape_cast %585 : vector<1x64x32xf32> to vector<64x32xf32>
    %cst_161 = arith.constant dense<0.000000e+00> : vector<16x32xf32>
    %587 = tpu.matmul %584, %586, %cst_161 {dimension_numbers = #tpu.dot_dimension_numbers<[1], [0], [0], [1], [0, 0, 1, 1], [], []>} : vector<16x64xf32>, vector<64x32xf32>, vector<16x32xf32> -> vector<16x32xf32>
    %588 = arith.addf %582, %587 : vector<16x32xf32>
    %589 = vector.extract_strided_slice %568 {offsets = [0, 3, 0], sizes = [2, 8, 64], strides = [1, 1, 1]} : vector<2x12x64xf32> to vector<2x8x64xf32>
    %590 = vector.shape_cast %589 : vector<2x8x64xf32> to vector<16x64xf32>
    %c3_162 = arith.constant 3 : index
    %c0_163 = arith.constant 0 : index
    %c0_164 = arith.constant 0 : index
    %591 = vector.load %arg7[%c3_162, %c0_163, %c0_164] : memref<5x64x32xf32, #tpu.memory_space<vmem>>, vector<1x64x32xf32>
    %592 = vector.shape_cast %591 : vector<1x64x32xf32> to vector<64x32xf32>
    %cst_165 = arith.constant dense<0.000000e+00> : vector<16x32xf32>
    %593 = tpu.matmul %590, %592, %cst_165 {dimension_numbers = #tpu.dot_dimension_numbers<[1], [0], [0], [1], [0, 0, 1, 1], [], []>} : vector<16x64xf32>, vector<64x32xf32>, vector<16x32xf32> -> vector<16x32xf32>
    %594 = arith.addf %588, %593 : vector<16x32xf32>
    %595 = vector.extract_strided_slice %568 {offsets = [0, 4, 0], sizes = [2, 8, 64], strides = [1, 1, 1]} : vector<2x12x64xf32> to vector<2x8x64xf32>
    %596 = vector.shape_cast %595 : vector<2x8x64xf32> to vector<16x64xf32>
    %c4_166 = arith.constant 4 : index
    %c0_167 = arith.constant 0 : index
    %c0_168 = arith.constant 0 : index
    %597 = vector.load %arg7[%c4_166, %c0_167, %c0_168] : memref<5x64x32xf32, #tpu.memory_space<vmem>>, vector<1x64x32xf32>
    %598 = vector.shape_cast %597 : vector<1x64x32xf32> to vector<64x32xf32>
    %cst_169 = arith.constant dense<0.000000e+00> : vector<16x32xf32>
    %599 = tpu.matmul %596, %598, %cst_169 {dimension_numbers = #tpu.dot_dimension_numbers<[1], [0], [0], [1], [0, 0, 1, 1], [], []>} : vector<16x64xf32>, vector<64x32xf32>, vector<16x32xf32> -> vector<16x32xf32>
    %600 = arith.addf %594, %599 : vector<16x32xf32>
    %cst_170 = arith.constant 0.000000e+00 : f32
    %601 = vector.broadcast %cst_170 : f32 to vector<16x32xf32>
    %602 = arith.maximumf %600, %601 : vector<16x32xf32>
    %c0_171 = arith.constant 0 : index
    %c0_172 = arith.constant 0 : index
    %603 = vector.load %arg9[%c0_171, %c0_172] : memref<1x32xf32, #tpu.memory_space<vmem>>, vector<1x32xf32>
    %604 = vector.broadcast %603 : vector<1x32xf32> to vector<16x32xf32>
    %605 = arith.mulf %602, %604 : vector<16x32xf32>
    %c0_173 = arith.constant 0 : index
    %c0_174 = arith.constant 0 : index
    %606 = vector.load %arg10[%c0_173, %c0_174] : memref<1x32xf32, #tpu.memory_space<vmem>>, vector<1x32xf32>
    %607 = vector.broadcast %606 : vector<1x32xf32> to vector<16x32xf32>
    %608 = arith.addf %605, %607 : vector<16x32xf32>
    %609 = vector.shape_cast %608 : vector<16x32xf32> to vector<2x8x32xf32>
    %cst_175 = arith.constant 0.000000e+00 : f32
    %610 = vector.broadcast %cst_175 : f32 to vector<2x1x32xf32>
    %611 = tpu.concatenate %610, %609, %610 in 1 : vector<2x1x32xf32>, vector<2x8x32xf32>, vector<2x1x32xf32> -> vector<2x10x32xf32>
    %c0_176 = arith.constant 0 : index
    %c0_177 = arith.constant 0 : index
    %612 = vector.load %arg12[%c0_176, %c0_177] : memref<1x16xf32, #tpu.memory_space<vmem>>, vector<1x16xf32>
    %613 = vector.extract_strided_slice %611 {offsets = [0, 0, 0], sizes = [2, 8, 32], strides = [1, 1, 1]} : vector<2x10x32xf32> to vector<2x8x32xf32>
    %614 = vector.shape_cast %613 : vector<2x8x32xf32> to vector<16x32xf32>
    %c0_178 = arith.constant 0 : index
    %c0_179 = arith.constant 0 : index
    %c0_180 = arith.constant 0 : index
    %615 = vector.load %arg11[%c0_178, %c0_179, %c0_180] : memref<3x32x16xf32, #tpu.memory_space<vmem>>, vector<1x32x16xf32>
    %616 = vector.shape_cast %615 : vector<1x32x16xf32> to vector<32x16xf32>
    %cst_181 = arith.constant dense<0.000000e+00> : vector<16x16xf32>
    %617 = tpu.matmul %614, %616, %cst_181 {dimension_numbers = #tpu.dot_dimension_numbers<[1], [0], [0], [1], [0, 0, 1, 1], [], []>} : vector<16x32xf32>, vector<32x16xf32>, vector<16x16xf32> -> vector<16x16xf32>
    %618 = vector.broadcast %612 : vector<1x16xf32> to vector<16x16xf32>
    %619 = arith.addf %618, %617 : vector<16x16xf32>
    %620 = vector.extract_strided_slice %611 {offsets = [0, 1, 0], sizes = [2, 8, 32], strides = [1, 1, 1]} : vector<2x10x32xf32> to vector<2x8x32xf32>
    %621 = vector.shape_cast %620 : vector<2x8x32xf32> to vector<16x32xf32>
    %c1_182 = arith.constant 1 : index
    %c0_183 = arith.constant 0 : index
    %c0_184 = arith.constant 0 : index
    %622 = vector.load %arg11[%c1_182, %c0_183, %c0_184] : memref<3x32x16xf32, #tpu.memory_space<vmem>>, vector<1x32x16xf32>
    %623 = vector.shape_cast %622 : vector<1x32x16xf32> to vector<32x16xf32>
    %cst_185 = arith.constant dense<0.000000e+00> : vector<16x16xf32>
    %624 = tpu.matmul %621, %623, %cst_185 {dimension_numbers = #tpu.dot_dimension_numbers<[1], [0], [0], [1], [0, 0, 1, 1], [], []>} : vector<16x32xf32>, vector<32x16xf32>, vector<16x16xf32> -> vector<16x16xf32>
    %625 = arith.addf %619, %624 : vector<16x16xf32>
    %626 = vector.extract_strided_slice %611 {offsets = [0, 2, 0], sizes = [2, 8, 32], strides = [1, 1, 1]} : vector<2x10x32xf32> to vector<2x8x32xf32>
    %627 = vector.shape_cast %626 : vector<2x8x32xf32> to vector<16x32xf32>
    %c2_186 = arith.constant 2 : index
    %c0_187 = arith.constant 0 : index
    %c0_188 = arith.constant 0 : index
    %628 = vector.load %arg11[%c2_186, %c0_187, %c0_188] : memref<3x32x16xf32, #tpu.memory_space<vmem>>, vector<1x32x16xf32>
    %629 = vector.shape_cast %628 : vector<1x32x16xf32> to vector<32x16xf32>
    %cst_189 = arith.constant dense<0.000000e+00> : vector<16x16xf32>
    %630 = tpu.matmul %627, %629, %cst_189 {dimension_numbers = #tpu.dot_dimension_numbers<[1], [0], [0], [1], [0, 0, 1, 1], [], []>} : vector<16x32xf32>, vector<32x16xf32>, vector<16x16xf32> -> vector<16x16xf32>
    %631 = arith.addf %625, %630 : vector<16x16xf32>
    %cst_190 = arith.constant 0.000000e+00 : f32
    %632 = vector.broadcast %cst_190 : f32 to vector<16x16xf32>
    %633 = arith.maximumf %631, %632 : vector<16x16xf32>
    %634 = vector.shape_cast %633 : vector<16x16xf32> to vector<2x8x16xf32>
    %635 = vector.shape_cast %634 : vector<2x8x16xf32> to vector<16x16xf32>
    %c0_191 = arith.constant 0 : index
    %c0_192 = arith.constant 0 : index
    %636 = vector.load %arg13[%c0_191, %c0_192] : memref<16x48xf32, #tpu.memory_space<vmem>>, vector<16x48xf32>
    %cst_193 = arith.constant dense<0.000000e+00> : vector<16x48xf32>
    %637 = tpu.matmul %635, %636, %cst_193 {dimension_numbers = #tpu.dot_dimension_numbers<[1], [0], [0], [1], [0, 0, 1, 1], [], []>} : vector<16x16xf32>, vector<16x48xf32>, vector<16x48xf32> -> vector<16x48xf32>
    %c0_194 = arith.constant 0 : index
    %c0_195 = arith.constant 0 : index
    %638 = vector.load %arg14[%c0_194, %c0_195] : memref<1x48xf32, #tpu.memory_space<vmem>>, vector<1x48xf32>
    %639 = vector.broadcast %638 : vector<1x48xf32> to vector<16x48xf32>
    %640 = arith.addf %637, %639 : vector<16x48xf32>
    %641 = vector.shape_cast %640 : vector<16x48xf32> to vector<2x8x48xf32>
    %642 = vector.extract_strided_slice %641 {offsets = [0, 0, 0], sizes = [2, 8, 16], strides = [1, 1, 1]} : vector<2x8x48xf32> to vector<2x8x16xf32>
    %643 = vector.extract_strided_slice %641 {offsets = [0, 0, 16], sizes = [2, 8, 16], strides = [1, 1, 1]} : vector<2x8x48xf32> to vector<2x8x16xf32>
    %644 = vector.extract_strided_slice %641 {offsets = [0, 0, 32], sizes = [2, 8, 16], strides = [1, 1, 1]} : vector<2x8x48xf32> to vector<2x8x16xf32>
    %cst_196 = arith.constant 0.000000e+00 : f32
    %645 = vector.broadcast %cst_196 : f32 to vector<2x8x8xf32>
    %c0_197 = arith.constant 0 : index
    %c0_198 = arith.constant 0 : index
    %646 = vector.load %arg16[%c0_197, %c0_198] : memref<1x32xf32, #tpu.memory_space<vmem>>, vector<1x32xf32>
    %647 = vector.extract_strided_slice %642 {offsets = [0, 0, 0], sizes = [2, 8, 4], strides = [1, 1, 1]} : vector<2x8x16xf32> to vector<2x8x4xf32>
    %648 = vector.extract_strided_slice %643 {offsets = [0, 0, 0], sizes = [2, 8, 4], strides = [1, 1, 1]} : vector<2x8x16xf32> to vector<2x8x4xf32>
    %649 = vector.extract_strided_slice %644 {offsets = [0, 0, 0], sizes = [2, 8, 4], strides = [1, 1, 1]} : vector<2x8x16xf32> to vector<2x8x4xf32>
    "tpu.trace_start"() <{level = 10 : i32, message = "bqd,bkd->bqk"}> : () -> ()
    %cst_199 = arith.constant dense<0.000000e+00> : vector<2x8x8xf32>
    %650 = tpu.matmul %647, %648, %cst_199 {dimension_numbers = #tpu.dot_dimension_numbers<[2], [2], [1], [1], [0, 0, 0, 1, 1, 1], [0], [0]>} : vector<2x8x4xf32>, vector<2x8x4xf32>, vector<2x8x8xf32> -> vector<2x8x8xf32>
    "tpu.trace_stop"() : () -> ()
    %cst_200 = arith.constant dense<0xFF800000> : vector<2x8xf32>
    %651 = vector.multi_reduction <maximumf>, %650, %cst_200 [2] : vector<2x8x8xf32> to vector<2x8xf32>
    %652 = vector.shape_cast %651 : vector<2x8xf32> to vector<2x8x1xf32>
    %653 = vector.broadcast %652 : vector<2x8x1xf32> to vector<2x8x8xf32>
    %654 = arith.subf %650, %653 : vector<2x8x8xf32>
    %655 = math.exp %654 : vector<2x8x8xf32>
    %cst_201 = arith.constant dense<0.000000e+00> : vector<2x8xf32>
    %656 = vector.multi_reduction <add>, %655, %cst_201 [2] : vector<2x8x8xf32> to vector<2x8xf32>
    %657 = vector.shape_cast %656 : vector<2x8xf32> to vector<2x8x1xf32>
    %658 = vector.broadcast %657 : vector<2x8x1xf32> to vector<2x8x8xf32>
    %659 = arith.divf %655, %658 : vector<2x8x8xf32>
    %660 = arith.addf %645, %659 : vector<2x8x8xf32>
    %cst_202 = arith.constant dense<0.000000e+00> : vector<2x8xf32>
    %661 = vector.multi_reduction <add>, %659, %cst_202 [1] : vector<2x8x8xf32> to vector<2x8xf32>
    %662 = vector.shape_cast %661 : vector<2x8xf32> to vector<2x1x8xf32>
    %cst_203 = arith.constant 8.000000e+00 : f32
    %663 = vector.broadcast %cst_203 : f32 to vector<2x1x8xf32>
    %664 = arith.divf %662, %663 : vector<2x1x8xf32>
    "tpu.trace_start"() <{level = 10 : i32, message = "bqk,bkd->bqd"}> : () -> ()
    %cst_204 = arith.constant dense<0.000000e+00> : vector<2x1x4xf32>
    %665 = tpu.matmul %664, %649, %cst_204 {dimension_numbers = #tpu.dot_dimension_numbers<[2], [1], [1], [2], [0, 0, 0, 1, 1, 2], [0], [0]>} : vector<2x1x8xf32>, vector<2x8x4xf32>, vector<2x1x4xf32> -> vector<2x1x4xf32>
    "tpu.trace_stop"() : () -> ()
    %666 = vector.shape_cast %665 : vector<2x1x4xf32> to vector<2x4xf32>
    %c0_205 = arith.constant 0 : index
    %c0_206 = arith.constant 0 : index
    %667 = vector.load %arg15[%c0_205, %c0_206] : memref<16x32xf32, #tpu.memory_space<vmem>>, vector<4x32xf32>
    %cst_207 = arith.constant dense<0.000000e+00> : vector<2x32xf32>
    %668 = tpu.matmul %666, %667, %cst_207 {dimension_numbers = #tpu.dot_dimension_numbers<[1], [0], [0], [1], [0, 0, 1, 1], [], []>} : vector<2x4xf32>, vector<4x32xf32>, vector<2x32xf32> -> vector<2x32xf32>
    %669 = vector.broadcast %646 : vector<1x32xf32> to vector<2x32xf32>
    %670 = arith.addf %669, %668 : vector<2x32xf32>
    %671 = vector.extract_strided_slice %642 {offsets = [0, 0, 4], sizes = [2, 8, 4], strides = [1, 1, 1]} : vector<2x8x16xf32> to vector<2x8x4xf32>
    %672 = vector.extract_strided_slice %643 {offsets = [0, 0, 4], sizes = [2, 8, 4], strides = [1, 1, 1]} : vector<2x8x16xf32> to vector<2x8x4xf32>
    %673 = vector.extract_strided_slice %644 {offsets = [0, 0, 4], sizes = [2, 8, 4], strides = [1, 1, 1]} : vector<2x8x16xf32> to vector<2x8x4xf32>
    "tpu.trace_start"() <{level = 10 : i32, message = "bqd,bkd->bqk"}> : () -> ()
    %cst_208 = arith.constant dense<0.000000e+00> : vector<2x8x8xf32>
    %674 = tpu.matmul %671, %672, %cst_208 {dimension_numbers = #tpu.dot_dimension_numbers<[2], [2], [1], [1], [0, 0, 0, 1, 1, 1], [0], [0]>} : vector<2x8x4xf32>, vector<2x8x4xf32>, vector<2x8x8xf32> -> vector<2x8x8xf32>
    "tpu.trace_stop"() : () -> ()
    %cst_209 = arith.constant dense<0xFF800000> : vector<2x8xf32>
    %675 = vector.multi_reduction <maximumf>, %674, %cst_209 [2] : vector<2x8x8xf32> to vector<2x8xf32>
    %676 = vector.shape_cast %675 : vector<2x8xf32> to vector<2x8x1xf32>
    %677 = vector.broadcast %676 : vector<2x8x1xf32> to vector<2x8x8xf32>
    %678 = arith.subf %674, %677 : vector<2x8x8xf32>
    %679 = math.exp %678 : vector<2x8x8xf32>
    %cst_210 = arith.constant dense<0.000000e+00> : vector<2x8xf32>
    %680 = vector.multi_reduction <add>, %679, %cst_210 [2] : vector<2x8x8xf32> to vector<2x8xf32>
    %681 = vector.shape_cast %680 : vector<2x8xf32> to vector<2x8x1xf32>
    %682 = vector.broadcast %681 : vector<2x8x1xf32> to vector<2x8x8xf32>
    %683 = arith.divf %679, %682 : vector<2x8x8xf32>
    %684 = arith.addf %660, %683 : vector<2x8x8xf32>
    %cst_211 = arith.constant dense<0.000000e+00> : vector<2x8xf32>
    %685 = vector.multi_reduction <add>, %683, %cst_211 [1] : vector<2x8x8xf32> to vector<2x8xf32>
    %686 = vector.shape_cast %685 : vector<2x8xf32> to vector<2x1x8xf32>
    %cst_212 = arith.constant 8.000000e+00 : f32
    %687 = vector.broadcast %cst_212 : f32 to vector<2x1x8xf32>
    %688 = arith.divf %686, %687 : vector<2x1x8xf32>
    "tpu.trace_start"() <{level = 10 : i32, message = "bqk,bkd->bqd"}> : () -> ()
    %cst_213 = arith.constant dense<0.000000e+00> : vector<2x1x4xf32>
    %689 = tpu.matmul %688, %673, %cst_213 {dimension_numbers = #tpu.dot_dimension_numbers<[2], [1], [1], [2], [0, 0, 0, 1, 1, 2], [0], [0]>} : vector<2x1x8xf32>, vector<2x8x4xf32>, vector<2x1x4xf32> -> vector<2x1x4xf32>
    "tpu.trace_stop"() : () -> ()
    %690 = vector.shape_cast %689 : vector<2x1x4xf32> to vector<2x4xf32>
    %c4_214 = arith.constant 4 : index
    %c0_215 = arith.constant 0 : index
    %691 = vector.load %arg15[%c4_214, %c0_215] : memref<16x32xf32, #tpu.memory_space<vmem>>, vector<4x32xf32>
    %cst_216 = arith.constant dense<0.000000e+00> : vector<2x32xf32>
    %692 = tpu.matmul %690, %691, %cst_216 {dimension_numbers = #tpu.dot_dimension_numbers<[1], [0], [0], [1], [0, 0, 1, 1], [], []>} : vector<2x4xf32>, vector<4x32xf32>, vector<2x32xf32> -> vector<2x32xf32>
    %693 = arith.addf %670, %692 : vector<2x32xf32>
    %694 = vector.extract_strided_slice %642 {offsets = [0, 0, 8], sizes = [2, 8, 4], strides = [1, 1, 1]} : vector<2x8x16xf32> to vector<2x8x4xf32>
    %695 = vector.extract_strided_slice %643 {offsets = [0, 0, 8], sizes = [2, 8, 4], strides = [1, 1, 1]} : vector<2x8x16xf32> to vector<2x8x4xf32>
    %696 = vector.extract_strided_slice %644 {offsets = [0, 0, 8], sizes = [2, 8, 4], strides = [1, 1, 1]} : vector<2x8x16xf32> to vector<2x8x4xf32>
    "tpu.trace_start"() <{level = 10 : i32, message = "bqd,bkd->bqk"}> : () -> ()
    %cst_217 = arith.constant dense<0.000000e+00> : vector<2x8x8xf32>
    %697 = tpu.matmul %694, %695, %cst_217 {dimension_numbers = #tpu.dot_dimension_numbers<[2], [2], [1], [1], [0, 0, 0, 1, 1, 1], [0], [0]>} : vector<2x8x4xf32>, vector<2x8x4xf32>, vector<2x8x8xf32> -> vector<2x8x8xf32>
    "tpu.trace_stop"() : () -> ()
    %cst_218 = arith.constant dense<0xFF800000> : vector<2x8xf32>
    %698 = vector.multi_reduction <maximumf>, %697, %cst_218 [2] : vector<2x8x8xf32> to vector<2x8xf32>
    %699 = vector.shape_cast %698 : vector<2x8xf32> to vector<2x8x1xf32>
    %700 = vector.broadcast %699 : vector<2x8x1xf32> to vector<2x8x8xf32>
    %701 = arith.subf %697, %700 : vector<2x8x8xf32>
    %702 = math.exp %701 : vector<2x8x8xf32>
    %cst_219 = arith.constant dense<0.000000e+00> : vector<2x8xf32>
    %703 = vector.multi_reduction <add>, %702, %cst_219 [2] : vector<2x8x8xf32> to vector<2x8xf32>
    %704 = vector.shape_cast %703 : vector<2x8xf32> to vector<2x8x1xf32>
    %705 = vector.broadcast %704 : vector<2x8x1xf32> to vector<2x8x8xf32>
    %706 = arith.divf %702, %705 : vector<2x8x8xf32>
    %707 = arith.addf %684, %706 : vector<2x8x8xf32>
    %cst_220 = arith.constant dense<0.000000e+00> : vector<2x8xf32>
    %708 = vector.multi_reduction <add>, %706, %cst_220 [1] : vector<2x8x8xf32> to vector<2x8xf32>
    %709 = vector.shape_cast %708 : vector<2x8xf32> to vector<2x1x8xf32>
    %cst_221 = arith.constant 8.000000e+00 : f32
    %710 = vector.broadcast %cst_221 : f32 to vector<2x1x8xf32>
    %711 = arith.divf %709, %710 : vector<2x1x8xf32>
    "tpu.trace_start"() <{level = 10 : i32, message = "bqk,bkd->bqd"}> : () -> ()
    %cst_222 = arith.constant dense<0.000000e+00> : vector<2x1x4xf32>
    %712 = tpu.matmul %711, %696, %cst_222 {dimension_numbers = #tpu.dot_dimension_numbers<[2], [1], [1], [2], [0, 0, 0, 1, 1, 2], [0], [0]>} : vector<2x1x8xf32>, vector<2x8x4xf32>, vector<2x1x4xf32> -> vector<2x1x4xf32>
    "tpu.trace_stop"() : () -> ()
    %713 = vector.shape_cast %712 : vector<2x1x4xf32> to vector<2x4xf32>
    %c8 = arith.constant 8 : index
    %c0_223 = arith.constant 0 : index
    %714 = vector.load %arg15[%c8, %c0_223] : memref<16x32xf32, #tpu.memory_space<vmem>>, vector<4x32xf32>
    %cst_224 = arith.constant dense<0.000000e+00> : vector<2x32xf32>
    %715 = tpu.matmul %713, %714, %cst_224 {dimension_numbers = #tpu.dot_dimension_numbers<[1], [0], [0], [1], [0, 0, 1, 1], [], []>} : vector<2x4xf32>, vector<4x32xf32>, vector<2x32xf32> -> vector<2x32xf32>
    %716 = arith.addf %693, %715 : vector<2x32xf32>
    %717 = vector.extract_strided_slice %642 {offsets = [0, 0, 12], sizes = [2, 8, 4], strides = [1, 1, 1]} : vector<2x8x16xf32> to vector<2x8x4xf32>
    %718 = vector.extract_strided_slice %643 {offsets = [0, 0, 12], sizes = [2, 8, 4], strides = [1, 1, 1]} : vector<2x8x16xf32> to vector<2x8x4xf32>
    %719 = vector.extract_strided_slice %644 {offsets = [0, 0, 12], sizes = [2, 8, 4], strides = [1, 1, 1]} : vector<2x8x16xf32> to vector<2x8x4xf32>
    "tpu.trace_start"() <{level = 10 : i32, message = "bqd,bkd->bqk"}> : () -> ()
    %cst_225 = arith.constant dense<0.000000e+00> : vector<2x8x8xf32>
    %720 = tpu.matmul %717, %718, %cst_225 {dimension_numbers = #tpu.dot_dimension_numbers<[2], [2], [1], [1], [0, 0, 0, 1, 1, 1], [0], [0]>} : vector<2x8x4xf32>, vector<2x8x4xf32>, vector<2x8x8xf32> -> vector<2x8x8xf32>
    "tpu.trace_stop"() : () -> ()
    %cst_226 = arith.constant dense<0xFF800000> : vector<2x8xf32>
    %721 = vector.multi_reduction <maximumf>, %720, %cst_226 [2] : vector<2x8x8xf32> to vector<2x8xf32>
    %722 = vector.shape_cast %721 : vector<2x8xf32> to vector<2x8x1xf32>
    %723 = vector.broadcast %722 : vector<2x8x1xf32> to vector<2x8x8xf32>
    %724 = arith.subf %720, %723 : vector<2x8x8xf32>
    %725 = math.exp %724 : vector<2x8x8xf32>
    %cst_227 = arith.constant dense<0.000000e+00> : vector<2x8xf32>
    %726 = vector.multi_reduction <add>, %725, %cst_227 [2] : vector<2x8x8xf32> to vector<2x8xf32>
    %727 = vector.shape_cast %726 : vector<2x8xf32> to vector<2x8x1xf32>
    %728 = vector.broadcast %727 : vector<2x8x1xf32> to vector<2x8x8xf32>
    %729 = arith.divf %725, %728 : vector<2x8x8xf32>
    %730 = arith.addf %707, %729 : vector<2x8x8xf32>
    %cst_228 = arith.constant dense<0.000000e+00> : vector<2x8xf32>
    %731 = vector.multi_reduction <add>, %729, %cst_228 [1] : vector<2x8x8xf32> to vector<2x8xf32>
    %732 = vector.shape_cast %731 : vector<2x8xf32> to vector<2x1x8xf32>
    %cst_229 = arith.constant 8.000000e+00 : f32
    %733 = vector.broadcast %cst_229 : f32 to vector<2x1x8xf32>
    %734 = arith.divf %732, %733 : vector<2x1x8xf32>
    "tpu.trace_start"() <{level = 10 : i32, message = "bqk,bkd->bqd"}> : () -> ()
    %cst_230 = arith.constant dense<0.000000e+00> : vector<2x1x4xf32>
    %735 = tpu.matmul %734, %719, %cst_230 {dimension_numbers = #tpu.dot_dimension_numbers<[2], [1], [1], [2], [0, 0, 0, 1, 1, 2], [0], [0]>} : vector<2x1x8xf32>, vector<2x8x4xf32>, vector<2x1x4xf32> -> vector<2x1x4xf32>
    "tpu.trace_stop"() : () -> ()
    %736 = vector.shape_cast %735 : vector<2x1x4xf32> to vector<2x4xf32>
    %c12 = arith.constant 12 : index
    %c0_231 = arith.constant 0 : index
    %737 = vector.load %arg15[%c12, %c0_231] : memref<16x32xf32, #tpu.memory_space<vmem>>, vector<4x32xf32>
    %cst_232 = arith.constant dense<0.000000e+00> : vector<2x32xf32>
    %738 = tpu.matmul %736, %737, %cst_232 {dimension_numbers = #tpu.dot_dimension_numbers<[1], [0], [0], [1], [0, 0, 1, 1], [], []>} : vector<2x4xf32>, vector<4x32xf32>, vector<2x32xf32> -> vector<2x32xf32>
    %739 = arith.addf %716, %738 : vector<2x32xf32>
    %cst_233 = arith.constant 2.500000e-01 : f32
    %740 = vector.broadcast %cst_233 : f32 to vector<2x8x8xf32>
    %741 = arith.mulf %730, %740 : vector<2x8x8xf32>
    %742 = vector.shape_cast %741 : vector<2x8x8xf32> to vector<2x64xf32>
    %c0_234 = arith.constant 0 : index
    %c0_235 = arith.constant 0 : index
    %743 = vector.load %arg20[%c0_234, %c0_235] : memref<2x64xf32, #tpu.memory_space<vmem>>, vector<2x64xf32>
    tpu.vector_store %arg20[%c0_234, %c0_235], %742 {strides = array<i32>} : memref<2x64xf32, #tpu.memory_space<vmem>>, vector<2x64xf32>,
    %cst_236 = arith.constant 0.000000e+00 : f32
    %744 = vector.broadcast %cst_236 : f32 to vector<2x32xf32>
    %745 = arith.maximumf %739, %744 : vector<2x32xf32>
    %c0_237 = arith.constant 0 : index
    %c0_238 = arith.constant 0 : index
    %746 = vector.load %arg17[%c0_237, %c0_238] : memref<32x1xf32, #tpu.memory_space<vmem>>, vector<32x1xf32>
    %cst_239 = arith.constant dense<0.000000e+00> : vector<2x1xf32>
    %747 = tpu.matmul %745, %746, %cst_239 {dimension_numbers = #tpu.dot_dimension_numbers<[1], [0], [0], [1], [0, 0, 1, 1], [], []>} : vector<2x32xf32>, vector<32x1xf32>, vector<2x1xf32> -> vector<2x1xf32>
    %c0_240 = arith.constant 0 : index
    %c0_241 = arith.constant 0 : index
    %748 = vector.load %arg18[%c0_240, %c0_241] : memref<1x1xf32, #tpu.memory_space<vmem>>, vector<1x1xf32>
    %749 = vector.broadcast %748 : vector<1x1xf32> to vector<2x1xf32>
    %750 = arith.addf %747, %749 : vector<2x1xf32>
    %c0_242 = arith.constant 0 : index
    %c0_243 = arith.constant 0 : index
    %751 = vector.load %arg19[%c0_242, %c0_243] : memref<2x1xf32, #tpu.memory_space<vmem>>, vector<2x1xf32>
    tpu.vector_store %arg19[%c0_242, %c0_243], %750 {strides = array<i32>} : memref<2x1xf32, #tpu.memory_space<vmem>>, vector<2x1xf32>,
    return
  }
}

</mosaic_0001>

<llo_original>
// kernel: tpu_custom_call.1
$region0: #{tpu_custom_call.1}
  #allocation0 [shape = 'u32[]', space=smem, size = 0x4, offset = 0x4, fixed_abs, tag = 'smem constant byte address 0x4 - core index']
  #allocation1 [shape = 'u32[144,128]{1,0:T(1,128)}', space=vmem, size = 0x12000, scoped, tag = 'internal scratch']
  #allocation2 [shape = 'f32[2,8,64]{2,1,0:T(8,128)}', space=vmem, size = 0x2000, scoped, tag = 'scratch operand']
  #allocation3 [shape = 'f32[2,8,64]{2,1,0:T(8,128)}', space=vmem, size = 0x2000, scoped, tag = 'scratch operand']
  #allocation4 [shape = 'f32[1,1]{1,0:T(1,128)S(1)}', space=vmem, size = 0x200, scoped, tag = 'scoped memory for tpu_custom_call.1']
  %s0 = inlined_call_operand.vmem [shape: f32[2,8,16], index: 0, kind: input, shape index: {}]
  %s1 = inlined_call_operand.vmem [shape: f32[16,256], index: 1, kind: input, shape index: {}]
  %s2 = inlined_call_operand.vmem [shape: f32[2,32,128], index: 2, kind: input, shape index: {}]
  %s3 = inlined_call_operand.vmem [shape: f32[1,256], index: 3, kind: input, shape index: {}]
  %s4 = inlined_call_operand.vmem [shape: f32[64,256], index: 4, kind: input, shape index: {}]
  %s5 = inlined_call_operand.vmem [shape: f32[2,32,128], index: 5, kind: input, shape index: {}]
  %s6 = inlined_call_operand.vmem [shape: f32[1,256], index: 6, kind: input, shape index: {}]
  %s7 = inlined_call_operand.vmem [shape: f32[5,64,32], index: 7, kind: input, shape index: {}]
  %s8 = inlined_call_operand.vmem [shape: f32[1,32], index: 8, kind: input, shape index: {}]
  %s9 = inlined_call_operand.vmem [shape: f32[1,32], index: 9, kind: input, shape index: {}]
  %s10 = inlined_call_operand.vmem [shape: f32[1,32], index: 10, kind: input, shape index: {}]
  %s11 = inlined_call_operand.vmem [shape: f32[3,32,16], index: 11, kind: input, shape index: {}]
  %s12 = inlined_call_operand.vmem [shape: f32[1,16], index: 12, kind: input, shape index: {}]
  %s13 = inlined_call_operand.vmem [shape: f32[16,48], index: 13, kind: input, shape index: {}]
  %s14 = inlined_call_operand.vmem [shape: f32[1,48], index: 14, kind: input, shape index: {}]
  %s15 = inlined_call_operand.vmem [shape: f32[16,32], index: 15, kind: input, shape index: {}]
  %s16 = inlined_call_operand.vmem [shape: f32[1,32], index: 16, kind: input, shape index: {}]
  %s17 = inlined_call_operand.vmem [shape: f32[32,1], index: 17, kind: input, shape index: {}]
  %s18 = inlined_call_operand.<no memory space> [shape: f32[1,1], index: 18, kind: input, shape index: {}]
  %s19 = inlined_call_operand.vmem [shape: f32[2,1], index: 19, kind: output, shape index: {0}]
  %s20 = inlined_call_operand.hbm [shape: f32[2,64], index: 20, kind: output, shape index: {1}]
  %21 = xla_tuple %s19, %s20
  %s22 = sld [smem:[#allocation0]]
  $region94: #{tpu_custom_call.1} parent=0
    _
  %s24 = ssub.s32 1, %s22
  %s25 = scalar_select 0, %s24, %s22
  %v26 = vstv %s18
  %27 = vst [vmem:[#allocation4] sm:$0x1] %v26
  $region1: #{tpu_custom_call.1} parent=0
    #allocation5 [shape = 'u8[1024]{0}', space=vmem, size = 0x400, scoped, tag = 'output window, operand 1, single buffered']
    #allocation6 [shape = 's32[1]{0}', space=sflag, size = 0x4, scoped, tag = 'scoped memory for tpu_custom_call.1']
    %28 = vsyncpa [#allocation6], 0
    // Predicated region
    $region2: #{tpu_custom_call.1} parent=1 // pred_check
      _
    $region3: #{tpu_custom_call.1} parent=1 // pred_check_branch
      %30 = sbr.rel (0) target = $region5
    $region4: #{tpu_custom_call.1} parent=1 // pred_region
      _
    $region5: #{tpu_custom_call.1} parent=1 // pred_fallthru
      _
    // Predicated region
    $region6: #{tpu_custom_call.1} parent=1 // pred_check
      _
    $region7: #{tpu_custom_call.1} parent=1 // pred_check_branch
      %32 = sbr.rel (0) target = $region9
    $region8: #{tpu_custom_call.1} parent=1 // pred_region
      _
    $region9: #{tpu_custom_call.1} parent=1 // pred_fallthru
      _
    // Predicated region
    $region10: #{tpu_custom_call.1} parent=1 // pred_check
      _
    $region11: #{tpu_custom_call.1} parent=1 // pred_check_branch
      %34 = sbr.rel (0) target = $region13
    $region12: #{tpu_custom_call.1} parent=1 // pred_region
      _
    $region13: #{tpu_custom_call.1} parent=1 // pred_fallthru
      _
    // Predicated region
    $region14: #{tpu_custom_call.1} parent=1 // pred_check
      _
    $region15: #{tpu_custom_call.1} parent=1 // pred_check_branch
      %36 = sbr.rel (0) target = $region17
    $region16: #{tpu_custom_call.1} parent=1 // pred_region
      _
    $region17: #{tpu_custom_call.1} parent=1 // pred_fallthru
      _
    // Predicated region
    $region18: #{tpu_custom_call.1} parent=1 // pred_check
      _
    $region19: #{tpu_custom_call.1} parent=1 // pred_check_branch
      %38 = sbr.rel (0) target = $region21
    $region20: #{tpu_custom_call.1} parent=1 // pred_region
      _
    $region21: #{tpu_custom_call.1} parent=1 // pred_fallthru
      _
    // Predicated region
    $region22: #{tpu_custom_call.1} parent=1 // pred_check
      _
    $region23: #{tpu_custom_call.1} parent=1 // pred_check_branch
      %40 = sbr.rel (0) target = $region25
    $region24: #{tpu_custom_call.1} parent=1 // pred_region
      _
    $region25: #{tpu_custom_call.1} parent=1 // pred_fallthru
      _
    // Predicated region
    $region26: #{tpu_custom_call.1} parent=1 // pred_check
      _
    $region27: #{tpu_custom_call.1} parent=1 // pred_check_branch
      %42 = sbr.rel (0) target = $region29
    $region28: #{tpu_custom_call.1} parent=1 // pred_region
      _
    $region29: #{tpu_custom_call.1} parent=1 // pred_fallthru
      _
    // Predicated region
    $region30: #{tpu_custom_call.1} parent=1 // pred_check
      _
    $region31: #{tpu_custom_call.1} parent=1 // pred_check_branch
      %44 = sbr.rel (0) target = $region33
    $region32: #{tpu_custom_call.1} parent=1 // pred_region
      _
    $region33: #{tpu_custom_call.1} parent=1 // pred_fallthru
      _
    // Predicated region
    $region34: #{tpu_custom_call.1} parent=1 // pred_check
      _
    $region35: #{tpu_custom_call.1} parent=1 // pred_check_branch
      %46 = sbr.rel (0) target = $region37
    $region36: #{tpu_custom_call.1} parent=1 // pred_region
      _
    $region37: #{tpu_custom_call.1} parent=1 // pred_fallthru
      _
    // Predicated region
    $region38: #{tpu_custom_call.1} parent=1 // pred_check
      _
    $region39: #{tpu_custom_call.1} parent=1 // pred_check_branch
      %48 = sbr.rel (0) target = $region41
    $region40: #{tpu_custom_call.1} parent=1 // pred_region
      _
    $region41: #{tpu_custom_call.1} parent=1 // pred_fallthru
      _
    // Predicated region
    $region42: #{tpu_custom_call.1} parent=1 // pred_check
      _
    $region43: #{tpu_custom_call.1} parent=1 // pred_check_branch
      %50 = sbr.rel (0) target = $region45
    $region44: #{tpu_custom_call.1} parent=1 // pred_region
      _
    $region45: #{tpu_custom_call.1} parent=1 // pred_fallthru
      _
    // Predicated region
    $region46: #{tpu_custom_call.1} parent=1 // pred_check
      _
    $region47: #{tpu_custom_call.1} parent=1 // pred_check_branch
      %52 = sbr.rel (0) target = $region49
    $region48: #{tpu_custom_call.1} parent=1 // pred_region
      _
    $region49: #{tpu_custom_call.1} parent=1 // pred_fallthru
      _
    // Predicated region
    $region50: #{tpu_custom_call.1} parent=1 // pred_check
      _
    $region51: #{tpu_custom_call.1} parent=1 // pred_check_branch
      %54 = sbr.rel (0) target = $region53
    $region52: #{tpu_custom_call.1} parent=1 // pred_region
      _
    $region53: #{tpu_custom_call.1} parent=1 // pred_fallthru
      _
    // Predicated region
    $region54: #{tpu_custom_call.1} parent=1 // pred_check
      _
    $region55: #{tpu_custom_call.1} parent=1 // pred_check_branch
      %56 = sbr.rel (0) target = $region57
    $region56: #{tpu_custom_call.1} parent=1 // pred_region
      _
    $region57: #{tpu_custom_call.1} parent=1 // pred_fallthru
      _
    // Predicated region
    $region58: #{tpu_custom_call.1} parent=1 // pred_check
      _
    $region59: #{tpu_custom_call.1} parent=1 // pred_check_branch
      %58 = sbr.rel (0) target = $region61
    $region60: #{tpu_custom_call.1} parent=1 // pred_region
      _
    $region61: #{tpu_custom_call.1} parent=1 // pred_fallthru
      _
    // Predicated region
    $region62: #{tpu_custom_call.1} parent=1 // pred_check
      _
    $region63: #{tpu_custom_call.1} parent=1 // pred_check_branch
      %60 = sbr.rel (0) target = $region65
    $region64: #{tpu_custom_call.1} parent=1 // pred_region
      _
    $region65: #{tpu_custom_call.1} parent=1 // pred_fallthru
      _
    // Predicated region
    $region66: #{tpu_custom_call.1} parent=1 // pred_check
      _
    $region67: #{tpu_custom_call.1} parent=1 // pred_check_branch
      %62 = sbr.rel (0) target = $region69
    $region68: #{tpu_custom_call.1} parent=1 // pred_region
      _
    $region69: #{tpu_custom_call.1} parent=1 // pred_fallthru
      _
    // Predicated region
    $region70: #{tpu_custom_call.1} parent=1 // pred_check
      _
    $region71: #{tpu_custom_call.1} parent=1 // pred_check_branch
      %64 = sbr.rel (0) target = $region73
    $region72: #{tpu_custom_call.1} parent=1 // pred_region
      _
    $region73: #{tpu_custom_call.1} parent=1 // pred_fallthru
      _
    // Predicated region
    $region74: #{tpu_custom_call.1} parent=1 // pred_check
      _
    $region75: #{tpu_custom_call.1} parent=1 // pred_check_branch
      %66 = sbr.rel (0) target = $region77
    $region76: #{tpu_custom_call.1} parent=1 // pred_region
      _
    $region77: #{tpu_custom_call.1} parent=1 // pred_fallthru
      _
    %v67 = vld [vmem:[%s0] sm:$0xff]
    %v68 = vld [vmem:[%s0 + $0x8] sm:$0xff]
    %v69 = vld [vmem:[%s1] sm:$0xff]
    %v70 = vld [vmem:[%s1 + $0x8] sm:$0xff]
    %v71 = vld [vmem:[%s1 + $0x10] sm:$0xff]
    %v72 = vld [vmem:[%s1 + $0x18] sm:$0xff]
    %v73 = vld [vmem:[%s3] sm:$0x3]
    %v75 = vlaneseq
    %v76 = vshrl.u32 %v75, 7
    %v77 = vsub.s32 0, %v76
    %v78 = vrot.slane %v73, %v77
    %v79 = vlaneseq
    %v80 = vshrl.u32 %v79, 7
    %v81 = vsub.s32 1, %v80
    %v82 = vrot.slane %v73, %v81
    %vm85 = vcmask 130048
    %v87 = vsel %vm85, %v67, 0
    %v90 = vsel %vm85, %v68, 0
    %92 = vmatprep.subr.mxu0 %v70
    %93 = vmatpush1.msra.mxu0 %v69
    %94 = vmatprep.subr.mxu0 %v72
    %95 = vmatpush1.msra.mxu0 %v71
    %96 = vmatprep.subr.mxu0 0.0
    %97 = vmatpush1.msra.mxu0 0.0
    %98 = vmatprep.subr.mxu0 0.0
    %99 = vmatpush1.msra.mxu0 0.0
    %100 = vmatprep.subr.mxu0 0.0
    %101 = vmatpush1.msra.mxu0 0.0
    %102 = vmatprep.subr.mxu0 0.0
    %103 = vmatpush1.msra.mxu0 0.0
    %104 = vmatprep.subr.mxu0 0.0
    %105 = vmatpush1.msra.mxu0 0.0
    %106 = vmatprep.subr.mxu0 0.0
    %107 = vmatpush1.msra.mxu0 0.0
    %108 = vmatprep.subr.mxu0 0.0
    %109 = vmatpush1.msra.mxu0 0.0
    %110 = vmatprep.subr.mxu0 0.0
    %111 = vmatpush1.msra.mxu0 0.0
    %112 = vmatprep.subr.mxu0 0.0
    %113 = vmatpush1.msra.mxu0 0.0
    %114 = vmatprep.subr.mxu0 0.0
    %115 = vmatpush1.msra.mxu0 0.0
    %116 = vmatprep.subr.mxu0 0.0
    %117 = vmatpush1.msra.mxu0 0.0
    %118 = vmatprep.subr.mxu0 0.0
    %119 = vmatpush1.msra.mxu0 0.0
    %120 = vmatprep.subr.mxu0 0.0
    %121 = vmatpush1.msra.mxu0 0.0
    %122 = vmatprep.subr.mxu0 0.0
    %123 = vmatpush1.msra.mxu0 0.0
    %124 = vmatprep.subr.mxu0 0.0
    %125 = vmatpush1.msra.mxu0 0.0
    %126 = vmatprep.subr.mxu0 0.0
    %127 = vmatpush1.msra.mxu0 0.0
    %128 = vmatprep.subr.mxu0 0.0
    %129 = vmatpush1.msra.mxu0 0.0
    %130 = vmatprep.subr.mxu0 0.0
    %131 = vmatpush1.msra.mxu0 0.0
    %132 = vmatprep.subr.mxu0 0.0
    %133 = vmatpush1.msra.mxu0 0.0
    %134 = vmatprep.subr.mxu0 0.0
    %135 = vmatpush1.msra.mxu0 0.0
    %136 = vmatprep.subr.mxu0 0.0
    %137 = vmatpush1.msra.mxu0 0.0
    %138 = vmatprep.subr.mxu0 0.0
    %139 = vmatpush1.msra.mxu0 0.0
    %140 = vmatprep.subr.mxu0 0.0
    %141 = vmatpush1.msra.mxu0 0.0
    %142 = vmatprep.subr.mxu0 0.0
    %143 = vmatpush1.msra.mxu0 0.0
    %144 = vmatprep.subr.mxu0 0.0
    %145 = vmatpush1.msra.mxu0 0.0
    %146 = vmatprep.subr.mxu0 0.0
    %147 = vmatpush1.msra.mxu0 0.0
    %148 = vmatprep.subr.mxu0 0.0
    %149 = vmatpush1.msra.mxu0 0.0
    %150 = vmatprep.subr.mxu0 0.0
    %151 = vmatpush1.msra.mxu0 0.0
    %152 = vmatprep.subr.mxu0 0.0
    %153 = vmatpush1.msra.mxu0 0.0
    %154 = vmatprep.subr.mxu0 0.0
    %155 = vmatpush1.msra.mxu0 0.0
    %156 = vmatprep.mubr.f32.mxu0 0.0
    %157 = vmatmul.mubr.f32.gmra.mrb[0].mxu0 %v87
    %v158 = vpop.f32.mrb[0].mxu0
    %v159 = vadd.f32 %v78, %v158
    %v160 = vpop.f32.mrb[0].mxu0
    %v161 = vadd.f32 %v82, %v160
    %162 = vmatprep.mubr.f32.mxu0 0.0
    %163 = vmatmul.mubr.f32.gmra.mrb[0].mxu0 %v90
    %v164 = vpop.f32.mrb[0].mxu0
    %v165 = vadd.f32 %v78, %v164
    %v166 = vpop.f32.mrb[0].mxu0
    %v167 = vadd.f32 %v82, %v166
    %168 = vdwg.mxu0
    %v169 = vld [vmem:[%s2] sm:$0xff]
    %v170 = vld [vmem:[%s2 + $0x8] sm:$0xff]
    %v171 = vld [vmem:[%s2 + $0x10] sm:$0xff]
    %v172 = vld [vmem:[%s2 + $0x18] sm:$0xff]
    %v173 = vld [vmem:[%s2 + $0x20] sm:$0xff]
    %v174 = vld [vmem:[%s2 + $0x28] sm:$0xff]
    %v175 = vld [vmem:[%s2 + $0x30] sm:$0xff]
    %v176 = vld [vmem:[%s2 + $0x38] sm:$0xff]
    %v179 = vrot.slane %v161, 7
    %v180 = vrot.slane %v167, 7
    %vm183 = vcmask 261120
    %v185 = vsel %vm183, 0.0, 0
    %187 = vmatprep.subr.mxu0 0.0
    %188 = vmatpush1.msra.mxu0 %v169
    %189 = vmatprep.subr.mxu0 0.0
    %190 = vmatpush1.msra.mxu0 %v170
    %191 = vmatprep.subr.mxu0 0.0
    %192 = vmatpush1.msra.mxu0 %v171
    %193 = vmatprep.subr.mxu0 0.0
    %194 = vmatpush1.msra.mxu0 %v172
    %195 = vmatprep.subr.mxu0 0.0
    %196 = vmatpush1.msra.mxu0 0.0
    %197 = vmatprep.subr.mxu0 0.0
    %198 = vmatpush1.msra.mxu0 0.0
    %199 = vmatprep.subr.mxu0 0.0
    %200 = vmatpush1.msra.mxu0 0.0
    %201 = vmatprep.subr.mxu0 0.0
    %202 = vmatpush1.msra.mxu0 0.0
    %203 = vmatprep.subr.mxu0 0.0
    %204 = vmatpush1.msra.mxu0 0.0
    %205 = vmatprep.subr.mxu0 0.0
    %206 = vmatpush1.msra.mxu0 0.0
    %207 = vmatprep.subr.mxu0 0.0
    %208 = vmatpush1.msra.mxu0 0.0
    %209 = vmatprep.subr.mxu0 0.0
    %210 = vmatpush1.msra.mxu0 0.0
    %211 = vmatprep.subr.mxu0 0.0
    %212 = vmatpush1.msra.mxu0 0.0
    %213 = vmatprep.subr.mxu0 0.0
    %214 = vmatpush1.msra.mxu0 0.0
    %215 = vmatprep.subr.mxu0 0.0
    %216 = vmatpush1.msra.mxu0 0.0
    %217 = vmatprep.subr.mxu0 0.0
    %218 = vmatpush1.msra.mxu0 0.0
    %219 = vmatprep.subr.mxu0 0.0
    %220 = vmatpush1.msra.mxu0 0.0
    %221 = vmatprep.subr.mxu0 0.0
    %222 = vmatpush1.msra.mxu0 0.0
    %223 = vmatprep.subr.mxu0 0.0
    %224 = vmatpush1.msra.mxu0 0.0
    %225 = vmatprep.subr.mxu0 0.0
    %226 = vmatpush1.msra.mxu0 0.0
    %227 = vmatprep.subr.mxu0 0.0
    %228 = vmatpush1.msra.mxu0 0.0
    %229 = vmatprep.subr.mxu0 0.0
    %230 = vmatpush1.msra.mxu0 0.0
    %231 = vmatprep.subr.mxu0 0.0
    %232 = vmatpush1.msra.mxu0 0.0
    %233 = vmatprep.subr.mxu0 0.0
    %234 = vmatpush1.msra.mxu0 0.0
    %235 = vmatprep.subr.mxu0 0.0
    %236 = vmatpush1.msra.mxu0 0.0
    %237 = vmatprep.subr.mxu0 0.0
    %238 = vmatpush1.msra.mxu0 0.0
    %239 = vmatprep.subr.mxu0 0.0
    %240 = vmatpush1.msra.mxu0 0.0
    %241 = vmatprep.subr.mxu0 0.0
    %242 = vmatpush1.msra.mxu0 0.0
    %243 = vmatprep.subr.mxu0 0.0
    %244 = vmatpush1.msra.mxu0 0.0
    %245 = vmatprep.subr.mxu0 0.0
    %246 = vmatpush1.msra.mxu0 0.0
    %247 = vmatprep.subr.mxu0 0.0
    %248 = vmatpush1.msra.mxu0 0.0
    %249 = vmatprep.subr.mxu0 0.0
    %250 = vmatpush1.msra.mxu0 0.0
    %251 = vmatprep.mubr.f32.mxu0 0.0
    %252 = vmatmul.mubr.f32.gmra.mrb[0].mxu0 %v185
    %v253 = vpop.f32.mrb[0].mxu0
    %v254 = vadd.f32 0.0, %v253
    %v255 = vpop.f32.mrb[0].mxu0
    %256 = vdwg.mxu0
    %257 = vmatprep.subr.mxu0 0.0
    %258 = vmatpush1.msra.mxu0 %v173
    %259 = vmatprep.subr.mxu0 0.0
    %260 = vmatpush1.msra.mxu0 %v174
    %261 = vmatprep.subr.mxu0 0.0
    %262 = vmatpush1.msra.mxu0 %v175
    %263 = vmatprep.subr.mxu0 0.0
    %264 = vmatpush1.msra.mxu0 %v176
    %265 = vmatprep.subr.mxu0 0.0
    %266 = vmatpush1.msra.mxu0 0.0
    %267 = vmatprep.subr.mxu0 0.0
    %268 = vmatpush1.msra.mxu0 0.0
    %269 = vmatprep.subr.mxu0 0.0
    %270 = vmatpush1.msra.mxu0 0.0
    %271 = vmatprep.subr.mxu0 0.0
    %272 = vmatpush1.msra.mxu0 0.0
    %273 = vmatprep.subr.mxu0 0.0
    %274 = vmatpush1.msra.mxu0 0.0
    %275 = vmatprep.subr.mxu0 0.0
    %276 = vmatpush1.msra.mxu0 0.0
    %277 = vmatprep.subr.mxu0 0.0
    %278 = vmatpush1.msra.mxu0 0.0
    %279 = vmatprep.subr.mxu0 0.0
    %280 = vmatpush1.msra.mxu0 0.0
    %281 = vmatprep.subr.mxu0 0.0
    %282 = vmatpush1.msra.mxu0 0.0
    %283 = vmatprep.subr.mxu0 0.0
    %284 = vmatpush1.msra.mxu0 0.0
    %285 = vmatprep.subr.mxu0 0.0
    %286 = vmatpush1.msra.mxu0 0.0
    %287 = vmatprep.subr.mxu0 0.0
    %288 = vmatpush1.msra.mxu0 0.0
    %289 = vmatprep.subr.mxu0 0.0
    %290 = vmatpush1.msra.mxu0 0.0
    %291 = vmatprep.subr.mxu0 0.0
    %292 = vmatpush1.msra.mxu0 0.0
    %293 = vmatprep.subr.mxu0 0.0
    %294 = vmatpush1.msra.mxu0 0.0
    %295 = vmatprep.subr.mxu0 0.0
    %296 = vmatpush1.msra.mxu0 0.0
    %297 = vmatprep.subr.mxu0 0.0
    %298 = vmatpush1.msra.mxu0 0.0
    %299 = vmatprep.subr.mxu0 0.0
    %300 = vmatpush1.msra.mxu0 0.0
    %301 = vmatprep.subr.mxu0 0.0
    %302 = vmatpush1.msra.mxu0 0.0
    %303 = vmatprep.subr.mxu0 0.0
    %304 = vmatpush1.msra.mxu0 0.0
    %305 = vmatprep.subr.mxu0 0.0
    %306 = vmatpush1.msra.mxu0 0.0
    %307 = vmatprep.subr.mxu0 0.0
    %308 = vmatpush1.msra.mxu0 0.0
    %309 = vmatprep.subr.mxu0 0.0
    %310 = vmatpush1.msra.mxu0 0.0
    %311 = vmatprep.subr.mxu0 0.0
    %312 = vmatpush1.msra.mxu0 0.0
    %313 = vmatprep.subr.mxu0 0.0
    %314 = vmatpush1.msra.mxu0 0.0
    %315 = vmatprep.subr.mxu0 0.0
    %316 = vmatpush1.msra.mxu0 0.0
    %317 = vmatprep.subr.mxu0 0.0
    %318 = vmatpush1.msra.mxu0 0.0
    %319 = vmatprep.subr.mxu0 0.0
    %320 = vmatpush1.msra.mxu0 0.0
    %321 = vmatprep.mubr.f32.mxu0 0.0
    %322 = vmatmul.mubr.f32.gmra.mrb[0].mxu0 %v185
    %v323 = vpop.f32.mrb[0].mxu0
    %v324 = vadd.f32 0.0, %v323
    %v325 = vpop.f32.mrb[0].mxu0
    %326 = vdwg.mxu0
    %v329 = vrot.slane %v254, 1
    %v330 = vrot.slane %v324, 1
    %v335 = vadd.f32 %v159, %v254
    %v336 = vadd.f32 %v165, %v329
    %v337 = vadd.f32 %v179, %v324
    %v338 = vadd.f32 %v180, %v330
    %v339 = vxor.u32 %v335, 2147483648
    %v340 = vxor.u32 %v336, 2147483648
    %v341 = vxor.u32 %v337, 2147483648
    %v342 = vxor.u32 %v338, 2147483648
    %v343 = vmul.f32 %v339, 1.442695
    %v344 = vpow.pop %v343
    %v345 = vmul.f32 %v340, 1.442695
    %v346 = vpow.pop %v345
    %v347 = vmul.f32 %v341, 1.442695
    %v348 = vpow.pop %v347
    %v349 = vmul.f32 %v342, 1.442695
    %v350 = vpow.pop %v349
    %v351 = vadd.f32 %v344, 1.0
    %v352 = vadd.f32 %v346, 1.0
    %v353 = vadd.f32 %v348, 1.0
    %v354 = vadd.f32 %v350, 1.0
    %v355 = vrcp.pop %v351
    %v356 = vmul.f32 1.0, %v355
    %v357 = vrcp.pop %v352
    %v358 = vmul.f32 1.0, %v357
    %v359 = vrcp.pop %v353
    %v360 = vmul.f32 1.0, %v359
    %v361 = vrcp.pop %v354
    %v362 = vmul.f32 1.0, %v361
    %v363 = vtanh.pop %v335
    %v364 = vtanh.pop %v336
    %v365 = vtanh.pop %v337
    %v366 = vtanh.pop %v338
    %v367 = vmul.f32 %v356, 0.0
    %v368 = vmul.f32 %v358, 0.0
    %v369 = vmul.f32 %v360, 0.0
    %v370 = vmul.f32 %v362, 0.0
    %375 = vrot.lane.b32.xlu0 %v363, 64
    %v376 = vpop.permute.xlu0 %375
    %377 = vrot.lane.b32.xlu0 %v364, 64
    %v378 = vpop.permute.xlu0 %377
    %379 = vrot.lane.b32.xlu0 %v365, 64
    %v380 = vpop.permute.xlu0 %379
    %381 = vrot.lane.b32.xlu0 %v366, 64
    %v382 = vpop.permute.xlu0 %381
    %v387 = vmul.f32 %v356, %v376
    %v388 = vmul.f32 %v358, %v378
    %v389 = vmul.f32 %v360, %v380
    %v390 = vmul.f32 %v362, %v382
    %395 = vrot.lane.b32.xlu0 %v387, 32
    %v396 = vpop.permute.xlu0 %395
    %397 = vrot.lane.b32.xlu0 %v388, 32
    %v398 = vpop.permute.xlu0 %397
    %399 = vrot.lane.b32.xlu0 %v389, 32
    %v400 = vpop.permute.xlu0 %399
    %401 = vrot.lane.b32.xlu0 %v390, 32
    %v402 = vpop.permute.xlu0 %401
    %v407 = vadd.f32 %v367, %v396
    %v408 = vadd.f32 %v368, %v398
    %v409 = vadd.f32 %v369, %v400
    %v410 = vadd.f32 %v370, %v402
    %v411 = vtanh.pop %v407
    %v412 = vtanh.pop %v408
    %v413 = vtanh.pop %v409
    %v414 = vtanh.pop %v410
    %419 = vrot.lane.b32.xlu0 %v411, 64
    %v420 = vpop.permute.xlu0 %419
    %421 = vrot.lane.b32.xlu0 %v412, 64
    %v422 = vpop.permute.xlu0 %421
    %423 = vrot.lane.b32.xlu0 %v413, 64
    %v424 = vpop.permute.xlu0 %423
    %425 = vrot.lane.b32.xlu0 %v414, 64
    %v426 = vpop.permute.xlu0 %425
    %v431 = vmul.f32 %v356, %v420
    %v432 = vmul.f32 %v358, %v422
    %v433 = vmul.f32 %v360, %v424
    %v434 = vmul.f32 %v362, %v426
    %437 = vrot.lane.b32.xlu0 %v431, 32
    %v438 = vpop.permute.xlu0 %437
    %439 = vrot.lane.b32.xlu0 %v432, 32
    %v440 = vpop.permute.xlu0 %439
    %vm443 = vcmask 253952
    %444 = vst.msk [vmem:[#allocation2] sm:$0x1] %vm443, %v438
    %445 = vst.msk [vmem:[#allocation2 + $0x8] sm:$0x1] %vm443, %v440
    %448 = vrot.lane.b32.xlu0 %v433, 64
    %v449 = vpop.permute.xlu0 %448
    %450 = vrot.lane.b32.xlu0 %v434, 64
    %v451 = vpop.permute.xlu0 %450
    %vm454 = vcmask 516352
    %455 = vst.msk [vmem:[#allocation2 + $0x7] sm:$0x1] %vm454, %v449
    %456 = vst.msk [vmem:[#allocation2 + $0xf] sm:$0x1] %vm454, %v451
    %v457 = vrot.slane %v161, 5
    %v458 = vrot.slane %v167, 5
    %v461 = vrot.slane %v432, 7
    %vm462 = vcmask 1041409
    %v463 = vsel %vm462, %v461, %v431
    %464 = vrot.lane.b32.xlu0 %v463, 32
    %v465 = vpop.permute.xlu0 %464
    %v466 = vsel %vm183, %v465, 0
    %468 = vmatprep.subr.mxu0 0.0
    %469 = vmatpush1.msra.mxu0 %v169
    %470 = vmatprep.subr.mxu0 0.0
    %471 = vmatpush1.msra.mxu0 %v170
    %472 = vmatprep.subr.mxu0 0.0
    %473 = vmatpush1.msra.mxu0 %v171
    %474 = vmatprep.subr.mxu0 0.0
    %475 = vmatpush1.msra.mxu0 %v172
    %476 = vmatprep.subr.mxu0 0.0
    %477 = vmatpush1.msra.mxu0 0.0
    %478 = vmatprep.subr.mxu0 0.0
    %479 = vmatpush1.msra.mxu0 0.0
    %480 = vmatprep.subr.mxu0 0.0
    %481 = vmatpush1.msra.mxu0 0.0
    %482 = vmatprep.subr.mxu0 0.0
    %483 = vmatpush1.msra.mxu0 0.0
    %484 = vmatprep.subr.mxu0 0.0
    %485 = vmatpush1.msra.mxu0 0.0
    %486 = vmatprep.subr.mxu0 0.0
    %487 = vmatpush1.msra.mxu0 0.0
    %488 = vmatprep.subr.mxu0 0.0
    %489 = vmatpush1.msra.mxu0 0.0
    %490 = vmatprep.subr.mxu0 0.0
    %491 = vmatpush1.msra.mxu0 0.0
    %492 = vmatprep.subr.mxu0 0.0
    %493 = vmatpush1.msra.mxu0 0.0
    %494 = vmatprep.subr.mxu0 0.0
    %495 = vmatpush1.msra.mxu0 0.0
    %496 = vmatprep.subr.mxu0 0.0
    %497 = vmatpush1.msra.mxu0 0.0
    %498 = vmatprep.subr.mxu0 0.0
    %499 = vmatpush1.msra.mxu0 0.0
    %500 = vmatprep.subr.mxu0 0.0
    %501 = vmatpush1.msra.mxu0 0.0
    %502 = vmatprep.subr.mxu0 0.0
    %503 = vmatpush1.msra.mxu0 0.0
    %504 = vmatprep.subr.mxu0 0.0
    %505 = vmatpush1.msra.mxu0 0.0
    %506 = vmatprep.subr.mxu0 0.0
    %507 = vmatpush1.msra.mxu0 0.0
    %508 = vmatprep.subr.mxu0 0.0
    %509 = vmatpush1.msra.mxu0 0.0
    %510 = vmatprep.subr.mxu0 0.0
    %511 = vmatpush1.msra.mxu0 0.0
    %512 = vmatprep.subr.mxu0 0.0
    %513 = vmatpush1.msra.mxu0 0.0
    %514 = vmatprep.subr.mxu0 0.0
    %515 = vmatpush1.msra.mxu0 0.0
    %516 = vmatprep.subr.mxu0 0.0
    %517 = vmatpush1.msra.mxu0 0.0
    %518 = vmatprep.subr.mxu0 0.0
    %519 = vmatpush1.msra.mxu0 0.0
    %520 = vmatprep.subr.mxu0 0.0
    %521 = vmatpush1.msra.mxu0 0.0
    %522 = vmatprep.subr.mxu0 0.0
    %523 = vmatpush1.msra.mxu0 0.0
    %524 = vmatprep.subr.mxu0 0.0
    %525 = vmatpush1.msra.mxu0 0.0
    %526 = vmatprep.subr.mxu0 0.0
    %527 = vmatpush1.msra.mxu0 0.0
    %528 = vmatprep.subr.mxu0 0.0
    %529 = vmatpush1.msra.mxu0 0.0
    %530 = vmatprep.subr.mxu0 0.0
    %531 = vmatpush1.msra.mxu0 0.0
    %532 = vmatprep.mubr.f32.mxu0 0.0
    %533 = vmatmul.mubr.f32.gmra.mrb[0].mxu0 %v466
    %v534 = vpop.f32.mrb[0].mxu0
    %v535 = vadd.f32 0.0, %v534
    %v536 = vpop.f32.mrb[0].mxu0
    %537 = vdwg.mxu0
    %v538 = vrot.slane %v434, 7
    %v539 = vsel %vm462, %v538, %v433
    %540 = vrot.lane.b32.xlu0 %v539, 32
    %v541 = vpop.permute.xlu0 %540
    %v542 = vsel %vm183, %v541, 0
    %544 = vmatprep.subr.mxu0 0.0
    %545 = vmatpush1.msra.mxu0 %v173
    %546 = vmatprep.subr.mxu0 0.0
    %547 = vmatpush1.msra.mxu0 %v174
    %548 = vmatprep.subr.mxu0 0.0
    %549 = vmatpush1.msra.mxu0 %v175
    %550 = vmatprep.subr.mxu0 0.0
    %551 = vmatpush1.msra.mxu0 %v176
    %552 = vmatprep.subr.mxu0 0.0
    %553 = vmatpush1.msra.mxu0 0.0
    %554 = vmatprep.subr.mxu0 0.0
    %555 = vmatpush1.msra.mxu0 0.0
    %556 = vmatprep.subr.mxu0 0.0
    %557 = vmatpush1.msra.mxu0 0.0
    %558 = vmatprep.subr.mxu0 0.0
    %559 = vmatpush1.msra.mxu0 0.0
    %560 = vmatprep.subr.mxu0 0.0
    %561 = vmatpush1.msra.mxu0 0.0
    %562 = vmatprep.subr.mxu0 0.0
    %563 = vmatpush1.msra.mxu0 0.0
    %564 = vmatprep.subr.mxu0 0.0
    %565 = vmatpush1.msra.mxu0 0.0
    %566 = vmatprep.subr.mxu0 0.0
    %567 = vmatpush1.msra.mxu0 0.0
    %568 = vmatprep.subr.mxu0 0.0
    %569 = vmatpush1.msra.mxu0 0.0
    %570 = vmatprep.subr.mxu0 0.0
    %571 = vmatpush1.msra.mxu0 0.0
    %572 = vmatprep.subr.mxu0 0.0
    %573 = vmatpush1.msra.mxu0 0.0
    %574 = vmatprep.subr.mxu0 0.0
    %575 = vmatpush1.msra.mxu0 0.0
    %576 = vmatprep.subr.mxu0 0.0
    %577 = vmatpush1.msra.mxu0 0.0
    %578 = vmatprep.subr.mxu0 0.0
    %579 = vmatpush1.msra.mxu0 0.0
    %580 = vmatprep.subr.mxu0 0.0
    %581 = vmatpush1.msra.mxu0 0.0
    %582 = vmatprep.subr.mxu0 0.0
    %583 = vmatpush1.msra.mxu0 0.0
    %584 = vmatprep.subr.mxu0 0.0
    %585 = vmatpush1.msra.mxu0 0.0
    %586 = vmatprep.subr.mxu0 0.0
    %587 = vmatpush1.msra.mxu0 0.0
    %588 = vmatprep.subr.mxu0 0.0
    %589 = vmatpush1.msra.mxu0 0.0
    %590 = vmatprep.subr.mxu0 0.0
    %591 = vmatpush1.msra.mxu0 0.0
    %592 = vmatprep.subr.mxu0 0.0
    %593 = vmatpush1.msra.mxu0 0.0
    %594 = vmatprep.subr.mxu0 0.0
    %595 = vmatpush1.msra.mxu0 0.0
    %596 = vmatprep.subr.mxu0 0.0
    %597 = vmatpush1.msra.mxu0 0.0
    %598 = vmatprep.subr.mxu0 0.0
    %599 = vmatpush1.msra.mxu0 0.0
    %600 = vmatprep.subr.mxu0 0.0
    %601 = vmatpush1.msra.mxu0 0.0
    %602 = vmatprep.subr.mxu0 0.0
    %603 = vmatpush1.msra.mxu0 0.0
    %604 = vmatprep.subr.mxu0 0.0
    %605 = vmatpush1.msra.mxu0 0.0
    %606 = vmatprep.subr.mxu0 0.0
    %607 = vmatpush1.msra.mxu0 0.0
    %608 = vmatprep.mubr.f32.mxu0 0.0
    %609 = vmatmul.mubr.f32.gmra.mrb[0].mxu0 %v542
    %v610 = vpop.f32.mrb[0].mxu0
    %v611 = vadd.f32 0.0, %v610
    %v612 = vpop.f32.mrb[0].mxu0
    %613 = vdwg.mxu0
    %v616 = vrot.slane %v535, 7
    %v617 = vrot.slane %v611, 7
    %v622 = vadd.f32 %v159, %v616
    %v623 = vadd.f32 %v165, %v535
    %v624 = vadd.f32 %v457, %v617
    %v625 = vadd.f32 %v458, %v611
    %v626 = vxor.u32 %v622, 2147483648
    %v627 = vxor.u32 %v623, 2147483648
    %v628 = vxor.u32 %v624, 2147483648
    %v629 = vxor.u32 %v625, 2147483648
    %v630 = vmul.f32 %v626, 1.442695
    %v631 = vpow.pop %v630
    %v632 = vmul.f32 %v627, 1.442695
    %v633 = vpow.pop %v632
    %v634 = vmul.f32 %v628, 1.442695
    %v635 = vpow.pop %v634
    %v636 = vmul.f32 %v629, 1.442695
    %v637 = vpow.pop %v636
    %v638 = vadd.f32 %v631, 1.0
    %v639 = vadd.f32 %v633, 1.0
    %v640 = vadd.f32 %v635, 1.0
    %v641 = vadd.f32 %v637, 1.0
    %v642 = vrcp.pop %v638
    %v643 = vmul.f32 1.0, %v642
    %v644 = vrcp.pop %v639
    %v645 = vmul.f32 1.0, %v644
    %v646 = vrcp.pop %v640
    %v647 = vmul.f32 1.0, %v646
    %v648 = vrcp.pop %v641
    %v649 = vmul.f32 1.0, %v648
    %v650 = vtanh.pop %v622
    %v651 = vtanh.pop %v623
    %v652 = vtanh.pop %v624
    %v653 = vtanh.pop %v625
    %v658 = vrot.slane %v407, 7
    %v659 = vrot.slane %v408, 7
    %v660 = vrot.slane %v409, 7
    %v661 = vrot.slane %v410, 7
    %v666 = vmul.f32 %v643, %v658
    %v667 = vmul.f32 %v645, %v659
    %v668 = vmul.f32 %v647, %v660
    %v669 = vmul.f32 %v649, %v661
    %674 = vrot.lane.b32.xlu0 %v650, 64
    %v675 = vpop.permute.xlu0 %674
    %676 = vrot.lane.b32.xlu0 %v651, 64
    %v677 = vpop.permute.xlu0 %676
    %678 = vrot.lane.b32.xlu0 %v652, 64
    %v679 = vpop.permute.xlu0 %678
    %680 = vrot.lane.b32.xlu0 %v653, 64
    %v681 = vpop.permute.xlu0 %680
    %v686 = vmul.f32 %v643, %v675
    %v687 = vmul.f32 %v645, %v677
    %v688 = vmul.f32 %v647, %v679
    %v689 = vmul.f32 %v649, %v681
    %694 = vrot.lane.b32.xlu0 %v686, 32
    %v695 = vpop.permute.xlu0 %694
    %696 = vrot.lane.b32.xlu0 %v687, 32
    %v697 = vpop.permute.xlu0 %696
    %698 = vrot.lane.b32.xlu0 %v688, 32
    %v699 = vpop.permute.xlu0 %698
    %700 = vrot.lane.b32.xlu0 %v689, 32
    %v701 = vpop.permute.xlu0 %700
    %v706 = vadd.f32 %v666, %v695
    %v707 = vadd.f32 %v667, %v697
    %v708 = vadd.f32 %v668, %v699
    %v709 = vadd.f32 %v669, %v701
    %v710 = vtanh.pop %v706
    %v711 = vtanh.pop %v707
    %v712 = vtanh.pop %v708
    %v713 = vtanh.pop %v709
    %718 = vrot.lane.b32.xlu0 %v710, 64
    %v719 = vpop.permute.xlu0 %718
    %720 = vrot.lane.b32.xlu0 %v711, 64
    %v721 = vpop.permute.xlu0 %720
    %722 = vrot.lane.b32.xlu0 %v712, 64
    %v723 = vpop.permute.xlu0 %722
    %724 = vrot.lane.b32.xlu0 %v713, 64
    %v725 = vpop.permute.xlu0 %724
    %v730 = vmul.f32 %v643, %v719
    %v731 = vmul.f32 %v645, %v721
    %v732 = vmul.f32 %v647, %v723
    %v733 = vmul.f32 %v649, %v725
    %736 = vrot.lane.b32.xlu0 %v730, 32
    %v737 = vpop.permute.xlu0 %736
    %738 = vrot.lane.b32.xlu0 %v731, 32
    %v739 = vpop.permute.xlu0 %738
    %vm742 = vcmask 254977
    %743 = vst.msk [vmem:[#allocation2] sm:$0x2] %vm742, %v737
    %744 = vst.msk [vmem:[#allocation2 + $0x8] sm:$0x2] %vm742, %v739
    %747 = vrot.lane.b32.xlu0 %v732, 64
    %v748 = vpop.permute.xlu0 %747
    %749 = vrot.lane.b32.xlu0 %v733, 64
    %v750 = vpop.permute.xlu0 %749
    %vm753 = vcmask 517377
    %754 = vst.msk [vmem:[#allocation2 + $0x5] sm:$0x2] %vm753, %v748
    %755 = vst.msk [vmem:[#allocation2 + $0xd] sm:$0x2] %vm753, %v750
    %v756 = vrot.slane %v161, 3
    %v757 = vrot.slane %v167, 3
    %v760 = vrot.slane %v730, 1
    %v761 = vsel %vm462, %v731, %v760
    %762 = vrot.lane.b32.xlu0 %v761, 32
    %v763 = vpop.permute.xlu0 %762
    %v764 = vsel %vm183, %v763, 0
    %766 = vmatprep.subr.mxu0 0.0
    %767 = vmatpush1.msra.mxu0 %v169
    %768 = vmatprep.subr.mxu0 0.0
    %769 = vmatpush1.msra.mxu0 %v170
    %770 = vmatprep.subr.mxu0 0.0
    %771 = vmatpush1.msra.mxu0 %v171
    %772 = vmatprep.subr.mxu0 0.0
    %773 = vmatpush1.msra.mxu0 %v172
    %774 = vmatprep.subr.mxu0 0.0
    %775 = vmatpush1.msra.mxu0 0.0
    %776 = vmatprep.subr.mxu0 0.0
    %777 = vmatpush1.msra.mxu0 0.0
    %778 = vmatprep.subr.mxu0 0.0
    %779 = vmatpush1.msra.mxu0 0.0
    %780 = vmatprep.subr.mxu0 0.0
    %781 = vmatpush1.msra.mxu0 0.0
    %782 = vmatprep.subr.mxu0 0.0
    %783 = vmatpush1.msra.mxu0 0.0
    %784 = vmatprep.subr.mxu0 0.0
    %785 = vmatpush1.msra.mxu0 0.0
    %786 = vmatprep.subr.mxu0 0.0
    %787 = vmatpush1.msra.mxu0 0.0
    %788 = vmatprep.subr.mxu0 0.0
    %789 = vmatpush1.msra.mxu0 0.0
    %790 = vmatprep.subr.mxu0 0.0
    %791 = vmatpush1.msra.mxu0 0.0
    %792 = vmatprep.subr.mxu0 0.0
    %793 = vmatpush1.msra.mxu0 0.0
    %794 = vmatprep.subr.mxu0 0.0
    %795 = vmatpush1.msra.mxu0 0.0
    %796 = vmatprep.subr.mxu0 0.0
    %797 = vmatpush1.msra.mxu0 0.0
    %798 = vmatprep.subr.mxu0 0.0
    %799 = vmatpush1.msra.mxu0 0.0
    %800 = vmatprep.subr.mxu0 0.0
    %801 = vmatpush1.msra.mxu0 0.0
    %802 = vmatprep.subr.mxu0 0.0
    %803 = vmatpush1.msra.mxu0 0.0
    %804 = vmatprep.subr.mxu0 0.0
    %805 = vmatpush1.msra.mxu0 0.0
    %806 = vmatprep.subr.mxu0 0.0
    %807 = vmatpush1.msra.mxu0 0.0
    %808 = vmatprep.subr.mxu0 0.0
    %809 = vmatpush1.msra.mxu0 0.0
    %810 = vmatprep.subr.mxu0 0.0
    %811 = vmatpush1.msra.mxu0 0.0
    %812 = vmatprep.subr.mxu0 0.0
    %813 = vmatpush1.msra.mxu0 0.0
    %814 = vmatprep.subr.mxu0 0.0
    %815 = vmatpush1.msra.mxu0 0.0
    %816 = vmatprep.subr.mxu0 0.0
    %817 = vmatpush1.msra.mxu0 0.0
    %818 = vmatprep.subr.mxu0 0.0
    %819 = vmatpush1.msra.mxu0 0.0
    %820 = vmatprep.subr.mxu0 0.0
    %821 = vmatpush1.msra.mxu0 0.0
    %822 = vmatprep.subr.mxu0 0.0
    %823 = vmatpush1.msra.mxu0 0.0
    %824 = vmatprep.subr.mxu0 0.0
    %825 = vmatpush1.msra.mxu0 0.0
    %826 = vmatprep.subr.mxu0 0.0
    %827 = vmatpush1.msra.mxu0 0.0
    %828 = vmatprep.subr.mxu0 0.0
    %829 = vmatpush1.msra.mxu0 0.0
    %830 = vmatprep.mubr.f32.mxu0 0.0
    %831 = vmatmul.mubr.f32.gmra.mrb[0].mxu0 %v764
    %v832 = vpop.f32.mrb[0].mxu0
    %v833 = vadd.f32 0.0, %v832
    %v834 = vpop.f32.mrb[0].mxu0
    %835 = vdwg.mxu0
    %v836 = vrot.slane %v732, 1
    %v837 = vsel %vm462, %v733, %v836
    %838 = vrot.lane.b32.xlu0 %v837, 32
    %v839 = vpop.permute.xlu0 %838
    %v840 = vsel %vm183, %v839, 0
    %842 = vmatprep.subr.mxu0 0.0
    %843 = vmatpush1.msra.mxu0 %v173
    %844 = vmatprep.subr.mxu0 0.0
    %845 = vmatpush1.msra.mxu0 %v174
    %846 = vmatprep.subr.mxu0 0.0
    %847 = vmatpush1.msra.mxu0 %v175
    %848 = vmatprep.subr.mxu0 0.0
    %849 = vmatpush1.msra.mxu0 %v176
    %850 = vmatprep.subr.mxu0 0.0
    %851 = vmatpush1.msra.mxu0 0.0
    %852 = vmatprep.subr.mxu0 0.0
    %853 = vmatpush1.msra.mxu0 0.0
    %854 = vmatprep.subr.mxu0 0.0
    %855 = vmatpush1.msra.mxu0 0.0
    %856 = vmatprep.subr.mxu0 0.0
    %857 = vmatpush1.msra.mxu0 0.0
    %858 = vmatprep.subr.mxu0 0.0
    %859 = vmatpush1.msra.mxu0 0.0
    %860 = vmatprep.subr.mxu0 0.0
    %861 = vmatpush1.msra.mxu0 0.0
    %862 = vmatprep.subr.mxu0 0.0
    %863 = vmatpush1.msra.mxu0 0.0
    %864 = vmatprep.subr.mxu0 0.0
    %865 = vmatpush1.msra.mxu0 0.0
    %866 = vmatprep.subr.mxu0 0.0
    %867 = vmatpush1.msra.mxu0 0.0
    %868 = vmatprep.subr.mxu0 0.0
    %869 = vmatpush1.msra.mxu0 0.0
    %870 = vmatprep.subr.mxu0 0.0
    %871 = vmatpush1.msra.mxu0 0.0
    %872 = vmatprep.subr.mxu0 0.0
    %873 = vmatpush1.msra.mxu0 0.0
    %874 = vmatprep.subr.mxu0 0.0
    %875 = vmatpush1.msra.mxu0 0.0
    %876 = vmatprep.subr.mxu0 0.0
    %877 = vmatpush1.msra.mxu0 0.0
    %878 = vmatprep.subr.mxu0 0.0
    %879 = vmatpush1.msra.mxu0 0.0
    %880 = vmatprep.subr.mxu0 0.0
    %881 = vmatpush1.msra.mxu0 0.0
    %882 = vmatprep.subr.mxu0 0.0
    %883 = vmatpush1.msra.mxu0 0.0
    %884 = vmatprep.subr.mxu0 0.0
    %885 = vmatpush1.msra.mxu0 0.0
    %886 = vmatprep.subr.mxu0 0.0
    %887 = vmatpush1.msra.mxu0 0.0
    %888 = vmatprep.subr.mxu0 0.0
    %889 = vmatpush1.msra.mxu0 0.0
    %890 = vmatprep.subr.mxu0 0.0
    %891 = vmatpush1.msra.mxu0 0.0
    %892 = vmatprep.subr.mxu0 0.0
    %893 = vmatpush1.msra.mxu0 0.0
    %894 = vmatprep.subr.mxu0 0.0
    %895 = vmatpush1.msra.mxu0 0.0
    %896 = vmatprep.subr.mxu0 0.0
    %897 = vmatpush1.msra.mxu0 0.0
    %898 = vmatprep.subr.mxu0 0.0
    %899 = vmatpush1.msra.mxu0 0.0
    %900 = vmatprep.subr.mxu0 0.0
    %901 = vmatpush1.msra.mxu0 0.0
    %902 = vmatprep.subr.mxu0 0.0
    %903 = vmatpush1.msra.mxu0 0.0
    %904 = vmatprep.subr.mxu0 0.0
    %905 = vmatpush1.msra.mxu0 0.0
    %906 = vmatprep.mubr.f32.mxu0 0.0
    %907 = vmatmul.mubr.f32.gmra.mrb[0].mxu0 %v840
    %v908 = vpop.f32.mrb[0].mxu0
    %v909 = vadd.f32 0.0, %v908
    %v910 = vpop.f32.mrb[0].mxu0
    %911 = vdwg.mxu0
    %v914 = vrot.slane %v833, 6
    %v915 = vrot.slane %v833, 7
    %v916 = vrot.slane %v909, 6
    %v917 = vrot.slane %v909, 7
    %v922 = vadd.f32 %v159, %v914
    %v923 = vadd.f32 %v165, %v915
    %v924 = vadd.f32 %v756, %v916
    %v925 = vadd.f32 %v757, %v917
    %v926 = vxor.u32 %v922, 2147483648
    %v927 = vxor.u32 %v923, 2147483648
    %v928 = vxor.u32 %v924, 2147483648
    %v929 = vxor.u32 %v925, 2147483648
    %v930 = vmul.f32 %v926, 1.442695
    %v931 = vpow.pop %v930
    %v932 = vmul.f32 %v927, 1.442695
    %v933 = vpow.pop %v932
    %v934 = vmul.f32 %v928, 1.442695
    %v935 = vpow.pop %v934
    %v936 = vmul.f32 %v929, 1.442695
    %v937 = vpow.pop %v936
    %v938 = vadd.f32 %v931, 1.0
    %v939 = vadd.f32 %v933, 1.0
    %v940 = vadd.f32 %v935, 1.0
    %v941 = vadd.f32 %v937, 1.0
    %v942 = vrcp.pop %v938
    %v943 = vmul.f32 1.0, %v942
    %v944 = vrcp.pop %v939
    %v945 = vmul.f32 1.0, %v944
    %v946 = vrcp.pop %v940
    %v947 = vmul.f32 1.0, %v946
    %v948 = vrcp.pop %v941
    %v949 = vmul.f32 1.0, %v948
    %v950 = vtanh.pop %v922
    %v951 = vtanh.pop %v923
    %v952 = vtanh.pop %v924
    %v953 = vtanh.pop %v925
    %v958 = vrot.slane %v706, 7
    %v959 = vrot.slane %v707, 7
    %v960 = vrot.slane %v708, 7
    %v961 = vrot.slane %v709, 7
    %v966 = vmul.f32 %v943, %v958
    %v967 = vmul.f32 %v945, %v959
    %v968 = vmul.f32 %v947, %v960
    %v969 = vmul.f32 %v949, %v961
    %974 = vrot.lane.b32.xlu0 %v950, 64
    %v975 = vpop.permute.xlu0 %974
    %976 = vrot.lane.b32.xlu0 %v951, 64
    %v977 = vpop.permute.xlu0 %976
    %978 = vrot.lane.b32.xlu0 %v952, 64
    %v979 = vpop.permute.xlu0 %978
    %980 = vrot.lane.b32.xlu0 %v953, 64
    %v981 = vpop.permute.xlu0 %980
    %v986 = vmul.f32 %v943, %v975
    %v987 = vmul.f32 %v945, %v977
    %v988 = vmul.f32 %v947, %v979
    %v989 = vmul.f32 %v949, %v981
    %994 = vrot.lane.b32.xlu0 %v986, 32
    %v995 = vpop.permute.xlu0 %994
    %996 = vrot.lane.b32.xlu0 %v987, 32
    %v997 = vpop.permute.xlu0 %996
    %998 = vrot.lane.b32.xlu0 %v988, 32
    %v999 = vpop.permute.xlu0 %998
    %1000 = vrot.lane.b32.xlu0 %v989, 32
    %v1001 = vpop.permute.xlu0 %1000
    %v1006 = vadd.f32 %v966, %v995
    %v1007 = vadd.f32 %v967, %v997
    %v1008 = vadd.f32 %v968, %v999
    %v1009 = vadd.f32 %v969, %v1001
    %v1010 = vtanh.pop %v1006
    %v1011 = vtanh.pop %v1007
    %v1012 = vtanh.pop %v1008
    %v1013 = vtanh.pop %v1009
    %1018 = vrot.lane.b32.xlu0 %v1010, 64
    %v1019 = vpop.permute.xlu0 %1018
    %1020 = vrot.lane.b32.xlu0 %v1011, 64
    %v1021 = vpop.permute.xlu0 %1020
    %1022 = vrot.lane.b32.xlu0 %v1012, 64
    %v1023 = vpop.permute.xlu0 %1022
    %1024 = vrot.lane.b32.xlu0 %v1013, 64
    %v1025 = vpop.permute.xlu0 %1024
    %v1030 = vmul.f32 %v943, %v1019
    %v1031 = vmul.f32 %v945, %v1021
    %v1032 = vmul.f32 %v947, %v1023
    %v1033 = vmul.f32 %v949, %v1025
    %1036 = vrot.lane.b32.xlu0 %v1030, 32
    %v1037 = vpop.permute.xlu0 %1036
    %1038 = vrot.lane.b32.xlu0 %v1031, 32
    %v1039 = vpop.permute.xlu0 %1038
    %vm1042 = vcmask 256002
    %1043 = vst.msk [vmem:[#allocation2] sm:$0x4] %vm1042, %v1037
    %1044 = vst.msk [vmem:[#allocation2 + $0x8] sm:$0x4] %vm1042, %v1039
    %1047 = vrot.lane.b32.xlu0 %v1032, 64
    %v1048 = vpop.permute.xlu0 %1047
    %1049 = vrot.lane.b32.xlu0 %v1033, 64
    %v1050 = vpop.permute.xlu0 %1049
    %vm1053 = vcmask 518402
    %1054 = vst.msk [vmem:[#allocation2 + $0x3] sm:$0x4] %vm1053, %v1048
    %1055 = vst.msk [vmem:[#allocation2 + $0xb] sm:$0x4] %vm1053, %v1050
    %v1056 = vrot.slane %v161, 1
    %v1057 = vrot.slane %v167, 1
    %v1060 = vrot.slane %v1030, 2
    %v1061 = vrot.slane %v1031, 1
    %v1062 = vsel %vm462, %v1061, %v1060
    %1063 = vrot.lane.b32.xlu0 %v1062, 32
    %v1064 = vpop.permute.xlu0 %1063
    %v1065 = vsel %vm183, %v1064, 0
    %1067 = vmatprep.subr.mxu0 0.0
    %1068 = vmatpush1.msra.mxu0 %v169
    %1069 = vmatprep.subr.mxu0 0.0
    %1070 = vmatpush1.msra.mxu0 %v170
    %1071 = vmatprep.subr.mxu0 0.0
    %1072 = vmatpush1.msra.mxu0 %v171
    %1073 = vmatprep.subr.mxu0 0.0
    %1074 = vmatpush1.msra.mxu0 %v172
    %1075 = vmatprep.subr.mxu0 0.0
    %1076 = vmatpush1.msra.mxu0 0.0
    %1077 = vmatprep.subr.mxu0 0.0
    %1078 = vmatpush1.msra.mxu0 0.0
    %1079 = vmatprep.subr.mxu0 0.0
    %1080 = vmatpush1.msra.mxu0 0.0
    %1081 = vmatprep.subr.mxu0 0.0
    %1082 = vmatpush1.msra.mxu0 0.0
    %1083 = vmatprep.subr.mxu0 0.0
    %1084 = vmatpush1.msra.mxu0 0.0
    %1085 = vmatprep.subr.mxu0 0.0
    %1086 = vmatpush1.msra.mxu0 0.0
    %1087 = vmatprep.subr.mxu0 0.0
    %1088 = vmatpush1.msra.mxu0 0.0
    %1089 = vmatprep.subr.mxu0 0.0
    %1090 = vmatpush1.msra.mxu0 0.0
    %1091 = vmatprep.subr.mxu0 0.0
    %1092 = vmatpush1.msra.mxu0 0.0
    %1093 = vmatprep.subr.mxu0 0.0
    %1094 = vmatpush1.msra.mxu0 0.0
    %1095 = vmatprep.subr.mxu0 0.0
    %1096 = vmatpush1.msra.mxu0 0.0
    %1097 = vmatprep.subr.mxu0 0.0
    %1098 = vmatpush1.msra.mxu0 0.0
    %1099 = vmatprep.subr.mxu0 0.0
    %1100 = vmatpush1.msra.mxu0 0.0
    %1101 = vmatprep.subr.mxu0 0.0
    %1102 = vmatpush1.msra.mxu0 0.0
    %1103 = vmatprep.subr.mxu0 0.0
    %1104 = vmatpush1.msra.mxu0 0.0
    %1105 = vmatprep.subr.mxu0 0.0
    %1106 = vmatpush1.msra.mxu0 0.0
    %1107 = vmatprep.subr.mxu0 0.0
    %1108 = vmatpush1.msra.mxu0 0.0
    %1109 = vmatprep.subr.mxu0 0.0
    %1110 = vmatpush1.msra.mxu0 0.0
    %1111 = vmatprep.subr.mxu0 0.0
    %1112 = vmatpush1.msra.mxu0 0.0
    %1113 = vmatprep.subr.mxu0 0.0
    %1114 = vmatpush1.msra.mxu0 0.0
    %1115 = vmatprep.subr.mxu0 0.0
    %1116 = vmatpush1.msra.mxu0 0.0
    %1117 = vmatprep.subr.mxu0 0.0
    %1118 = vmatpush1.msra.mxu0 0.0
    %1119 = vmatprep.subr.mxu0 0.0
    %1120 = vmatpush1.msra.mxu0 0.0
    %1121 = vmatprep.subr.mxu0 0.0
    %1122 = vmatpush1.msra.mxu0 0.0
    %1123 = vmatprep.subr.mxu0 0.0
    %1124 = vmatpush1.msra.mxu0 0.0
    %1125 = vmatprep.subr.mxu0 0.0
    %1126 = vmatpush1.msra.mxu0 0.0
    %1127 = vmatprep.subr.mxu0 0.0
    %1128 = vmatpush1.msra.mxu0 0.0
    %1129 = vmatprep.subr.mxu0 0.0
    %1130 = vmatpush1.msra.mxu0 0.0
    %1131 = vmatprep.mubr.f32.mxu0 0.0
    %1132 = vmatmul.mubr.f32.gmra.mrb[0].mxu0 %v1065
    %v1133 = vpop.f32.mrb[0].mxu0
    %v1134 = vadd.f32 0.0, %v1133
    %v1135 = vpop.f32.mrb[0].mxu0
    %1136 = vdwg.mxu0
    %v1137 = vrot.slane %v1032, 2
    %v1138 = vrot.slane %v1033, 1
    %v1139 = vsel %vm462, %v1138, %v1137
    %1140 = vrot.lane.b32.xlu0 %v1139, 32
    %v1141 = vpop.permute.xlu0 %1140
    %v1142 = vsel %vm183, %v1141, 0
    %1144 = vmatprep.subr.mxu0 0.0
    %1145 = vmatpush1.msra.mxu0 %v173
    %1146 = vmatprep.subr.mxu0 0.0
    %1147 = vmatpush1.msra.mxu0 %v174
    %1148 = vmatprep.subr.mxu0 0.0
    %1149 = vmatpush1.msra.mxu0 %v175
    %1150 = vmatprep.subr.mxu0 0.0
    %1151 = vmatpush1.msra.mxu0 %v176
    %1152 = vmatprep.subr.mxu0 0.0
    %1153 = vmatpush1.msra.mxu0 0.0
    %1154 = vmatprep.subr.mxu0 0.0
    %1155 = vmatpush1.msra.mxu0 0.0
    %1156 = vmatprep.subr.mxu0 0.0
    %1157 = vmatpush1.msra.mxu0 0.0
    %1158 = vmatprep.subr.mxu0 0.0
    %1159 = vmatpush1.msra.mxu0 0.0
    %1160 = vmatprep.subr.mxu0 0.0
    %1161 = vmatpush1.msra.mxu0 0.0
    %1162 = vmatprep.subr.mxu0 0.0
    %1163 = vmatpush1.msra.mxu0 0.0
    %1164 = vmatprep.subr.mxu0 0.0
    %1165 = vmatpush1.msra.mxu0 0.0
    %1166 = vmatprep.subr.mxu0 0.0
    %1167 = vmatpush1.msra.mxu0 0.0
    %1168 = vmatprep.subr.mxu0 0.0
    %1169 = vmatpush1.msra.mxu0 0.0
    %1170 = vmatprep.subr.mxu0 0.0
    %1171 = vmatpush1.msra.mxu0 0.0
    %1172 = vmatprep.subr.mxu0 0.0
    %1173 = vmatpush1.msra.mxu0 0.0
    %1174 = vmatprep.subr.mxu0 0.0
    %1175 = vmatpush1.msra.mxu0 0.0
    %1176 = vmatprep.subr.mxu0 0.0
    %1177 = vmatpush1.msra.mxu0 0.0
    %1178 = vmatprep.subr.mxu0 0.0
    %1179 = vmatpush1.msra.mxu0 0.0
    %1180 = vmatprep.subr.mxu0 0.0
    %1181 = vmatpush1.msra.mxu0 0.0
    %1182 = vmatprep.subr.mxu0 0.0
    %1183 = vmatpush1.msra.mxu0 0.0
    %1184 = vmatprep.subr.mxu0 0.0
    %1185 = vmatpush1.msra.mxu0 0.0
    %1186 = vmatprep.subr.mxu0 0.0
    %1187 = vmatpush1.msra.mxu0 0.0
    %1188 = vmatprep.subr.mxu0 0.0
    %1189 = vmatpush1.msra.mxu0 0.0
    %1190 = vmatprep.subr.mxu0 0.0
    %1191 = vmatpush1.msra.mxu0 0.0
    %1192 = vmatprep.subr.mxu0 0.0
    %1193 = vmatpush1.msra.mxu0 0.0
    %1194 = vmatprep.subr.mxu0 0.0
    %1195 = vmatpush1.msra.mxu0 0.0
    %1196 = vmatprep.subr.mxu0 0.0
    %1197 = vmatpush1.msra.mxu0 0.0
    %1198 = vmatprep.subr.mxu0 0.0
    %1199 = vmatpush1.msra.mxu0 0.0
    %1200 = vmatprep.subr.mxu0 0.0
    %1201 = vmatpush1.msra.mxu0 0.0
    %1202 = vmatprep.subr.mxu0 0.0
    %1203 = vmatpush1.msra.mxu0 0.0
    %1204 = vmatprep.subr.mxu0 0.0
    %1205 = vmatpush1.msra.mxu0 0.0
    %1206 = vmatprep.subr.mxu0 0.0
    %1207 = vmatpush1.msra.mxu0 0.0
    %1208 = vmatprep.mubr.f32.mxu0 0.0
    %1209 = vmatmul.mubr.f32.gmra.mrb[0].mxu0 %v1142
    %v1210 = vpop.f32.mrb[0].mxu0
    %v1211 = vadd.f32 0.0, %v1210
    %v1212 = vpop.f32.mrb[0].mxu0
    %1213 = vdwg.mxu0
    %v1216 = vrot.slane %v1134, 5
    %v1217 = vrot.slane %v1134, 6
    %v1218 = vrot.slane %v1211, 5
    %v1219 = vrot.slane %v1211, 6
    %v1224 = vadd.f32 %v159, %v1216
    %v1225 = vadd.f32 %v165, %v1217
    %v1226 = vadd.f32 %v1056, %v1218
    %v1227 = vadd.f32 %v1057, %v1219
    %v1228 = vxor.u32 %v1224, 2147483648
    %v1229 = vxor.u32 %v1225, 2147483648
    %v1230 = vxor.u32 %v1226, 2147483648
    %v1231 = vxor.u32 %v1227, 2147483648
    %v1232 = vmul.f32 %v1228, 1.442695
    %v1233 = vpow.pop %v1232
    %v1234 = vmul.f32 %v1229, 1.442695
    %v1235 = vpow.pop %v1234
    %v1236 = vmul.f32 %v1230, 1.442695
    %v1237 = vpow.pop %v1236
    %v1238 = vmul.f32 %v1231, 1.442695
    %v1239 = vpow.pop %v1238
    %v1240 = vadd.f32 %v1233, 1.0
    %v1241 = vadd.f32 %v1235, 1.0
    %v1242 = vadd.f32 %v1237, 1.0
    %v1243 = vadd.f32 %v1239, 1.0
    %v1244 = vrcp.pop %v1240
    %v1245 = vmul.f32 1.0, %v1244
    %v1246 = vrcp.pop %v1241
    %v1247 = vmul.f32 1.0, %v1246
    %v1248 = vrcp.pop %v1242
    %v1249 = vmul.f32 1.0, %v1248
    %v1250 = vrcp.pop %v1243
    %v1251 = vmul.f32 1.0, %v1250
    %v1252 = vtanh.pop %v1224
    %v1253 = vtanh.pop %v1225
    %v1254 = vtanh.pop %v1226
    %v1255 = vtanh.pop %v1227
    %v1260 = vrot.slane %v1006, 7
    %v1261 = vrot.slane %v1007, 7
    %v1262 = vrot.slane %v1008, 7
    %v1263 = vrot.slane %v1009, 7
    %v1268 = vmul.f32 %v1245, %v1260
    %v1269 = vmul.f32 %v1247, %v1261
    %v1270 = vmul.f32 %v1249, %v1262
    %v1271 = vmul.f32 %v1251, %v1263
    %1276 = vrot.lane.b32.xlu0 %v1252, 64
    %v1277 = vpop.permute.xlu0 %1276
    %1278 = vrot.lane.b32.xlu0 %v1253, 64
    %v1279 = vpop.permute.xlu0 %1278
    %1280 = vrot.lane.b32.xlu0 %v1254, 64
    %v1281 = vpop.permute.xlu0 %1280
    %1282 = vrot.lane.b32.xlu0 %v1255, 64
    %v1283 = vpop.permute.xlu0 %1282
    %v1288 = vmul.f32 %v1245, %v1277
    %v1289 = vmul.f32 %v1247, %v1279
    %v1290 = vmul.f32 %v1249, %v1281
    %v1291 = vmul.f32 %v1251, %v1283
    %1296 = vrot.lane.b32.xlu0 %v1288, 32
    %v1297 = vpop.permute.xlu0 %1296
    %1298 = vrot.lane.b32.xlu0 %v1289, 32
    %v1299 = vpop.permute.xlu0 %1298
    %1300 = vrot.lane.b32.xlu0 %v1290, 32
    %v1301 = vpop.permute.xlu0 %1300
    %1302 = vrot.lane.b32.xlu0 %v1291, 32
    %v1303 = vpop.permute.xlu0 %1302
    %v1308 = vadd.f32 %v1268, %v1297
    %v1309 = vadd.f32 %v1269, %v1299
    %v1310 = vadd.f32 %v1270, %v1301
    %v1311 = vadd.f32 %v1271, %v1303
    %v1312 = vtanh.pop %v1308
    %v1313 = vtanh.pop %v1309
    %v1314 = vtanh.pop %v1310
    %v1315 = vtanh.pop %v1311
    %1320 = vrot.lane.b32.xlu0 %v1312, 64
    %v1321 = vpop.permute.xlu0 %1320
    %1322 = vrot.lane.b32.xlu0 %v1313, 64
    %v1323 = vpop.permute.xlu0 %1322
    %1324 = vrot.lane.b32.xlu0 %v1314, 64
    %v1325 = vpop.permute.xlu0 %1324
    %1326 = vrot.lane.b32.xlu0 %v1315, 64
    %v1327 = vpop.permute.xlu0 %1326
    %v1332 = vmul.f32 %v1245, %v1321
    %v1333 = vmul.f32 %v1247, %v1323
    %v1334 = vmul.f32 %v1249, %v1325
    %v1335 = vmul.f32 %v1251, %v1327
    %1338 = vrot.lane.b32.xlu0 %v1332, 32
    %v1339 = vpop.permute.xlu0 %1338
    %1340 = vrot.lane.b32.xlu0 %v1333, 32
    %v1341 = vpop.permute.xlu0 %1340
    %vm1344 = vcmask 257027
    %1345 = vst.msk [vmem:[#allocation2] sm:$0x8] %vm1344, %v1339
    %1346 = vst.msk [vmem:[#allocation2 + $0x8] sm:$0x8] %vm1344, %v1341
    %1349 = vrot.lane.b32.xlu0 %v1334, 64
    %v1350 = vpop.permute.xlu0 %1349
    %1351 = vrot.lane.b32.xlu0 %v1335, 64
    %v1352 = vpop.permute.xlu0 %1351
    %vm1355 = vcmask 519427
    %1356 = vst.msk [vmem:[#allocation2 + $0x1] sm:$0x8] %vm1355, %v1350
    %1357 = vst.msk [vmem:[#allocation2 + $0x9] sm:$0x8] %vm1355, %v1352
    %v1358 = vrot.slane %v1332, 3
    %v1359 = vrot.slane %v1333, 2
    %v1360 = vsel %vm462, %v1359, %v1358
    %1361 = vrot.lane.b32.xlu0 %v1360, 32
    %v1362 = vpop.permute.xlu0 %1361
    %v1363 = vsel %vm183, %v1362, 0
    %1365 = vmatprep.subr.mxu0 0.0
    %1366 = vmatpush1.msra.mxu0 %v169
    %1367 = vmatprep.subr.mxu0 0.0
    %1368 = vmatpush1.msra.mxu0 %v170
    %1369 = vmatprep.subr.mxu0 0.0
    %1370 = vmatpush1.msra.mxu0 %v171
    %1371 = vmatprep.subr.mxu0 0.0
    %1372 = vmatpush1.msra.mxu0 %v172
    %1373 = vmatprep.subr.mxu0 0.0
    %1374 = vmatpush1.msra.mxu0 0.0
    %1375 = vmatprep.subr.mxu0 0.0
    %1376 = vmatpush1.msra.mxu0 0.0
    %1377 = vmatprep.subr.mxu0 0.0
    %1378 = vmatpush1.msra.mxu0 0.0
    %1379 = vmatprep.subr.mxu0 0.0
    %1380 = vmatpush1.msra.mxu0 0.0
    %1381 = vmatprep.subr.mxu0 0.0
    %1382 = vmatpush1.msra.mxu0 0.0
    %1383 = vmatprep.subr.mxu0 0.0
    %1384 = vmatpush1.msra.mxu0 0.0
    %1385 = vmatprep.subr.mxu0 0.0
    %1386 = vmatpush1.msra.mxu0 0.0
    %1387 = vmatprep.subr.mxu0 0.0
    %1388 = vmatpush1.msra.mxu0 0.0
    %1389 = vmatprep.subr.mxu0 0.0
    %1390 = vmatpush1.msra.mxu0 0.0
    %1391 = vmatprep.subr.mxu0 0.0
    %1392 = vmatpush1.msra.mxu0 0.0
    %1393 = vmatprep.subr.mxu0 0.0
    %1394 = vmatpush1.msra.mxu0 0.0
    %1395 = vmatprep.subr.mxu0 0.0
    %1396 = vmatpush1.msra.mxu0 0.0
    %1397 = vmatprep.subr.mxu0 0.0
    %1398 = vmatpush1.msra.mxu0 0.0
    %1399 = vmatprep.subr.mxu0 0.0
    %1400 = vmatpush1.msra.mxu0 0.0
    %1401 = vmatprep.subr.mxu0 0.0
    %1402 = vmatpush1.msra.mxu0 0.0
    %1403 = vmatprep.subr.mxu0 0.0
    %1404 = vmatpush1.msra.mxu0 0.0
    %1405 = vmatprep.subr.mxu0 0.0
    %1406 = vmatpush1.msra.mxu0 0.0
    %1407 = vmatprep.subr.mxu0 0.0
    %1408 = vmatpush1.msra.mxu0 0.0
    %1409 = vmatprep.subr.mxu0 0.0
    %1410 = vmatpush1.msra.mxu0 0.0
    %1411 = vmatprep.subr.mxu0 0.0
    %1412 = vmatpush1.msra.mxu0 0.0
    %1413 = vmatprep.subr.mxu0 0.0
    %1414 = vmatpush1.msra.mxu0 0.0
    %1415 = vmatprep.subr.mxu0 0.0
    %1416 = vmatpush1.msra.mxu0 0.0
    %1417 = vmatprep.subr.mxu0 0.0
    %1418 = vmatpush1.msra.mxu0 0.0
    %1419 = vmatprep.subr.mxu0 0.0
    %1420 = vmatpush1.msra.mxu0 0.0
    %1421 = vmatprep.subr.mxu0 0.0
    %1422 = vmatpush1.msra.mxu0 0.0
    %1423 = vmatprep.subr.mxu0 0.0
    %1424 = vmatpush1.msra.mxu0 0.0
    %1425 = vmatprep.subr.mxu0 0.0
    %1426 = vmatpush1.msra.mxu0 0.0
    %1427 = vmatprep.subr.mxu0 0.0
    %1428 = vmatpush1.msra.mxu0 0.0
    %1429 = vmatprep.mubr.f32.mxu0 0.0
    %1430 = vmatmul.mubr.f32.gmra.mrb[0].mxu0 %v1363
    %v1431 = vpop.f32.mrb[0].mxu0
    %v1432 = vadd.f32 0.0, %v1431
    %v1433 = vpop.f32.mrb[0].mxu0
    %1434 = vdwg.mxu0
    %v1435 = vrot.slane %v1334, 3
    %v1436 = vrot.slane %v1335, 2
    %v1437 = vsel %vm462, %v1436, %v1435
    %1438 = vrot.lane.b32.xlu0 %v1437, 32
    %v1439 = vpop.permute.xlu0 %1438
    %v1440 = vsel %vm183, %v1439, 0
    %1442 = vmatprep.subr.mxu0 0.0
    %1443 = vmatpush1.msra.mxu0 %v173
    %1444 = vmatprep.subr.mxu0 0.0
    %1445 = vmatpush1.msra.mxu0 %v174
    %1446 = vmatprep.subr.mxu0 0.0
    %1447 = vmatpush1.msra.mxu0 %v175
    %1448 = vmatprep.subr.mxu0 0.0
    %1449 = vmatpush1.msra.mxu0 %v176
    %1450 = vmatprep.subr.mxu0 0.0
    %1451 = vmatpush1.msra.mxu0 0.0
    %1452 = vmatprep.subr.mxu0 0.0
    %1453 = vmatpush1.msra.mxu0 0.0
    %1454 = vmatprep.subr.mxu0 0.0
    %1455 = vmatpush1.msra.mxu0 0.0
    %1456 = vmatprep.subr.mxu0 0.0
    %1457 = vmatpush1.msra.mxu0 0.0
    %1458 = vmatprep.subr.mxu0 0.0
    %1459 = vmatpush1.msra.mxu0 0.0
    %1460 = vmatprep.subr.mxu0 0.0
    %1461 = vmatpush1.msra.mxu0 0.0
    %1462 = vmatprep.subr.mxu0 0.0
    %1463 = vmatpush1.msra.mxu0 0.0
    %1464 = vmatprep.subr.mxu0 0.0
    %1465 = vmatpush1.msra.mxu0 0.0
    %1466 = vmatprep.subr.mxu0 0.0
    %1467 = vmatpush1.msra.mxu0 0.0
    %1468 = vmatprep.subr.mxu0 0.0
    %1469 = vmatpush1.msra.mxu0 0.0
    %1470 = vmatprep.subr.mxu0 0.0
    %1471 = vmatpush1.msra.mxu0 0.0
    %1472 = vmatprep.subr.mxu0 0.0
    %1473 = vmatpush1.msra.mxu0 0.0
    %1474 = vmatprep.subr.mxu0 0.0
    %1475 = vmatpush1.msra.mxu0 0.0
    %1476 = vmatprep.subr.mxu0 0.0
    %1477 = vmatpush1.msra.mxu0 0.0
    %1478 = vmatprep.subr.mxu0 0.0
    %1479 = vmatpush1.msra.mxu0 0.0
    %1480 = vmatprep.subr.mxu0 0.0
    %1481 = vmatpush1.msra.mxu0 0.0
    %1482 = vmatprep.subr.mxu0 0.0
    %1483 = vmatpush1.msra.mxu0 0.0
    %1484 = vmatprep.subr.mxu0 0.0
    %1485 = vmatpush1.msra.mxu0 0.0
    %1486 = vmatprep.subr.mxu0 0.0
    %1487 = vmatpush1.msra.mxu0 0.0
    %1488 = vmatprep.subr.mxu0 0.0
    %1489 = vmatpush1.msra.mxu0 0.0
    %1490 = vmatprep.subr.mxu0 0.0
    %1491 = vmatpush1.msra.mxu0 0.0
    %1492 = vmatprep.subr.mxu0 0.0
    %1493 = vmatpush1.msra.mxu0 0.0
    %1494 = vmatprep.subr.mxu0 0.0
    %1495 = vmatpush1.msra.mxu0 0.0
    %1496 = vmatprep.subr.mxu0 0.0
    %1497 = vmatpush1.msra.mxu0 0.0
    %1498 = vmatprep.subr.mxu0 0.0
    %1499 = vmatpush1.msra.mxu0 0.0
    %1500 = vmatprep.subr.mxu0 0.0
    %1501 = vmatpush1.msra.mxu0 0.0
    %1502 = vmatprep.subr.mxu0 0.0
    %1503 = vmatpush1.msra.mxu0 0.0
    %1504 = vmatprep.subr.mxu0 0.0
    %1505 = vmatpush1.msra.mxu0 0.0
    %1506 = vmatprep.mubr.f32.mxu0 0.0
    %1507 = vmatmul.mubr.f32.gmra.mrb[0].mxu0 %v1440
    %v1508 = vpop.f32.mrb[0].mxu0
    %v1509 = vadd.f32 0.0, %v1508
    %v1510 = vpop.f32.mrb[0].mxu0
    %1511 = vdwg.mxu0
    %v1514 = vrot.slane %v1432, 4
    %v1515 = vrot.slane %v1432, 5
    %v1516 = vrot.slane %v1509, 4
    %v1517 = vrot.slane %v1509, 5
    %v1522 = vadd.f32 %v159, %v1514
    %v1523 = vadd.f32 %v165, %v1515
    %v1524 = vadd.f32 %v179, %v1516
    %v1525 = vadd.f32 %v180, %v1517
    %v1526 = vxor.u32 %v1522, 2147483648
    %v1527 = vxor.u32 %v1523, 2147483648
    %v1528 = vxor.u32 %v1524, 2147483648
    %v1529 = vxor.u32 %v1525, 2147483648
    %v1530 = vmul.f32 %v1526, 1.442695
    %v1531 = vpow.pop %v1530
    %v1532 = vmul.f32 %v1527, 1.442695
    %v1533 = vpow.pop %v1532
    %v1534 = vmul.f32 %v1528, 1.442695
    %v1535 = vpow.pop %v1534
    %v1536 = vmul.f32 %v1529, 1.442695
    %v1537 = vpow.pop %v1536
    %v1538 = vadd.f32 %v1531, 1.0
    %v1539 = vadd.f32 %v1533, 1.0
    %v1540 = vadd.f32 %v1535, 1.0
    %v1541 = vadd.f32 %v1537, 1.0
    %v1542 = vrcp.pop %v1538
    %v1543 = vmul.f32 1.0, %v1542
    %v1544 = vrcp.pop %v1539
    %v1545 = vmul.f32 1.0, %v1544
    %v1546 = vrcp.pop %v1540
    %v1547 = vmul.f32 1.0, %v1546
    %v1548 = vrcp.pop %v1541
    %v1549 = vmul.f32 1.0, %v1548
    %v1550 = vtanh.pop %v1522
    %v1551 = vtanh.pop %v1523
    %v1552 = vtanh.pop %v1524
    %v1553 = vtanh.pop %v1525
    %v1558 = vrot.slane %v1308, 7
    %v1559 = vrot.slane %v1309, 7
    %v1560 = vrot.slane %v1310, 7
    %v1561 = vrot.slane %v1311, 7
    %v1566 = vmul.f32 %v1543, %v1558
    %v1567 = vmul.f32 %v1545, %v1559
    %v1568 = vmul.f32 %v1547, %v1560
    %v1569 = vmul.f32 %v1549, %v1561
    %1574 = vrot.lane.b32.xlu0 %v1550, 64
    %v1575 = vpop.permute.xlu0 %1574
    %1576 = vrot.lane.b32.xlu0 %v1551, 64
    %v1577 = vpop.permute.xlu0 %1576
    %1578 = vrot.lane.b32.xlu0 %v1552, 64
    %v1579 = vpop.permute.xlu0 %1578
    %1580 = vrot.lane.b32.xlu0 %v1553, 64
    %v1581 = vpop.permute.xlu0 %1580
    %v1586 = vmul.f32 %v1543, %v1575
    %v1587 = vmul.f32 %v1545, %v1577
    %v1588 = vmul.f32 %v1547, %v1579
    %v1589 = vmul.f32 %v1549, %v1581
    %1594 = vrot.lane.b32.xlu0 %v1586, 32
    %v1595 = vpop.permute.xlu0 %1594
    %1596 = vrot.lane.b32.xlu0 %v1587, 32
    %v1597 = vpop.permute.xlu0 %1596
    %1598 = vrot.lane.b32.xlu0 %v1588, 32
    %v1599 = vpop.permute.xlu0 %1598
    %1600 = vrot.lane.b32.xlu0 %v1589, 32
    %v1601 = vpop.permute.xlu0 %1600
    %v1606 = vadd.f32 %v1566, %v1595
    %v1607 = vadd.f32 %v1567, %v1597
    %v1608 = vadd.f32 %v1568, %v1599
    %v1609 = vadd.f32 %v1569, %v1601
    %v1610 = vtanh.pop %v1606
    %v1611 = vtanh.pop %v1607
    %v1612 = vtanh.pop %v1608
    %v1613 = vtanh.pop %v1609
    %1618 = vrot.lane.b32.xlu0 %v1610, 64
    %v1619 = vpop.permute.xlu0 %1618
    %1620 = vrot.lane.b32.xlu0 %v1611, 64
    %v1621 = vpop.permute.xlu0 %1620
    %1622 = vrot.lane.b32.xlu0 %v1612, 64
    %v1623 = vpop.permute.xlu0 %1622
    %1624 = vrot.lane.b32.xlu0 %v1613, 64
    %v1625 = vpop.permute.xlu0 %1624
    %v1630 = vmul.f32 %v1543, %v1619
    %v1631 = vmul.f32 %v1545, %v1621
    %v1632 = vmul.f32 %v1547, %v1623
    %v1633 = vmul.f32 %v1549, %v1625
    %1636 = vrot.lane.b32.xlu0 %v1630, 32
    %v1637 = vpop.permute.xlu0 %1636
    %1638 = vrot.lane.b32.xlu0 %v1631, 32
    %v1639 = vpop.permute.xlu0 %1638
    %vm1642 = vcmask 258052
    %1643 = vst.msk [vmem:[#allocation2] sm:$0x10] %vm1642, %v1637
    %1644 = vst.msk [vmem:[#allocation2 + $0x8] sm:$0x10] %vm1642, %v1639
    %1647 = vrot.lane.b32.xlu0 %v1632, 64
    %v1648 = vpop.permute.xlu0 %1647
    %1649 = vrot.lane.b32.xlu0 %v1633, 64
    %v1650 = vpop.permute.xlu0 %1649
    %vm1653 = vcmask 520452
    %1654 = vst.msk [vmem:[#allocation2 - $0x1] sm:$0x10] %vm1653, %v1648
    %1655 = vst.msk [vmem:[#allocation2 + $0x7] sm:$0x10] %vm1653, %v1650
    %v1656 = vrot.slane %v1630, 4
    %v1657 = vrot.slane %v1631, 3
    %v1658 = vsel %vm462, %v1657, %v1656
    %1659 = vrot.lane.b32.xlu0 %v1658, 32
    %v1660 = vpop.permute.xlu0 %1659
    %v1661 = vsel %vm183, %v1660, 0
    %1663 = vmatprep.subr.mxu0 0.0
    %1664 = vmatpush1.msra.mxu0 %v169
    %1665 = vmatprep.subr.mxu0 0.0
    %1666 = vmatpush1.msra.mxu0 %v170
    %1667 = vmatprep.subr.mxu0 0.0
    %1668 = vmatpush1.msra.mxu0 %v171
    %1669 = vmatprep.subr.mxu0 0.0
    %1670 = vmatpush1.msra.mxu0 %v172
    %1671 = vmatprep.subr.mxu0 0.0
    %1672 = vmatpush1.msra.mxu0 0.0
    %1673 = vmatprep.subr.mxu0 0.0
    %1674 = vmatpush1.msra.mxu0 0.0
    %1675 = vmatprep.subr.mxu0 0.0
    %1676 = vmatpush1.msra.mxu0 0.0
    %1677 = vmatprep.subr.mxu0 0.0
    %1678 = vmatpush1.msra.mxu0 0.0
    %1679 = vmatprep.subr.mxu0 0.0
    %1680 = vmatpush1.msra.mxu0 0.0
    %1681 = vmatprep.subr.mxu0 0.0
    %1682 = vmatpush1.msra.mxu0 0.0
    %1683 = vmatprep.subr.mxu0 0.0
    %1684 = vmatpush1.msra.mxu0 0.0
    %1685 = vmatprep.subr.mxu0 0.0
    %1686 = vmatpush1.msra.mxu0 0.0
    %1687 = vmatprep.subr.mxu0 0.0
    %1688 = vmatpush1.msra.mxu0 0.0
    %1689 = vmatprep.subr.mxu0 0.0
    %1690 = vmatpush1.msra.mxu0 0.0
    %1691 = vmatprep.subr.mxu0 0.0
    %1692 = vmatpush1.msra.mxu0 0.0
    %1693 = vmatprep.subr.mxu0 0.0
    %1694 = vmatpush1.msra.mxu0 0.0
    %1695 = vmatprep.subr.mxu0 0.0
    %1696 = vmatpush1.msra.mxu0 0.0
    %1697 = vmatprep.subr.mxu0 0.0
    %1698 = vmatpush1.msra.mxu0 0.0
    %1699 = vmatprep.subr.mxu0 0.0
    %1700 = vmatpush1.msra.mxu0 0.0
    %1701 = vmatprep.subr.mxu0 0.0
    %1702 = vmatpush1.msra.mxu0 0.0
    %1703 = vmatprep.subr.mxu0 0.0
    %1704 = vmatpush1.msra.mxu0 0.0
    %1705 = vmatprep.subr.mxu0 0.0
    %1706 = vmatpush1.msra.mxu0 0.0
    %1707 = vmatprep.subr.mxu0 0.0
    %1708 = vmatpush1.msra.mxu0 0.0
    %1709 = vmatprep.subr.mxu0 0.0
    %1710 = vmatpush1.msra.mxu0 0.0
    %1711 = vmatprep.subr.mxu0 0.0
    %1712 = vmatpush1.msra.mxu0 0.0
    %1713 = vmatprep.subr.mxu0 0.0
    %1714 = vmatpush1.msra.mxu0 0.0
    %1715 = vmatprep.subr.mxu0 0.0
    %1716 = vmatpush1.msra.mxu0 0.0
    %1717 = vmatprep.subr.mxu0 0.0
    %1718 = vmatpush1.msra.mxu0 0.0
    %1719 = vmatprep.subr.mxu0 0.0
    %1720 = vmatpush1.msra.mxu0 0.0
    %1721 = vmatprep.subr.mxu0 0.0
    %1722 = vmatpush1.msra.mxu0 0.0
    %1723 = vmatprep.subr.mxu0 0.0
    %1724 = vmatpush1.msra.mxu0 0.0
    %1725 = vmatprep.subr.mxu0 0.0
    %1726 = vmatpush1.msra.mxu0 0.0
    %1727 = vmatprep.mubr.f32.mxu0 0.0
    %1728 = vmatmul.mubr.f32.gmra.mrb[0].mxu0 %v1661
    %v1729 = vpop.f32.mrb[0].mxu0
    %v1730 = vadd.f32 0.0, %v1729
    %v1731 = vpop.f32.mrb[0].mxu0
    %1732 = vdwg.mxu0
    %v1733 = vrot.slane %v1632, 4
    %v1734 = vrot.slane %v1633, 3
    %v1735 = vsel %vm462, %v1734, %v1733
    %1736 = vrot.lane.b32.xlu0 %v1735, 32
    %v1737 = vpop.permute.xlu0 %1736
    %v1738 = vsel %vm183, %v1737, 0
    %1740 = vmatprep.subr.mxu0 0.0
    %1741 = vmatpush1.msra.mxu0 %v173
    %1742 = vmatprep.subr.mxu0 0.0
    %1743 = vmatpush1.msra.mxu0 %v174
    %1744 = vmatprep.subr.mxu0 0.0
    %1745 = vmatpush1.msra.mxu0 %v175
    %1746 = vmatprep.subr.mxu0 0.0
    %1747 = vmatpush1.msra.mxu0 %v176
    %1748 = vmatprep.subr.mxu0 0.0
    %1749 = vmatpush1.msra.mxu0 0.0
    %1750 = vmatprep.subr.mxu0 0.0
    %1751 = vmatpush1.msra.mxu0 0.0
    %1752 = vmatprep.subr.mxu0 0.0
    %1753 = vmatpush1.msra.mxu0 0.0
    %1754 = vmatprep.subr.mxu0 0.0
    %1755 = vmatpush1.msra.mxu0 0.0
    %1756 = vmatprep.subr.mxu0 0.0
    %1757 = vmatpush1.msra.mxu0 0.0
    %1758 = vmatprep.subr.mxu0 0.0
    %1759 = vmatpush1.msra.mxu0 0.0
    %1760 = vmatprep.subr.mxu0 0.0
    %1761 = vmatpush1.msra.mxu0 0.0
    %1762 = vmatprep.subr.mxu0 0.0
    %1763 = vmatpush1.msra.mxu0 0.0
    %1764 = vmatprep.subr.mxu0 0.0
    %1765 = vmatpush1.msra.mxu0 0.0
    %1766 = vmatprep.subr.mxu0 0.0
    %1767 = vmatpush1.msra.mxu0 0.0
    %1768 = vmatprep.subr.mxu0 0.0
    %1769 = vmatpush1.msra.mxu0 0.0
    %1770 = vmatprep.subr.mxu0 0.0
    %1771 = vmatpush1.msra.mxu0 0.0
    %1772 = vmatprep.subr.mxu0 0.0
    %1773 = vmatpush1.msra.mxu0 0.0
    %1774 = vmatprep.subr.mxu0 0.0
    %1775 = vmatpush1.msra.mxu0 0.0
    %1776 = vmatprep.subr.mxu0 0.0
    %1777 = vmatpush1.msra.mxu0 0.0
    %1778 = vmatprep.subr.mxu0 0.0
    %1779 = vmatpush1.msra.mxu0 0.0
    %1780 = vmatprep.subr.mxu0 0.0
    %1781 = vmatpush1.msra.mxu0 0.0
    %1782 = vmatprep.subr.mxu0 0.0
    %1783 = vmatpush1.msra.mxu0 0.0
    %1784 = vmatprep.subr.mxu0 0.0
    %1785 = vmatpush1.msra.mxu0 0.0
    %1786 = vmatprep.subr.mxu0 0.0
    %1787 = vmatpush1.msra.mxu0 0.0
    %1788 = vmatprep.subr.mxu0 0.0
    %1789 = vmatpush1.msra.mxu0 0.0
    %1790 = vmatprep.subr.mxu0 0.0
    %1791 = vmatpush1.msra.mxu0 0.0
    %1792 = vmatprep.subr.mxu0 0.0
    %1793 = vmatpush1.msra.mxu0 0.0
    %1794 = vmatprep.subr.mxu0 0.0
    %1795 = vmatpush1.msra.mxu0 0.0
    %1796 = vmatprep.subr.mxu0 0.0
    %1797 = vmatpush1.msra.mxu0 0.0
    %1798 = vmatprep.subr.mxu0 0.0
    %1799 = vmatpush1.msra.mxu0 0.0
    %1800 = vmatprep.subr.mxu0 0.0
    %1801 = vmatpush1.msra.mxu0 0.0
    %1802 = vmatprep.subr.mxu0 0.0
    %1803 = vmatpush1.msra.mxu0 0.0
    %1804 = vmatprep.mubr.f32.mxu0 0.0
    %1805 = vmatmul.mubr.f32.gmra.mrb[0].mxu0 %v1738
    %v1806 = vpop.f32.mrb[0].mxu0
    %v1807 = vadd.f32 0.0, %v1806
    %v1808 = vpop.f32.mrb[0].mxu0
    %1809 = vdwg.mxu0
    %v1812 = vrot.slane %v1730, 3
    %v1813 = vrot.slane %v1730, 4
    %v1814 = vrot.slane %v1807, 3
    %v1815 = vrot.slane %v1807, 4
    %v1820 = vadd.f32 %v159, %v1812
    %v1821 = vadd.f32 %v165, %v1813
    %v1822 = vadd.f32 %v457, %v1814
    %v1823 = vadd.f32 %v458, %v1815
    %v1824 = vxor.u32 %v1820, 2147483648
    %v1825 = vxor.u32 %v1821, 2147483648
    %v1826 = vxor.u32 %v1822, 2147483648
    %v1827 = vxor.u32 %v1823, 2147483648
    %v1828 = vmul.f32 %v1824, 1.442695
    %v1829 = vpow.pop %v1828
    %v1830 = vmul.f32 %v1825, 1.442695
    %v1831 = vpow.pop %v1830
    %v1832 = vmul.f32 %v1826, 1.442695
    %v1833 = vpow.pop %v1832
    %v1834 = vmul.f32 %v1827, 1.442695
    %v1835 = vpow.pop %v1834
    %v1836 = vadd.f32 %v1829, 1.0
    %v1837 = vadd.f32 %v1831, 1.0
    %v1838 = vadd.f32 %v1833, 1.0
    %v1839 = vadd.f32 %v1835, 1.0
    %v1840 = vrcp.pop %v1836
    %v1841 = vmul.f32 1.0, %v1840
    %v1842 = vrcp.pop %v1837
    %v1843 = vmul.f32 1.0, %v1842
    %v1844 = vrcp.pop %v1838
    %v1845 = vmul.f32 1.0, %v1844
    %v1846 = vrcp.pop %v1839
    %v1847 = vmul.f32 1.0, %v1846
    %v1848 = vtanh.pop %v1820
    %v1849 = vtanh.pop %v1821
    %v1850 = vtanh.pop %v1822
    %v1851 = vtanh.pop %v1823
    %v1856 = vrot.slane %v1606, 7
    %v1857 = vrot.slane %v1607, 7
    %v1858 = vrot.slane %v1608, 7
    %v1859 = vrot.slane %v1609, 7
    %v1864 = vmul.f32 %v1841, %v1856
    %v1865 = vmul.f32 %v1843, %v1857
    %v1866 = vmul.f32 %v1845, %v1858
    %v1867 = vmul.f32 %v1847, %v1859
    %1872 = vrot.lane.b32.xlu0 %v1848, 64
    %v1873 = vpop.permute.xlu0 %1872
    %1874 = vrot.lane.b32.xlu0 %v1849, 64
    %v1875 = vpop.permute.xlu0 %1874
    %1876 = vrot.lane.b32.xlu0 %v1850, 64
    %v1877 = vpop.permute.xlu0 %1876
    %1878 = vrot.lane.b32.xlu0 %v1851, 64
    %v1879 = vpop.permute.xlu0 %1878
    %v1884 = vmul.f32 %v1841, %v1873
    %v1885 = vmul.f32 %v1843, %v1875
    %v1886 = vmul.f32 %v1845, %v1877
    %v1887 = vmul.f32 %v1847, %v1879
    %1892 = vrot.lane.b32.xlu0 %v1884, 32
    %v1893 = vpop.permute.xlu0 %1892
    %1894 = vrot.lane.b32.xlu0 %v1885, 32
    %v1895 = vpop.permute.xlu0 %1894
    %1896 = vrot.lane.b32.xlu0 %v1886, 32
    %v1897 = vpop.permute.xlu0 %1896
    %1898 = vrot.lane.b32.xlu0 %v1887, 32
    %v1899 = vpop.permute.xlu0 %1898
    %v1904 = vadd.f32 %v1864, %v1893
    %v1905 = vadd.f32 %v1865, %v1895
    %v1906 = vadd.f32 %v1866, %v1897
    %v1907 = vadd.f32 %v1867, %v1899
    %v1908 = vtanh.pop %v1904
    %v1909 = vtanh.pop %v1905
    %v1910 = vtanh.pop %v1906
    %v1911 = vtanh.pop %v1907
    %1916 = vrot.lane.b32.xlu0 %v1908, 64
    %v1917 = vpop.permute.xlu0 %1916
    %1918 = vrot.lane.b32.xlu0 %v1909, 64
    %v1919 = vpop.permute.xlu0 %1918
    %1920 = vrot.lane.b32.xlu0 %v1910, 64
    %v1921 = vpop.permute.xlu0 %1920
    %1922 = vrot.lane.b32.xlu0 %v1911, 64
    %v1923 = vpop.permute.xlu0 %1922
    %v1928 = vmul.f32 %v1841, %v1917
    %v1929 = vmul.f32 %v1843, %v1919
    %v1930 = vmul.f32 %v1845, %v1921
    %v1931 = vmul.f32 %v1847, %v1923
    %1934 = vrot.lane.b32.xlu0 %v1928, 32
    %v1935 = vpop.permute.xlu0 %1934
    %1936 = vrot.lane.b32.xlu0 %v1929, 32
    %v1937 = vpop.permute.xlu0 %1936
    %vm1940 = vcmask 259077
    %1941 = vst.msk [vmem:[#allocation2] sm:$0x20] %vm1940, %v1935
    %1942 = vst.msk [vmem:[#allocation2 + $0x8] sm:$0x20] %vm1940, %v1937
    %1945 = vrot.lane.b32.xlu0 %v1930, 64
    %v1946 = vpop.permute.xlu0 %1945
    %1947 = vrot.lane.b32.xlu0 %v1931, 64
    %v1948 = vpop.permute.xlu0 %1947
    %vm1951 = vcmask 521477
    %1952 = vst.msk [vmem:[#allocation2 - $0x3] sm:$0x20] %vm1951, %v1946
    %1953 = vst.msk [vmem:[#allocation2 + $0x5] sm:$0x20] %vm1951, %v1948
    %v1954 = vrot.slane %v1928, 5
    %v1955 = vrot.slane %v1929, 4
    %v1956 = vsel %vm462, %v1955, %v1954
    %1957 = vrot.lane.b32.xlu0 %v1956, 32
    %v1958 = vpop.permute.xlu0 %1957
    %v1959 = vsel %vm183, %v1958, 0
    %1961 = vmatprep.subr.mxu0 0.0
    %1962 = vmatpush1.msra.mxu0 %v169
    %1963 = vmatprep.subr.mxu0 0.0
    %1964 = vmatpush1.msra.mxu0 %v170
    %1965 = vmatprep.subr.mxu0 0.0
    %1966 = vmatpush1.msra.mxu0 %v171
    %1967 = vmatprep.subr.mxu0 0.0
    %1968 = vmatpush1.msra.mxu0 %v172
    %1969 = vmatprep.subr.mxu0 0.0
    %1970 = vmatpush1.msra.mxu0 0.0
    %1971 = vmatprep.subr.mxu0 0.0
    %1972 = vmatpush1.msra.mxu0 0.0
    %1973 = vmatprep.subr.mxu0 0.0
    %1974 = vmatpush1.msra.mxu0 0.0
    %1975 = vmatprep.subr.mxu0 0.0
    %1976 = vmatpush1.msra.mxu0 0.0
    %1977 = vmatprep.subr.mxu0 0.0
    %1978 = vmatpush1.msra.mxu0 0.0
    %1979 = vmatprep.subr.mxu0 0.0
    %1980 = vmatpush1.msra.mxu0 0.0
    %1981 = vmatprep.subr.mxu0 0.0
    %1982 = vmatpush1.msra.mxu0 0.0
    %1983 = vmatprep.subr.mxu0 0.0
    %1984 = vmatpush1.msra.mxu0 0.0
    %1985 = vmatprep.subr.mxu0 0.0
    %1986 = vmatpush1.msra.mxu0 0.0
    %1987 = vmatprep.subr.mxu0 0.0
    %1988 = vmatpush1.msra.mxu0 0.0
    %1989 = vmatprep.subr.mxu0 0.0
    %1990 = vmatpush1.msra.mxu0 0.0
    %1991 = vmatprep.subr.mxu0 0.0
    %1992 = vmatpush1.msra.mxu0 0.0
    %1993 = vmatprep.subr.mxu0 0.0
    %1994 = vmatpush1.msra.mxu0 0.0
    %1995 = vmatprep.subr.mxu0 0.0
    %1996 = vmatpush1.msra.mxu0 0.0
    %1997 = vmatprep.subr.mxu0 0.0
    %1998 = vmatpush1.msra.mxu0 0.0
    %1999 = vmatprep.subr.mxu0 0.0
    %2000 = vmatpush1.msra.mxu0 0.0
    %2001 = vmatprep.subr.mxu0 0.0
    %2002 = vmatpush1.msra.mxu0 0.0
    %2003 = vmatprep.subr.mxu0 0.0
    %2004 = vmatpush1.msra.mxu0 0.0
    %2005 = vmatprep.subr.mxu0 0.0
    %2006 = vmatpush1.msra.mxu0 0.0
    %2007 = vmatprep.subr.mxu0 0.0
    %2008 = vmatpush1.msra.mxu0 0.0
    %2009 = vmatprep.subr.mxu0 0.0
    %2010 = vmatpush1.msra.mxu0 0.0
    %2011 = vmatprep.subr.mxu0 0.0
    %2012 = vmatpush1.msra.mxu0 0.0
    %2013 = vmatprep.subr.mxu0 0.0
    %2014 = vmatpush1.msra.mxu0 0.0
    %2015 = vmatprep.subr.mxu0 0.0
    %2016 = vmatpush1.msra.mxu0 0.0
    %2017 = vmatprep.subr.mxu0 0.0
    %2018 = vmatpush1.msra.mxu0 0.0
    %2019 = vmatprep.subr.mxu0 0.0
    %2020 = vmatpush1.msra.mxu0 0.0
    %2021 = vmatprep.subr.mxu0 0.0
    %2022 = vmatpush1.msra.mxu0 0.0
    %2023 = vmatprep.subr.mxu0 0.0
    %2024 = vmatpush1.msra.mxu0 0.0
    %2025 = vmatprep.mubr.f32.mxu0 0.0
    %2026 = vmatmul.mubr.f32.gmra.mrb[0].mxu0 %v1959
    %v2027 = vpop.f32.mrb[0].mxu0
    %v2028 = vadd.f32 0.0, %v2027
    %v2029 = vpop.f32.mrb[0].mxu0
    %2030 = vdwg.mxu0
    %v2031 = vrot.slane %v1930, 5
    %v2032 = vrot.slane %v1931, 4
    %v2033 = vsel %vm462, %v2032, %v2031
    %2034 = vrot.lane.b32.xlu0 %v2033, 32
    %v2035 = vpop.permute.xlu0 %2034
    %v2036 = vsel %vm183, %v2035, 0
    %2038 = vmatprep.subr.mxu0 0.0
    %2039 = vmatpush1.msra.mxu0 %v173
    %2040 = vmatprep.subr.mxu0 0.0
    %2041 = vmatpush1.msra.mxu0 %v174
    %2042 = vmatprep.subr.mxu0 0.0
    %2043 = vmatpush1.msra.mxu0 %v175
    %2044 = vmatprep.subr.mxu0 0.0
    %2045 = vmatpush1.msra.mxu0 %v176
    %2046 = vmatprep.subr.mxu0 0.0
    %2047 = vmatpush1.msra.mxu0 0.0
    %2048 = vmatprep.subr.mxu0 0.0
    %2049 = vmatpush1.msra.mxu0 0.0
    %2050 = vmatprep.subr.mxu0 0.0
    %2051 = vmatpush1.msra.mxu0 0.0
    %2052 = vmatprep.subr.mxu0 0.0
    %2053 = vmatpush1.msra.mxu0 0.0
    %2054 = vmatprep.subr.mxu0 0.0
    %2055 = vmatpush1.msra.mxu0 0.0
    %2056 = vmatprep.subr.mxu0 0.0
    %2057 = vmatpush1.msra.mxu0 0.0
    %2058 = vmatprep.subr.mxu0 0.0
    %2059 = vmatpush1.msra.mxu0 0.0
    %2060 = vmatprep.subr.mxu0 0.0
    %2061 = vmatpush1.msra.mxu0 0.0
    %2062 = vmatprep.subr.mxu0 0.0
    %2063 = vmatpush1.msra.mxu0 0.0
    %2064 = vmatprep.subr.mxu0 0.0
    %2065 = vmatpush1.msra.mxu0 0.0
    %2066 = vmatprep.subr.mxu0 0.0
    %2067 = vmatpush1.msra.mxu0 0.0
    %2068 = vmatprep.subr.mxu0 0.0
    %2069 = vmatpush1.msra.mxu0 0.0
    %2070 = vmatprep.subr.mxu0 0.0
    %2071 = vmatpush1.msra.mxu0 0.0
    %2072 = vmatprep.subr.mxu0 0.0
    %2073 = vmatpush1.msra.mxu0 0.0
    %2074 = vmatprep.subr.mxu0 0.0
    %2075 = vmatpush1.msra.mxu0 0.0
    %2076 = vmatprep.subr.mxu0 0.0
    %2077 = vmatpush1.msra.mxu0 0.0
    %2078 = vmatprep.subr.mxu0 0.0
    %2079 = vmatpush1.msra.mxu0 0.0
    %2080 = vmatprep.subr.mxu0 0.0
    %2081 = vmatpush1.msra.mxu0 0.0
    %2082 = vmatprep.subr.mxu0 0.0
    %2083 = vmatpush1.msra.mxu0 0.0
    %2084 = vmatprep.subr.mxu0 0.0
    %2085 = vmatpush1.msra.mxu0 0.0
    %2086 = vmatprep.subr.mxu0 0.0
    %2087 = vmatpush1.msra.mxu0 0.0
    %2088 = vmatprep.subr.mxu0 0.0
    %2089 = vmatpush1.msra.mxu0 0.0
    %2090 = vmatprep.subr.mxu0 0.0
    %2091 = vmatpush1.msra.mxu0 0.0
    %2092 = vmatprep.subr.mxu0 0.0
    %2093 = vmatpush1.msra.mxu0 0.0
    %2094 = vmatprep.subr.mxu0 0.0
    %2095 = vmatpush1.msra.mxu0 0.0
    %2096 = vmatprep.subr.mxu0 0.0
    %2097 = vmatpush1.msra.mxu0 0.0
    %2098 = vmatprep.subr.mxu0 0.0
    %2099 = vmatpush1.msra.mxu0 0.0
    %2100 = vmatprep.subr.mxu0 0.0
    %2101 = vmatpush1.msra.mxu0 0.0
    %2102 = vmatprep.mubr.f32.mxu0 0.0
    %2103 = vmatmul.mubr.f32.gmra.mrb[0].mxu0 %v2036
    %v2104 = vpop.f32.mrb[0].mxu0
    %v2105 = vadd.f32 0.0, %v2104
    %v2106 = vpop.f32.mrb[0].mxu0
    %2107 = vdwg.mxu0
    %v2110 = vrot.slane %v2028, 2
    %v2111 = vrot.slane %v2028, 3
    %v2112 = vrot.slane %v2105, 2
    %v2113 = vrot.slane %v2105, 3
    %v2118 = vadd.f32 %v159, %v2110
    %v2119 = vadd.f32 %v165, %v2111
    %v2120 = vadd.f32 %v756, %v2112
    %v2121 = vadd.f32 %v757, %v2113
    %v2122 = vxor.u32 %v2118, 2147483648
    %v2123 = vxor.u32 %v2119, 2147483648
    %v2124 = vxor.u32 %v2120, 2147483648
    %v2125 = vxor.u32 %v2121, 2147483648
    %v2126 = vmul.f32 %v2122, 1.442695
    %v2127 = vpow.pop %v2126
    %v2128 = vmul.f32 %v2123, 1.442695
    %v2129 = vpow.pop %v2128
    %v2130 = vmul.f32 %v2124, 1.442695
    %v2131 = vpow.pop %v2130
    %v2132 = vmul.f32 %v2125, 1.442695
    %v2133 = vpow.pop %v2132
    %v2134 = vadd.f32 %v2127, 1.0
    %v2135 = vadd.f32 %v2129, 1.0
    %v2136 = vadd.f32 %v2131, 1.0
    %v2137 = vadd.f32 %v2133, 1.0
    %v2138 = vrcp.pop %v2134
    %v2139 = vmul.f32 1.0, %v2138
    %v2140 = vrcp.pop %v2135
    %v2141 = vmul.f32 1.0, %v2140
    %v2142 = vrcp.pop %v2136
    %v2143 = vmul.f32 1.0, %v2142
    %v2144 = vrcp.pop %v2137
    %v2145 = vmul.f32 1.0, %v2144
    %v2146 = vtanh.pop %v2118
    %v2147 = vtanh.pop %v2119
    %v2148 = vtanh.pop %v2120
    %v2149 = vtanh.pop %v2121
    %v2154 = vrot.slane %v1904, 7
    %v2155 = vrot.slane %v1905, 7
    %v2156 = vrot.slane %v1906, 7
    %v2157 = vrot.slane %v1907, 7
    %v2162 = vmul.f32 %v2139, %v2154
    %v2163 = vmul.f32 %v2141, %v2155
    %v2164 = vmul.f32 %v2143, %v2156
    %v2165 = vmul.f32 %v2145, %v2157
    %2170 = vrot.lane.b32.xlu0 %v2146, 64
    %v2171 = vpop.permute.xlu0 %2170
    %2172 = vrot.lane.b32.xlu0 %v2147, 64
    %v2173 = vpop.permute.xlu0 %2172
    %2174 = vrot.lane.b32.xlu0 %v2148, 64
    %v2175 = vpop.permute.xlu0 %2174
    %2176 = vrot.lane.b32.xlu0 %v2149, 64
    %v2177 = vpop.permute.xlu0 %2176
    %v2182 = vmul.f32 %v2139, %v2171
    %v2183 = vmul.f32 %v2141, %v2173
    %v2184 = vmul.f32 %v2143, %v2175
    %v2185 = vmul.f32 %v2145, %v2177
    %2190 = vrot.lane.b32.xlu0 %v2182, 32
    %v2191 = vpop.permute.xlu0 %2190
    %2192 = vrot.lane.b32.xlu0 %v2183, 32
    %v2193 = vpop.permute.xlu0 %2192
    %2194 = vrot.lane.b32.xlu0 %v2184, 32
    %v2195 = vpop.permute.xlu0 %2194
    %2196 = vrot.lane.b32.xlu0 %v2185, 32
    %v2197 = vpop.permute.xlu0 %2196
    %v2202 = vadd.f32 %v2162, %v2191
    %v2203 = vadd.f32 %v2163, %v2193
    %v2204 = vadd.f32 %v2164, %v2195
    %v2205 = vadd.f32 %v2165, %v2197
    %v2206 = vtanh.pop %v2202
    %v2207 = vtanh.pop %v2203
    %v2208 = vtanh.pop %v2204
    %v2209 = vtanh.pop %v2205
    %2214 = vrot.lane.b32.xlu0 %v2206, 64
    %v2215 = vpop.permute.xlu0 %2214
    %2216 = vrot.lane.b32.xlu0 %v2207, 64
    %v2217 = vpop.permute.xlu0 %2216
    %2218 = vrot.lane.b32.xlu0 %v2208, 64
    %v2219 = vpop.permute.xlu0 %2218
    %2220 = vrot.lane.b32.xlu0 %v2209, 64
    %v2221 = vpop.permute.xlu0 %2220
    %v2226 = vmul.f32 %v2139, %v2215
    %v2227 = vmul.f32 %v2141, %v2217
    %v2228 = vmul.f32 %v2143, %v2219
    %v2229 = vmul.f32 %v2145, %v2221
    %2232 = vrot.lane.b32.xlu0 %v2226, 32
    %v2233 = vpop.permute.xlu0 %2232
    %2234 = vrot.lane.b32.xlu0 %v2227, 32
    %v2235 = vpop.permute.xlu0 %2234
    %vm2238 = vcmask 260102
    %2239 = vst.msk [vmem:[#allocation2] sm:$0x40] %vm2238, %v2233
    %2240 = vst.msk [vmem:[#allocation2 + $0x8] sm:$0x40] %vm2238, %v2235
    %2243 = vrot.lane.b32.xlu0 %v2228, 64
    %v2244 = vpop.permute.xlu0 %2243
    %2245 = vrot.lane.b32.xlu0 %v2229, 64
    %v2246 = vpop.permute.xlu0 %2245
    %vm2249 = vcmask 522502
    %2250 = vst.msk [vmem:[#allocation2 - $0x5] sm:$0x40] %vm2249, %v2244
    %2251 = vst.msk [vmem:[#allocation2 + $0x3] sm:$0x40] %vm2249, %v2246
    %v2252 = vrot.slane %v2226, 6
    %v2253 = vrot.slane %v2227, 5
    %v2254 = vsel %vm462, %v2253, %v2252
    %2255 = vrot.lane.b32.xlu0 %v2254, 32
    %v2256 = vpop.permute.xlu0 %2255
    %v2257 = vsel %vm183, %v2256, 0
    %2259 = vmatprep.subr.mxu0 0.0
    %2260 = vmatpush1.msra.mxu0 %v169
    %2261 = vmatprep.subr.mxu0 0.0
    %2262 = vmatpush1.msra.mxu0 %v170
    %2263 = vmatprep.subr.mxu0 0.0
    %2264 = vmatpush1.msra.mxu0 %v171
    %2265 = vmatprep.subr.mxu0 0.0
    %2266 = vmatpush1.msra.mxu0 %v172
    %2267 = vmatprep.subr.mxu0 0.0
    %2268 = vmatpush1.msra.mxu0 0.0
    %2269 = vmatprep.subr.mxu0 0.0
    %2270 = vmatpush1.msra.mxu0 0.0
    %2271 = vmatprep.subr.mxu0 0.0
    %2272 = vmatpush1.msra.mxu0 0.0
    %2273 = vmatprep.subr.mxu0 0.0
    %2274 = vmatpush1.msra.mxu0 0.0
    %2275 = vmatprep.subr.mxu0 0.0
    %2276 = vmatpush1.msra.mxu0 0.0
    %2277 = vmatprep.subr.mxu0 0.0
    %2278 = vmatpush1.msra.mxu0 0.0
    %2279 = vmatprep.subr.mxu0 0.0
    %2280 = vmatpush1.msra.mxu0 0.0
    %2281 = vmatprep.subr.mxu0 0.0
    %2282 = vmatpush1.msra.mxu0 0.0
    %2283 = vmatprep.subr.mxu0 0.0
    %2284 = vmatpush1.msra.mxu0 0.0
    %2285 = vmatprep.subr.mxu0 0.0
    %2286 = vmatpush1.msra.mxu0 0.0
    %2287 = vmatprep.subr.mxu0 0.0
    %2288 = vmatpush1.msra.mxu0 0.0
    %2289 = vmatprep.subr.mxu0 0.0
    %2290 = vmatpush1.msra.mxu0 0.0
    %2291 = vmatprep.subr.mxu0 0.0
    %2292 = vmatpush1.msra.mxu0 0.0
    %2293 = vmatprep.subr.mxu0 0.0
    %2294 = vmatpush1.msra.mxu0 0.0
    %2295 = vmatprep.subr.mxu0 0.0
    %2296 = vmatpush1.msra.mxu0 0.0
    %2297 = vmatprep.subr.mxu0 0.0
    %2298 = vmatpush1.msra.mxu0 0.0
    %2299 = vmatprep.subr.mxu0 0.0
    %2300 = vmatpush1.msra.mxu0 0.0
    %2301 = vmatprep.subr.mxu0 0.0
    %2302 = vmatpush1.msra.mxu0 0.0
    %2303 = vmatprep.subr.mxu0 0.0
    %2304 = vmatpush1.msra.mxu0 0.0
    %2305 = vmatprep.subr.mxu0 0.0
    %2306 = vmatpush1.msra.mxu0 0.0
    %2307 = vmatprep.subr.mxu0 0.0
    %2308 = vmatpush1.msra.mxu0 0.0
    %2309 = vmatprep.subr.mxu0 0.0
    %2310 = vmatpush1.msra.mxu0 0.0
    %2311 = vmatprep.subr.mxu0 0.0
    %2312 = vmatpush1.msra.mxu0 0.0
    %2313 = vmatprep.subr.mxu0 0.0
    %2314 = vmatpush1.msra.mxu0 0.0
    %2315 = vmatprep.subr.mxu0 0.0
    %2316 = vmatpush1.msra.mxu0 0.0
    %2317 = vmatprep.subr.mxu0 0.0
    %2318 = vmatpush1.msra.mxu0 0.0
    %2319 = vmatprep.subr.mxu0 0.0
    %2320 = vmatpush1.msra.mxu0 0.0
    %2321 = vmatprep.subr.mxu0 0.0
    %2322 = vmatpush1.msra.mxu0 0.0
    %2323 = vmatprep.mubr.f32.mxu0 0.0
    %2324 = vmatmul.mubr.f32.gmra.mrb[0].mxu0 %v2257
    %v2325 = vpop.f32.mrb[0].mxu0
    %v2326 = vadd.f32 0.0, %v2325
    %v2327 = vpop.f32.mrb[0].mxu0
    %2328 = vdwg.mxu0
    %v2329 = vrot.slane %v2228, 6
    %v2330 = vrot.slane %v2229, 5
    %v2331 = vsel %vm462, %v2330, %v2329
    %2332 = vrot.lane.b32.xlu0 %v2331, 32
    %v2333 = vpop.permute.xlu0 %2332
    %v2334 = vsel %vm183, %v2333, 0
    %2336 = vmatprep.subr.mxu0 0.0
    %2337 = vmatpush1.msra.mxu0 %v173
    %2338 = vmatprep.subr.mxu0 0.0
    %2339 = vmatpush1.msra.mxu0 %v174
    %2340 = vmatprep.subr.mxu0 0.0
    %2341 = vmatpush1.msra.mxu0 %v175
    %2342 = vmatprep.subr.mxu0 0.0
    %2343 = vmatpush1.msra.mxu0 %v176
    %2344 = vmatprep.subr.mxu0 0.0
    %2345 = vmatpush1.msra.mxu0 0.0
    %2346 = vmatprep.subr.mxu0 0.0
    %2347 = vmatpush1.msra.mxu0 0.0
    %2348 = vmatprep.subr.mxu0 0.0
    %2349 = vmatpush1.msra.mxu0 0.0
    %2350 = vmatprep.subr.mxu0 0.0
    %2351 = vmatpush1.msra.mxu0 0.0
    %2352 = vmatprep.subr.mxu0 0.0
    %2353 = vmatpush1.msra.mxu0 0.0
    %2354 = vmatprep.subr.mxu0 0.0
    %2355 = vmatpush1.msra.mxu0 0.0
    %2356 = vmatprep.subr.mxu0 0.0
    %2357 = vmatpush1.msra.mxu0 0.0
    %2358 = vmatprep.subr.mxu0 0.0
    %2359 = vmatpush1.msra.mxu0 0.0
    %2360 = vmatprep.subr.mxu0 0.0
    %2361 = vmatpush1.msra.mxu0 0.0
    %2362 = vmatprep.subr.mxu0 0.0
    %2363 = vmatpush1.msra.mxu0 0.0
    %2364 = vmatprep.subr.mxu0 0.0
    %2365 = vmatpush1.msra.mxu0 0.0
    %2366 = vmatprep.subr.mxu0 0.0
    %2367 = vmatpush1.msra.mxu0 0.0
    %2368 = vmatprep.subr.mxu0 0.0
    %2369 = vmatpush1.msra.mxu0 0.0
    %2370 = vmatprep.subr.mxu0 0.0
    %2371 = vmatpush1.msra.mxu0 0.0
    %2372 = vmatprep.subr.mxu0 0.0
    %2373 = vmatpush1.msra.mxu0 0.0
    %2374 = vmatprep.subr.mxu0 0.0
    %2375 = vmatpush1.msra.mxu0 0.0
    %2376 = vmatprep.subr.mxu0 0.0
    %2377 = vmatpush1.msra.mxu0 0.0
    %2378 = vmatprep.subr.mxu0 0.0
    %2379 = vmatpush1.msra.mxu0 0.0
    %2380 = vmatprep.subr.mxu0 0.0
    %2381 = vmatpush1.msra.mxu0 0.0
    %2382 = vmatprep.subr.mxu0 0.0
    %2383 = vmatpush1.msra.mxu0 0.0
    %2384 = vmatprep.subr.mxu0 0.0
    %2385 = vmatpush1.msra.mxu0 0.0
    %2386 = vmatprep.subr.mxu0 0.0
    %2387 = vmatpush1.msra.mxu0 0.0
    %2388 = vmatprep.subr.mxu0 0.0
    %2389 = vmatpush1.msra.mxu0 0.0
    %2390 = vmatprep.subr.mxu0 0.0
    %2391 = vmatpush1.msra.mxu0 0.0
    %2392 = vmatprep.subr.mxu0 0.0
    %2393 = vmatpush1.msra.mxu0 0.0
    %2394 = vmatprep.subr.mxu0 0.0
    %2395 = vmatpush1.msra.mxu0 0.0
    %2396 = vmatprep.subr.mxu0 0.0
    %2397 = vmatpush1.msra.mxu0 0.0
    %2398 = vmatprep.subr.mxu0 0.0
    %2399 = vmatpush1.msra.mxu0 0.0
    %2400 = vmatprep.mubr.f32.mxu0 0.0
    %2401 = vmatmul.mubr.f32.gmra.mrb[0].mxu0 %v2334
    %v2402 = vpop.f32.mrb[0].mxu0
    %v2403 = vadd.f32 0.0, %v2402
    %v2404 = vpop.f32.mrb[0].mxu0
    %2405 = vdwg.mxu0
    %v2408 = vrot.slane %v2326, 1
    %v2409 = vrot.slane %v2326, 2
    %v2410 = vrot.slane %v2403, 1
    %v2411 = vrot.slane %v2403, 2
    %v2416 = vadd.f32 %v159, %v2408
    %v2417 = vadd.f32 %v165, %v2409
    %v2418 = vadd.f32 %v1056, %v2410
    %v2419 = vadd.f32 %v1057, %v2411
    %v2420 = vxor.u32 %v2416, 2147483648
    %v2421 = vxor.u32 %v2417, 2147483648
    %v2422 = vxor.u32 %v2418, 2147483648
    %v2423 = vxor.u32 %v2419, 2147483648
    %v2424 = vmul.f32 %v2420, 1.442695
    %v2425 = vpow.pop %v2424
    %v2426 = vmul.f32 %v2421, 1.442695
    %v2427 = vpow.pop %v2426
    %v2428 = vmul.f32 %v2422, 1.442695
    %v2429 = vpow.pop %v2428
    %v2430 = vmul.f32 %v2423, 1.442695
    %v2431 = vpow.pop %v2430
    %v2432 = vadd.f32 %v2425, 1.0
    %v2433 = vadd.f32 %v2427, 1.0
    %v2434 = vadd.f32 %v2429, 1.0
    %v2435 = vadd.f32 %v2431, 1.0
    %v2436 = vrcp.pop %v2432
    %v2437 = vmul.f32 1.0, %v2436
    %v2438 = vrcp.pop %v2433
    %v2439 = vmul.f32 1.0, %v2438
    %v2440 = vrcp.pop %v2434
    %v2441 = vmul.f32 1.0, %v2440
    %v2442 = vrcp.pop %v2435
    %v2443 = vmul.f32 1.0, %v2442
    %v2444 = vtanh.pop %v2416
    %v2445 = vtanh.pop %v2417
    %v2446 = vtanh.pop %v2418
    %v2447 = vtanh.pop %v2419
    %v2452 = vrot.slane %v2202, 7
    %v2453 = vrot.slane %v2203, 7
    %v2454 = vrot.slane %v2204, 7
    %v2455 = vrot.slane %v2205, 7
    %v2460 = vmul.f32 %v2437, %v2452
    %v2461 = vmul.f32 %v2439, %v2453
    %v2462 = vmul.f32 %v2441, %v2454
    %v2463 = vmul.f32 %v2443, %v2455
    %2468 = vrot.lane.b32.xlu0 %v2444, 64
    %v2469 = vpop.permute.xlu0 %2468
    %2470 = vrot.lane.b32.xlu0 %v2445, 64
    %v2471 = vpop.permute.xlu0 %2470
    %2472 = vrot.lane.b32.xlu0 %v2446, 64
    %v2473 = vpop.permute.xlu0 %2472
    %2474 = vrot.lane.b32.xlu0 %v2447, 64
    %v2475 = vpop.permute.xlu0 %2474
    %v2480 = vmul.f32 %v2437, %v2469
    %v2481 = vmul.f32 %v2439, %v2471
    %v2482 = vmul.f32 %v2441, %v2473
    %v2483 = vmul.f32 %v2443, %v2475
    %2488 = vrot.lane.b32.xlu0 %v2480, 32
    %v2489 = vpop.permute.xlu0 %2488
    %2490 = vrot.lane.b32.xlu0 %v2481, 32
    %v2491 = vpop.permute.xlu0 %2490
    %2492 = vrot.lane.b32.xlu0 %v2482, 32
    %v2493 = vpop.permute.xlu0 %2492
    %2494 = vrot.lane.b32.xlu0 %v2483, 32
    %v2495 = vpop.permute.xlu0 %2494
    %v2500 = vadd.f32 %v2460, %v2489
    %v2501 = vadd.f32 %v2461, %v2491
    %v2502 = vadd.f32 %v2462, %v2493
    %v2503 = vadd.f32 %v2463, %v2495
    %v2504 = vtanh.pop %v2500
    %v2505 = vtanh.pop %v2501
    %v2506 = vtanh.pop %v2502
    %v2507 = vtanh.pop %v2503
    %2512 = vrot.lane.b32.xlu0 %v2504, 64
    %v2513 = vpop.permute.xlu0 %2512
    %2514 = vrot.lane.b32.xlu0 %v2505, 64
    %v2515 = vpop.permute.xlu0 %2514
    %2516 = vrot.lane.b32.xlu0 %v2506, 64
    %v2517 = vpop.permute.xlu0 %2516
    %2518 = vrot.lane.b32.xlu0 %v2507, 64
    %v2519 = vpop.permute.xlu0 %2518
    %v2524 = vmul.f32 %v2437, %v2513
    %v2525 = vmul.f32 %v2439, %v2515
    %v2526 = vmul.f32 %v2441, %v2517
    %v2527 = vmul.f32 %v2443, %v2519
    %2530 = vrot.lane.b32.xlu0 %v2524, 32
    %v2531 = vpop.permute.xlu0 %2530
    %2532 = vrot.lane.b32.xlu0 %v2525, 32
    %v2533 = vpop.permute.xlu0 %2532
    %vm2536 = vcmask 261127
    %2537 = vst.msk [vmem:[#allocation2] sm:$0x80] %vm2536, %v2531
    %2538 = vst.msk [vmem:[#allocation2 + $0x8] sm:$0x80] %vm2536, %v2533
    %2541 = vrot.lane.b32.xlu0 %v2526, 64
    %v2542 = vpop.permute.xlu0 %2541
    %2543 = vrot.lane.b32.xlu0 %v2527, 64
    %v2544 = vpop.permute.xlu0 %2543
    %vm2547 = vcmask 523527
    %2548 = vst.msk [vmem:[#allocation2 - $0x7] sm:$0x80] %vm2547, %v2542
    %2549 = vst.msk [vmem:[#allocation2 + $0x1] sm:$0x80] %vm2547, %v2544
    %v2550 = vld [vmem:[#allocation2] sm:$0xff]
    %v2551 = vld [vmem:[#allocation2 + $0x8] sm:$0xff]
    %v2552 = vld [vmem:[%s4] sm:$0xff]
    %v2553 = vld [vmem:[%s4 + $0x8] sm:$0xff]
    %v2554 = vld [vmem:[%s4 + $0x10] sm:$0xff]
    %v2555 = vld [vmem:[%s4 + $0x18] sm:$0xff]
    %v2556 = vld [vmem:[%s4 + $0x20] sm:$0xff]
    %v2557 = vld [vmem:[%s4 + $0x28] sm:$0xff]
    %v2558 = vld [vmem:[%s4 + $0x30] sm:$0xff]
    %v2559 = vld [vmem:[%s4 + $0x38] sm:$0xff]
    %v2560 = vld [vmem:[%s4 + $0x40] sm:$0xff]
    %v2561 = vld [vmem:[%s4 + $0x48] sm:$0xff]
    %v2562 = vld [vmem:[%s4 + $0x50] sm:$0xff]
    %v2563 = vld [vmem:[%s4 + $0x58] sm:$0xff]
    %v2564 = vld [vmem:[%s4 + $0x60] sm:$0xff]
    %v2565 = vld [vmem:[%s4 + $0x68] sm:$0xff]
    %v2566 = vld [vmem:[%s4 + $0x70] sm:$0xff]
    %v2567 = vld [vmem:[%s4 + $0x78] sm:$0xff]
    %v2568 = vld [vmem:[%s6] sm:$0x3]
    %v2570 = vlaneseq
    %v2571 = vshrl.u32 %v2570, 7
    %v2572 = vsub.s32 0, %v2571
    %v2573 = vrot.slane %v2568, %v2572
    %v2574 = vlaneseq
    %v2575 = vshrl.u32 %v2574, 7
    %v2576 = vsub.s32 1, %v2575
    %v2577 = vrot.slane %v2568, %v2576
    %vm2580 = vcmask 523264
    %v2582 = vsel %vm2580, %v2550, 0
    %v2585 = vsel %vm2580, %v2551, 0
    %2587 = vmatprep.subr.mxu0 %v2553
    %2588 = vmatpush1.msra.mxu0 %v2552
    %2589 = vmatprep.subr.mxu0 %v2555
    %2590 = vmatpush1.msra.mxu0 %v2554
    %2591 = vmatprep.subr.mxu0 %v2557
    %2592 = vmatpush1.msra.mxu0 %v2556
    %2593 = vmatprep.subr.mxu0 %v2559
    %2594 = vmatpush1.msra.mxu0 %v2558
    %2595 = vmatprep.subr.mxu0 %v2561
    %2596 = vmatpush1.msra.mxu0 %v2560
    %2597 = vmatprep.subr.mxu0 %v2563
    %2598 = vmatpush1.msra.mxu0 %v2562
    %2599 = vmatprep.subr.mxu0 %v2565
    %2600 = vmatpush1.msra.mxu0 %v2564
    %2601 = vmatprep.subr.mxu0 %v2567
    %2602 = vmatpush1.msra.mxu0 %v2566
    %2603 = vmatprep.subr.mxu0 0.0
    %2604 = vmatpush1.msra.mxu0 0.0
    %2605 = vmatprep.subr.mxu0 0.0
    %2606 = vmatpush1.msra.mxu0 0.0
    %2607 = vmatprep.subr.mxu0 0.0
    %2608 = vmatpush1.msra.mxu0 0.0
    %2609 = vmatprep.subr.mxu0 0.0
    %2610 = vmatpush1.msra.mxu0 0.0
    %2611 = vmatprep.subr.mxu0 0.0
    %2612 = vmatpush1.msra.mxu0 0.0
    %2613 = vmatprep.subr.mxu0 0.0
    %2614 = vmatpush1.msra.mxu0 0.0
    %2615 = vmatprep.subr.mxu0 0.0
    %2616 = vmatpush1.msra.mxu0 0.0
    %2617 = vmatprep.subr.mxu0 0.0
    %2618 = vmatpush1.msra.mxu0 0.0
    %2619 = vmatprep.subr.mxu0 0.0
    %2620 = vmatpush1.msra.mxu0 0.0
    %2621 = vmatprep.subr.mxu0 0.0
    %2622 = vmatpush1.msra.mxu0 0.0
    %2623 = vmatprep.subr.mxu0 0.0
    %2624 = vmatpush1.msra.mxu0 0.0
    %2625 = vmatprep.subr.mxu0 0.0
    %2626 = vmatpush1.msra.mxu0 0.0
    %2627 = vmatprep.subr.mxu0 0.0
    %2628 = vmatpush1.msra.mxu0 0.0
    %2629 = vmatprep.subr.mxu0 0.0
    %2630 = vmatpush1.msra.mxu0 0.0
    %2631 = vmatprep.subr.mxu0 0.0
    %2632 = vmatpush1.msra.mxu0 0.0
    %2633 = vmatprep.subr.mxu0 0.0
    %2634 = vmatpush1.msra.mxu0 0.0
    %2635 = vmatprep.subr.mxu0 0.0
    %2636 = vmatpush1.msra.mxu0 0.0
    %2637 = vmatprep.subr.mxu0 0.0
    %2638 = vmatpush1.msra.mxu0 0.0
    %2639 = vmatprep.subr.mxu0 0.0
    %2640 = vmatpush1.msra.mxu0 0.0
    %2641 = vmatprep.subr.mxu0 0.0
    %2642 = vmatpush1.msra.mxu0 0.0
    %2643 = vmatprep.subr.mxu0 0.0
    %2644 = vmatpush1.msra.mxu0 0.0
    %2645 = vmatprep.subr.mxu0 0.0
    %2646 = vmatpush1.msra.mxu0 0.0
    %2647 = vmatprep.subr.mxu0 0.0
    %2648 = vmatpush1.msra.mxu0 0.0
    %2649 = vmatprep.subr.mxu0 0.0
    %2650 = vmatpush1.msra.mxu0 0.0
    %2651 = vmatprep.mubr.f32.mxu0 0.0
    %2652 = vmatmul.mubr.f32.gmra.mrb[0].mxu0 %v2582
    %v2653 = vpop.f32.mrb[0].mxu0
    %v2654 = vadd.f32 %v2573, %v2653
    %v2655 = vpop.f32.mrb[0].mxu0
    %v2656 = vadd.f32 %v2577, %v2655
    %2657 = vmatprep.mubr.f32.mxu0 0.0
    %2658 = vmatmul.mubr.f32.gmra.mrb[0].mxu0 %v2585
    %v2659 = vpop.f32.mrb[0].mxu0
    %v2660 = vadd.f32 %v2573, %v2659
    %v2661 = vpop.f32.mrb[0].mxu0
    %v2662 = vadd.f32 %v2577, %v2661
    %2663 = vdwg.mxu0
    %v2664 = vld [vmem:[%s5] sm:$0xff]
    %v2665 = vld [vmem:[%s5 + $0x8] sm:$0xff]
    %v2666 = vld [vmem:[%s5 + $0x10] sm:$0xff]
    %v2667 = vld [vmem:[%s5 + $0x18] sm:$0xff]
    %v2668 = vld [vmem:[%s5 + $0x20] sm:$0xff]
    %v2669 = vld [vmem:[%s5 + $0x28] sm:$0xff]
    %v2670 = vld [vmem:[%s5 + $0x30] sm:$0xff]
    %v2671 = vld [vmem:[%s5 + $0x38] sm:$0xff]
    %v2674 = vrot.slane %v2656, 7
    %v2675 = vrot.slane %v2662, 7
    %2678 = vmatprep.subr.mxu0 0.0
    %2679 = vmatpush1.msra.mxu0 %v2664
    %2680 = vmatprep.subr.mxu0 0.0
    %2681 = vmatpush1.msra.mxu0 %v2665
    %2682 = vmatprep.subr.mxu0 0.0
    %2683 = vmatpush1.msra.mxu0 %v2666
    %2684 = vmatprep.subr.mxu0 0.0
    %2685 = vmatpush1.msra.mxu0 %v2667
    %2686 = vmatprep.subr.mxu0 0.0
    %2687 = vmatpush1.msra.mxu0 0.0
    %2688 = vmatprep.subr.mxu0 0.0
    %2689 = vmatpush1.msra.mxu0 0.0
    %2690 = vmatprep.subr.mxu0 0.0
    %2691 = vmatpush1.msra.mxu0 0.0
    %2692 = vmatprep.subr.mxu0 0.0
    %2693 = vmatpush1.msra.mxu0 0.0
    %2694 = vmatprep.subr.mxu0 0.0
    %2695 = vmatpush1.msra.mxu0 0.0
    %2696 = vmatprep.subr.mxu0 0.0
    %2697 = vmatpush1.msra.mxu0 0.0
    %2698 = vmatprep.subr.mxu0 0.0
    %2699 = vmatpush1.msra.mxu0 0.0
    %2700 = vmatprep.subr.mxu0 0.0
    %2701 = vmatpush1.msra.mxu0 0.0
    %2702 = vmatprep.subr.mxu0 0.0
    %2703 = vmatpush1.msra.mxu0 0.0
    %2704 = vmatprep.subr.mxu0 0.0
    %2705 = vmatpush1.msra.mxu0 0.0
    %2706 = vmatprep.subr.mxu0 0.0
    %2707 = vmatpush1.msra.mxu0 0.0
    %2708 = vmatprep.subr.mxu0 0.0
    %2709 = vmatpush1.msra.mxu0 0.0
    %2710 = vmatprep.subr.mxu0 0.0
    %2711 = vmatpush1.msra.mxu0 0.0
    %2712 = vmatprep.subr.mxu0 0.0
    %2713 = vmatpush1.msra.mxu0 0.0
    %2714 = vmatprep.subr.mxu0 0.0
    %2715 = vmatpush1.msra.mxu0 0.0
    %2716 = vmatprep.subr.mxu0 0.0
    %2717 = vmatpush1.msra.mxu0 0.0
    %2718 = vmatprep.subr.mxu0 0.0
    %2719 = vmatpush1.msra.mxu0 0.0
    %2720 = vmatprep.subr.mxu0 0.0
    %2721 = vmatpush1.msra.mxu0 0.0
    %2722 = vmatprep.subr.mxu0 0.0
    %2723 = vmatpush1.msra.mxu0 0.0
    %2724 = vmatprep.subr.mxu0 0.0
    %2725 = vmatpush1.msra.mxu0 0.0
    %2726 = vmatprep.subr.mxu0 0.0
    %2727 = vmatpush1.msra.mxu0 0.0
    %2728 = vmatprep.subr.mxu0 0.0
    %2729 = vmatpush1.msra.mxu0 0.0
    %2730 = vmatprep.subr.mxu0 0.0
    %2731 = vmatpush1.msra.mxu0 0.0
    %2732 = vmatprep.subr.mxu0 0.0
    %2733 = vmatpush1.msra.mxu0 0.0
    %2734 = vmatprep.subr.mxu0 0.0
    %2735 = vmatpush1.msra.mxu0 0.0
    %2736 = vmatprep.subr.mxu0 0.0
    %2737 = vmatpush1.msra.mxu0 0.0
    %2738 = vmatprep.subr.mxu0 0.0
    %2739 = vmatpush1.msra.mxu0 0.0
    %2740 = vmatprep.subr.mxu0 0.0
    %2741 = vmatpush1.msra.mxu0 0.0
    %2742 = vmatprep.mubr.f32.mxu0 0.0
    %2743 = vmatmul.mubr.f32.gmra.mrb[0].mxu0 %v185
    %v2744 = vpop.f32.mrb[0].mxu0
    %v2745 = vadd.f32 0.0, %v2744
    %v2746 = vpop.f32.mrb[0].mxu0
    %2747 = vdwg.mxu0
    %2748 = vmatprep.subr.mxu0 0.0
    %2749 = vmatpush1.msra.mxu0 %v2668
    %2750 = vmatprep.subr.mxu0 0.0
    %2751 = vmatpush1.msra.mxu0 %v2669
    %2752 = vmatprep.subr.mxu0 0.0
    %2753 = vmatpush1.msra.mxu0 %v2670
    %2754 = vmatprep.subr.mxu0 0.0
    %2755 = vmatpush1.msra.mxu0 %v2671
    %2756 = vmatprep.subr.mxu0 0.0
    %2757 = vmatpush1.msra.mxu0 0.0
    %2758 = vmatprep.subr.mxu0 0.0
    %2759 = vmatpush1.msra.mxu0 0.0
    %2760 = vmatprep.subr.mxu0 0.0
    %2761 = vmatpush1.msra.mxu0 0.0
    %2762 = vmatprep.subr.mxu0 0.0
    %2763 = vmatpush1.msra.mxu0 0.0
    %2764 = vmatprep.subr.mxu0 0.0
    %2765 = vmatpush1.msra.mxu0 0.0
    %2766 = vmatprep.subr.mxu0 0.0
    %2767 = vmatpush1.msra.mxu0 0.0
    %2768 = vmatprep.subr.mxu0 0.0
    %2769 = vmatpush1.msra.mxu0 0.0
    %2770 = vmatprep.subr.mxu0 0.0
    %2771 = vmatpush1.msra.mxu0 0.0
    %2772 = vmatprep.subr.mxu0 0.0
    %2773 = vmatpush1.msra.mxu0 0.0
    %2774 = vmatprep.subr.mxu0 0.0
    %2775 = vmatpush1.msra.mxu0 0.0
    %2776 = vmatprep.subr.mxu0 0.0
    %2777 = vmatpush1.msra.mxu0 0.0
    %2778 = vmatprep.subr.mxu0 0.0
    %2779 = vmatpush1.msra.mxu0 0.0
    %2780 = vmatprep.subr.mxu0 0.0
    %2781 = vmatpush1.msra.mxu0 0.0
    %2782 = vmatprep.subr.mxu0 0.0
    %2783 = vmatpush1.msra.mxu0 0.0
    %2784 = vmatprep.subr.mxu0 0.0
    %2785 = vmatpush1.msra.mxu0 0.0
    %2786 = vmatprep.subr.mxu0 0.0
    %2787 = vmatpush1.msra.mxu0 0.0
    %2788 = vmatprep.subr.mxu0 0.0
    %2789 = vmatpush1.msra.mxu0 0.0
    %2790 = vmatprep.subr.mxu0 0.0
    %2791 = vmatpush1.msra.mxu0 0.0
    %2792 = vmatprep.subr.mxu0 0.0
    %2793 = vmatpush1.msra.mxu0 0.0
    %2794 = vmatprep.subr.mxu0 0.0
    %2795 = vmatpush1.msra.mxu0 0.0
    %2796 = vmatprep.subr.mxu0 0.0
    %2797 = vmatpush1.msra.mxu0 0.0
    %2798 = vmatprep.subr.mxu0 0.0
    %2799 = vmatpush1.msra.mxu0 0.0
    %2800 = vmatprep.subr.mxu0 0.0
    %2801 = vmatpush1.msra.mxu0 0.0
    %2802 = vmatprep.subr.mxu0 0.0
    %2803 = vmatpush1.msra.mxu0 0.0
    %2804 = vmatprep.subr.mxu0 0.0
    %2805 = vmatpush1.msra.mxu0 0.0
    %2806 = vmatprep.subr.mxu0 0.0
    %2807 = vmatpush1.msra.mxu0 0.0
    %2808 = vmatprep.subr.mxu0 0.0
    %2809 = vmatpush1.msra.mxu0 0.0
    %2810 = vmatprep.subr.mxu0 0.0
    %2811 = vmatpush1.msra.mxu0 0.0
    %2812 = vmatprep.mubr.f32.mxu0 0.0
    %2813 = vmatmul.mubr.f32.gmra.mrb[0].mxu0 %v185
    %v2814 = vpop.f32.mrb[0].mxu0
    %v2815 = vadd.f32 0.0, %v2814
    %v2816 = vpop.f32.mrb[0].mxu0
    %2817 = vdwg.mxu0
    %v2820 = vrot.slane %v2745, 1
    %v2821 = vrot.slane %v2815, 1
    %v2826 = vadd.f32 %v2654, %v2745
    %v2827 = vadd.f32 %v2660, %v2820
    %v2828 = vadd.f32 %v2674, %v2815
    %v2829 = vadd.f32 %v2675, %v2821
    %v2830 = vxor.u32 %v2826, 2147483648
    %v2831 = vxor.u32 %v2827, 2147483648
    %v2832 = vxor.u32 %v2828, 2147483648
    %v2833 = vxor.u32 %v2829, 2147483648
    %v2834 = vmul.f32 %v2830, 1.442695
    %v2835 = vpow.pop %v2834
    %v2836 = vmul.f32 %v2831, 1.442695
    %v2837 = vpow.pop %v2836
    %v2838 = vmul.f32 %v2832, 1.442695
    %v2839 = vpow.pop %v2838
    %v2840 = vmul.f32 %v2833, 1.442695
    %v2841 = vpow.pop %v2840
    %v2842 = vadd.f32 %v2835, 1.0
    %v2843 = vadd.f32 %v2837, 1.0
    %v2844 = vadd.f32 %v2839, 1.0
    %v2845 = vadd.f32 %v2841, 1.0
    %v2846 = vrcp.pop %v2842
    %v2847 = vmul.f32 1.0, %v2846
    %v2848 = vrcp.pop %v2843
    %v2849 = vmul.f32 1.0, %v2848
    %v2850 = vrcp.pop %v2844
    %v2851 = vmul.f32 1.0, %v2850
    %v2852 = vrcp.pop %v2845
    %v2853 = vmul.f32 1.0, %v2852
    %v2854 = vtanh.pop %v2826
    %v2855 = vtanh.pop %v2827
    %v2856 = vtanh.pop %v2828
    %v2857 = vtanh.pop %v2829
    %v2858 = vmul.f32 %v2847, 0.0
    %v2859 = vmul.f32 %v2849, 0.0
    %v2860 = vmul.f32 %v2851, 0.0
    %v2861 = vmul.f32 %v2853, 0.0
    %2866 = vrot.lane.b32.xlu0 %v2854, 64
    %v2867 = vpop.permute.xlu0 %2866
    %2868 = vrot.lane.b32.xlu0 %v2855, 64
    %v2869 = vpop.permute.xlu0 %2868
    %2870 = vrot.lane.b32.xlu0 %v2856, 64
    %v2871 = vpop.permute.xlu0 %2870
    %2872 = vrot.lane.b32.xlu0 %v2857, 64
    %v2873 = vpop.permute.xlu0 %2872
    %v2878 = vmul.f32 %v2847, %v2867
    %v2879 = vmul.f32 %v2849, %v2869
    %v2880 = vmul.f32 %v2851, %v2871
    %v2881 = vmul.f32 %v2853, %v2873
    %2886 = vrot.lane.b32.xlu0 %v2878, 32
    %v2887 = vpop.permute.xlu0 %2886
    %2888 = vrot.lane.b32.xlu0 %v2879, 32
    %v2889 = vpop.permute.xlu0 %2888
    %2890 = vrot.lane.b32.xlu0 %v2880, 32
    %v2891 = vpop.permute.xlu0 %2890
    %2892 = vrot.lane.b32.xlu0 %v2881, 32
    %v2893 = vpop.permute.xlu0 %2892
    %v2898 = vadd.f32 %v2858, %v2887
    %v2899 = vadd.f32 %v2859, %v2889
    %v2900 = vadd.f32 %v2860, %v2891
    %v2901 = vadd.f32 %v2861, %v2893
    %v2902 = vtanh.pop %v2898
    %v2903 = vtanh.pop %v2899
    %v2904 = vtanh.pop %v2900
    %v2905 = vtanh.pop %v2901
    %2910 = vrot.lane.b32.xlu0 %v2902, 64
    %v2911 = vpop.permute.xlu0 %2910
    %2912 = vrot.lane.b32.xlu0 %v2903, 64
    %v2913 = vpop.permute.xlu0 %2912
    %2914 = vrot.lane.b32.xlu0 %v2904, 64
    %v2915 = vpop.permute.xlu0 %2914
    %2916 = vrot.lane.b32.xlu0 %v2905, 64
    %v2917 = vpop.permute.xlu0 %2916
    %v2922 = vmul.f32 %v2847, %v2911
    %v2923 = vmul.f32 %v2849, %v2913
    %v2924 = vmul.f32 %v2851, %v2915
    %v2925 = vmul.f32 %v2853, %v2917
    %2928 = vrot.lane.b32.xlu0 %v2922, 32
    %v2929 = vpop.permute.xlu0 %2928
    %2930 = vrot.lane.b32.xlu0 %v2923, 32
    %v2931 = vpop.permute.xlu0 %2930
    %2934 = vst.msk [vmem:[#allocation3] sm:$0x1] %vm443, %v2929
    %2935 = vst.msk [vmem:[#allocation3 + $0x8] sm:$0x1] %vm443, %v2931
    %2938 = vrot.lane.b32.xlu0 %v2924, 64
    %v2939 = vpop.permute.xlu0 %2938
    %2940 = vrot.lane.b32.xlu0 %v2925, 64
    %v2941 = vpop.permute.xlu0 %2940
    %2944 = vst.msk [vmem:[#allocation3 + $0x7] sm:$0x1] %vm454, %v2939
    %2945 = vst.msk [vmem:[#allocation3 + $0xf] sm:$0x1] %vm454, %v2941
    %v2946 = vrot.slane %v2656, 5
    %v2947 = vrot.slane %v2662, 5
    %v2950 = vrot.slane %v2923, 7
    %v2951 = vsel %vm462, %v2950, %v2922
    %2952 = vrot.lane.b32.xlu0 %v2951, 32
    %v2953 = vpop.permute.xlu0 %2952
    %v2954 = vsel %vm183, %v2953, 0
    %2956 = vmatprep.subr.mxu0 0.0
    %2957 = vmatpush1.msra.mxu0 %v2664
    %2958 = vmatprep.subr.mxu0 0.0
    %2959 = vmatpush1.msra.mxu0 %v2665
    %2960 = vmatprep.subr.mxu0 0.0
    %2961 = vmatpush1.msra.mxu0 %v2666
    %2962 = vmatprep.subr.mxu0 0.0
    %2963 = vmatpush1.msra.mxu0 %v2667
    %2964 = vmatprep.subr.mxu0 0.0
    %2965 = vmatpush1.msra.mxu0 0.0
    %2966 = vmatprep.subr.mxu0 0.0
    %2967 = vmatpush1.msra.mxu0 0.0
    %2968 = vmatprep.subr.mxu0 0.0
    %2969 = vmatpush1.msra.mxu0 0.0
    %2970 = vmatprep.subr.mxu0 0.0
    %2971 = vmatpush1.msra.mxu0 0.0
    %2972 = vmatprep.subr.mxu0 0.0
    %2973 = vmatpush1.msra.mxu0 0.0
    %2974 = vmatprep.subr.mxu0 0.0
    %2975 = vmatpush1.msra.mxu0 0.0
    %2976 = vmatprep.subr.mxu0 0.0
    %2977 = vmatpush1.msra.mxu0 0.0
    %2978 = vmatprep.subr.mxu0 0.0
    %2979 = vmatpush1.msra.mxu0 0.0
    %2980 = vmatprep.subr.mxu0 0.0
    %2981 = vmatpush1.msra.mxu0 0.0
    %2982 = vmatprep.subr.mxu0 0.0
    %2983 = vmatpush1.msra.mxu0 0.0
    %2984 = vmatprep.subr.mxu0 0.0
    %2985 = vmatpush1.msra.mxu0 0.0
    %2986 = vmatprep.subr.mxu0 0.0
    %2987 = vmatpush1.msra.mxu0 0.0
    %2988 = vmatprep.subr.mxu0 0.0
    %2989 = vmatpush1.msra.mxu0 0.0
    %2990 = vmatprep.subr.mxu0 0.0
    %2991 = vmatpush1.msra.mxu0 0.0
    %2992 = vmatprep.subr.mxu0 0.0
    %2993 = vmatpush1.msra.mxu0 0.0
    %2994 = vmatprep.subr.mxu0 0.0
    %2995 = vmatpush1.msra.mxu0 0.0
    %2996 = vmatprep.subr.mxu0 0.0
    %2997 = vmatpush1.msra.mxu0 0.0
    %2998 = vmatprep.subr.mxu0 0.0
    %2999 = vmatpush1.msra.mxu0 0.0
    %3000 = vmatprep.subr.mxu0 0.0
    %3001 = vmatpush1.msra.mxu0 0.0
    %3002 = vmatprep.subr.mxu0 0.0
    %3003 = vmatpush1.msra.mxu0 0.0
    %3004 = vmatprep.subr.mxu0 0.0
    %3005 = vmatpush1.msra.mxu0 0.0
    %3006 = vmatprep.subr.mxu0 0.0
    %3007 = vmatpush1.msra.mxu0 0.0
    %3008 = vmatprep.subr.mxu0 0.0
    %3009 = vmatpush1.msra.mxu0 0.0
    %3010 = vmatprep.subr.mxu0 0.0
    %3011 = vmatpush1.msra.mxu0 0.0
    %3012 = vmatprep.subr.mxu0 0.0
    %3013 = vmatpush1.msra.mxu0 0.0
    %3014 = vmatprep.subr.mxu0 0.0
    %3015 = vmatpush1.msra.mxu0 0.0
    %3016 = vmatprep.subr.mxu0 0.0
    %3017 = vmatpush1.msra.mxu0 0.0
    %3018 = vmatprep.subr.mxu0 0.0
    %3019 = vmatpush1.msra.mxu0 0.0
    %3020 = vmatprep.mubr.f32.mxu0 0.0
    %3021 = vmatmul.mubr.f32.gmra.mrb[0].mxu0 %v2954
    %v3022 = vpop.f32.mrb[0].mxu0
    %v3023 = vadd.f32 0.0, %v3022
    %v3024 = vpop.f32.mrb[0].mxu0
    %3025 = vdwg.mxu0
    %v3026 = vrot.slane %v2925, 7
    %v3027 = vsel %vm462, %v3026, %v2924
    %3028 = vrot.lane.b32.xlu0 %v3027, 32
    %v3029 = vpop.permute.xlu0 %3028
    %v3030 = vsel %vm183, %v3029, 0
    %3032 = vmatprep.subr.mxu0 0.0
    %3033 = vmatpush1.msra.mxu0 %v2668
    %3034 = vmatprep.subr.mxu0 0.0
    %3035 = vmatpush1.msra.mxu0 %v2669
    %3036 = vmatprep.subr.mxu0 0.0
    %3037 = vmatpush1.msra.mxu0 %v2670
    %3038 = vmatprep.subr.mxu0 0.0
    %3039 = vmatpush1.msra.mxu0 %v2671
    %3040 = vmatprep.subr.mxu0 0.0
    %3041 = vmatpush1.msra.mxu0 0.0
    %3042 = vmatprep.subr.mxu0 0.0
    %3043 = vmatpush1.msra.mxu0 0.0
    %3044 = vmatprep.subr.mxu0 0.0
    %3045 = vmatpush1.msra.mxu0 0.0
    %3046 = vmatprep.subr.mxu0 0.0
    %3047 = vmatpush1.msra.mxu0 0.0
    %3048 = vmatprep.subr.mxu0 0.0
    %3049 = vmatpush1.msra.mxu0 0.0
    %3050 = vmatprep.subr.mxu0 0.0
    %3051 = vmatpush1.msra.mxu0 0.0
    %3052 = vmatprep.subr.mxu0 0.0
    %3053 = vmatpush1.msra.mxu0 0.0
    %3054 = vmatprep.subr.mxu0 0.0
    %3055 = vmatpush1.msra.mxu0 0.0
    %3056 = vmatprep.subr.mxu0 0.0
    %3057 = vmatpush1.msra.mxu0 0.0
    %3058 = vmatprep.subr.mxu0 0.0
    %3059 = vmatpush1.msra.mxu0 0.0
    %3060 = vmatprep.subr.mxu0 0.0
    %3061 = vmatpush1.msra.mxu0 0.0
    %3062 = vmatprep.subr.mxu0 0.0
    %3063 = vmatpush1.msra.mxu0 0.0
    %3064 = vmatprep.subr.mxu0 0.0
    %3065 = vmatpush1.msra.mxu0 0.0
    %3066 = vmatprep.subr.mxu0 0.0
    %3067 = vmatpush1.msra.mxu0 0.0
    %3068 = vmatprep.subr.mxu0 0.0
    %3069 = vmatpush1.msra.mxu0 0.0
    %3070 = vmatprep.subr.mxu0 0.0
    %3071 = vmatpush1.msra.mxu0 0.0
    %3072 = vmatprep.subr.mxu0 0.0
    %3073 = vmatpush1.msra.mxu0 0.0
    %3074 = vmatprep.subr.mxu0 0.0
    %3075 = vmatpush1.msra.mxu0 0.0
    %3076 = vmatprep.subr.mxu0 0.0
    %3077 = vmatpush1.msra.mxu0 0.0
    %3078 = vmatprep.subr.mxu0 0.0
    %3079 = vmatpush1.msra.mxu0 0.0
    %3080 = vmatprep.subr.mxu0 0.0
    %3081 = vmatpush1.msra.mxu0 0.0
    %3082 = vmatprep.subr.mxu0 0.0
    %3083 = vmatpush1.msra.mxu0 0.0
    %3084 = vmatprep.subr.mxu0 0.0
    %3085 = vmatpush1.msra.mxu0 0.0
    %3086 = vmatprep.subr.mxu0 0.0
    %3087 = vmatpush1.msra.mxu0 0.0
    %3088 = vmatprep.subr.mxu0 0.0
    %3089 = vmatpush1.msra.mxu0 0.0
    %3090 = vmatprep.subr.mxu0 0.0
    %3091 = vmatpush1.msra.mxu0 0.0
    %3092 = vmatprep.subr.mxu0 0.0
    %3093 = vmatpush1.msra.mxu0 0.0
    %3094 = vmatprep.subr.mxu0 0.0
    %3095 = vmatpush1.msra.mxu0 0.0
    %3096 = vmatprep.mubr.f32.mxu0 0.0
    %3097 = vmatmul.mubr.f32.gmra.mrb[0].mxu0 %v3030
    %v3098 = vpop.f32.mrb[0].mxu0
    %v3099 = vadd.f32 0.0, %v3098
    %v3100 = vpop.f32.mrb[0].mxu0
    %3101 = vdwg.mxu0
    %v3104 = vrot.slane %v3023, 7
    %v3105 = vrot.slane %v3099, 7
    %v3110 = vadd.f32 %v2654, %v3104
    %v3111 = vadd.f32 %v2660, %v3023
    %v3112 = vadd.f32 %v2946, %v3105
    %v3113 = vadd.f32 %v2947, %v3099
    %v3114 = vxor.u32 %v3110, 2147483648
    %v3115 = vxor.u32 %v3111, 2147483648
    %v3116 = vxor.u32 %v3112, 2147483648
    %v3117 = vxor.u32 %v3113, 2147483648
    %v3118 = vmul.f32 %v3114, 1.442695
    %v3119 = vpow.pop %v3118
    %v3120 = vmul.f32 %v3115, 1.442695
    %v3121 = vpow.pop %v3120
    %v3122 = vmul.f32 %v3116, 1.442695
    %v3123 = vpow.pop %v3122
    %v3124 = vmul.f32 %v3117, 1.442695
    %v3125 = vpow.pop %v3124
    %v3126 = vadd.f32 %v3119, 1.0
    %v3127 = vadd.f32 %v3121, 1.0
    %v3128 = vadd.f32 %v3123, 1.0
    %v3129 = vadd.f32 %v3125, 1.0
    %v3130 = vrcp.pop %v3126
    %v3131 = vmul.f32 1.0, %v3130
    %v3132 = vrcp.pop %v3127
    %v3133 = vmul.f32 1.0, %v3132
    %v3134 = vrcp.pop %v3128
    %v3135 = vmul.f32 1.0, %v3134
    %v3136 = vrcp.pop %v3129
    %v3137 = vmul.f32 1.0, %v3136
    %v3138 = vtanh.pop %v3110
    %v3139 = vtanh.pop %v3111
    %v3140 = vtanh.pop %v3112
    %v3141 = vtanh.pop %v3113
    %v3146 = vrot.slane %v2898, 7
    %v3147 = vrot.slane %v2899, 7
    %v3148 = vrot.slane %v2900, 7
    %v3149 = vrot.slane %v2901, 7
    %v3154 = vmul.f32 %v3131, %v3146
    %v3155 = vmul.f32 %v3133, %v3147
    %v3156 = vmul.f32 %v3135, %v3148
    %v3157 = vmul.f32 %v3137, %v3149
    %3162 = vrot.lane.b32.xlu0 %v3138, 64
    %v3163 = vpop.permute.xlu0 %3162
    %3164 = vrot.lane.b32.xlu0 %v3139, 64
    %v3165 = vpop.permute.xlu0 %3164
    %3166 = vrot.lane.b32.xlu0 %v3140, 64
    %v3167 = vpop.permute.xlu0 %3166
    %3168 = vrot.lane.b32.xlu0 %v3141, 64
    %v3169 = vpop.permute.xlu0 %3168
    %v3174 = vmul.f32 %v3131, %v3163
    %v3175 = vmul.f32 %v3133, %v3165
    %v3176 = vmul.f32 %v3135, %v3167
    %v3177 = vmul.f32 %v3137, %v3169
    %3182 = vrot.lane.b32.xlu0 %v3174, 32
    %v3183 = vpop.permute.xlu0 %3182
    %3184 = vrot.lane.b32.xlu0 %v3175, 32
    %v3185 = vpop.permute.xlu0 %3184
    %3186 = vrot.lane.b32.xlu0 %v3176, 32
    %v3187 = vpop.permute.xlu0 %3186
    %3188 = vrot.lane.b32.xlu0 %v3177, 32
    %v3189 = vpop.permute.xlu0 %3188
    %v3194 = vadd.f32 %v3154, %v3183
    %v3195 = vadd.f32 %v3155, %v3185
    %v3196 = vadd.f32 %v3156, %v3187
    %v3197 = vadd.f32 %v3157, %v3189
    %v3198 = vtanh.pop %v3194
    %v3199 = vtanh.pop %v3195
    %v3200 = vtanh.pop %v3196
    %v3201 = vtanh.pop %v3197
    %3206 = vrot.lane.b32.xlu0 %v3198, 64
    %v3207 = vpop.permute.xlu0 %3206
    %3208 = vrot.lane.b32.xlu0 %v3199, 64
    %v3209 = vpop.permute.xlu0 %3208
    %3210 = vrot.lane.b32.xlu0 %v3200, 64
    %v3211 = vpop.permute.xlu0 %3210
    %3212 = vrot.lane.b32.xlu0 %v3201, 64
    %v3213 = vpop.permute.xlu0 %3212
    %v3218 = vmul.f32 %v3131, %v3207
    %v3219 = vmul.f32 %v3133, %v3209
    %v3220 = vmul.f32 %v3135, %v3211
    %v3221 = vmul.f32 %v3137, %v3213
    %3224 = vrot.lane.b32.xlu0 %v3218, 32
    %v3225 = vpop.permute.xlu0 %3224
    %3226 = vrot.lane.b32.xlu0 %v3219, 32
    %v3227 = vpop.permute.xlu0 %3226
    %3230 = vst.msk [vmem:[#allocation3] sm:$0x2] %vm742, %v3225
    %3231 = vst.msk [vmem:[#allocation3 + $0x8] sm:$0x2] %vm742, %v3227
    %3234 = vrot.lane.b32.xlu0 %v3220, 64
    %v3235 = vpop.permute.xlu0 %3234
    %3236 = vrot.lane.b32.xlu0 %v3221, 64
    %v3237 = vpop.permute.xlu0 %3236
    %3240 = vst.msk [vmem:[#allocation3 + $0x5] sm:$0x2] %vm753, %v3235
    %3241 = vst.msk [vmem:[#allocation3 + $0xd] sm:$0x2] %vm753, %v3237
    %v3242 = vrot.slane %v2656, 3
    %v3243 = vrot.slane %v2662, 3
    %v3246 = vrot.slane %v3218, 1
    %v3247 = vsel %vm462, %v3219, %v3246
    %3248 = vrot.lane.b32.xlu0 %v3247, 32
    %v3249 = vpop.permute.xlu0 %3248
    %v3250 = vsel %vm183, %v3249, 0
    %3252 = vmatprep.subr.mxu0 0.0
    %3253 = vmatpush1.msra.mxu0 %v2664
    %3254 = vmatprep.subr.mxu0 0.0
    %3255 = vmatpush1.msra.mxu0 %v2665
    %3256 = vmatprep.subr.mxu0 0.0
    %3257 = vmatpush1.msra.mxu0 %v2666
    %3258 = vmatprep.subr.mxu0 0.0
    %3259 = vmatpush1.msra.mxu0 %v2667
    %3260 = vmatprep.subr.mxu0 0.0
    %3261 = vmatpush1.msra.mxu0 0.0
    %3262 = vmatprep.subr.mxu0 0.0
    %3263 = vmatpush1.msra.mxu0 0.0
    %3264 = vmatprep.subr.mxu0 0.0
    %3265 = vmatpush1.msra.mxu0 0.0
    %3266 = vmatprep.subr.mxu0 0.0
    %3267 = vmatpush1.msra.mxu0 0.0
    %3268 = vmatprep.subr.mxu0 0.0
    %3269 = vmatpush1.msra.mxu0 0.0
    %3270 = vmatprep.subr.mxu0 0.0
    %3271 = vmatpush1.msra.mxu0 0.0
    %3272 = vmatprep.subr.mxu0 0.0
    %3273 = vmatpush1.msra.mxu0 0.0
    %3274 = vmatprep.subr.mxu0 0.0
    %3275 = vmatpush1.msra.mxu0 0.0
    %3276 = vmatprep.subr.mxu0 0.0
    %3277 = vmatpush1.msra.mxu0 0.0
    %3278 = vmatprep.subr.mxu0 0.0
    %3279 = vmatpush1.msra.mxu0 0.0
    %3280 = vmatprep.subr.mxu0 0.0
    %3281 = vmatpush1.msra.mxu0 0.0
    %3282 = vmatprep.subr.mxu0 0.0
    %3283 = vmatpush1.msra.mxu0 0.0
    %3284 = vmatprep.subr.mxu0 0.0
    %3285 = vmatpush1.msra.mxu0 0.0
    %3286 = vmatprep.subr.mxu0 0.0
    %3287 = vmatpush1.msra.mxu0 0.0
    %3288 = vmatprep.subr.mxu0 0.0
    %3289 = vmatpush1.msra.mxu0 0.0
    %3290 = vmatprep.subr.mxu0 0.0
    %3291 = vmatpush1.msra.mxu0 0.0
    %3292 = vmatprep.subr.mxu0 0.0
    %3293 = vmatpush1.msra.mxu0 0.0
    %3294 = vmatprep.subr.mxu0 0.0
    %3295 = vmatpush1.msra.mxu0 0.0
    %3296 = vmatprep.subr.mxu0 0.0
    %3297 = vmatpush1.msra.mxu0 0.0
    %3298 = vmatprep.subr.mxu0 0.0
    %3299 = vmatpush1.msra.mxu0 0.0
    %3300 = vmatprep.subr.mxu0 0.0
    %3301 = vmatpush1.msra.mxu0 0.0
    %3302 = vmatprep.subr.mxu0 0.0
    %3303 = vmatpush1.msra.mxu0 0.0
    %3304 = vmatprep.subr.mxu0 0.0
    %3305 = vmatpush1.msra.mxu0 0.0
    %3306 = vmatprep.subr.mxu0 0.0
    %3307 = vmatpush1.msra.mxu0 0.0
    %3308 = vmatprep.subr.mxu0 0.0
    %3309 = vmatpush1.msra.mxu0 0.0
    %3310 = vmatprep.subr.mxu0 0.0
    %3311 = vmatpush1.msra.mxu0 0.0
    %3312 = vmatprep.subr.mxu0 0.0
    %3313 = vmatpush1.msra.mxu0 0.0
    %3314 = vmatprep.subr.mxu0 0.0
    %3315 = vmatpush1.msra.mxu0 0.0
    %3316 = vmatprep.mubr.f32.mxu0 0.0
    %3317 = vmatmul.mubr.f32.gmra.mrb[0].mxu0 %v3250
    %v3318 = vpop.f32.mrb[0].mxu0
    %v3319 = vadd.f32 0.0, %v3318
    %v3320 = vpop.f32.mrb[0].mxu0
    %3321 = vdwg.mxu0
    %v3322 = vrot.slane %v3220, 1
    %v3323 = vsel %vm462, %v3221, %v3322
    %3324 = vrot.lane.b32.xlu0 %v3323, 32
    %v3325 = vpop.permute.xlu0 %3324
    %v3326 = vsel %vm183, %v3325, 0
    %3328 = vmatprep.subr.mxu0 0.0
    %3329 = vmatpush1.msra.mxu0 %v2668
    %3330 = vmatprep.subr.mxu0 0.0
    %3331 = vmatpush1.msra.mxu0 %v2669
    %3332 = vmatprep.subr.mxu0 0.0
    %3333 = vmatpush1.msra.mxu0 %v2670
    %3334 = vmatprep.subr.mxu0 0.0
    %3335 = vmatpush1.msra.mxu0 %v2671
    %3336 = vmatprep.subr.mxu0 0.0
    %3337 = vmatpush1.msra.mxu0 0.0
    %3338 = vmatprep.subr.mxu0 0.0
    %3339 = vmatpush1.msra.mxu0 0.0
    %3340 = vmatprep.subr.mxu0 0.0
    %3341 = vmatpush1.msra.mxu0 0.0
    %3342 = vmatprep.subr.mxu0 0.0
    %3343 = vmatpush1.msra.mxu0 0.0
    %3344 = vmatprep.subr.mxu0 0.0
    %3345 = vmatpush1.msra.mxu0 0.0
    %3346 = vmatprep.subr.mxu0 0.0
    %3347 = vmatpush1.msra.mxu0 0.0
    %3348 = vmatprep.subr.mxu0 0.0
    %3349 = vmatpush1.msra.mxu0 0.0
    %3350 = vmatprep.subr.mxu0 0.0
    %3351 = vmatpush1.msra.mxu0 0.0
    %3352 = vmatprep.subr.mxu0 0.0
    %3353 = vmatpush1.msra.mxu0 0.0
    %3354 = vmatprep.subr.mxu0 0.0
    %3355 = vmatpush1.msra.mxu0 0.0
    %3356 = vmatprep.subr.mxu0 0.0
    %3357 = vmatpush1.msra.mxu0 0.0
    %3358 = vmatprep.subr.mxu0 0.0
    %3359 = vmatpush1.msra.mxu0 0.0
    %3360 = vmatprep.subr.mxu0 0.0
    %3361 = vmatpush1.msra.mxu0 0.0
    %3362 = vmatprep.subr.mxu0 0.0
    %3363 = vmatpush1.msra.mxu0 0.0
    %3364 = vmatprep.subr.mxu0 0.0
    %3365 = vmatpush1.msra.mxu0 0.0
    %3366 = vmatprep.subr.mxu0 0.0
    %3367 = vmatpush1.msra.mxu0 0.0
    %3368 = vmatprep.subr.mxu0 0.0
    %3369 = vmatpush1.msra.mxu0 0.0
    %3370 = vmatprep.subr.mxu0 0.0
    %3371 = vmatpush1.msra.mxu0 0.0
    %3372 = vmatprep.subr.mxu0 0.0
    %3373 = vmatpush1.msra.mxu0 0.0
    %3374 = vmatprep.subr.mxu0 0.0
    %3375 = vmatpush1.msra.mxu0 0.0
    %3376 = vmatprep.subr.mxu0 0.0
    %3377 = vmatpush1.msra.mxu0 0.0
    %3378 = vmatprep.subr.mxu0 0.0
    %3379 = vmatpush1.msra.mxu0 0.0
    %3380 = vmatprep.subr.mxu0 0.0
    %3381 = vmatpush1.msra.mxu0 0.0
    %3382 = vmatprep.subr.mxu0 0.0
    %3383 = vmatpush1.msra.mxu0 0.0
    %3384 = vmatprep.subr.mxu0 0.0
    %3385 = vmatpush1.msra.mxu0 0.0
    %3386 = vmatprep.subr.mxu0 0.0
    %3387 = vmatpush1.msra.mxu0 0.0
    %3388 = vmatprep.subr.mxu0 0.0
    %3389 = vmatpush1.msra.mxu0 0.0
    %3390 = vmatprep.subr.mxu0 0.0
    %3391 = vmatpush1.msra.mxu0 0.0
    %3392 = vmatprep.mubr.f32.mxu0 0.0
    %3393 = vmatmul.mubr.f32.gmra.mrb[0].mxu0 %v3326
    %v3394 = vpop.f32.mrb[0].mxu0
    %v3395 = vadd.f32 0.0, %v3394
    %v3396 = vpop.f32.mrb[0].mxu0
    %3397 = vdwg.mxu0
    %v3400 = vrot.slane %v3319, 6
    %v3401 = vrot.slane %v3319, 7
    %v3402 = vrot.slane %v3395, 6
    %v3403 = vrot.slane %v3395, 7
    %v3408 = vadd.f32 %v2654, %v3400
    %v3409 = vadd.f32 %v2660, %v3401
    %v3410 = vadd.f32 %v3242, %v3402
    %v3411 = vadd.f32 %v3243, %v3403
    %v3412 = vxor.u32 %v3408, 2147483648
    %v3413 = vxor.u32 %v3409, 2147483648
    %v3414 = vxor.u32 %v3410, 2147483648
    %v3415 = vxor.u32 %v3411, 2147483648
    %v3416 = vmul.f32 %v3412, 1.442695
    %v3417 = vpow.pop %v3416
    %v3418 = vmul.f32 %v3413, 1.442695
    %v3419 = vpow.pop %v3418
    %v3420 = vmul.f32 %v3414, 1.442695
    %v3421 = vpow.pop %v3420
    %v3422 = vmul.f32 %v3415, 1.442695
    %v3423 = vpow.pop %v3422
    %v3424 = vadd.f32 %v3417, 1.0
    %v3425 = vadd.f32 %v3419, 1.0
    %v3426 = vadd.f32 %v3421, 1.0
    %v3427 = vadd.f32 %v3423, 1.0
    %v3428 = vrcp.pop %v3424
    %v3429 = vmul.f32 1.0, %v3428
    %v3430 = vrcp.pop %v3425
    %v3431 = vmul.f32 1.0, %v3430
    %v3432 = vrcp.pop %v3426
    %v3433 = vmul.f32 1.0, %v3432
    %v3434 = vrcp.pop %v3427
    %v3435 = vmul.f32 1.0, %v3434
    %v3436 = vtanh.pop %v3408
    %v3437 = vtanh.pop %v3409
    %v3438 = vtanh.pop %v3410
    %v3439 = vtanh.pop %v3411
    %v3444 = vrot.slane %v3194, 7
    %v3445 = vrot.slane %v3195, 7
    %v3446 = vrot.slane %v3196, 7
    %v3447 = vrot.slane %v3197, 7
    %v3452 = vmul.f32 %v3429, %v3444
    %v3453 = vmul.f32 %v3431, %v3445
    %v3454 = vmul.f32 %v3433, %v3446
    %v3455 = vmul.f32 %v3435, %v3447
    %3460 = vrot.lane.b32.xlu0 %v3436, 64
    %v3461 = vpop.permute.xlu0 %3460
    %3462 = vrot.lane.b32.xlu0 %v3437, 64
    %v3463 = vpop.permute.xlu0 %3462
    %3464 = vrot.lane.b32.xlu0 %v3438, 64
    %v3465 = vpop.permute.xlu0 %3464
    %3466 = vrot.lane.b32.xlu0 %v3439, 64
    %v3467 = vpop.permute.xlu0 %3466
    %v3472 = vmul.f32 %v3429, %v3461
    %v3473 = vmul.f32 %v3431, %v3463
    %v3474 = vmul.f32 %v3433, %v3465
    %v3475 = vmul.f32 %v3435, %v3467
    %3480 = vrot.lane.b32.xlu0 %v3472, 32
    %v3481 = vpop.permute.xlu0 %3480
    %3482 = vrot.lane.b32.xlu0 %v3473, 32
    %v3483 = vpop.permute.xlu0 %3482
    %3484 = vrot.lane.b32.xlu0 %v3474, 32
    %v3485 = vpop.permute.xlu0 %3484
    %3486 = vrot.lane.b32.xlu0 %v3475, 32
    %v3487 = vpop.permute.xlu0 %3486
    %v3492 = vadd.f32 %v3452, %v3481
    %v3493 = vadd.f32 %v3453, %v3483
    %v3494 = vadd.f32 %v3454, %v3485
    %v3495 = vadd.f32 %v3455, %v3487
    %v3496 = vtanh.pop %v3492
    %v3497 = vtanh.pop %v3493
    %v3498 = vtanh.pop %v3494
    %v3499 = vtanh.pop %v3495
    %3504 = vrot.lane.b32.xlu0 %v3496, 64
    %v3505 = vpop.permute.xlu0 %3504
    %3506 = vrot.lane.b32.xlu0 %v3497, 64
    %v3507 = vpop.permute.xlu0 %3506
    %3508 = vrot.lane.b32.xlu0 %v3498, 64
    %v3509 = vpop.permute.xlu0 %3508
    %3510 = vrot.lane.b32.xlu0 %v3499, 64
    %v3511 = vpop.permute.xlu0 %3510
    %v3516 = vmul.f32 %v3429, %v3505
    %v3517 = vmul.f32 %v3431, %v3507
    %v3518 = vmul.f32 %v3433, %v3509
    %v3519 = vmul.f32 %v3435, %v3511
    %3522 = vrot.lane.b32.xlu0 %v3516, 32
    %v3523 = vpop.permute.xlu0 %3522
    %3524 = vrot.lane.b32.xlu0 %v3517, 32
    %v3525 = vpop.permute.xlu0 %3524
    %3528 = vst.msk [vmem:[#allocation3] sm:$0x4] %vm1042, %v3523
    %3529 = vst.msk [vmem:[#allocation3 + $0x8] sm:$0x4] %vm1042, %v3525
    %3532 = vrot.lane.b32.xlu0 %v3518, 64
    %v3533 = vpop.permute.xlu0 %3532
    %3534 = vrot.lane.b32.xlu0 %v3519, 64
    %v3535 = vpop.permute.xlu0 %3534
    %3538 = vst.msk [vmem:[#allocation3 + $0x3] sm:$0x4] %vm1053, %v3533
    %3539 = vst.msk [vmem:[#allocation3 + $0xb] sm:$0x4] %vm1053, %v3535
    %v3540 = vrot.slane %v2656, 1
    %v3541 = vrot.slane %v2662, 1
    %v3544 = vrot.slane %v3516, 2
    %v3545 = vrot.slane %v3517, 1
    %v3546 = vsel %vm462, %v3545, %v3544
    %3547 = vrot.lane.b32.xlu0 %v3546, 32
    %v3548 = vpop.permute.xlu0 %3547
    %v3549 = vsel %vm183, %v3548, 0
    %3551 = vmatprep.subr.mxu0 0.0
    %3552 = vmatpush1.msra.mxu0 %v2664
    %3553 = vmatprep.subr.mxu0 0.0
    %3554 = vmatpush1.msra.mxu0 %v2665
    %3555 = vmatprep.subr.mxu0 0.0
    %3556 = vmatpush1.msra.mxu0 %v2666
    %3557 = vmatprep.subr.mxu0 0.0
    %3558 = vmatpush1.msra.mxu0 %v2667
    %3559 = vmatprep.subr.mxu0 0.0
    %3560 = vmatpush1.msra.mxu0 0.0
    %3561 = vmatprep.subr.mxu0 0.0
    %3562 = vmatpush1.msra.mxu0 0.0
    %3563 = vmatprep.subr.mxu0 0.0
    %3564 = vmatpush1.msra.mxu0 0.0
    %3565 = vmatprep.subr.mxu0 0.0
    %3566 = vmatpush1.msra.mxu0 0.0
    %3567 = vmatprep.subr.mxu0 0.0
    %3568 = vmatpush1.msra.mxu0 0.0
    %3569 = vmatprep.subr.mxu0 0.0
    %3570 = vmatpush1.msra.mxu0 0.0
    %3571 = vmatprep.subr.mxu0 0.0
    %3572 = vmatpush1.msra.mxu0 0.0
    %3573 = vmatprep.subr.mxu0 0.0
    %3574 = vmatpush1.msra.mxu0 0.0
    %3575 = vmatprep.subr.mxu0 0.0
    %3576 = vmatpush1.msra.mxu0 0.0
    %3577 = vmatprep.subr.mxu0 0.0
    %3578 = vmatpush1.msra.mxu0 0.0
    %3579 = vmatprep.subr.mxu0 0.0
    %3580 = vmatpush1.msra.mxu0 0.0
    %3581 = vmatprep.subr.mxu0 0.0
    %3582 = vmatpush1.msra.mxu0 0.0
    %3583 = vmatprep.subr.mxu0 0.0
    %3584 = vmatpush1.msra.mxu0 0.0
    %3585 = vmatprep.subr.mxu0 0.0
    %3586 = vmatpush1.msra.mxu0 0.0
    %3587 = vmatprep.subr.mxu0 0.0
    %3588 = vmatpush1.msra.mxu0 0.0
    %3589 = vmatprep.subr.mxu0 0.0
    %3590 = vmatpush1.msra.mxu0 0.0
    %3591 = vmatprep.subr.mxu0 0.0
    %3592 = vmatpush1.msra.mxu0 0.0
    %3593 = vmatprep.subr.mxu0 0.0
    %3594 = vmatpush1.msra.mxu0 0.0
    %3595 = vmatprep.subr.mxu0 0.0
    %3596 = vmatpush1.msra.mxu0 0.0
    %3597 = vmatprep.subr.mxu0 0.0
    %3598 = vmatpush1.msra.mxu0 0.0
    %3599 = vmatprep.subr.mxu0 0.0
    %3600 = vmatpush1.msra.mxu0 0.0
    %3601 = vmatprep.subr.mxu0 0.0
    %3602 = vmatpush1.msra.mxu0 0.0
    %3603 = vmatprep.subr.mxu0 0.0
    %3604 = vmatpush1.msra.mxu0 0.0
    %3605 = vmatprep.subr.mxu0 0.0
    %3606 = vmatpush1.msra.mxu0 0.0
    %3607 = vmatprep.subr.mxu0 0.0
    %3608 = vmatpush1.msra.mxu0 0.0
    %3609 = vmatprep.subr.mxu0 0.0
    %3610 = vmatpush1.msra.mxu0 0.0
    %3611 = vmatprep.subr.mxu0 0.0
    %3612 = vmatpush1.msra.mxu0 0.0
    %3613 = vmatprep.subr.mxu0 0.0
    %3614 = vmatpush1.msra.mxu0 0.0
    %3615 = vmatprep.mubr.f32.mxu0 0.0
    %3616 = vmatmul.mubr.f32.gmra.mrb[0].mxu0 %v3549
    %v3617 = vpop.f32.mrb[0].mxu0
    %v3618 = vadd.f32 0.0, %v3617
    %v3619 = vpop.f32.mrb[0].mxu0
    %3620 = vdwg.mxu0
    %v3621 = vrot.slane %v3518, 2
    %v3622 = vrot.slane %v3519, 1
    %v3623 = vsel %vm462, %v3622, %v3621
    %3624 = vrot.lane.b32.xlu0 %v3623, 32
    %v3625 = vpop.permute.xlu0 %3624
    %v3626 = vsel %vm183, %v3625, 0
    %3628 = vmatprep.subr.mxu0 0.0
    %3629 = vmatpush1.msra.mxu0 %v2668
    %3630 = vmatprep.subr.mxu0 0.0
    %3631 = vmatpush1.msra.mxu0 %v2669
    %3632 = vmatprep.subr.mxu0 0.0
    %3633 = vmatpush1.msra.mxu0 %v2670
    %3634 = vmatprep.subr.mxu0 0.0
    %3635 = vmatpush1.msra.mxu0 %v2671
    %3636 = vmatprep.subr.mxu0 0.0
    %3637 = vmatpush1.msra.mxu0 0.0
    %3638 = vmatprep.subr.mxu0 0.0
    %3639 = vmatpush1.msra.mxu0 0.0
    %3640 = vmatprep.subr.mxu0 0.0
    %3641 = vmatpush1.msra.mxu0 0.0
    %3642 = vmatprep.subr.mxu0 0.0
    %3643 = vmatpush1.msra.mxu0 0.0
    %3644 = vmatprep.subr.mxu0 0.0
    %3645 = vmatpush1.msra.mxu0 0.0
    %3646 = vmatprep.subr.mxu0 0.0
    %3647 = vmatpush1.msra.mxu0 0.0
    %3648 = vmatprep.subr.mxu0 0.0
    %3649 = vmatpush1.msra.mxu0 0.0
    %3650 = vmatprep.subr.mxu0 0.0
    %3651 = vmatpush1.msra.mxu0 0.0
    %3652 = vmatprep.subr.mxu0 0.0
    %3653 = vmatpush1.msra.mxu0 0.0
    %3654 = vmatprep.subr.mxu0 0.0
    %3655 = vmatpush1.msra.mxu0 0.0
    %3656 = vmatprep.subr.mxu0 0.0
    %3657 = vmatpush1.msra.mxu0 0.0
    %3658 = vmatprep.subr.mxu0 0.0
    %3659 = vmatpush1.msra.mxu0 0.0
    %3660 = vmatprep.subr.mxu0 0.0
    %3661 = vmatpush1.msra.mxu0 0.0
    %3662 = vmatprep.subr.mxu0 0.0
    %3663 = vmatpush1.msra.mxu0 0.0
    %3664 = vmatprep.subr.mxu0 0.0
    %3665 = vmatpush1.msra.mxu0 0.0
    %3666 = vmatprep.subr.mxu0 0.0
    %3667 = vmatpush1.msra.mxu0 0.0
    %3668 = vmatprep.subr.mxu0 0.0
    %3669 = vmatpush1.msra.mxu0 0.0
    %3670 = vmatprep.subr.mxu0 0.0
    %3671 = vmatpush1.msra.mxu0 0.0
    %3672 = vmatprep.subr.mxu0 0.0
    %3673 = vmatpush1.msra.mxu0 0.0
    %3674 = vmatprep.subr.mxu0 0.0
    %3675 = vmatpush1.msra.mxu0 0.0
    %3676 = vmatprep.subr.mxu0 0.0
    %3677 = vmatpush1.msra.mxu0 0.0
    %3678 = vmatprep.subr.mxu0 0.0
    %3679 = vmatpush1.msra.mxu0 0.0
    %3680 = vmatprep.subr.mxu0 0.0
    %3681 = vmatpush1.msra.mxu0 0.0
    %3682 = vmatprep.subr.mxu0 0.0
    %3683 = vmatpush1.msra.mxu0 0.0
    %3684 = vmatprep.subr.mxu0 0.0
    %3685 = vmatpush1.msra.mxu0 0.0
    %3686 = vmatprep.subr.mxu0 0.0
    %3687 = vmatpush1.msra.mxu0 0.0
    %3688 = vmatprep.subr.mxu0 0.0
    %3689 = vmatpush1.msra.mxu0 0.0
    %3690 = vmatprep.subr.mxu0 0.0
    %3691 = vmatpush1.msra.mxu0 0.0
    %3692 = vmatprep.mubr.f32.mxu0 0.0
    %3693 = vmatmul.mubr.f32.gmra.mrb[0].mxu0 %v3626
    %v3694 = vpop.f32.mrb[0].mxu0
    %v3695 = vadd.f32 0.0, %v3694
    %v3696 = vpop.f32.mrb[0].mxu0
    %3697 = vdwg.mxu0
    %v3700 = vrot.slane %v3618, 5
    %v3701 = vrot.slane %v3618, 6
    %v3702 = vrot.slane %v3695, 5
    %v3703 = vrot.slane %v3695, 6
    %v3708 = vadd.f32 %v2654, %v3700
    %v3709 = vadd.f32 %v2660, %v3701
    %v3710 = vadd.f32 %v3540, %v3702
    %v3711 = vadd.f32 %v3541, %v3703
    %v3712 = vxor.u32 %v3708, 2147483648
    %v3713 = vxor.u32 %v3709, 2147483648
    %v3714 = vxor.u32 %v3710, 2147483648
    %v3715 = vxor.u32 %v3711, 2147483648
    %v3716 = vmul.f32 %v3712, 1.442695
    %v3717 = vpow.pop %v3716
    %v3718 = vmul.f32 %v3713, 1.442695
    %v3719 = vpow.pop %v3718
    %v3720 = vmul.f32 %v3714, 1.442695
    %v3721 = vpow.pop %v3720
    %v3722 = vmul.f32 %v3715, 1.442695
    %v3723 = vpow.pop %v3722
    %v3724 = vadd.f32 %v3717, 1.0
    %v3725 = vadd.f32 %v3719, 1.0
    %v3726 = vadd.f32 %v3721, 1.0
    %v3727 = vadd.f32 %v3723, 1.0
    %v3728 = vrcp.pop %v3724
    %v3729 = vmul.f32 1.0, %v3728
    %v3730 = vrcp.pop %v3725
    %v3731 = vmul.f32 1.0, %v3730
    %v3732 = vrcp.pop %v3726
    %v3733 = vmul.f32 1.0, %v3732
    %v3734 = vrcp.pop %v3727
    %v3735 = vmul.f32 1.0, %v3734
    %v3736 = vtanh.pop %v3708
    %v3737 = vtanh.pop %v3709
    %v3738 = vtanh.pop %v3710
    %v3739 = vtanh.pop %v3711
    %v3744 = vrot.slane %v3492, 7
    %v3745 = vrot.slane %v3493, 7
    %v3746 = vrot.slane %v3494, 7
    %v3747 = vrot.slane %v3495, 7
    %v3752 = vmul.f32 %v3729, %v3744
    %v3753 = vmul.f32 %v3731, %v3745
    %v3754 = vmul.f32 %v3733, %v3746
    %v3755 = vmul.f32 %v3735, %v3747
    %3760 = vrot.lane.b32.xlu0 %v3736, 64
    %v3761 = vpop.permute.xlu0 %3760
    %3762 = vrot.lane.b32.xlu0 %v3737, 64
    %v3763 = vpop.permute.xlu0 %3762
    %3764 = vrot.lane.b32.xlu0 %v3738, 64
    %v3765 = vpop.permute.xlu0 %3764
    %3766 = vrot.lane.b32.xlu0 %v3739, 64
    %v3767 = vpop.permute.xlu0 %3766
    %v3772 = vmul.f32 %v3729, %v3761
    %v3773 = vmul.f32 %v3731, %v3763
    %v3774 = vmul.f32 %v3733, %v3765
    %v3775 = vmul.f32 %v3735, %v3767
    %3780 = vrot.lane.b32.xlu0 %v3772, 32
    %v3781 = vpop.permute.xlu0 %3780
    %3782 = vrot.lane.b32.xlu0 %v3773, 32
    %v3783 = vpop.permute.xlu0 %3782
    %3784 = vrot.lane.b32.xlu0 %v3774, 32
    %v3785 = vpop.permute.xlu0 %3784
    %3786 = vrot.lane.b32.xlu0 %v3775, 32
    %v3787 = vpop.permute.xlu0 %3786
    %v3792 = vadd.f32 %v3752, %v3781
    %v3793 = vadd.f32 %v3753, %v3783
    %v3794 = vadd.f32 %v3754, %v3785
    %v3795 = vadd.f32 %v3755, %v3787
    %v3796 = vtanh.pop %v3792
    %v3797 = vtanh.pop %v3793
    %v3798 = vtanh.pop %v3794
    %v3799 = vtanh.pop %v3795
    %3804 = vrot.lane.b32.xlu0 %v3796, 64
    %v3805 = vpop.permute.xlu0 %3804
    %3806 = vrot.lane.b32.xlu0 %v3797, 64
    %v3807 = vpop.permute.xlu0 %3806
    %3808 = vrot.lane.b32.xlu0 %v3798, 64
    %v3809 = vpop.permute.xlu0 %3808
    %3810 = vrot.lane.b32.xlu0 %v3799, 64
    %v3811 = vpop.permute.xlu0 %3810
    %v3816 = vmul.f32 %v3729, %v3805
    %v3817 = vmul.f32 %v3731, %v3807
    %v3818 = vmul.f32 %v3733, %v3809
    %v3819 = vmul.f32 %v3735, %v3811
    %3822 = vrot.lane.b32.xlu0 %v3816, 32
    %v3823 = vpop.permute.xlu0 %3822
    %3824 = vrot.lane.b32.xlu0 %v3817, 32
    %v3825 = vpop.permute.xlu0 %3824
    %3828 = vst.msk [vmem:[#allocation3] sm:$0x8] %vm1344, %v3823
    %3829 = vst.msk [vmem:[#allocation3 + $0x8] sm:$0x8] %vm1344, %v3825
    %3832 = vrot.lane.b32.xlu0 %v3818, 64
    %v3833 = vpop.permute.xlu0 %3832
    %3834 = vrot.lane.b32.xlu0 %v3819, 64
    %v3835 = vpop.permute.xlu0 %3834
    %3838 = vst.msk [vmem:[#allocation3 + $0x1] sm:$0x8] %vm1355, %v3833
    %3839 = vst.msk [vmem:[#allocation3 + $0x9] sm:$0x8] %vm1355, %v3835
    %v3840 = vrot.slane %v3816, 3
    %v3841 = vrot.slane %v3817, 2
    %v3842 = vsel %vm462, %v3841, %v3840
    %3843 = vrot.lane.b32.xlu0 %v3842, 32
    %v3844 = vpop.permute.xlu0 %3843
    %v3845 = vsel %vm183, %v3844, 0
    %3847 = vmatprep.subr.mxu0 0.0
    %3848 = vmatpush1.msra.mxu0 %v2664
    %3849 = vmatprep.subr.mxu0 0.0
    %3850 = vmatpush1.msra.mxu0 %v2665
    %3851 = vmatprep.subr.mxu0 0.0
    %3852 = vmatpush1.msra.mxu0 %v2666
    %3853 = vmatprep.subr.mxu0 0.0
    %3854 = vmatpush1.msra.mxu0 %v2667
    %3855 = vmatprep.subr.mxu0 0.0
    %3856 = vmatpush1.msra.mxu0 0.0
    %3857 = vmatprep.subr.mxu0 0.0
    %3858 = vmatpush1.msra.mxu0 0.0
    %3859 = vmatprep.subr.mxu0 0.0
    %3860 = vmatpush1.msra.mxu0 0.0
    %3861 = vmatprep.subr.mxu0 0.0
    %3862 = vmatpush1.msra.mxu0 0.0
    %3863 = vmatprep.subr.mxu0 0.0
    %3864 = vmatpush1.msra.mxu0 0.0
    %3865 = vmatprep.subr.mxu0 0.0
    %3866 = vmatpush1.msra.mxu0 0.0
    %3867 = vmatprep.subr.mxu0 0.0
    %3868 = vmatpush1.msra.mxu0 0.0
    %3869 = vmatprep.subr.mxu0 0.0
    %3870 = vmatpush1.msra.mxu0 0.0
    %3871 = vmatprep.subr.mxu0 0.0
    %3872 = vmatpush1.msra.mxu0 0.0
    %3873 = vmatprep.subr.mxu0 0.0
    %3874 = vmatpush1.msra.mxu0 0.0
    %3875 = vmatprep.subr.mxu0 0.0
    %3876 = vmatpush1.msra.mxu0 0.0
    %3877 = vmatprep.subr.mxu0 0.0
    %3878 = vmatpush1.msra.mxu0 0.0
    %3879 = vmatprep.subr.mxu0 0.0
    %3880 = vmatpush1.msra.mxu0 0.0
    %3881 = vmatprep.subr.mxu0 0.0
    %3882 = vmatpush1.msra.mxu0 0.0
    %3883 = vmatprep.subr.mxu0 0.0
    %3884 = vmatpush1.msra.mxu0 0.0
    %3885 = vmatprep.subr.mxu0 0.0
    %3886 = vmatpush1.msra.mxu0 0.0
    %3887 = vmatprep.subr.mxu0 0.0
    %3888 = vmatpush1.msra.mxu0 0.0
    %3889 = vmatprep.subr.mxu0 0.0
    %3890 = vmatpush1.msra.mxu0 0.0
    %3891 = vmatprep.subr.mxu0 0.0
    %3892 = vmatpush1.msra.mxu0 0.0
    %3893 = vmatprep.subr.mxu0 0.0
    %3894 = vmatpush1.msra.mxu0 0.0
    %3895 = vmatprep.subr.mxu0 0.0
    %3896 = vmatpush1.msra.mxu0 0.0
    %3897 = vmatprep.subr.mxu0 0.0
    %3898 = vmatpush1.msra.mxu0 0.0
    %3899 = vmatprep.subr.mxu0 0.0
    %3900 = vmatpush1.msra.mxu0 0.0
    %3901 = vmatprep.subr.mxu0 0.0
    %3902 = vmatpush1.msra.mxu0 0.0
    %3903 = vmatprep.subr.mxu0 0.0
    %3904 = vmatpush1.msra.mxu0 0.0
    %3905 = vmatprep.subr.mxu0 0.0
    %3906 = vmatpush1.msra.mxu0 0.0
    %3907 = vmatprep.subr.mxu0 0.0
    %3908 = vmatpush1.msra.mxu0 0.0
    %3909 = vmatprep.subr.mxu0 0.0
    %3910 = vmatpush1.msra.mxu0 0.0
    %3911 = vmatprep.mubr.f32.mxu0 0.0
    %3912 = vmatmul.mubr.f32.gmra.mrb[0].mxu0 %v3845
    %v3913 = vpop.f32.mrb[0].mxu0
    %v3914 = vadd.f32 0.0, %v3913
    %v3915 = vpop.f32.mrb[0].mxu0
    %3916 = vdwg.mxu0
    %v3917 = vrot.slane %v3818, 3
    %v3918 = vrot.slane %v3819, 2
    %v3919 = vsel %vm462, %v3918, %v3917
    %3920 = vrot.lane.b32.xlu0 %v3919, 32
    %v3921 = vpop.permute.xlu0 %3920
    %v3922 = vsel %vm183, %v3921, 0
    %3924 = vmatprep.subr.mxu0 0.0
    %3925 = vmatpush1.msra.mxu0 %v2668
    %3926 = vmatprep.subr.mxu0 0.0
    %3927 = vmatpush1.msra.mxu0 %v2669
    %3928 = vmatprep.subr.mxu0 0.0
    %3929 = vmatpush1.msra.mxu0 %v2670
    %3930 = vmatprep.subr.mxu0 0.0
    %3931 = vmatpush1.msra.mxu0 %v2671
    %3932 = vmatprep.subr.mxu0 0.0
    %3933 = vmatpush1.msra.mxu0 0.0
    %3934 = vmatprep.subr.mxu0 0.0
    %3935 = vmatpush1.msra.mxu0 0.0
    %3936 = vmatprep.subr.mxu0 0.0
    %3937 = vmatpush1.msra.mxu0 0.0
    %3938 = vmatprep.subr.mxu0 0.0
    %3939 = vmatpush1.msra.mxu0 0.0
    %3940 = vmatprep.subr.mxu0 0.0
    %3941 = vmatpush1.msra.mxu0 0.0
    %3942 = vmatprep.subr.mxu0 0.0
    %3943 = vmatpush1.msra.mxu0 0.0
    %3944 = vmatprep.subr.mxu0 0.0
    %3945 = vmatpush1.msra.mxu0 0.0
    %3946 = vmatprep.subr.mxu0 0.0
    %3947 = vmatpush1.msra.mxu0 0.0
    %3948 = vmatprep.subr.mxu0 0.0
    %3949 = vmatpush1.msra.mxu0 0.0
    %3950 = vmatprep.subr.mxu0 0.0
    %3951 = vmatpush1.msra.mxu0 0.0
    %3952 = vmatprep.subr.mxu0 0.0
    %3953 = vmatpush1.msra.mxu0 0.0
    %3954 = vmatprep.subr.mxu0 0.0
    %3955 = vmatpush1.msra.mxu0 0.0
    %3956 = vmatprep.subr.mxu0 0.0
    %3957 = vmatpush1.msra.mxu0 0.0
    %3958 = vmatprep.subr.mxu0 0.0
    %3959 = vmatpush1.msra.mxu0 0.0
    %3960 = vmatprep.subr.mxu0 0.0
    %3961 = vmatpush1.msra.mxu0 0.0
    %3962 = vmatprep.subr.mxu0 0.0
    %3963 = vmatpush1.msra.mxu0 0.0
    %3964 = vmatprep.subr.mxu0 0.0
    %3965 = vmatpush1.msra.mxu0 0.0
    %3966 = vmatprep.subr.mxu0 0.0
    %3967 = vmatpush1.msra.mxu0 0.0
    %3968 = vmatprep.subr.mxu0 0.0
    %3969 = vmatpush1.msra.mxu0 0.0
    %3970 = vmatprep.subr.mxu0 0.0
    %3971 = vmatpush1.msra.mxu0 0.0
    %3972 = vmatprep.subr.mxu0 0.0
    %3973 = vmatpush1.msra.mxu0 0.0
    %3974 = vmatprep.subr.mxu0 0.0
    %3975 = vmatpush1.msra.mxu0 0.0
    %3976 = vmatprep.subr.mxu0 0.0
    %3977 = vmatpush1.msra.mxu0 0.0
    %3978 = vmatprep.subr.mxu0 0.0
    %3979 = vmatpush1.msra.mxu0 0.0
    %3980 = vmatprep.subr.mxu0 0.0
    %3981 = vmatpush1.msra.mxu0 0.0
    %3982 = vmatprep.subr.mxu0 0.0
    %3983 = vmatpush1.msra.mxu0 0.0
    %3984 = vmatprep.subr.mxu0 0.0
    %3985 = vmatpush1.msra.mxu0 0.0
    %3986 = vmatprep.subr.mxu0 0.0
    %3987 = vmatpush1.msra.mxu0 0.0
    %3988 = vmatprep.mubr.f32.mxu0 0.0
    %3989 = vmatmul.mubr.f32.gmra.mrb[0].mxu0 %v3922
    %v3990 = vpop.f32.mrb[0].mxu0
    %v3991 = vadd.f32 0.0, %v3990
    %v3992 = vpop.f32.mrb[0].mxu0
    %3993 = vdwg.mxu0
    %v3996 = vrot.slane %v3914, 4
    %v3997 = vrot.slane %v3914, 5
    %v3998 = vrot.slane %v3991, 4
    %v3999 = vrot.slane %v3991, 5
    %v4004 = vadd.f32 %v2654, %v3996
    %v4005 = vadd.f32 %v2660, %v3997
    %v4006 = vadd.f32 %v2674, %v3998
    %v4007 = vadd.f32 %v2675, %v3999
    %v4008 = vxor.u32 %v4004, 2147483648
    %v4009 = vxor.u32 %v4005, 2147483648
    %v4010 = vxor.u32 %v4006, 2147483648
    %v4011 = vxor.u32 %v4007, 2147483648
    %v4012 = vmul.f32 %v4008, 1.442695
    %v4013 = vpow.pop %v4012
    %v4014 = vmul.f32 %v4009, 1.442695
    %v4015 = vpow.pop %v4014
    %v4016 = vmul.f32 %v4010, 1.442695
    %v4017 = vpow.pop %v4016
    %v4018 = vmul.f32 %v4011, 1.442695
    %v4019 = vpow.pop %v4018
    %v4020 = vadd.f32 %v4013, 1.0
    %v4021 = vadd.f32 %v4015, 1.0
    %v4022 = vadd.f32 %v4017, 1.0
    %v4023 = vadd.f32 %v4019, 1.0
    %v4024 = vrcp.pop %v4020
    %v4025 = vmul.f32 1.0, %v4024
    %v4026 = vrcp.pop %v4021
    %v4027 = vmul.f32 1.0, %v4026
    %v4028 = vrcp.pop %v4022
    %v4029 = vmul.f32 1.0, %v4028
    %v4030 = vrcp.pop %v4023
    %v4031 = vmul.f32 1.0, %v4030
    %v4032 = vtanh.pop %v4004
    %v4033 = vtanh.pop %v4005
    %v4034 = vtanh.pop %v4006
    %v4035 = vtanh.pop %v4007
    %v4040 = vrot.slane %v3792, 7
    %v4041 = vrot.slane %v3793, 7
    %v4042 = vrot.slane %v3794, 7
    %v4043 = vrot.slane %v3795, 7
    %v4048 = vmul.f32 %v4025, %v4040
    %v4049 = vmul.f32 %v4027, %v4041
    %v4050 = vmul.f32 %v4029, %v4042
    %v4051 = vmul.f32 %v4031, %v4043
    %4056 = vrot.lane.b32.xlu0 %v4032, 64
    %v4057 = vpop.permute.xlu0 %4056
    %4058 = vrot.lane.b32.xlu0 %v4033, 64
    %v4059 = vpop.permute.xlu0 %4058
    %4060 = vrot.lane.b32.xlu0 %v4034, 64
    %v4061 = vpop.permute.xlu0 %4060
    %4062 = vrot.lane.b32.xlu0 %v4035, 64
    %v4063 = vpop.permute.xlu0 %4062
    %v4068 = vmul.f32 %v4025, %v4057
    %v4069 = vmul.f32 %v4027, %v4059
    %v4070 = vmul.f32 %v4029, %v4061
    %v4071 = vmul.f32 %v4031, %v4063
    %4076 = vrot.lane.b32.xlu0 %v4068, 32
    %v4077 = vpop.permute.xlu0 %4076
    %4078 = vrot.lane.b32.xlu0 %v4069, 32
    %v4079 = vpop.permute.xlu0 %4078
    %4080 = vrot.lane.b32.xlu0 %v4070, 32
    %v4081 = vpop.permute.xlu0 %4080
    %4082 = vrot.lane.b32.xlu0 %v4071, 32
    %v4083 = vpop.permute.xlu0 %4082
    %v4088 = vadd.f32 %v4048, %v4077
    %v4089 = vadd.f32 %v4049, %v4079
    %v4090 = vadd.f32 %v4050, %v4081
    %v4091 = vadd.f32 %v4051, %v4083
    %v4092 = vtanh.pop %v4088
    %v4093 = vtanh.pop %v4089
    %v4094 = vtanh.pop %v4090
    %v4095 = vtanh.pop %v4091
    %4100 = vrot.lane.b32.xlu0 %v4092, 64
    %v4101 = vpop.permute.xlu0 %4100
    %4102 = vrot.lane.b32.xlu0 %v4093, 64
    %v4103 = vpop.permute.xlu0 %4102
    %4104 = vrot.lane.b32.xlu0 %v4094, 64
    %v4105 = vpop.permute.xlu0 %4104
    %4106 = vrot.lane.b32.xlu0 %v4095, 64
    %v4107 = vpop.permute.xlu0 %4106
    %v4112 = vmul.f32 %v4025, %v4101
    %v4113 = vmul.f32 %v4027, %v4103
    %v4114 = vmul.f32 %v4029, %v4105
    %v4115 = vmul.f32 %v4031, %v4107
    %4118 = vrot.lane.b32.xlu0 %v4112, 32
    %v4119 = vpop.permute.xlu0 %4118
    %4120 = vrot.lane.b32.xlu0 %v4113, 32
    %v4121 = vpop.permute.xlu0 %4120
    %4124 = vst.msk [vmem:[#allocation3] sm:$0x10] %vm1642, %v4119
    %4125 = vst.msk [vmem:[#allocation3 + $0x8] sm:$0x10] %vm1642, %v4121
    %4128 = vrot.lane.b32.xlu0 %v4114, 64
    %v4129 = vpop.permute.xlu0 %4128
    %4130 = vrot.lane.b32.xlu0 %v4115, 64
    %v4131 = vpop.permute.xlu0 %4130
    %4134 = vst.msk [vmem:[#allocation3 - $0x1] sm:$0x10] %vm1653, %v4129
    %4135 = vst.msk [vmem:[#allocation3 + $0x7] sm:$0x10] %vm1653, %v4131
    %v4136 = vrot.slane %v4112, 4
    %v4137 = vrot.slane %v4113, 3
    %v4138 = vsel %vm462, %v4137, %v4136
    %4139 = vrot.lane.b32.xlu0 %v4138, 32
    %v4140 = vpop.permute.xlu0 %4139
    %v4141 = vsel %vm183, %v4140, 0
    %4143 = vmatprep.subr.mxu0 0.0
    %4144 = vmatpush1.msra.mxu0 %v2664
    %4145 = vmatprep.subr.mxu0 0.0
    %4146 = vmatpush1.msra.mxu0 %v2665
    %4147 = vmatprep.subr.mxu0 0.0
    %4148 = vmatpush1.msra.mxu0 %v2666
    %4149 = vmatprep.subr.mxu0 0.0
    %4150 = vmatpush1.msra.mxu0 %v2667
    %4151 = vmatprep.subr.mxu0 0.0
    %4152 = vmatpush1.msra.mxu0 0.0
    %4153 = vmatprep.subr.mxu0 0.0
    %4154 = vmatpush1.msra.mxu0 0.0
    %4155 = vmatprep.subr.mxu0 0.0
    %4156 = vmatpush1.msra.mxu0 0.0
    %4157 = vmatprep.subr.mxu0 0.0
    %4158 = vmatpush1.msra.mxu0 0.0
    %4159 = vmatprep.subr.mxu0 0.0
    %4160 = vmatpush1.msra.mxu0 0.0
    %4161 = vmatprep.subr.mxu0 0.0
    %4162 = vmatpush1.msra.mxu0 0.0
    %4163 = vmatprep.subr.mxu0 0.0
    %4164 = vmatpush1.msra.mxu0 0.0
    %4165 = vmatprep.subr.mxu0 0.0
    %4166 = vmatpush1.msra.mxu0 0.0
    %4167 = vmatprep.subr.mxu0 0.0
    %4168 = vmatpush1.msra.mxu0 0.0
    %4169 = vmatprep.subr.mxu0 0.0
    %4170 = vmatpush1.msra.mxu0 0.0
    %4171 = vmatprep.subr.mxu0 0.0
    %4172 = vmatpush1.msra.mxu0 0.0
    %4173 = vmatprep.subr.mxu0 0.0
    %4174 = vmatpush1.msra.mxu0 0.0
    %4175 = vmatprep.subr.mxu0 0.0
    %4176 = vmatpush1.msra.mxu0 0.0
    %4177 = vmatprep.subr.mxu0 0.0
    %4178 = vmatpush1.msra.mxu0 0.0
    %4179 = vmatprep.subr.mxu0 0.0
    %4180 = vmatpush1.msra.mxu0 0.0
    %4181 = vmatprep.subr.mxu0 0.0
    %4182 = vmatpush1.msra.mxu0 0.0
    %4183 = vmatprep.subr.mxu0 0.0
    %4184 = vmatpush1.msra.mxu0 0.0
    %4185 = vmatprep.subr.mxu0 0.0
    %4186 = vmatpush1.msra.mxu0 0.0
    %4187 = vmatprep.subr.mxu0 0.0
    %4188 = vmatpush1.msra.mxu0 0.0
    %4189 = vmatprep.subr.mxu0 0.0
    %4190 = vmatpush1.msra.mxu0 0.0
    %4191 = vmatprep.subr.mxu0 0.0
    %4192 = vmatpush1.msra.mxu0 0.0
    %4193 = vmatprep.subr.mxu0 0.0
    %4194 = vmatpush1.msra.mxu0 0.0
    %4195 = vmatprep.subr.mxu0 0.0
    %4196 = vmatpush1.msra.mxu0 0.0
    %4197 = vmatprep.subr.mxu0 0.0
    %4198 = vmatpush1.msra.mxu0 0.0
    %4199 = vmatprep.subr.mxu0 0.0
    %4200 = vmatpush1.msra.mxu0 0.0
    %4201 = vmatprep.subr.mxu0 0.0
    %4202 = vmatpush1.msra.mxu0 0.0
    %4203 = vmatprep.subr.mxu0 0.0
    %4204 = vmatpush1.msra.mxu0 0.0
    %4205 = vmatprep.subr.mxu0 0.0
    %4206 = vmatpush1.msra.mxu0 0.0
    %4207 = vmatprep.mubr.f32.mxu0 0.0
    %4208 = vmatmul.mubr.f32.gmra.mrb[0].mxu0 %v4141
    %v4209 = vpop.f32.mrb[0].mxu0
    %v4210 = vadd.f32 0.0, %v4209
    %v4211 = vpop.f32.mrb[0].mxu0
    %4212 = vdwg.mxu0
    %v4213 = vrot.slane %v4114, 4
    %v4214 = vrot.slane %v4115, 3
    %v4215 = vsel %vm462, %v4214, %v4213
    %4216 = vrot.lane.b32.xlu0 %v4215, 32
    %v4217 = vpop.permute.xlu0 %4216
    %v4218 = vsel %vm183, %v4217, 0
    %4220 = vmatprep.subr.mxu0 0.0
    %4221 = vmatpush1.msra.mxu0 %v2668
    %4222 = vmatprep.subr.mxu0 0.0
    %4223 = vmatpush1.msra.mxu0 %v2669
    %4224 = vmatprep.subr.mxu0 0.0
    %4225 = vmatpush1.msra.mxu0 %v2670
    %4226 = vmatprep.subr.mxu0 0.0
    %4227 = vmatpush1.msra.mxu0 %v2671
    %4228 = vmatprep.subr.mxu0 0.0
    %4229 = vmatpush1.msra.mxu0 0.0
    %4230 = vmatprep.subr.mxu0 0.0
    %4231 = vmatpush1.msra.mxu0 0.0
    %4232 = vmatprep.subr.mxu0 0.0
    %4233 = vmatpush1.msra.mxu0 0.0
    %4234 = vmatprep.subr.mxu0 0.0
    %4235 = vmatpush1.msra.mxu0 0.0
    %4236 = vmatprep.subr.mxu0 0.0
    %4237 = vmatpush1.msra.mxu0 0.0
    %4238 = vmatprep.subr.mxu0 0.0
    %4239 = vmatpush1.msra.mxu0 0.0
    %4240 = vmatprep.subr.mxu0 0.0
    %4241 = vmatpush1.msra.mxu0 0.0
    %4242 = vmatprep.subr.mxu0 0.0
    %4243 = vmatpush1.msra.mxu0 0.0
    %4244 = vmatprep.subr.mxu0 0.0
    %4245 = vmatpush1.msra.mxu0 0.0
    %4246 = vmatprep.subr.mxu0 0.0
    %4247 = vmatpush1.msra.mxu0 0.0
    %4248 = vmatprep.subr.mxu0 0.0
    %4249 = vmatpush1.msra.mxu0 0.0
    %4250 = vmatprep.subr.mxu0 0.0
    %4251 = vmatpush1.msra.mxu0 0.0
    %4252 = vmatprep.subr.mxu0 0.0
    %4253 = vmatpush1.msra.mxu0 0.0
    %4254 = vmatprep.subr.mxu0 0.0
    %4255 = vmatpush1.msra.mxu0 0.0
    %4256 = vmatprep.subr.mxu0 0.0
    %4257 = vmatpush1.msra.mxu0 0.0
    %4258 = vmatprep.subr.mxu0 0.0
    %4259 = vmatpush1.msra.mxu0 0.0
    %4260 = vmatprep.subr.mxu0 0.0
    %4261 = vmatpush1.msra.mxu0 0.0
    %4262 = vmatprep.subr.mxu0 0.0
    %4263 = vmatpush1.msra.mxu0 0.0
    %4264 = vmatprep.subr.mxu0 0.0
    %4265 = vmatpush1.msra.mxu0 0.0
    %4266 = vmatprep.subr.mxu0 0.0
    %4267 = vmatpush1.msra.mxu0 0.0
    %4268 = vmatprep.subr.mxu0 0.0
    %4269 = vmatpush1.msra.mxu0 0.0
    %4270 = vmatprep.subr.mxu0 0.0
    %4271 = vmatpush1.msra.mxu0 0.0
    %4272 = vmatprep.subr.mxu0 0.0
    %4273 = vmatpush1.msra.mxu0 0.0
    %4274 = vmatprep.subr.mxu0 0.0
    %4275 = vmatpush1.msra.mxu0 0.0
    %4276 = vmatprep.subr.mxu0 0.0
    %4277 = vmatpush1.msra.mxu0 0.0
    %4278 = vmatprep.subr.mxu0 0.0
    %4279 = vmatpush1.msra.mxu0 0.0
    %4280 = vmatprep.subr.mxu0 0.0
    %4281 = vmatpush1.msra.mxu0 0.0
    %4282 = vmatprep.subr.mxu0 0.0
    %4283 = vmatpush1.msra.mxu0 0.0
    %4284 = vmatprep.mubr.f32.mxu0 0.0
    %4285 = vmatmul.mubr.f32.gmra.mrb[0].mxu0 %v4218
    %v4286 = vpop.f32.mrb[0].mxu0
    %v4287 = vadd.f32 0.0, %v4286
    %v4288 = vpop.f32.mrb[0].mxu0
    %4289 = vdwg.mxu0
    %v4292 = vrot.slane %v4210, 3
    %v4293 = vrot.slane %v4210, 4
    %v4294 = vrot.slane %v4287, 3
    %v4295 = vrot.slane %v4287, 4
    %v4300 = vadd.f32 %v2654, %v4292
    %v4301 = vadd.f32 %v2660, %v4293
    %v4302 = vadd.f32 %v2946, %v4294
    %v4303 = vadd.f32 %v2947, %v4295
    %v4304 = vxor.u32 %v4300, 2147483648
    %v4305 = vxor.u32 %v4301, 2147483648
    %v4306 = vxor.u32 %v4302, 2147483648
    %v4307 = vxor.u32 %v4303, 2147483648
    %v4308 = vmul.f32 %v4304, 1.442695
    %v4309 = vpow.pop %v4308
    %v4310 = vmul.f32 %v4305, 1.442695
    %v4311 = vpow.pop %v4310
    %v4312 = vmul.f32 %v4306, 1.442695
    %v4313 = vpow.pop %v4312
    %v4314 = vmul.f32 %v4307, 1.442695
    %v4315 = vpow.pop %v4314
    %v4316 = vadd.f32 %v4309, 1.0
    %v4317 = vadd.f32 %v4311, 1.0
    %v4318 = vadd.f32 %v4313, 1.0
    %v4319 = vadd.f32 %v4315, 1.0
    %v4320 = vrcp.pop %v4316
    %v4321 = vmul.f32 1.0, %v4320
    %v4322 = vrcp.pop %v4317
    %v4323 = vmul.f32 1.0, %v4322
    %v4324 = vrcp.pop %v4318
    %v4325 = vmul.f32 1.0, %v4324
    %v4326 = vrcp.pop %v4319
    %v4327 = vmul.f32 1.0, %v4326
    %v4328 = vtanh.pop %v4300
    %v4329 = vtanh.pop %v4301
    %v4330 = vtanh.pop %v4302
    %v4331 = vtanh.pop %v4303
    %v4336 = vrot.slane %v4088, 7
    %v4337 = vrot.slane %v4089, 7
    %v4338 = vrot.slane %v4090, 7
    %v4339 = vrot.slane %v4091, 7
    %v4344 = vmul.f32 %v4321, %v4336
    %v4345 = vmul.f32 %v4323, %v4337
    %v4346 = vmul.f32 %v4325, %v4338
    %v4347 = vmul.f32 %v4327, %v4339
    %4352 = vrot.lane.b32.xlu0 %v4328, 64
    %v4353 = vpop.permute.xlu0 %4352
    %4354 = vrot.lane.b32.xlu0 %v4329, 64
    %v4355 = vpop.permute.xlu0 %4354
    %4356 = vrot.lane.b32.xlu0 %v4330, 64
    %v4357 = vpop.permute.xlu0 %4356
    %4358 = vrot.lane.b32.xlu0 %v4331, 64
    %v4359 = vpop.permute.xlu0 %4358
    %v4364 = vmul.f32 %v4321, %v4353
    %v4365 = vmul.f32 %v4323, %v4355
    %v4366 = vmul.f32 %v4325, %v4357
    %v4367 = vmul.f32 %v4327, %v4359
    %4372 = vrot.lane.b32.xlu0 %v4364, 32
    %v4373 = vpop.permute.xlu0 %4372
    %4374 = vrot.lane.b32.xlu0 %v4365, 32
    %v4375 = vpop.permute.xlu0 %4374
    %4376 = vrot.lane.b32.xlu0 %v4366, 32
    %v4377 = vpop.permute.xlu0 %4376
    %4378 = vrot.lane.b32.xlu0 %v4367, 32
    %v4379 = vpop.permute.xlu0 %4378
    %v4384 = vadd.f32 %v4344, %v4373
    %v4385 = vadd.f32 %v4345, %v4375
    %v4386 = vadd.f32 %v4346, %v4377
    %v4387 = vadd.f32 %v4347, %v4379
    %v4388 = vtanh.pop %v4384
    %v4389 = vtanh.pop %v4385
    %v4390 = vtanh.pop %v4386
    %v4391 = vtanh.pop %v4387
    %4396 = vrot.lane.b32.xlu0 %v4388, 64
    %v4397 = vpop.permute.xlu0 %4396
    %4398 = vrot.lane.b32.xlu0 %v4389, 64
    %v4399 = vpop.permute.xlu0 %4398
    %4400 = vrot.lane.b32.xlu0 %v4390, 64
    %v4401 = vpop.permute.xlu0 %4400
    %4402 = vrot.lane.b32.xlu0 %v4391, 64
    %v4403 = vpop.permute.xlu0 %4402
    %v4408 = vmul.f32 %v4321, %v4397
    %v4409 = vmul.f32 %v4323, %v4399
    %v4410 = vmul.f32 %v4325, %v4401
    %v4411 = vmul.f32 %v4327, %v4403
    %4414 = vrot.lane.b32.xlu0 %v4408, 32
    %v4415 = vpop.permute.xlu0 %4414
    %4416 = vrot.lane.b32.xlu0 %v4409, 32
    %v4417 = vpop.permute.xlu0 %4416
    %4420 = vst.msk [vmem:[#allocation3] sm:$0x20] %vm1940, %v4415
    %4421 = vst.msk [vmem:[#allocation3 + $0x8] sm:$0x20] %vm1940, %v4417
    %4424 = vrot.lane.b32.xlu0 %v4410, 64
    %v4425 = vpop.permute.xlu0 %4424
    %4426 = vrot.lane.b32.xlu0 %v4411, 64
    %v4427 = vpop.permute.xlu0 %4426
    %4430 = vst.msk [vmem:[#allocation3 - $0x3] sm:$0x20] %vm1951, %v4425
    %4431 = vst.msk [vmem:[#allocation3 + $0x5] sm:$0x20] %vm1951, %v4427
    %v4432 = vrot.slane %v4408, 5
    %v4433 = vrot.slane %v4409, 4
    %v4434 = vsel %vm462, %v4433, %v4432
    %4435 = vrot.lane.b32.xlu0 %v4434, 32
    %v4436 = vpop.permute.xlu0 %4435
    %v4437 = vsel %vm183, %v4436, 0
    %4439 = vmatprep.subr.mxu0 0.0
    %4440 = vmatpush1.msra.mxu0 %v2664
    %4441 = vmatprep.subr.mxu0 0.0
    %4442 = vmatpush1.msra.mxu0 %v2665
    %4443 = vmatprep.subr.mxu0 0.0
    %4444 = vmatpush1.msra.mxu0 %v2666
    %4445 = vmatprep.subr.mxu0 0.0
    %4446 = vmatpush1.msra.mxu0 %v2667
    %4447 = vmatprep.subr.mxu0 0.0
    %4448 = vmatpush1.msra.mxu0 0.0
    %4449 = vmatprep.subr.mxu0 0.0
    %4450 = vmatpush1.msra.mxu0 0.0
    %4451 = vmatprep.subr.mxu0 0.0
    %4452 = vmatpush1.msra.mxu0 0.0
    %4453 = vmatprep.subr.mxu0 0.0
    %4454 = vmatpush1.msra.mxu0 0.0
    %4455 = vmatprep.subr.mxu0 0.0
    %4456 = vmatpush1.msra.mxu0 0.0
    %4457 = vmatprep.subr.mxu0 0.0
    %4458 = vmatpush1.msra.mxu0 0.0
    %4459 = vmatprep.subr.mxu0 0.0
    %4460 = vmatpush1.msra.mxu0 0.0
    %4461 = vmatprep.subr.mxu0 0.0
    %4462 = vmatpush1.msra.mxu0 0.0
    %4463 = vmatprep.subr.mxu0 0.0
    %4464 = vmatpush1.msra.mxu0 0.0
    %4465 = vmatprep.subr.mxu0 0.0
    %4466 = vmatpush1.msra.mxu0 0.0
    %4467 = vmatprep.subr.mxu0 0.0
    %4468 = vmatpush1.msra.mxu0 0.0
    %4469 = vmatprep.subr.mxu0 0.0
    %4470 = vmatpush1.msra.mxu0 0.0
    %4471 = vmatprep.subr.mxu0 0.0
    %4472 = vmatpush1.msra.mxu0 0.0
    %4473 = vmatprep.subr.mxu0 0.0
    %4474 = vmatpush1.msra.mxu0 0.0
    %4475 = vmatprep.subr.mxu0 0.0
    %4476 = vmatpush1.msra.mxu0 0.0
    %4477 = vmatprep.subr.mxu0 0.0
    %4478 = vmatpush1.msra.mxu0 0.0
    %4479 = vmatprep.subr.mxu0 0.0
    %4480 = vmatpush1.msra.mxu0 0.0
    %4481 = vmatprep.subr.mxu0 0.0
    %4482 = vmatpush1.msra.mxu0 0.0
    %4483 = vmatprep.subr.mxu0 0.0
    %4484 = vmatpush1.msra.mxu0 0.0
    %4485 = vmatprep.subr.mxu0 0.0
    %4486 = vmatpush1.msra.mxu0 0.0
    %4487 = vmatprep.subr.mxu0 0.0
    %4488 = vmatpush1.msra.mxu0 0.0
    %4489 = vmatprep.subr.mxu0 0.0
    %4490 = vmatpush1.msra.mxu0 0.0
    %4491 = vmatprep.subr.mxu0 0.0
    %4492 = vmatpush1.msra.mxu0 0.0
    %4493 = vmatprep.subr.mxu0 0.0
    %4494 = vmatpush1.msra.mxu0 0.0
    %4495 = vmatprep.subr.mxu0 0.0
    %4496 = vmatpush1.msra.mxu0 0.0
    %4497 = vmatprep.subr.mxu0 0.0
    %4498 = vmatpush1.msra.mxu0 0.0
    %4499 = vmatprep.subr.mxu0 0.0
    %4500 = vmatpush1.msra.mxu0 0.0
    %4501 = vmatprep.subr.mxu0 0.0
    %4502 = vmatpush1.msra.mxu0 0.0
    %4503 = vmatprep.mubr.f32.mxu0 0.0
    %4504 = vmatmul.mubr.f32.gmra.mrb[0].mxu0 %v4437
    %v4505 = vpop.f32.mrb[0].mxu0
    %v4506 = vadd.f32 0.0, %v4505
    %v4507 = vpop.f32.mrb[0].mxu0
    %4508 = vdwg.mxu0
    %v4509 = vrot.slane %v4410, 5
    %v4510 = vrot.slane %v4411, 4
    %v4511 = vsel %vm462, %v4510, %v4509
    %4512 = vrot.lane.b32.xlu0 %v4511, 32
    %v4513 = vpop.permute.xlu0 %4512
    %v4514 = vsel %vm183, %v4513, 0
    %4516 = vmatprep.subr.mxu0 0.0
    %4517 = vmatpush1.msra.mxu0 %v2668
    %4518 = vmatprep.subr.mxu0 0.0
    %4519 = vmatpush1.msra.mxu0 %v2669
    %4520 = vmatprep.subr.mxu0 0.0
    %4521 = vmatpush1.msra.mxu0 %v2670
    %4522 = vmatprep.subr.mxu0 0.0
    %4523 = vmatpush1.msra.mxu0 %v2671
    %4524 = vmatprep.subr.mxu0 0.0
    %4525 = vmatpush1.msra.mxu0 0.0
    %4526 = vmatprep.subr.mxu0 0.0
    %4527 = vmatpush1.msra.mxu0 0.0
    %4528 = vmatprep.subr.mxu0 0.0
    %4529 = vmatpush1.msra.mxu0 0.0
    %4530 = vmatprep.subr.mxu0 0.0
    %4531 = vmatpush1.msra.mxu0 0.0
    %4532 = vmatprep.subr.mxu0 0.0
    %4533 = vmatpush1.msra.mxu0 0.0
    %4534 = vmatprep.subr.mxu0 0.0
    %4535 = vmatpush1.msra.mxu0 0.0
    %4536 = vmatprep.subr.mxu0 0.0
    %4537 = vmatpush1.msra.mxu0 0.0
    %4538 = vmatprep.subr.mxu0 0.0
    %4539 = vmatpush1.msra.mxu0 0.0
    %4540 = vmatprep.subr.mxu0 0.0
    %4541 = vmatpush1.msra.mxu0 0.0
    %4542 = vmatprep.subr.mxu0 0.0
    %4543 = vmatpush1.msra.mxu0 0.0
    %4544 = vmatprep.subr.mxu0 0.0
    %4545 = vmatpush1.msra.mxu0 0.0
    %4546 = vmatprep.subr.mxu0 0.0
    %4547 = vmatpush1.msra.mxu0 0.0
    %4548 = vmatprep.subr.mxu0 0.0
    %4549 = vmatpush1.msra.mxu0 0.0
    %4550 = vmatprep.subr.mxu0 0.0
    %4551 = vmatpush1.msra.mxu0 0.0
    %4552 = vmatprep.subr.mxu0 0.0
    %4553 = vmatpush1.msra.mxu0 0.0
    %4554 = vmatprep.subr.mxu0 0.0
    %4555 = vmatpush1.msra.mxu0 0.0
    %4556 = vmatprep.subr.mxu0 0.0
    %4557 = vmatpush1.msra.mxu0 0.0
    %4558 = vmatprep.subr.mxu0 0.0
    %4559 = vmatpush1.msra.mxu0 0.0
    %4560 = vmatprep.subr.mxu0 0.0
    %4561 = vmatpush1.msra.mxu0 0.0
    %4562 = vmatprep.subr.mxu0 0.0
    %4563 = vmatpush1.msra.mxu0 0.0
    %4564 = vmatprep.subr.mxu0 0.0
    %4565 = vmatpush1.msra.mxu0 0.0
    %4566 = vmatprep.subr.mxu0 0.0
    %4567 = vmatpush1.msra.mxu0 0.0
    %4568 = vmatprep.subr.mxu0 0.0
    %4569 = vmatpush1.msra.mxu0 0.0
    %4570 = vmatprep.subr.mxu0 0.0
    %4571 = vmatpush1.msra.mxu0 0.0
    %4572 = vmatprep.subr.mxu0 0.0
    %4573 = vmatpush1.msra.mxu0 0.0
    %4574 = vmatprep.subr.mxu0 0.0
    %4575 = vmatpush1.msra.mxu0 0.0
    %4576 = vmatprep.subr.mxu0 0.0
    %4577 = vmatpush1.msra.mxu0 0.0
    %4578 = vmatprep.subr.mxu0 0.0
    %4579 = vmatpush1.msra.mxu0 0.0
    %4580 = vmatprep.mubr.f32.mxu0 0.0
    %4581 = vmatmul.mubr.f32.gmra.mrb[0].mxu0 %v4514
    %v4582 = vpop.f32.mrb[0].mxu0
    %v4583 = vadd.f32 0.0, %v4582
    %v4584 = vpop.f32.mrb[0].mxu0
    %4585 = vdwg.mxu0
    %v4588 = vrot.slane %v4506, 2
    %v4589 = vrot.slane %v4506, 3
    %v4590 = vrot.slane %v4583, 2
    %v4591 = vrot.slane %v4583, 3
    %v4596 = vadd.f32 %v2654, %v4588
    %v4597 = vadd.f32 %v2660, %v4589
    %v4598 = vadd.f32 %v3242, %v4590
    %v4599 = vadd.f32 %v3243, %v4591
    %v4600 = vxor.u32 %v4596, 2147483648
    %v4601 = vxor.u32 %v4597, 2147483648
    %v4602 = vxor.u32 %v4598, 2147483648
    %v4603 = vxor.u32 %v4599, 2147483648
    %v4604 = vmul.f32 %v4600, 1.442695
    %v4605 = vpow.pop %v4604
    %v4606 = vmul.f32 %v4601, 1.442695
    %v4607 = vpow.pop %v4606
    %v4608 = vmul.f32 %v4602, 1.442695
    %v4609 = vpow.pop %v4608
    %v4610 = vmul.f32 %v4603, 1.442695
    %v4611 = vpow.pop %v4610
    %v4612 = vadd.f32 %v4605, 1.0
    %v4613 = vadd.f32 %v4607, 1.0
    %v4614 = vadd.f32 %v4609, 1.0
    %v4615 = vadd.f32 %v4611, 1.0
    %v4616 = vrcp.pop %v4612
    %v4617 = vmul.f32 1.0, %v4616
    %v4618 = vrcp.pop %v4613
    %v4619 = vmul.f32 1.0, %v4618
    %v4620 = vrcp.pop %v4614
    %v4621 = vmul.f32 1.0, %v4620
    %v4622 = vrcp.pop %v4615
    %v4623 = vmul.f32 1.0, %v4622
    %v4624 = vtanh.pop %v4596
    %v4625 = vtanh.pop %v4597
    %v4626 = vtanh.pop %v4598
    %v4627 = vtanh.pop %v4599
    %v4632 = vrot.slane %v4384, 7
    %v4633 = vrot.slane %v4385, 7
    %v4634 = vrot.slane %v4386, 7
    %v4635 = vrot.slane %v4387, 7
    %v4640 = vmul.f32 %v4617, %v4632
    %v4641 = vmul.f32 %v4619, %v4633
    %v4642 = vmul.f32 %v4621, %v4634
    %v4643 = vmul.f32 %v4623, %v4635
    %4648 = vrot.lane.b32.xlu0 %v4624, 64
    %v4649 = vpop.permute.xlu0 %4648
    %4650 = vrot.lane.b32.xlu0 %v4625, 64
    %v4651 = vpop.permute.xlu0 %4650
    %4652 = vrot.lane.b32.xlu0 %v4626, 64
    %v4653 = vpop.permute.xlu0 %4652
    %4654 = vrot.lane.b32.xlu0 %v4627, 64
    %v4655 = vpop.permute.xlu0 %4654
    %v4660 = vmul.f32 %v4617, %v4649
    %v4661 = vmul.f32 %v4619, %v4651
    %v4662 = vmul.f32 %v4621, %v4653
    %v4663 = vmul.f32 %v4623, %v4655
    %4668 = vrot.lane.b32.xlu0 %v4660, 32
    %v4669 = vpop.permute.xlu0 %4668
    %4670 = vrot.lane.b32.xlu0 %v4661, 32
    %v4671 = vpop.permute.xlu0 %4670
    %4672 = vrot.lane.b32.xlu0 %v4662, 32
    %v4673 = vpop.permute.xlu0 %4672
    %4674 = vrot.lane.b32.xlu0 %v4663, 32
    %v4675 = vpop.permute.xlu0 %4674
    %v4680 = vadd.f32 %v4640, %v4669
    %v4681 = vadd.f32 %v4641, %v4671
    %v4682 = vadd.f32 %v4642, %v4673
    %v4683 = vadd.f32 %v4643, %v4675
    %v4684 = vtanh.pop %v4680
    %v4685 = vtanh.pop %v4681
    %v4686 = vtanh.pop %v4682
    %v4687 = vtanh.pop %v4683
    %4692 = vrot.lane.b32.xlu0 %v4684, 64
    %v4693 = vpop.permute.xlu0 %4692
    %4694 = vrot.lane.b32.xlu0 %v4685, 64
    %v4695 = vpop.permute.xlu0 %4694
    %4696 = vrot.lane.b32.xlu0 %v4686, 64
    %v4697 = vpop.permute.xlu0 %4696
    %4698 = vrot.lane.b32.xlu0 %v4687, 64
    %v4699 = vpop.permute.xlu0 %4698
    %v4704 = vmul.f32 %v4617, %v4693
    %v4705 = vmul.f32 %v4619, %v4695
    %v4706 = vmul.f32 %v4621, %v4697
    %v4707 = vmul.f32 %v4623, %v4699
    %4710 = vrot.lane.b32.xlu0 %v4704, 32
    %v4711 = vpop.permute.xlu0 %4710
    %4712 = vrot.lane.b32.xlu0 %v4705, 32
    %v4713 = vpop.permute.xlu0 %4712
    %4716 = vst.msk [vmem:[#allocation3] sm:$0x40] %vm2238, %v4711
    %4717 = vst.msk [vmem:[#allocation3 + $0x8] sm:$0x40] %vm2238, %v4713
    %4720 = vrot.lane.b32.xlu0 %v4706, 64
    %v4721 = vpop.permute.xlu0 %4720
    %4722 = vrot.lane.b32.xlu0 %v4707, 64
    %v4723 = vpop.permute.xlu0 %4722
    %4726 = vst.msk [vmem:[#allocation3 - $0x5] sm:$0x40] %vm2249, %v4721
    %4727 = vst.msk [vmem:[#allocation3 + $0x3] sm:$0x40] %vm2249, %v4723
    %v4728 = vrot.slane %v4704, 6
    %v4729 = vrot.slane %v4705, 5
    %v4730 = vsel %vm462, %v4729, %v4728
    %4731 = vrot.lane.b32.xlu0 %v4730, 32
    %v4732 = vpop.permute.xlu0 %4731
    %v4733 = vsel %vm183, %v4732, 0
    %4735 = vmatprep.subr.mxu0 0.0
    %4736 = vmatpush1.msra.mxu0 %v2664
    %4737 = vmatprep.subr.mxu0 0.0
    %4738 = vmatpush1.msra.mxu0 %v2665
    %4739 = vmatprep.subr.mxu0 0.0
    %4740 = vmatpush1.msra.mxu0 %v2666
    %4741 = vmatprep.subr.mxu0 0.0
    %4742 = vmatpush1.msra.mxu0 %v2667
    %4743 = vmatprep.subr.mxu0 0.0
    %4744 = vmatpush1.msra.mxu0 0.0
    %4745 = vmatprep.subr.mxu0 0.0
    %4746 = vmatpush1.msra.mxu0 0.0
    %4747 = vmatprep.subr.mxu0 0.0
    %4748 = vmatpush1.msra.mxu0 0.0
    %4749 = vmatprep.subr.mxu0 0.0
    %4750 = vmatpush1.msra.mxu0 0.0
    %4751 = vmatprep.subr.mxu0 0.0
    %4752 = vmatpush1.msra.mxu0 0.0
    %4753 = vmatprep.subr.mxu0 0.0
    %4754 = vmatpush1.msra.mxu0 0.0
    %4755 = vmatprep.subr.mxu0 0.0
    %4756 = vmatpush1.msra.mxu0 0.0
    %4757 = vmatprep.subr.mxu0 0.0
    %4758 = vmatpush1.msra.mxu0 0.0
    %4759 = vmatprep.subr.mxu0 0.0
    %4760 = vmatpush1.msra.mxu0 0.0
    %4761 = vmatprep.subr.mxu0 0.0
    %4762 = vmatpush1.msra.mxu0 0.0
    %4763 = vmatprep.subr.mxu0 0.0
    %4764 = vmatpush1.msra.mxu0 0.0
    %4765 = vmatprep.subr.mxu0 0.0
    %4766 = vmatpush1.msra.mxu0 0.0
    %4767 = vmatprep.subr.mxu0 0.0
    %4768 = vmatpush1.msra.mxu0 0.0
    %4769 = vmatprep.subr.mxu0 0.0
    %4770 = vmatpush1.msra.mxu0 0.0
    %4771 = vmatprep.subr.mxu0 0.0
    %4772 = vmatpush1.msra.mxu0 0.0
    %4773 = vmatprep.subr.mxu0 0.0
    %4774 = vmatpush1.msra.mxu0 0.0
    %4775 = vmatprep.subr.mxu0 0.0
    %4776 = vmatpush1.msra.mxu0 0.0
    %4777 = vmatprep.subr.mxu0 0.0
    %4778 = vmatpush1.msra.mxu0 0.0
    %4779 = vmatprep.subr.mxu0 0.0
    %4780 = vmatpush1.msra.mxu0 0.0
    %4781 = vmatprep.subr.mxu0 0.0
    %4782 = vmatpush1.msra.mxu0 0.0
    %4783 = vmatprep.subr.mxu0 0.0
    %4784 = vmatpush1.msra.mxu0 0.0
    %4785 = vmatprep.subr.mxu0 0.0
    %4786 = vmatpush1.msra.mxu0 0.0
    %4787 = vmatprep.subr.mxu0 0.0
    %4788 = vmatpush1.msra.mxu0 0.0
    %4789 = vmatprep.subr.mxu0 0.0
    %4790 = vmatpush1.msra.mxu0 0.0
    %4791 = vmatprep.subr.mxu0 0.0
    %4792 = vmatpush1.msra.mxu0 0.0
    %4793 = vmatprep.subr.mxu0 0.0
    %4794 = vmatpush1.msra.mxu0 0.0
    %4795 = vmatprep.subr.mxu0 0.0
    %4796 = vmatpush1.msra.mxu0 0.0
    %4797 = vmatprep.subr.mxu0 0.0
    %4798 = vmatpush1.msra.mxu0 0.0
    %4799 = vmatprep.mubr.f32.mxu0 0.0
    %4800 = vmatmul.mubr.f32.gmra.mrb[0].mxu0 %v4733
    %v4801 = vpop.f32.mrb[0].mxu0
    %v4802 = vadd.f32 0.0, %v4801
    %v4803 = vpop.f32.mrb[0].mxu0
    %4804 = vdwg.mxu0
    %v4805 = vrot.slane %v4706, 6
    %v4806 = vrot.slane %v4707, 5
    %v4807 = vsel %vm462, %v4806, %v4805
    %4808 = vrot.lane.b32.xlu0 %v4807, 32
    %v4809 = vpop.permute.xlu0 %4808
    %v4810 = vsel %vm183, %v4809, 0
    %4812 = vmatprep.subr.mxu0 0.0
    %4813 = vmatpush1.msra.mxu0 %v2668
    %4814 = vmatprep.subr.mxu0 0.0
    %4815 = vmatpush1.msra.mxu0 %v2669
    %4816 = vmatprep.subr.mxu0 0.0
    %4817 = vmatpush1.msra.mxu0 %v2670
    %4818 = vmatprep.subr.mxu0 0.0
    %4819 = vmatpush1.msra.mxu0 %v2671
    %4820 = vmatprep.subr.mxu0 0.0
    %4821 = vmatpush1.msra.mxu0 0.0
    %4822 = vmatprep.subr.mxu0 0.0
    %4823 = vmatpush1.msra.mxu0 0.0
    %4824 = vmatprep.subr.mxu0 0.0
    %4825 = vmatpush1.msra.mxu0 0.0
    %4826 = vmatprep.subr.mxu0 0.0
    %4827 = vmatpush1.msra.mxu0 0.0
    %4828 = vmatprep.subr.mxu0 0.0
    %4829 = vmatpush1.msra.mxu0 0.0
    %4830 = vmatprep.subr.mxu0 0.0
    %4831 = vmatpush1.msra.mxu0 0.0
    %4832 = vmatprep.subr.mxu0 0.0
    %4833 = vmatpush1.msra.mxu0 0.0
    %4834 = vmatprep.subr.mxu0 0.0
    %4835 = vmatpush1.msra.mxu0 0.0
    %4836 = vmatprep.subr.mxu0 0.0
    %4837 = vmatpush1.msra.mxu0 0.0
    %4838 = vmatprep.subr.mxu0 0.0
    %4839 = vmatpush1.msra.mxu0 0.0
    %4840 = vmatprep.subr.mxu0 0.0
    %4841 = vmatpush1.msra.mxu0 0.0
    %4842 = vmatprep.subr.mxu0 0.0
    %4843 = vmatpush1.msra.mxu0 0.0
    %4844 = vmatprep.subr.mxu0 0.0
    %4845 = vmatpush1.msra.mxu0 0.0
    %4846 = vmatprep.subr.mxu0 0.0
    %4847 = vmatpush1.msra.mxu0 0.0
    %4848 = vmatprep.subr.mxu0 0.0
    %4849 = vmatpush1.msra.mxu0 0.0
    %4850 = vmatprep.subr.mxu0 0.0
    %4851 = vmatpush1.msra.mxu0 0.0
    %4852 = vmatprep.subr.mxu0 0.0
    %4853 = vmatpush1.msra.mxu0 0.0
    %4854 = vmatprep.subr.mxu0 0.0
    %4855 = vmatpush1.msra.mxu0 0.0
    %4856 = vmatprep.subr.mxu0 0.0
    %4857 = vmatpush1.msra.mxu0 0.0
    %4858 = vmatprep.subr.mxu0 0.0
    %4859 = vmatpush1.msra.mxu0 0.0
    %4860 = vmatprep.subr.mxu0 0.0
    %4861 = vmatpush1.msra.mxu0 0.0
    %4862 = vmatprep.subr.mxu0 0.0
    %4863 = vmatpush1.msra.mxu0 0.0
    %4864 = vmatprep.subr.mxu0 0.0
    %4865 = vmatpush1.msra.mxu0 0.0
    %4866 = vmatprep.subr.mxu0 0.0
    %4867 = vmatpush1.msra.mxu0 0.0
    %4868 = vmatprep.subr.mxu0 0.0
    %4869 = vmatpush1.msra.mxu0 0.0
    %4870 = vmatprep.subr.mxu0 0.0
    %4871 = vmatpush1.msra.mxu0 0.0
    %4872 = vmatprep.subr.mxu0 0.0
    %4873 = vmatpush1.msra.mxu0 0.0
    %4874 = vmatprep.subr.mxu0 0.0
    %4875 = vmatpush1.msra.mxu0 0.0
    %4876 = vmatprep.mubr.f32.mxu0 0.0
    %4877 = vmatmul.mubr.f32.gmra.mrb[0].mxu0 %v4810
    %v4878 = vpop.f32.mrb[0].mxu0
    %v4879 = vadd.f32 0.0, %v4878
    %v4880 = vpop.f32.mrb[0].mxu0
    %4881 = vdwg.mxu0
    %v4884 = vrot.slane %v4802, 1
    %v4885 = vrot.slane %v4802, 2
    %v4886 = vrot.slane %v4879, 1
    %v4887 = vrot.slane %v4879, 2
    %v4892 = vadd.f32 %v2654, %v4884
    %v4893 = vadd.f32 %v2660, %v4885
    %v4894 = vadd.f32 %v3540, %v4886
    %v4895 = vadd.f32 %v3541, %v4887
    %v4896 = vxor.u32 %v4892, 2147483648
    %v4897 = vxor.u32 %v4893, 2147483648
    %v4898 = vxor.u32 %v4894, 2147483648
    %v4899 = vxor.u32 %v4895, 2147483648
    %v4900 = vmul.f32 %v4896, 1.442695
    %v4901 = vpow.pop %v4900
    %v4902 = vmul.f32 %v4897, 1.442695
    %v4903 = vpow.pop %v4902
    %v4904 = vmul.f32 %v4898, 1.442695
    %v4905 = vpow.pop %v4904
    %v4906 = vmul.f32 %v4899, 1.442695
    %v4907 = vpow.pop %v4906
    %v4908 = vadd.f32 %v4901, 1.0
    %v4909 = vadd.f32 %v4903, 1.0
    %v4910 = vadd.f32 %v4905, 1.0
    %v4911 = vadd.f32 %v4907, 1.0
    %v4912 = vrcp.pop %v4908
    %v4913 = vmul.f32 1.0, %v4912
    %v4914 = vrcp.pop %v4909
    %v4915 = vmul.f32 1.0, %v4914
    %v4916 = vrcp.pop %v4910
    %v4917 = vmul.f32 1.0, %v4916
    %v4918 = vrcp.pop %v4911
    %v4919 = vmul.f32 1.0, %v4918
    %v4920 = vtanh.pop %v4892
    %v4921 = vtanh.pop %v4893
    %v4922 = vtanh.pop %v4894
    %v4923 = vtanh.pop %v4895
    %v4928 = vrot.slane %v4680, 7
    %v4929 = vrot.slane %v4681, 7
    %v4930 = vrot.slane %v4682, 7
    %v4931 = vrot.slane %v4683, 7
    %v4936 = vmul.f32 %v4913, %v4928
    %v4937 = vmul.f32 %v4915, %v4929
    %v4938 = vmul.f32 %v4917, %v4930
    %v4939 = vmul.f32 %v4919, %v4931
    %4944 = vrot.lane.b32.xlu0 %v4920, 64
    %v4945 = vpop.permute.xlu0 %4944
    %4946 = vrot.lane.b32.xlu0 %v4921, 64
    %v4947 = vpop.permute.xlu0 %4946
    %4948 = vrot.lane.b32.xlu0 %v4922, 64
    %v4949 = vpop.permute.xlu0 %4948
    %4950 = vrot.lane.b32.xlu0 %v4923, 64
    %v4951 = vpop.permute.xlu0 %4950
    %v4956 = vmul.f32 %v4913, %v4945
    %v4957 = vmul.f32 %v4915, %v4947
    %v4958 = vmul.f32 %v4917, %v4949
    %v4959 = vmul.f32 %v4919, %v4951
    %4964 = vrot.lane.b32.xlu0 %v4956, 32
    %v4965 = vpop.permute.xlu0 %4964
    %4966 = vrot.lane.b32.xlu0 %v4957, 32
    %v4967 = vpop.permute.xlu0 %4966
    %4968 = vrot.lane.b32.xlu0 %v4958, 32
    %v4969 = vpop.permute.xlu0 %4968
    %4970 = vrot.lane.b32.xlu0 %v4959, 32
    %v4971 = vpop.permute.xlu0 %4970
    %v4976 = vadd.f32 %v4936, %v4965
    %v4977 = vadd.f32 %v4937, %v4967
    %v4978 = vadd.f32 %v4938, %v4969
    %v4979 = vadd.f32 %v4939, %v4971
    %v4980 = vtanh.pop %v4976
    %v4981 = vtanh.pop %v4977
    %v4982 = vtanh.pop %v4978
    %v4983 = vtanh.pop %v4979
    %4988 = vrot.lane.b32.xlu0 %v4980, 64
    %v4989 = vpop.permute.xlu0 %4988
    %4990 = vrot.lane.b32.xlu0 %v4981, 64
    %v4991 = vpop.permute.xlu0 %4990
    %4992 = vrot.lane.b32.xlu0 %v4982, 64
    %v4993 = vpop.permute.xlu0 %4992
    %4994 = vrot.lane.b32.xlu0 %v4983, 64
    %v4995 = vpop.permute.xlu0 %4994
    %v5000 = vmul.f32 %v4913, %v4989
    %v5001 = vmul.f32 %v4915, %v4991
    %v5002 = vmul.f32 %v4917, %v4993
    %v5003 = vmul.f32 %v4919, %v4995
    %5006 = vrot.lane.b32.xlu0 %v5000, 32
    %v5007 = vpop.permute.xlu0 %5006
    %5008 = vrot.lane.b32.xlu0 %v5001, 32
    %v5009 = vpop.permute.xlu0 %5008
    %5012 = vst.msk [vmem:[#allocation3] sm:$0x80] %vm2536, %v5007
    %5013 = vst.msk [vmem:[#allocation3 + $0x8] sm:$0x80] %vm2536, %v5009
    %5016 = vrot.lane.b32.xlu0 %v5002, 64
    %v5017 = vpop.permute.xlu0 %5016
    %5018 = vrot.lane.b32.xlu0 %v5003, 64
    %v5019 = vpop.permute.xlu0 %5018
    %5022 = vst.msk [vmem:[#allocation3 - $0x7] sm:$0x80] %vm2547, %v5017
    %5023 = vst.msk [vmem:[#allocation3 + $0x1] sm:$0x80] %vm2547, %v5019
    %v5024 = vld [vmem:[#allocation3] sm:$0xff]
    %v5025 = vld [vmem:[#allocation3 + $0x8] sm:$0xff]
    %v5028 = vrot.slane %v5024, 6
    %v5029 = vrot.slane %v5025, 6
    %vm5032 = vcmask 1041408
    %v5033 = vsel %vm5032, 0.0, %v5028
    %v5034 = vsel %vm5032, 0.0, %v5029
    %v5035 = vsel %vm5032, %v5028, 0.0
    %v5036 = vsel %vm5032, %v5029, 0.0
    %v5037 = vld [vmem:[%s8] sm:$0x1]
    %v5038 = vld [vmem:[%s7] sm:$0xff]
    %v5039 = vld [vmem:[%s7 + $0x8] sm:$0xff]
    %v5040 = vld [vmem:[%s7 + $0x10] sm:$0xff]
    %v5041 = vld [vmem:[%s7 + $0x18] sm:$0xff]
    %v5042 = vld [vmem:[%s7 + $0x20] sm:$0xff]
    %v5043 = vld [vmem:[%s7 + $0x28] sm:$0xff]
    %v5044 = vld [vmem:[%s7 + $0x30] sm:$0xff]
    %v5045 = vld [vmem:[%s7 + $0x38] sm:$0xff]
    %v5047 = vsel %vm2580, %v5033, 0
    %v5050 = vsel %vm2580, %v5034, 0
    %5052 = vmatprep.subr.mxu0 0.0
    %5053 = vmatpush1.msra.mxu0 %v5038
    %5054 = vmatprep.subr.mxu0 0.0
    %5055 = vmatpush1.msra.mxu0 %v5039
    %5056 = vmatprep.subr.mxu0 0.0
    %5057 = vmatpush1.msra.mxu0 %v5040
    %5058 = vmatprep.subr.mxu0 0.0
    %5059 = vmatpush1.msra.mxu0 %v5041
    %5060 = vmatprep.subr.mxu0 0.0
    %5061 = vmatpush1.msra.mxu0 %v5042
    %5062 = vmatprep.subr.mxu0 0.0
    %5063 = vmatpush1.msra.mxu0 %v5043
    %5064 = vmatprep.subr.mxu0 0.0
    %5065 = vmatpush1.msra.mxu0 %v5044
    %5066 = vmatprep.subr.mxu0 0.0
    %5067 = vmatpush1.msra.mxu0 %v5045
    %5068 = vmatprep.subr.mxu0 0.0
    %5069 = vmatpush1.msra.mxu0 0.0
    %5070 = vmatprep.subr.mxu0 0.0
    %5071 = vmatpush1.msra.mxu0 0.0
    %5072 = vmatprep.subr.mxu0 0.0
    %5073 = vmatpush1.msra.mxu0 0.0
    %5074 = vmatprep.subr.mxu0 0.0
    %5075 = vmatpush1.msra.mxu0 0.0
    %5076 = vmatprep.subr.mxu0 0.0
    %5077 = vmatpush1.msra.mxu0 0.0
    %5078 = vmatprep.subr.mxu0 0.0
    %5079 = vmatpush1.msra.mxu0 0.0
    %5080 = vmatprep.subr.mxu0 0.0
    %5081 = vmatpush1.msra.mxu0 0.0
    %5082 = vmatprep.subr.mxu0 0.0
    %5083 = vmatpush1.msra.mxu0 0.0
    %5084 = vmatprep.subr.mxu0 0.0
    %5085 = vmatpush1.msra.mxu0 0.0
    %5086 = vmatprep.subr.mxu0 0.0
    %5087 = vmatpush1.msra.mxu0 0.0
    %5088 = vmatprep.subr.mxu0 0.0
    %5089 = vmatpush1.msra.mxu0 0.0
    %5090 = vmatprep.subr.mxu0 0.0
    %5091 = vmatpush1.msra.mxu0 0.0
    %5092 = vmatprep.subr.mxu0 0.0
    %5093 = vmatpush1.msra.mxu0 0.0
    %5094 = vmatprep.subr.mxu0 0.0
    %5095 = vmatpush1.msra.mxu0 0.0
    %5096 = vmatprep.subr.mxu0 0.0
    %5097 = vmatpush1.msra.mxu0 0.0
    %5098 = vmatprep.subr.mxu0 0.0
    %5099 = vmatpush1.msra.mxu0 0.0
    %5100 = vmatprep.subr.mxu0 0.0
    %5101 = vmatpush1.msra.mxu0 0.0
    %5102 = vmatprep.subr.mxu0 0.0
    %5103 = vmatpush1.msra.mxu0 0.0
    %5104 = vmatprep.subr.mxu0 0.0
    %5105 = vmatpush1.msra.mxu0 0.0
    %5106 = vmatprep.subr.mxu0 0.0
    %5107 = vmatpush1.msra.mxu0 0.0
    %5108 = vmatprep.subr.mxu0 0.0
    %5109 = vmatpush1.msra.mxu0 0.0
    %5110 = vmatprep.subr.mxu0 0.0
    %5111 = vmatpush1.msra.mxu0 0.0
    %5112 = vmatprep.subr.mxu0 0.0
    %5113 = vmatpush1.msra.mxu0 0.0
    %5114 = vmatprep.subr.mxu0 0.0
    %5115 = vmatpush1.msra.mxu0 0.0
    %5116 = vmatprep.mubr.f32.mxu0 0.0
    %5117 = vmatmul.mubr.f32.gmra.mrb[0].mxu0 %v5047
    %v5118 = vpop.f32.mrb[0].mxu0
    %v5119 = vadd.f32 0.0, %v5118
    %v5120 = vpop.f32.mrb[0].mxu0
    %5121 = vmatprep.mubr.f32.mxu0 0.0
    %5122 = vmatmul.mubr.f32.gmra.mrb[0].mxu0 %v5050
    %v5123 = vpop.f32.mrb[0].mxu0
    %v5124 = vadd.f32 0.0, %v5123
    %v5125 = vpop.f32.mrb[0].mxu0
    %5126 = vdwg.mxu0
    %v5128 = vlaneseq
    %v5129 = vshrl.u32 %v5128, 7
    %v5130 = vsub.s32 0, %v5129
    %v5131 = vrot.slane %v5037, %v5130
    %v5133 = vadd.f32 %v5131, %v5119
    %v5134 = vadd.f32 %v5131, %v5124
    %vm5137 = vcmask 1046528
    %v5138 = vrot.slane %v5033, 1
    %v5139 = vrot.slane %v5035, 1
    %v5140 = vsel %vm5137, %v5138, %v5139
    %v5141 = vrot.slane %v5034, 1
    %v5142 = vrot.slane %v5036, 1
    %v5143 = vsel %vm5137, %v5141, %v5142
    %s5144 = scalar_lea.vmem %s7, 64
    %v5145 = vld [vmem:[%s5144] sm:$0xff]
    %v5146 = vld [vmem:[%s5144 + $0x8] sm:$0xff]
    %v5147 = vld [vmem:[%s5144 + $0x10] sm:$0xff]
    %v5148 = vld [vmem:[%s5144 + $0x18] sm:$0xff]
    %v5149 = vld [vmem:[%s5144 + $0x20] sm:$0xff]
    %v5150 = vld [vmem:[%s5144 + $0x28] sm:$0xff]
    %v5151 = vld [vmem:[%s5144 + $0x30] sm:$0xff]
    %v5152 = vld [vmem:[%s5144 + $0x38] sm:$0xff]
    %v5153 = vsel %vm2580, %v5140, 0
    %v5155 = vsel %vm2580, %v5143, 0
    %5157 = vmatprep.subr.mxu0 0.0
    %5158 = vmatpush1.msra.mxu0 %v5145
    %5159 = vmatprep.subr.mxu0 0.0
    %5160 = vmatpush1.msra.mxu0 %v5146
    %5161 = vmatprep.subr.mxu0 0.0
    %5162 = vmatpush1.msra.mxu0 %v5147
    %5163 = vmatprep.subr.mxu0 0.0
    %5164 = vmatpush1.msra.mxu0 %v5148
    %5165 = vmatprep.subr.mxu0 0.0
    %5166 = vmatpush1.msra.mxu0 %v5149
    %5167 = vmatprep.subr.mxu0 0.0
    %5168 = vmatpush1.msra.mxu0 %v5150
    %5169 = vmatprep.subr.mxu0 0.0
    %5170 = vmatpush1.msra.mxu0 %v5151
    %5171 = vmatprep.subr.mxu0 0.0
    %5172 = vmatpush1.msra.mxu0 %v5152
    %5173 = vmatprep.subr.mxu0 0.0
    %5174 = vmatpush1.msra.mxu0 0.0
    %5175 = vmatprep.subr.mxu0 0.0
    %5176 = vmatpush1.msra.mxu0 0.0
    %5177 = vmatprep.subr.mxu0 0.0
    %5178 = vmatpush1.msra.mxu0 0.0
    %5179 = vmatprep.subr.mxu0 0.0
    %5180 = vmatpush1.msra.mxu0 0.0
    %5181 = vmatprep.subr.mxu0 0.0
    %5182 = vmatpush1.msra.mxu0 0.0
    %5183 = vmatprep.subr.mxu0 0.0
    %5184 = vmatpush1.msra.mxu0 0.0
    %5185 = vmatprep.subr.mxu0 0.0
    %5186 = vmatpush1.msra.mxu0 0.0
    %5187 = vmatprep.subr.mxu0 0.0
    %5188 = vmatpush1.msra.mxu0 0.0
    %5189 = vmatprep.subr.mxu0 0.0
    %5190 = vmatpush1.msra.mxu0 0.0
    %5191 = vmatprep.subr.mxu0 0.0
    %5192 = vmatpush1.msra.mxu0 0.0
    %5193 = vmatprep.subr.mxu0 0.0
    %5194 = vmatpush1.msra.mxu0 0.0
    %5195 = vmatprep.subr.mxu0 0.0
    %5196 = vmatpush1.msra.mxu0 0.0
    %5197 = vmatprep.subr.mxu0 0.0
    %5198 = vmatpush1.msra.mxu0 0.0
    %5199 = vmatprep.subr.mxu0 0.0
    %5200 = vmatpush1.msra.mxu0 0.0
    %5201 = vmatprep.subr.mxu0 0.0
    %5202 = vmatpush1.msra.mxu0 0.0
    %5203 = vmatprep.subr.mxu0 0.0
    %5204 = vmatpush1.msra.mxu0 0.0
    %5205 = vmatprep.subr.mxu0 0.0
    %5206 = vmatpush1.msra.mxu0 0.0
    %5207 = vmatprep.subr.mxu0 0.0
    %5208 = vmatpush1.msra.mxu0 0.0
    %5209 = vmatprep.subr.mxu0 0.0
    %5210 = vmatpush1.msra.mxu0 0.0
    %5211 = vmatprep.subr.mxu0 0.0
    %5212 = vmatpush1.msra.mxu0 0.0
    %5213 = vmatprep.subr.mxu0 0.0
    %5214 = vmatpush1.msra.mxu0 0.0
    %5215 = vmatprep.subr.mxu0 0.0
    %5216 = vmatpush1.msra.mxu0 0.0
    %5217 = vmatprep.subr.mxu0 0.0
    %5218 = vmatpush1.msra.mxu0 0.0
    %5219 = vmatprep.subr.mxu0 0.0
    %5220 = vmatpush1.msra.mxu0 0.0
    %5221 = vmatprep.mubr.f32.mxu0 0.0
    %5222 = vmatmul.mubr.f32.gmra.mrb[0].mxu0 %v5153
    %v5223 = vpop.f32.mrb[0].mxu0
    %v5224 = vadd.f32 0.0, %v5223
    %v5225 = vpop.f32.mrb[0].mxu0
    %5226 = vmatprep.mubr.f32.mxu0 0.0
    %5227 = vmatmul.mubr.f32.gmra.mrb[0].mxu0 %v5155
    %v5228 = vpop.f32.mrb[0].mxu0
    %v5229 = vadd.f32 0.0, %v5228
    %v5230 = vpop.f32.mrb[0].mxu0
    %5231 = vdwg.mxu0
    %v5232 = vadd.f32 %v5133, %v5224
    %v5233 = vadd.f32 %v5134, %v5229
    %vm5234 = vcmask 1045504
    %v5235 = vrot.slane %v5033, 2
    %v5236 = vrot.slane %v5035, 2
    %v5237 = vsel %vm5234, %v5235, %v5236
    %v5238 = vrot.slane %v5034, 2
    %v5239 = vrot.slane %v5036, 2
    %v5240 = vsel %vm5234, %v5238, %v5239
    %s5241 = scalar_lea.vmem %s7, 128
    %v5242 = vld [vmem:[%s5241] sm:$0xff]
    %v5243 = vld [vmem:[%s5241 + $0x8] sm:$0xff]
    %v5244 = vld [vmem:[%s5241 + $0x10] sm:$0xff]
    %v5245 = vld [vmem:[%s5241 + $0x18] sm:$0xff]
    %v5246 = vld [vmem:[%s5241 + $0x20] sm:$0xff]
    %v5247 = vld [vmem:[%s5241 + $0x28] sm:$0xff]
    %v5248 = vld [vmem:[%s5241 + $0x30] sm:$0xff]
    %v5249 = vld [vmem:[%s5241 + $0x38] sm:$0xff]
    %v5250 = vsel %vm2580, %v5237, 0
    %v5252 = vsel %vm2580, %v5240, 0
    %5254 = vmatprep.subr.mxu0 0.0
    %5255 = vmatpush1.msra.mxu0 %v5242
    %5256 = vmatprep.subr.mxu0 0.0
    %5257 = vmatpush1.msra.mxu0 %v5243
    %5258 = vmatprep.subr.mxu0 0.0
    %5259 = vmatpush1.msra.mxu0 %v5244
    %5260 = vmatprep.subr.mxu0 0.0
    %5261 = vmatpush1.msra.mxu0 %v5245
    %5262 = vmatprep.subr.mxu0 0.0
    %5263 = vmatpush1.msra.mxu0 %v5246
    %5264 = vmatprep.subr.mxu0 0.0
    %5265 = vmatpush1.msra.mxu0 %v5247
    %5266 = vmatprep.subr.mxu0 0.0
    %5267 = vmatpush1.msra.mxu0 %v5248
    %5268 = vmatprep.subr.mxu0 0.0
    %5269 = vmatpush1.msra.mxu0 %v5249
    %5270 = vmatprep.subr.mxu0 0.0
    %5271 = vmatpush1.msra.mxu0 0.0
    %5272 = vmatprep.subr.mxu0 0.0
    %5273 = vmatpush1.msra.mxu0 0.0
    %5274 = vmatprep.subr.mxu0 0.0
    %5275 = vmatpush1.msra.mxu0 0.0
    %5276 = vmatprep.subr.mxu0 0.0
    %5277 = vmatpush1.msra.mxu0 0.0
    %5278 = vmatprep.subr.mxu0 0.0
    %5279 = vmatpush1.msra.mxu0 0.0
    %5280 = vmatprep.subr.mxu0 0.0
    %5281 = vmatpush1.msra.mxu0 0.0
    %5282 = vmatprep.subr.mxu0 0.0
    %5283 = vmatpush1.msra.mxu0 0.0
    %5284 = vmatprep.subr.mxu0 0.0
    %5285 = vmatpush1.msra.mxu0 0.0
    %5286 = vmatprep.subr.mxu0 0.0
    %5287 = vmatpush1.msra.mxu0 0.0
    %5288 = vmatprep.subr.mxu0 0.0
    %5289 = vmatpush1.msra.mxu0 0.0
    %5290 = vmatprep.subr.mxu0 0.0
    %5291 = vmatpush1.msra.mxu0 0.0
    %5292 = vmatprep.subr.mxu0 0.0
    %5293 = vmatpush1.msra.mxu0 0.0
    %5294 = vmatprep.subr.mxu0 0.0
    %5295 = vmatpush1.msra.mxu0 0.0
    %5296 = vmatprep.subr.mxu0 0.0
    %5297 = vmatpush1.msra.mxu0 0.0
    %5298 = vmatprep.subr.mxu0 0.0
    %5299 = vmatpush1.msra.mxu0 0.0
    %5300 = vmatprep.subr.mxu0 0.0
    %5301 = vmatpush1.msra.mxu0 0.0
    %5302 = vmatprep.subr.mxu0 0.0
    %5303 = vmatpush1.msra.mxu0 0.0
    %5304 = vmatprep.subr.mxu0 0.0
    %5305 = vmatpush1.msra.mxu0 0.0
    %5306 = vmatprep.subr.mxu0 0.0
    %5307 = vmatpush1.msra.mxu0 0.0
    %5308 = vmatprep.subr.mxu0 0.0
    %5309 = vmatpush1.msra.mxu0 0.0
    %5310 = vmatprep.subr.mxu0 0.0
    %5311 = vmatpush1.msra.mxu0 0.0
    %5312 = vmatprep.subr.mxu0 0.0
    %5313 = vmatpush1.msra.mxu0 0.0
    %5314 = vmatprep.subr.mxu0 0.0
    %5315 = vmatpush1.msra.mxu0 0.0
    %5316 = vmatprep.subr.mxu0 0.0
    %5317 = vmatpush1.msra.mxu0 0.0
    %5318 = vmatprep.mubr.f32.mxu0 0.0
    %5319 = vmatmul.mubr.f32.gmra.mrb[0].mxu0 %v5250
    %v5320 = vpop.f32.mrb[0].mxu0
    %v5321 = vadd.f32 0.0, %v5320
    %v5322 = vpop.f32.mrb[0].mxu0
    %5323 = vmatprep.mubr.f32.mxu0 0.0
    %5324 = vmatmul.mubr.f32.gmra.mrb[0].mxu0 %v5252
    %v5325 = vpop.f32.mrb[0].mxu0
    %v5326 = vadd.f32 0.0, %v5325
    %v5327 = vpop.f32.mrb[0].mxu0
    %5328 = vdwg.mxu0
    %v5329 = vadd.f32 %v5232, %v5321
    %v5330 = vadd.f32 %v5233, %v5326
    %vm5331 = vcmask 1044480
    %v5332 = vrot.slane %v5033, 3
    %v5333 = vrot.slane %v5035, 3
    %v5334 = vsel %vm5331, %v5332, %v5333
    %v5335 = vrot.slane %v5034, 3
    %v5336 = vrot.slane %v5036, 3
    %v5337 = vsel %vm5331, %v5335, %v5336
    %s5338 = scalar_lea.vmem %s7, 192
    %v5339 = vld [vmem:[%s5338] sm:$0xff]
    %v5340 = vld [vmem:[%s5338 + $0x8] sm:$0xff]
    %v5341 = vld [vmem:[%s5338 + $0x10] sm:$0xff]
    %v5342 = vld [vmem:[%s5338 + $0x18] sm:$0xff]
    %v5343 = vld [vmem:[%s5338 + $0x20] sm:$0xff]
    %v5344 = vld [vmem:[%s5338 + $0x28] sm:$0xff]
    %v5345 = vld [vmem:[%s5338 + $0x30] sm:$0xff]
    %v5346 = vld [vmem:[%s5338 + $0x38] sm:$0xff]
    %v5347 = vsel %vm2580, %v5334, 0
    %v5349 = vsel %vm2580, %v5337, 0
    %5351 = vmatprep.subr.mxu0 0.0
    %5352 = vmatpush1.msra.mxu0 %v5339
    %5353 = vmatprep.subr.mxu0 0.0
    %5354 = vmatpush1.msra.mxu0 %v5340
    %5355 = vmatprep.subr.mxu0 0.0
    %5356 = vmatpush1.msra.mxu0 %v5341
    %5357 = vmatprep.subr.mxu0 0.0
    %5358 = vmatpush1.msra.mxu0 %v5342
    %5359 = vmatprep.subr.mxu0 0.0
    %5360 = vmatpush1.msra.mxu0 %v5343
    %5361 = vmatprep.subr.mxu0 0.0
    %5362 = vmatpush1.msra.mxu0 %v5344
    %5363 = vmatprep.subr.mxu0 0.0
    %5364 = vmatpush1.msra.mxu0 %v5345
    %5365 = vmatprep.subr.mxu0 0.0
    %5366 = vmatpush1.msra.mxu0 %v5346
    %5367 = vmatprep.subr.mxu0 0.0
    %5368 = vmatpush1.msra.mxu0 0.0
    %5369 = vmatprep.subr.mxu0 0.0
    %5370 = vmatpush1.msra.mxu0 0.0
    %5371 = vmatprep.subr.mxu0 0.0
    %5372 = vmatpush1.msra.mxu0 0.0
    %5373 = vmatprep.subr.mxu0 0.0
    %5374 = vmatpush1.msra.mxu0 0.0
    %5375 = vmatprep.subr.mxu0 0.0
    %5376 = vmatpush1.msra.mxu0 0.0
    %5377 = vmatprep.subr.mxu0 0.0
    %5378 = vmatpush1.msra.mxu0 0.0
    %5379 = vmatprep.subr.mxu0 0.0
    %5380 = vmatpush1.msra.mxu0 0.0
    %5381 = vmatprep.subr.mxu0 0.0
    %5382 = vmatpush1.msra.mxu0 0.0
    %5383 = vmatprep.subr.mxu0 0.0
    %5384 = vmatpush1.msra.mxu0 0.0
    %5385 = vmatprep.subr.mxu0 0.0
    %5386 = vmatpush1.msra.mxu0 0.0
    %5387 = vmatprep.subr.mxu0 0.0
    %5388 = vmatpush1.msra.mxu0 0.0
    %5389 = vmatprep.subr.mxu0 0.0
    %5390 = vmatpush1.msra.mxu0 0.0
    %5391 = vmatprep.subr.mxu0 0.0
    %5392 = vmatpush1.msra.mxu0 0.0
    %5393 = vmatprep.subr.mxu0 0.0
    %5394 = vmatpush1.msra.mxu0 0.0
    %5395 = vmatprep.subr.mxu0 0.0
    %5396 = vmatpush1.msra.mxu0 0.0
    %5397 = vmatprep.subr.mxu0 0.0
    %5398 = vmatpush1.msra.mxu0 0.0
    %5399 = vmatprep.subr.mxu0 0.0
    %5400 = vmatpush1.msra.mxu0 0.0
    %5401 = vmatprep.subr.mxu0 0.0
    %5402 = vmatpush1.msra.mxu0 0.0
    %5403 = vmatprep.subr.mxu0 0.0
    %5404 = vmatpush1.msra.mxu0 0.0
    %5405 = vmatprep.subr.mxu0 0.0
    %5406 = vmatpush1.msra.mxu0 0.0
    %5407 = vmatprep.subr.mxu0 0.0
    %5408 = vmatpush1.msra.mxu0 0.0
    %5409 = vmatprep.subr.mxu0 0.0
    %5410 = vmatpush1.msra.mxu0 0.0
    %5411 = vmatprep.subr.mxu0 0.0
    %5412 = vmatpush1.msra.mxu0 0.0
    %5413 = vmatprep.subr.mxu0 0.0
    %5414 = vmatpush1.msra.mxu0 0.0
    %5415 = vmatprep.mubr.f32.mxu0 0.0
    %5416 = vmatmul.mubr.f32.gmra.mrb[0].mxu0 %v5347
    %v5417 = vpop.f32.mrb[0].mxu0
    %v5418 = vadd.f32 0.0, %v5417
    %v5419 = vpop.f32.mrb[0].mxu0
    %5420 = vmatprep.mubr.f32.mxu0 0.0
    %5421 = vmatmul.mubr.f32.gmra.mrb[0].mxu0 %v5349
    %v5422 = vpop.f32.mrb[0].mxu0
    %v5423 = vadd.f32 0.0, %v5422
    %v5424 = vpop.f32.mrb[0].mxu0
    %5425 = vdwg.mxu0
    %v5426 = vadd.f32 %v5329, %v5418
    %v5427 = vadd.f32 %v5330, %v5423
    %vm5428 = vcmask 1043456
    %v5429 = vrot.slane %v5033, 4
    %v5430 = vrot.slane %v5035, 4
    %v5431 = vsel %vm5428, %v5429, %v5430
    %v5432 = vrot.slane %v5034, 4
    %v5433 = vrot.slane %v5036, 4
    %v5434 = vsel %vm5428, %v5432, %v5433
    %s5435 = scalar_lea.vmem %s7, 256
    %v5436 = vld [vmem:[%s5435] sm:$0xff]
    %v5437 = vld [vmem:[%s5435 + $0x8] sm:$0xff]
    %v5438 = vld [vmem:[%s5435 + $0x10] sm:$0xff]
    %v5439 = vld [vmem:[%s5435 + $0x18] sm:$0xff]
    %v5440 = vld [vmem:[%s5435 + $0x20] sm:$0xff]
    %v5441 = vld [vmem:[%s5435 + $0x28] sm:$0xff]
    %v5442 = vld [vmem:[%s5435 + $0x30] sm:$0xff]
    %v5443 = vld [vmem:[%s5435 + $0x38] sm:$0xff]
    %v5444 = vsel %vm2580, %v5431, 0
    %v5446 = vsel %vm2580, %v5434, 0
    %5448 = vmatprep.subr.mxu0 0.0
    %5449 = vmatpush1.msra.mxu0 %v5436
    %5450 = vmatprep.subr.mxu0 0.0
    %5451 = vmatpush1.msra.mxu0 %v5437
    %5452 = vmatprep.subr.mxu0 0.0
    %5453 = vmatpush1.msra.mxu0 %v5438
    %5454 = vmatprep.subr.mxu0 0.0
    %5455 = vmatpush1.msra.mxu0 %v5439
    %5456 = vmatprep.subr.mxu0 0.0
    %5457 = vmatpush1.msra.mxu0 %v5440
    %5458 = vmatprep.subr.mxu0 0.0
    %5459 = vmatpush1.msra.mxu0 %v5441
    %5460 = vmatprep.subr.mxu0 0.0
    %5461 = vmatpush1.msra.mxu0 %v5442
    %5462 = vmatprep.subr.mxu0 0.0
    %5463 = vmatpush1.msra.mxu0 %v5443
    %5464 = vmatprep.subr.mxu0 0.0
    %5465 = vmatpush1.msra.mxu0 0.0
    %5466 = vmatprep.subr.mxu0 0.0
    %5467 = vmatpush1.msra.mxu0 0.0
    %5468 = vmatprep.subr.mxu0 0.0
    %5469 = vmatpush1.msra.mxu0 0.0
    %5470 = vmatprep.subr.mxu0 0.0
    %5471 = vmatpush1.msra.mxu0 0.0
    %5472 = vmatprep.subr.mxu0 0.0
    %5473 = vmatpush1.msra.mxu0 0.0
    %5474 = vmatprep.subr.mxu0 0.0
    %5475 = vmatpush1.msra.mxu0 0.0
    %5476 = vmatprep.subr.mxu0 0.0
    %5477 = vmatpush1.msra.mxu0 0.0
    %5478 = vmatprep.subr.mxu0 0.0
    %5479 = vmatpush1.msra.mxu0 0.0
    %5480 = vmatprep.subr.mxu0 0.0
    %5481 = vmatpush1.msra.mxu0 0.0
    %5482 = vmatprep.subr.mxu0 0.0
    %5483 = vmatpush1.msra.mxu0 0.0
    %5484 = vmatprep.subr.mxu0 0.0
    %5485 = vmatpush1.msra.mxu0 0.0
    %5486 = vmatprep.subr.mxu0 0.0
    %5487 = vmatpush1.msra.mxu0 0.0
    %5488 = vmatprep.subr.mxu0 0.0
    %5489 = vmatpush1.msra.mxu0 0.0
    %5490 = vmatprep.subr.mxu0 0.0
    %5491 = vmatpush1.msra.mxu0 0.0
    %5492 = vmatprep.subr.mxu0 0.0
    %5493 = vmatpush1.msra.mxu0 0.0
    %5494 = vmatprep.subr.mxu0 0.0
    %5495 = vmatpush1.msra.mxu0 0.0
    %5496 = vmatprep.subr.mxu0 0.0
    %5497 = vmatpush1.msra.mxu0 0.0
    %5498 = vmatprep.subr.mxu0 0.0
    %5499 = vmatpush1.msra.mxu0 0.0
    %5500 = vmatprep.subr.mxu0 0.0
    %5501 = vmatpush1.msra.mxu0 0.0
    %5502 = vmatprep.subr.mxu0 0.0
    %5503 = vmatpush1.msra.mxu0 0.0
    %5504 = vmatprep.subr.mxu0 0.0
    %5505 = vmatpush1.msra.mxu0 0.0
    %5506 = vmatprep.subr.mxu0 0.0
    %5507 = vmatpush1.msra.mxu0 0.0
    %5508 = vmatprep.subr.mxu0 0.0
    %5509 = vmatpush1.msra.mxu0 0.0
    %5510 = vmatprep.subr.mxu0 0.0
    %5511 = vmatpush1.msra.mxu0 0.0
    %5512 = vmatprep.mubr.f32.mxu0 0.0
    %5513 = vmatmul.mubr.f32.gmra.mrb[0].mxu0 %v5444
    %v5514 = vpop.f32.mrb[0].mxu0
    %v5515 = vadd.f32 0.0, %v5514
    %v5516 = vpop.f32.mrb[0].mxu0
    %5517 = vmatprep.mubr.f32.mxu0 0.0
    %5518 = vmatmul.mubr.f32.gmra.mrb[0].mxu0 %v5446
    %v5519 = vpop.f32.mrb[0].mxu0
    %v5520 = vadd.f32 0.0, %v5519
    %v5521 = vpop.f32.mrb[0].mxu0
    %5522 = vdwg.mxu0
    %v5523 = vadd.f32 %v5426, %v5515
    %v5524 = vadd.f32 %v5427, %v5520
    %v5525 = vmax.f32 %v5523, 0.0
    %v5526 = vmax.f32 %v5524, 0.0
    %v5527 = vld [vmem:[%s9] sm:$0x1]
    %v5529 = vlaneseq
    %v5530 = vshrl.u32 %v5529, 7
    %v5531 = vsub.s32 0, %v5530
    %v5532 = vrot.slane %v5527, %v5531
    %v5534 = vmul.f32 %v5525, %v5532
    %v5535 = vmul.f32 %v5526, %v5532
    %v5536 = vld [vmem:[%s10] sm:$0x1]
    %v5538 = vlaneseq
    %v5539 = vshrl.u32 %v5538, 7
    %v5540 = vsub.s32 0, %v5539
    %v5541 = vrot.slane %v5536, %v5540
    %v5543 = vadd.f32 %v5534, %v5541
    %v5544 = vadd.f32 %v5535, %v5541
    %v5547 = vrot.slane %v5543, 7
    %v5548 = vrot.slane %v5544, 7
    %vm5551 = vcmask 1040384
    %v5552 = vsel %vm5551, 0.0, %v5547
    %v5553 = vsel %vm5551, 0.0, %v5548
    %v5554 = vsel %vm5551, %v5547, 0.0
    %v5555 = vsel %vm5551, %v5548, 0.0
    %v5556 = vld [vmem:[%s12] sm:$0x1]
    %v5557 = vld [vmem:[%s11] sm:$0xff]
    %v5558 = vld [vmem:[%s11 + $0x8] sm:$0xff]
    %v5559 = vld [vmem:[%s11 + $0x10] sm:$0xff]
    %v5560 = vld [vmem:[%s11 + $0x18] sm:$0xff]
    %v5562 = vsel %vm183, %v5552, 0
    %v5565 = vsel %vm183, %v5553, 0
    %5567 = vmatprep.subr.mxu0 0.0
    %5568 = vmatpush1.msra.mxu0 %v5557
    %5569 = vmatprep.subr.mxu0 0.0
    %5570 = vmatpush1.msra.mxu0 %v5558
    %5571 = vmatprep.subr.mxu0 0.0
    %5572 = vmatpush1.msra.mxu0 %v5559
    %5573 = vmatprep.subr.mxu0 0.0
    %5574 = vmatpush1.msra.mxu0 %v5560
    %5575 = vmatprep.subr.mxu0 0.0
    %5576 = vmatpush1.msra.mxu0 0.0
    %5577 = vmatprep.subr.mxu0 0.0
    %5578 = vmatpush1.msra.mxu0 0.0
    %5579 = vmatprep.subr.mxu0 0.0
    %5580 = vmatpush1.msra.mxu0 0.0
    %5581 = vmatprep.subr.mxu0 0.0
    %5582 = vmatpush1.msra.mxu0 0.0
    %5583 = vmatprep.subr.mxu0 0.0
    %5584 = vmatpush1.msra.mxu0 0.0
    %5585 = vmatprep.subr.mxu0 0.0
    %5586 = vmatpush1.msra.mxu0 0.0
    %5587 = vmatprep.subr.mxu0 0.0
    %5588 = vmatpush1.msra.mxu0 0.0
    %5589 = vmatprep.subr.mxu0 0.0
    %5590 = vmatpush1.msra.mxu0 0.0
    %5591 = vmatprep.subr.mxu0 0.0
    %5592 = vmatpush1.msra.mxu0 0.0
    %5593 = vmatprep.subr.mxu0 0.0
    %5594 = vmatpush1.msra.mxu0 0.0
    %5595 = vmatprep.subr.mxu0 0.0
    %5596 = vmatpush1.msra.mxu0 0.0
    %5597 = vmatprep.subr.mxu0 0.0
    %5598 = vmatpush1.msra.mxu0 0.0
    %5599 = vmatprep.subr.mxu0 0.0
    %5600 = vmatpush1.msra.mxu0 0.0
    %5601 = vmatprep.subr.mxu0 0.0
    %5602 = vmatpush1.msra.mxu0 0.0
    %5603 = vmatprep.subr.mxu0 0.0
    %5604 = vmatpush1.msra.mxu0 0.0
    %5605 = vmatprep.subr.mxu0 0.0
    %5606 = vmatpush1.msra.mxu0 0.0
    %5607 = vmatprep.subr.mxu0 0.0
    %5608 = vmatpush1.msra.mxu0 0.0
    %5609 = vmatprep.subr.mxu0 0.0
    %5610 = vmatpush1.msra.mxu0 0.0
    %5611 = vmatprep.subr.mxu0 0.0
    %5612 = vmatpush1.msra.mxu0 0.0
    %5613 = vmatprep.subr.mxu0 0.0
    %5614 = vmatpush1.msra.mxu0 0.0
    %5615 = vmatprep.subr.mxu0 0.0
    %5616 = vmatpush1.msra.mxu0 0.0
    %5617 = vmatprep.subr.mxu0 0.0
    %5618 = vmatpush1.msra.mxu0 0.0
    %5619 = vmatprep.subr.mxu0 0.0
    %5620 = vmatpush1.msra.mxu0 0.0
    %5621 = vmatprep.subr.mxu0 0.0
    %5622 = vmatpush1.msra.mxu0 0.0
    %5623 = vmatprep.subr.mxu0 0.0
    %5624 = vmatpush1.msra.mxu0 0.0
    %5625 = vmatprep.subr.mxu0 0.0
    %5626 = vmatpush1.msra.mxu0 0.0
    %5627 = vmatprep.subr.mxu0 0.0
    %5628 = vmatpush1.msra.mxu0 0.0
    %5629 = vmatprep.subr.mxu0 0.0
    %5630 = vmatpush1.msra.mxu0 0.0
    %5631 = vmatprep.mubr.f32.mxu0 0.0
    %5632 = vmatmul.mubr.f32.gmra.mrb[0].mxu0 %v5562
    %v5633 = vpop.f32.mrb[0].mxu0
    %v5634 = vadd.f32 0.0, %v5633
    %v5635 = vpop.f32.mrb[0].mxu0
    %5636 = vmatprep.mubr.f32.mxu0 0.0
    %5637 = vmatmul.mubr.f32.gmra.mrb[0].mxu0 %v5565
    %v5638 = vpop.f32.mrb[0].mxu0
    %v5639 = vadd.f32 0.0, %v5638
    %v5640 = vpop.f32.mrb[0].mxu0
    %5641 = vdwg.mxu0
    %v5643 = vlaneseq
    %v5644 = vshrl.u32 %v5643, 7
    %v5645 = vsub.s32 0, %v5644
    %v5646 = vrot.slane %v5556, %v5645
    %v5648 = vadd.f32 %v5646, %v5634
    %v5649 = vadd.f32 %v5646, %v5639
    %v5652 = vrot.slane %v5552, 1
    %v5653 = vrot.slane %v5554, 1
    %v5654 = vsel %vm5137, %v5652, %v5653
    %v5655 = vrot.slane %v5553, 1
    %v5656 = vrot.slane %v5555, 1
    %v5657 = vsel %vm5137, %v5655, %v5656
    %s5658 = scalar_lea.vmem %s11, 32
    %v5659 = vld [vmem:[%s5658] sm:$0xff]
    %v5660 = vld [vmem:[%s5658 + $0x8] sm:$0xff]
    %v5661 = vld [vmem:[%s5658 + $0x10] sm:$0xff]
    %v5662 = vld [vmem:[%s5658 + $0x18] sm:$0xff]
    %v5663 = vsel %vm183, %v5654, 0
    %v5665 = vsel %vm183, %v5657, 0
    %5667 = vmatprep.subr.mxu0 0.0
    %5668 = vmatpush1.msra.mxu0 %v5659
    %5669 = vmatprep.subr.mxu0 0.0
    %5670 = vmatpush1.msra.mxu0 %v5660
    %5671 = vmatprep.subr.mxu0 0.0
    %5672 = vmatpush1.msra.mxu0 %v5661
    %5673 = vmatprep.subr.mxu0 0.0
    %5674 = vmatpush1.msra.mxu0 %v5662
    %5675 = vmatprep.subr.mxu0 0.0
    %5676 = vmatpush1.msra.mxu0 0.0
    %5677 = vmatprep.subr.mxu0 0.0
    %5678 = vmatpush1.msra.mxu0 0.0
    %5679 = vmatprep.subr.mxu0 0.0
    %5680 = vmatpush1.msra.mxu0 0.0
    %5681 = vmatprep.subr.mxu0 0.0
    %5682 = vmatpush1.msra.mxu0 0.0
    %5683 = vmatprep.subr.mxu0 0.0
    %5684 = vmatpush1.msra.mxu0 0.0
    %5685 = vmatprep.subr.mxu0 0.0
    %5686 = vmatpush1.msra.mxu0 0.0
    %5687 = vmatprep.subr.mxu0 0.0
    %5688 = vmatpush1.msra.mxu0 0.0
    %5689 = vmatprep.subr.mxu0 0.0
    %5690 = vmatpush1.msra.mxu0 0.0
    %5691 = vmatprep.subr.mxu0 0.0
    %5692 = vmatpush1.msra.mxu0 0.0
    %5693 = vmatprep.subr.mxu0 0.0
    %5694 = vmatpush1.msra.mxu0 0.0
    %5695 = vmatprep.subr.mxu0 0.0
    %5696 = vmatpush1.msra.mxu0 0.0
    %5697 = vmatprep.subr.mxu0 0.0
    %5698 = vmatpush1.msra.mxu0 0.0
    %5699 = vmatprep.subr.mxu0 0.0
    %5700 = vmatpush1.msra.mxu0 0.0
    %5701 = vmatprep.subr.mxu0 0.0
    %5702 = vmatpush1.msra.mxu0 0.0
    %5703 = vmatprep.subr.mxu0 0.0
    %5704 = vmatpush1.msra.mxu0 0.0
    %5705 = vmatprep.subr.mxu0 0.0
    %5706 = vmatpush1.msra.mxu0 0.0
    %5707 = vmatprep.subr.mxu0 0.0
    %5708 = vmatpush1.msra.mxu0 0.0
    %5709 = vmatprep.subr.mxu0 0.0
    %5710 = vmatpush1.msra.mxu0 0.0
    %5711 = vmatprep.subr.mxu0 0.0
    %5712 = vmatpush1.msra.mxu0 0.0
    %5713 = vmatprep.subr.mxu0 0.0
    %5714 = vmatpush1.msra.mxu0 0.0
    %5715 = vmatprep.subr.mxu0 0.0
    %5716 = vmatpush1.msra.mxu0 0.0
    %5717 = vmatprep.subr.mxu0 0.0
    %5718 = vmatpush1.msra.mxu0 0.0
    %5719 = vmatprep.subr.mxu0 0.0
    %5720 = vmatpush1.msra.mxu0 0.0
    %5721 = vmatprep.subr.mxu0 0.0
    %5722 = vmatpush1.msra.mxu0 0.0
    %5723 = vmatprep.subr.mxu0 0.0
    %5724 = vmatpush1.msra.mxu0 0.0
    %5725 = vmatprep.subr.mxu0 0.0
    %5726 = vmatpush1.msra.mxu0 0.0
    %5727 = vmatprep.subr.mxu0 0.0
    %5728 = vmatpush1.msra.mxu0 0.0
    %5729 = vmatprep.subr.mxu0 0.0
    %5730 = vmatpush1.msra.mxu0 0.0
    %5731 = vmatprep.mubr.f32.mxu0 0.0
    %5732 = vmatmul.mubr.f32.gmra.mrb[0].mxu0 %v5663
    %v5733 = vpop.f32.mrb[0].mxu0
    %v5734 = vadd.f32 0.0, %v5733
    %v5735 = vpop.f32.mrb[0].mxu0
    %5736 = vmatprep.mubr.f32.mxu0 0.0
    %5737 = vmatmul.mubr.f32.gmra.mrb[0].mxu0 %v5665
    %v5738 = vpop.f32.mrb[0].mxu0
    %v5739 = vadd.f32 0.0, %v5738
    %v5740 = vpop.f32.mrb[0].mxu0
    %5741 = vdwg.mxu0
    %v5742 = vadd.f32 %v5648, %v5734
    %v5743 = vadd.f32 %v5649, %v5739
    %v5744 = vrot.slane %v5552, 2
    %v5745 = vrot.slane %v5554, 2
    %v5746 = vsel %vm5234, %v5744, %v5745
    %v5747 = vrot.slane %v5553, 2
    %v5748 = vrot.slane %v5555, 2
    %v5749 = vsel %vm5234, %v5747, %v5748
    %s5750 = scalar_lea.vmem %s11, 64
    %v5751 = vld [vmem:[%s5750] sm:$0xff]
    %v5752 = vld [vmem:[%s5750 + $0x8] sm:$0xff]
    %v5753 = vld [vmem:[%s5750 + $0x10] sm:$0xff]
    %v5754 = vld [vmem:[%s5750 + $0x18] sm:$0xff]
    %v5755 = vsel %vm183, %v5746, 0
    %v5757 = vsel %vm183, %v5749, 0
    %5759 = vmatprep.subr.mxu0 0.0
    %5760 = vmatpush1.msra.mxu0 %v5751
    %5761 = vmatprep.subr.mxu0 0.0
    %5762 = vmatpush1.msra.mxu0 %v5752
    %5763 = vmatprep.subr.mxu0 0.0
    %5764 = vmatpush1.msra.mxu0 %v5753
    %5765 = vmatprep.subr.mxu0 0.0
    %5766 = vmatpush1.msra.mxu0 %v5754
    %5767 = vmatprep.subr.mxu0 0.0
    %5768 = vmatpush1.msra.mxu0 0.0
    %5769 = vmatprep.subr.mxu0 0.0
    %5770 = vmatpush1.msra.mxu0 0.0
    %5771 = vmatprep.subr.mxu0 0.0
    %5772 = vmatpush1.msra.mxu0 0.0
    %5773 = vmatprep.subr.mxu0 0.0
    %5774 = vmatpush1.msra.mxu0 0.0
    %5775 = vmatprep.subr.mxu0 0.0
    %5776 = vmatpush1.msra.mxu0 0.0
    %5777 = vmatprep.subr.mxu0 0.0
    %5778 = vmatpush1.msra.mxu0 0.0
    %5779 = vmatprep.subr.mxu0 0.0
    %5780 = vmatpush1.msra.mxu0 0.0
    %5781 = vmatprep.subr.mxu0 0.0
    %5782 = vmatpush1.msra.mxu0 0.0
    %5783 = vmatprep.subr.mxu0 0.0
    %5784 = vmatpush1.msra.mxu0 0.0
    %5785 = vmatprep.subr.mxu0 0.0
    %5786 = vmatpush1.msra.mxu0 0.0
    %5787 = vmatprep.subr.mxu0 0.0
    %5788 = vmatpush1.msra.mxu0 0.0
    %5789 = vmatprep.subr.mxu0 0.0
    %5790 = vmatpush1.msra.mxu0 0.0
    %5791 = vmatprep.subr.mxu0 0.0
    %5792 = vmatpush1.msra.mxu0 0.0
    %5793 = vmatprep.subr.mxu0 0.0
    %5794 = vmatpush1.msra.mxu0 0.0
    %5795 = vmatprep.subr.mxu0 0.0
    %5796 = vmatpush1.msra.mxu0 0.0
    %5797 = vmatprep.subr.mxu0 0.0
    %5798 = vmatpush1.msra.mxu0 0.0
    %5799 = vmatprep.subr.mxu0 0.0
    %5800 = vmatpush1.msra.mxu0 0.0
    %5801 = vmatprep.subr.mxu0 0.0
    %5802 = vmatpush1.msra.mxu0 0.0
    %5803 = vmatprep.subr.mxu0 0.0
    %5804 = vmatpush1.msra.mxu0 0.0
    %5805 = vmatprep.subr.mxu0 0.0
    %5806 = vmatpush1.msra.mxu0 0.0
    %5807 = vmatprep.subr.mxu0 0.0
    %5808 = vmatpush1.msra.mxu0 0.0
    %5809 = vmatprep.subr.mxu0 0.0
    %5810 = vmatpush1.msra.mxu0 0.0
    %5811 = vmatprep.subr.mxu0 0.0
    %5812 = vmatpush1.msra.mxu0 0.0
    %5813 = vmatprep.subr.mxu0 0.0
    %5814 = vmatpush1.msra.mxu0 0.0
    %5815 = vmatprep.subr.mxu0 0.0
    %5816 = vmatpush1.msra.mxu0 0.0
    %5817 = vmatprep.subr.mxu0 0.0
    %5818 = vmatpush1.msra.mxu0 0.0
    %5819 = vmatprep.subr.mxu0 0.0
    %5820 = vmatpush1.msra.mxu0 0.0
    %5821 = vmatprep.subr.mxu0 0.0
    %5822 = vmatpush1.msra.mxu0 0.0
    %5823 = vmatprep.mubr.f32.mxu0 0.0
    %5824 = vmatmul.mubr.f32.gmra.mrb[0].mxu0 %v5755
    %v5825 = vpop.f32.mrb[0].mxu0
    %v5826 = vadd.f32 0.0, %v5825
    %v5827 = vpop.f32.mrb[0].mxu0
    %5828 = vmatprep.mubr.f32.mxu0 0.0
    %5829 = vmatmul.mubr.f32.gmra.mrb[0].mxu0 %v5757
    %v5830 = vpop.f32.mrb[0].mxu0
    %v5831 = vadd.f32 0.0, %v5830
    %v5832 = vpop.f32.mrb[0].mxu0
    %5833 = vdwg.mxu0
    %v5834 = vadd.f32 %v5742, %v5826
    %v5835 = vadd.f32 %v5743, %v5831
    %v5836 = vmax.f32 %v5834, 0.0
    %v5837 = vmax.f32 %v5835, 0.0
    %v5838 = vld [vmem:[%s13] sm:$0xff]
    %v5839 = vld [vmem:[%s13 + $0x8] sm:$0xff]
    %v5840 = vld [vmem:[%s14] sm:$0x1]
    %v5842 = vlaneseq
    %v5843 = vshrl.u32 %v5842, 7
    %v5844 = vsub.s32 0, %v5843
    %v5845 = vrot.slane %v5840, %v5844
    %v5848 = vsel %vm85, %v5836, 0
    %v5851 = vsel %vm85, %v5837, 0
    %5853 = vmatprep.subr.mxu0 0.0
    %5854 = vmatpush1.msra.mxu0 %v5838
    %5855 = vmatprep.subr.mxu0 0.0
    %5856 = vmatpush1.msra.mxu0 %v5839
    %5857 = vmatprep.subr.mxu0 0.0
    %5858 = vmatpush1.msra.mxu0 0.0
    %5859 = vmatprep.subr.mxu0 0.0
    %5860 = vmatpush1.msra.mxu0 0.0
    %5861 = vmatprep.subr.mxu0 0.0
    %5862 = vmatpush1.msra.mxu0 0.0
    %5863 = vmatprep.subr.mxu0 0.0
    %5864 = vmatpush1.msra.mxu0 0.0
    %5865 = vmatprep.subr.mxu0 0.0
    %5866 = vmatpush1.msra.mxu0 0.0
    %5867 = vmatprep.subr.mxu0 0.0
    %5868 = vmatpush1.msra.mxu0 0.0
    %5869 = vmatprep.subr.mxu0 0.0
    %5870 = vmatpush1.msra.mxu0 0.0
    %5871 = vmatprep.subr.mxu0 0.0
    %5872 = vmatpush1.msra.mxu0 0.0
    %5873 = vmatprep.subr.mxu0 0.0
    %5874 = vmatpush1.msra.mxu0 0.0
    %5875 = vmatprep.subr.mxu0 0.0
    %5876 = vmatpush1.msra.mxu0 0.0
    %5877 = vmatprep.subr.mxu0 0.0
    %5878 = vmatpush1.msra.mxu0 0.0
    %5879 = vmatprep.subr.mxu0 0.0
    %5880 = vmatpush1.msra.mxu0 0.0
    %5881 = vmatprep.subr.mxu0 0.0
    %5882 = vmatpush1.msra.mxu0 0.0
    %5883 = vmatprep.subr.mxu0 0.0
    %5884 = vmatpush1.msra.mxu0 0.0
    %5885 = vmatprep.subr.mxu0 0.0
    %5886 = vmatpush1.msra.mxu0 0.0
    %5887 = vmatprep.subr.mxu0 0.0
    %5888 = vmatpush1.msra.mxu0 0.0
    %5889 = vmatprep.subr.mxu0 0.0
    %5890 = vmatpush1.msra.mxu0 0.0
    %5891 = vmatprep.subr.mxu0 0.0
    %5892 = vmatpush1.msra.mxu0 0.0
    %5893 = vmatprep.subr.mxu0 0.0
    %5894 = vmatpush1.msra.mxu0 0.0
    %5895 = vmatprep.subr.mxu0 0.0
    %5896 = vmatpush1.msra.mxu0 0.0
    %5897 = vmatprep.subr.mxu0 0.0
    %5898 = vmatpush1.msra.mxu0 0.0
    %5899 = vmatprep.subr.mxu0 0.0
    %5900 = vmatpush1.msra.mxu0 0.0
    %5901 = vmatprep.subr.mxu0 0.0
    %5902 = vmatpush1.msra.mxu0 0.0
    %5903 = vmatprep.subr.mxu0 0.0
    %5904 = vmatpush1.msra.mxu0 0.0
    %5905 = vmatprep.subr.mxu0 0.0
    %5906 = vmatpush1.msra.mxu0 0.0
    %5907 = vmatprep.subr.mxu0 0.0
    %5908 = vmatpush1.msra.mxu0 0.0
    %5909 = vmatprep.subr.mxu0 0.0
    %5910 = vmatpush1.msra.mxu0 0.0
    %5911 = vmatprep.subr.mxu0 0.0
    %5912 = vmatpush1.msra.mxu0 0.0
    %5913 = vmatprep.subr.mxu0 0.0
    %5914 = vmatpush1.msra.mxu0 0.0
    %5915 = vmatprep.subr.mxu0 0.0
    %5916 = vmatpush1.msra.mxu0 0.0
    %5917 = vmatprep.mubr.f32.mxu0 0.0
    %5918 = vmatmul.mubr.f32.gmra.mrb[0].mxu0 %v5848
    %v5919 = vpop.f32.mrb[0].mxu0
    %v5920 = vadd.f32 %v5845, %v5919
    %v5921 = vpop.f32.mrb[0].mxu0
    %5922 = vmatprep.mubr.f32.mxu0 0.0
    %5923 = vmatmul.mubr.f32.gmra.mrb[0].mxu0 %v5851
    %v5924 = vpop.f32.mrb[0].mxu0
    %v5925 = vadd.f32 %v5845, %v5924
    %v5926 = vpop.f32.mrb[0].mxu0
    %5927 = vdwg.mxu0
    %v5928 = vld [vmem:[%s16] sm:$0x1]
    %5930 = vrot.lane.b32.xlu0 %v5920, 112
    %v5931 = vpop.permute.xlu0 %5930
    %vm5932 = vcmask 31744
    %v5933 = vsel %vm5932, %v5920, 0
    %v5935 = vsel %vm5932, %v5931, 0
    %5937 = vmatprep.subr.mxu0 0.0
    %5938 = vmatpush1.xpose.msra.mxu0 %v5935
    %5939 = vmatprep.subr.mxu0 0.0
    %5940 = vmatpush1.xpose.msra.mxu0 0.0
    %5941 = vmatprep.subr.mxu0 0.0
    %5942 = vmatpush1.xpose.msra.mxu0 0.0
    %5943 = vmatprep.subr.mxu0 0.0
    %5944 = vmatpush1.xpose.msra.mxu0 0.0
    %5945 = vmatprep.subr.mxu0 0.0
    %5946 = vmatpush1.xpose.msra.mxu0 0.0
    %5947 = vmatprep.subr.mxu0 0.0
    %5948 = vmatpush1.xpose.msra.mxu0 0.0
    %5949 = vmatprep.subr.mxu0 0.0
    %5950 = vmatpush1.xpose.msra.mxu0 0.0
    %5951 = vmatprep.subr.mxu0 0.0
    %5952 = vmatpush1.xpose.msra.mxu0 0.0
    %5953 = vmatprep.subr.mxu0 0.0
    %5954 = vmatpush1.xpose.msra.mxu0 0.0
    %5955 = vmatprep.subr.mxu0 0.0
    %5956 = vmatpush1.xpose.msra.mxu0 0.0
    %5957 = vmatprep.subr.mxu0 0.0
    %5958 = vmatpush1.xpose.msra.mxu0 0.0
    %5959 = vmatprep.subr.mxu0 0.0
    %5960 = vmatpush1.xpose.msra.mxu0 0.0
    %5961 = vmatprep.subr.mxu0 0.0
    %5962 = vmatpush1.xpose.msra.mxu0 0.0
    %5963 = vmatprep.subr.mxu0 0.0
    %5964 = vmatpush1.xpose.msra.mxu0 0.0
    %5965 = vmatprep.subr.mxu0 0.0
    %5966 = vmatpush1.xpose.msra.mxu0 0.0
    %5967 = vmatprep.subr.mxu0 0.0
    %5968 = vmatpush1.xpose.msra.mxu0 0.0
    %5969 = vmatprep.subr.mxu0 0.0
    %5970 = vmatpush1.xpose.msra.mxu0 0.0
    %5971 = vmatprep.subr.mxu0 0.0
    %5972 = vmatpush1.xpose.msra.mxu0 0.0
    %5973 = vmatprep.subr.mxu0 0.0
    %5974 = vmatpush1.xpose.msra.mxu0 0.0
    %5975 = vmatprep.subr.mxu0 0.0
    %5976 = vmatpush1.xpose.msra.mxu0 0.0
    %5977 = vmatprep.subr.mxu0 0.0
    %5978 = vmatpush1.xpose.msra.mxu0 0.0
    %5979 = vmatprep.subr.mxu0 0.0
    %5980 = vmatpush1.xpose.msra.mxu0 0.0
    %5981 = vmatprep.subr.mxu0 0.0
    %5982 = vmatpush1.xpose.msra.mxu0 0.0
    %5983 = vmatprep.subr.mxu0 0.0
    %5984 = vmatpush1.xpose.msra.mxu0 0.0
    %5985 = vmatprep.subr.mxu0 0.0
    %5986 = vmatpush1.xpose.msra.mxu0 0.0
    %5987 = vmatprep.subr.mxu0 0.0
    %5988 = vmatpush1.xpose.msra.mxu0 0.0
    %5989 = vmatprep.subr.mxu0 0.0
    %5990 = vmatpush1.xpose.msra.mxu0 0.0
    %5991 = vmatprep.subr.mxu0 0.0
    %5992 = vmatpush1.xpose.msra.mxu0 0.0
    %5993 = vmatprep.subr.mxu0 0.0
    %5994 = vmatpush1.xpose.msra.mxu0 0.0
    %5995 = vmatprep.subr.mxu0 0.0
    %5996 = vmatpush1.xpose.msra.mxu0 0.0
    %5997 = vmatprep.subr.mxu0 0.0
    %5998 = vmatpush1.xpose.msra.mxu0 0.0
    %5999 = vmatprep.subr.mxu0 0.0
    %6000 = vmatpush1.xpose.msra.mxu0 0.0
    %6001 = vmatprep.mubr.f32.mxu0 0.0
    %6002 = vmatmul.mubr.f32.gmra.mrb[0].mxu0 %v5933
    %v6003 = vpop.f32.mrb[0].mxu0
    %v6004 = vadd.f32 0.0, %v6003
    %v6005 = vpop.f32.mrb[0].mxu0
    %6006 = vdwg.mxu0
    %6008 = vrot.lane.b32.xlu0 %v5925, 112
    %v6009 = vpop.permute.xlu0 %6008
    %v6010 = vsel %vm5932, %v5925, 0
    %v6012 = vsel %vm5932, %v6009, 0
    %6014 = vmatprep.subr.mxu0 0.0
    %6015 = vmatpush1.xpose.msra.mxu0 %v6012
    %6016 = vmatprep.subr.mxu0 0.0
    %6017 = vmatpush1.xpose.msra.mxu0 0.0
    %6018 = vmatprep.subr.mxu0 0.0
    %6019 = vmatpush1.xpose.msra.mxu0 0.0
    %6020 = vmatprep.subr.mxu0 0.0
    %6021 = vmatpush1.xpose.msra.mxu0 0.0
    %6022 = vmatprep.subr.mxu0 0.0
    %6023 = vmatpush1.xpose.msra.mxu0 0.0
    %6024 = vmatprep.subr.mxu0 0.0
    %6025 = vmatpush1.xpose.msra.mxu0 0.0
    %6026 = vmatprep.subr.mxu0 0.0
    %6027 = vmatpush1.xpose.msra.mxu0 0.0
    %6028 = vmatprep.subr.mxu0 0.0
    %6029 = vmatpush1.xpose.msra.mxu0 0.0
    %6030 = vmatprep.subr.mxu0 0.0
    %6031 = vmatpush1.xpose.msra.mxu0 0.0
    %6032 = vmatprep.subr.mxu0 0.0
    %6033 = vmatpush1.xpose.msra.mxu0 0.0
    %6034 = vmatprep.subr.mxu0 0.0
    %6035 = vmatpush1.xpose.msra.mxu0 0.0
    %6036 = vmatprep.subr.mxu0 0.0
    %6037 = vmatpush1.xpose.msra.mxu0 0.0
    %6038 = vmatprep.subr.mxu0 0.0
    %6039 = vmatpush1.xpose.msra.mxu0 0.0
    %6040 = vmatprep.subr.mxu0 0.0
    %6041 = vmatpush1.xpose.msra.mxu0 0.0
    %6042 = vmatprep.subr.mxu0 0.0
    %6043 = vmatpush1.xpose.msra.mxu0 0.0
    %6044 = vmatprep.subr.mxu0 0.0
    %6045 = vmatpush1.xpose.msra.mxu0 0.0
    %6046 = vmatprep.subr.mxu0 0.0
    %6047 = vmatpush1.xpose.msra.mxu0 0.0
    %6048 = vmatprep.subr.mxu0 0.0
    %6049 = vmatpush1.xpose.msra.mxu0 0.0
    %6050 = vmatprep.subr.mxu0 0.0
    %6051 = vmatpush1.xpose.msra.mxu0 0.0
    %6052 = vmatprep.subr.mxu0 0.0
    %6053 = vmatpush1.xpose.msra.mxu0 0.0
    %6054 = vmatprep.subr.mxu0 0.0
    %6055 = vmatpush1.xpose.msra.mxu0 0.0
    %6056 = vmatprep.subr.mxu0 0.0
    %6057 = vmatpush1.xpose.msra.mxu0 0.0
    %6058 = vmatprep.subr.mxu0 0.0
    %6059 = vmatpush1.xpose.msra.mxu0 0.0
    %6060 = vmatprep.subr.mxu0 0.0
    %6061 = vmatpush1.xpose.msra.mxu0 0.0
    %6062 = vmatprep.subr.mxu0 0.0
    %6063 = vmatpush1.xpose.msra.mxu0 0.0
    %6064 = vmatprep.subr.mxu0 0.0
    %6065 = vmatpush1.xpose.msra.mxu0 0.0
    %6066 = vmatprep.subr.mxu0 0.0
    %6067 = vmatpush1.xpose.msra.mxu0 0.0
    %6068 = vmatprep.subr.mxu0 0.0
    %6069 = vmatpush1.xpose.msra.mxu0 0.0
    %6070 = vmatprep.subr.mxu0 0.0
    %6071 = vmatpush1.xpose.msra.mxu0 0.0
    %6072 = vmatprep.subr.mxu0 0.0
    %6073 = vmatpush1.xpose.msra.mxu0 0.0
    %6074 = vmatprep.subr.mxu0 0.0
    %6075 = vmatpush1.xpose.msra.mxu0 0.0
    %6076 = vmatprep.subr.mxu0 0.0
    %6077 = vmatpush1.xpose.msra.mxu0 0.0
    %6078 = vmatprep.mubr.f32.mxu0 0.0
    %6079 = vmatmul.mubr.f32.gmra.mrb[0].mxu0 %v6010
    %v6080 = vpop.f32.mrb[0].mxu0
    %v6081 = vadd.f32 0.0, %v6080
    %v6082 = vpop.f32.mrb[0].mxu0
    %6083 = vdwg.mxu0
    %vm6084 = vcmask 64512
    %v6085 = vsel %vm6084, %v6004, -inf
    %6086 = vmax.xlane.f32.xlu0 %v6085
    %v6087 = vpop.xlane.xlu0 %6086
    %v6088 = vsel %vm6084, %v6081, -inf
    %6089 = vmax.xlane.f32.xlu0 %v6088
    %v6090 = vpop.xlane.xlu0 %6089
    %v6091 = vsub.f32 %v6004, %v6087
    %v6092 = vsub.f32 %v6081, %v6090
    %v6093 = vmul.f32 %v6091, 1.442695
    %v6094 = vpow.pop %v6093
    %v6095 = vmul.f32 %v6092, 1.442695
    %v6096 = vpow.pop %v6095
    %v6097 = vsel %vm6084, %v6094, 0.0
    %6098 = vadd.xlane.f32.xlu0 %v6097
    %v6099 = vpop.xlane.xlu0 %6098
    %v6100 = vsel %vm6084, %v6096, 0.0
    %6101 = vadd.xlane.f32.xlu0 %v6100
    %v6102 = vpop.xlane.xlu0 %6101
    %v6103 = vrcp.pop %v6099
    %v6104 = vmul.f32 %v6094, %v6103
    %v6105 = vrcp.pop %v6102
    %v6106 = vmul.f32 %v6096, %v6105
    %v6107 = vadd.f32 %v6104, 0.0
    %v6108 = vadd.f32 %v6106, 0.0
    %v6109 = vsel %vm6084, %v6104, 0.0
    %v6110 = vrot.slane %v6109, 4
    %v6111 = vadd.f32 %v6109, %v6110
    %v6112 = vrot.slane %v6111, 2
    %v6113 = vadd.f32 %v6111, %v6112
    %v6114 = vrot.slane %v6113, 1
    %v6115 = vadd.f32 %v6113, %v6114
    %v6116 = vsel %vm6084, %v6106, 0.0
    %v6117 = vrot.slane %v6116, 4
    %v6118 = vadd.f32 %v6116, %v6117
    %v6119 = vrot.slane %v6118, 2
    %v6120 = vadd.f32 %v6118, %v6119
    %v6121 = vrot.slane %v6120, 1
    %v6122 = vadd.f32 %v6120, %v6121
    %v6123 = vrcp.pop 8.0
    %v6124 = vmul.f32 %v6115, %v6123
    %v6125 = vmul.f32 %v6122, %v6123
    %6126 = vrot.lane.b32.xlu0 %v5920, 96
    %v6127 = vpop.permute.xlu0 %6126
    %v6130 = vsel %vm6084, %v6124, 0
    %6132 = vmatprep.subr.mxu0 0.0
    %6133 = vmatpush1.msra.mxu0 %v6127
    %6134 = vmatprep.subr.mxu0 0.0
    %6135 = vmatpush1.msra.mxu0 0.0
    %6136 = vmatprep.subr.mxu0 0.0
    %6137 = vmatpush1.msra.mxu0 0.0
    %6138 = vmatprep.subr.mxu0 0.0
    %6139 = vmatpush1.msra.mxu0 0.0
    %6140 = vmatprep.subr.mxu0 0.0
    %6141 = vmatpush1.msra.mxu0 0.0
    %6142 = vmatprep.subr.mxu0 0.0
    %6143 = vmatpush1.msra.mxu0 0.0
    %6144 = vmatprep.subr.mxu0 0.0
    %6145 = vmatpush1.msra.mxu0 0.0
    %6146 = vmatprep.subr.mxu0 0.0
    %6147 = vmatpush1.msra.mxu0 0.0
    %6148 = vmatprep.subr.mxu0 0.0
    %6149 = vmatpush1.msra.mxu0 0.0
    %6150 = vmatprep.subr.mxu0 0.0
    %6151 = vmatpush1.msra.mxu0 0.0
    %6152 = vmatprep.subr.mxu0 0.0
    %6153 = vmatpush1.msra.mxu0 0.0
    %6154 = vmatprep.subr.mxu0 0.0
    %6155 = vmatpush1.msra.mxu0 0.0
    %6156 = vmatprep.subr.mxu0 0.0
    %6157 = vmatpush1.msra.mxu0 0.0
    %6158 = vmatprep.subr.mxu0 0.0
    %6159 = vmatpush1.msra.mxu0 0.0
    %6160 = vmatprep.subr.mxu0 0.0
    %6161 = vmatpush1.msra.mxu0 0.0
    %6162 = vmatprep.subr.mxu0 0.0
    %6163 = vmatpush1.msra.mxu0 0.0
    %6164 = vmatprep.subr.mxu0 0.0
    %6165 = vmatpush1.msra.mxu0 0.0
    %6166 = vmatprep.subr.mxu0 0.0
    %6167 = vmatpush1.msra.mxu0 0.0
    %6168 = vmatprep.subr.mxu0 0.0
    %6169 = vmatpush1.msra.mxu0 0.0
    %6170 = vmatprep.subr.mxu0 0.0
    %6171 = vmatpush1.msra.mxu0 0.0
    %6172 = vmatprep.subr.mxu0 0.0
    %6173 = vmatpush1.msra.mxu0 0.0
    %6174 = vmatprep.subr.mxu0 0.0
    %6175 = vmatpush1.msra.mxu0 0.0
    %6176 = vmatprep.subr.mxu0 0.0
    %6177 = vmatpush1.msra.mxu0 0.0
    %6178 = vmatprep.subr.mxu0 0.0
    %6179 = vmatpush1.msra.mxu0 0.0
    %6180 = vmatprep.subr.mxu0 0.0
    %6181 = vmatpush1.msra.mxu0 0.0
    %6182 = vmatprep.subr.mxu0 0.0
    %6183 = vmatpush1.msra.mxu0 0.0
    %6184 = vmatprep.subr.mxu0 0.0
    %6185 = vmatpush1.msra.mxu0 0.0
    %6186 = vmatprep.subr.mxu0 0.0
    %6187 = vmatpush1.msra.mxu0 0.0
    %6188 = vmatprep.subr.mxu0 0.0
    %6189 = vmatpush1.msra.mxu0 0.0
    %6190 = vmatprep.subr.mxu0 0.0
    %6191 = vmatpush1.msra.mxu0 0.0
    %6192 = vmatprep.subr.mxu0 0.0
    %6193 = vmatpush1.msra.mxu0 0.0
    %6194 = vmatprep.subr.mxu0 0.0
    %6195 = vmatpush1.msra.mxu0 0.0
    %6196 = vmatprep.mubr.f32.mxu0 0.0
    %6197 = vmatmul.mubr.f32.gmra.mrb[0].mxu0 %v6130
    %v6198 = vpop.f32.mrb[0].mxu0
    %v6199 = vadd.f32 0.0, %v6198
    %v6200 = vpop.f32.mrb[0].mxu0
    %6201 = vdwg.mxu0
    %6202 = vrot.lane.b32.xlu0 %v5925, 96
    %v6203 = vpop.permute.xlu0 %6202
    %v6206 = vsel %vm6084, %v6125, 0
    %6208 = vmatprep.subr.mxu0 0.0
    %6209 = vmatpush1.msra.mxu0 %v6203
    %6210 = vmatprep.subr.mxu0 0.0
    %6211 = vmatpush1.msra.mxu0 0.0
    %6212 = vmatprep.subr.mxu0 0.0
    %6213 = vmatpush1.msra.mxu0 0.0
    %6214 = vmatprep.subr.mxu0 0.0
    %6215 = vmatpush1.msra.mxu0 0.0
    %6216 = vmatprep.subr.mxu0 0.0
    %6217 = vmatpush1.msra.mxu0 0.0
    %6218 = vmatprep.subr.mxu0 0.0
    %6219 = vmatpush1.msra.mxu0 0.0
    %6220 = vmatprep.subr.mxu0 0.0
    %6221 = vmatpush1.msra.mxu0 0.0
    %6222 = vmatprep.subr.mxu0 0.0
    %6223 = vmatpush1.msra.mxu0 0.0
    %6224 = vmatprep.subr.mxu0 0.0
    %6225 = vmatpush1.msra.mxu0 0.0
    %6226 = vmatprep.subr.mxu0 0.0
    %6227 = vmatpush1.msra.mxu0 0.0
    %6228 = vmatprep.subr.mxu0 0.0
    %6229 = vmatpush1.msra.mxu0 0.0
    %6230 = vmatprep.subr.mxu0 0.0
    %6231 = vmatpush1.msra.mxu0 0.0
    %6232 = vmatprep.subr.mxu0 0.0
    %6233 = vmatpush1.msra.mxu0 0.0
    %6234 = vmatprep.subr.mxu0 0.0
    %6235 = vmatpush1.msra.mxu0 0.0
    %6236 = vmatprep.subr.mxu0 0.0
    %6237 = vmatpush1.msra.mxu0 0.0
    %6238 = vmatprep.subr.mxu0 0.0
    %6239 = vmatpush1.msra.mxu0 0.0
    %6240 = vmatprep.subr.mxu0 0.0
    %6241 = vmatpush1.msra.mxu0 0.0
    %6242 = vmatprep.subr.mxu0 0.0
    %6243 = vmatpush1.msra.mxu0 0.0
    %6244 = vmatprep.subr.mxu0 0.0
    %6245 = vmatpush1.msra.mxu0 0.0
    %6246 = vmatprep.subr.mxu0 0.0
    %6247 = vmatpush1.msra.mxu0 0.0
    %6248 = vmatprep.subr.mxu0 0.0
    %6249 = vmatpush1.msra.mxu0 0.0
    %6250 = vmatprep.subr.mxu0 0.0
    %6251 = vmatpush1.msra.mxu0 0.0
    %6252 = vmatprep.subr.mxu0 0.0
    %6253 = vmatpush1.msra.mxu0 0.0
    %6254 = vmatprep.subr.mxu0 0.0
    %6255 = vmatpush1.msra.mxu0 0.0
    %6256 = vmatprep.subr.mxu0 0.0
    %6257 = vmatpush1.msra.mxu0 0.0
    %6258 = vmatprep.subr.mxu0 0.0
    %6259 = vmatpush1.msra.mxu0 0.0
    %6260 = vmatprep.subr.mxu0 0.0
    %6261 = vmatpush1.msra.mxu0 0.0
    %6262 = vmatprep.subr.mxu0 0.0
    %6263 = vmatpush1.msra.mxu0 0.0
    %6264 = vmatprep.subr.mxu0 0.0
    %6265 = vmatpush1.msra.mxu0 0.0
    %6266 = vmatprep.subr.mxu0 0.0
    %6267 = vmatpush1.msra.mxu0 0.0
    %6268 = vmatprep.subr.mxu0 0.0
    %6269 = vmatpush1.msra.mxu0 0.0
    %6270 = vmatprep.subr.mxu0 0.0
    %6271 = vmatpush1.msra.mxu0 0.0
    %6272 = vmatprep.mubr.f32.mxu0 0.0
    %6273 = vmatmul.mubr.f32.gmra.mrb[0].mxu0 %v6206
    %v6274 = vpop.f32.mrb[0].mxu0
    %v6275 = vadd.f32 0.0, %v6274
    %v6276 = vpop.f32.mrb[0].mxu0
    %6277 = vdwg.mxu0
    %v6278 = vld [vmem:[%s15] sm:$0xf]
    %v6281 = vrot.slane %v6275, 7
    %v6282 = vsel %vm462, %v6281, %v6199
    %v6283 = vsel %vm5932, %v6282, 0
    %v6286 = vsel %vm5428, %v6278, 0
    %6288 = vmatprep.subr.mxu0 0.0
    %6289 = vmatpush1.msra.mxu0 %v6286
    %6290 = vmatprep.subr.mxu0 0.0
    %6291 = vmatpush1.msra.mxu0 0.0
    %6292 = vmatprep.subr.mxu0 0.0
    %6293 = vmatpush1.msra.mxu0 0.0
    %6294 = vmatprep.subr.mxu0 0.0
    %6295 = vmatpush1.msra.mxu0 0.0
    %6296 = vmatprep.subr.mxu0 0.0
    %6297 = vmatpush1.msra.mxu0 0.0
    %6298 = vmatprep.subr.mxu0 0.0
    %6299 = vmatpush1.msra.mxu0 0.0
    %6300 = vmatprep.subr.mxu0 0.0
    %6301 = vmatpush1.msra.mxu0 0.0
    %6302 = vmatprep.subr.mxu0 0.0
    %6303 = vmatpush1.msra.mxu0 0.0
    %6304 = vmatprep.subr.mxu0 0.0
    %6305 = vmatpush1.msra.mxu0 0.0
    %6306 = vmatprep.subr.mxu0 0.0
    %6307 = vmatpush1.msra.mxu0 0.0
    %6308 = vmatprep.subr.mxu0 0.0
    %6309 = vmatpush1.msra.mxu0 0.0
    %6310 = vmatprep.subr.mxu0 0.0
    %6311 = vmatpush1.msra.mxu0 0.0
    %6312 = vmatprep.subr.mxu0 0.0
    %6313 = vmatpush1.msra.mxu0 0.0
    %6314 = vmatprep.subr.mxu0 0.0
    %6315 = vmatpush1.msra.mxu0 0.0
    %6316 = vmatprep.subr.mxu0 0.0
    %6317 = vmatpush1.msra.mxu0 0.0
    %6318 = vmatprep.subr.mxu0 0.0
    %6319 = vmatpush1.msra.mxu0 0.0
    %6320 = vmatprep.subr.mxu0 0.0
    %6321 = vmatpush1.msra.mxu0 0.0
    %6322 = vmatprep.subr.mxu0 0.0
    %6323 = vmatpush1.msra.mxu0 0.0
    %6324 = vmatprep.subr.mxu0 0.0
    %6325 = vmatpush1.msra.mxu0 0.0
    %6326 = vmatprep.subr.mxu0 0.0
    %6327 = vmatpush1.msra.mxu0 0.0
    %6328 = vmatprep.subr.mxu0 0.0
    %6329 = vmatpush1.msra.mxu0 0.0
    %6330 = vmatprep.subr.mxu0 0.0
    %6331 = vmatpush1.msra.mxu0 0.0
    %6332 = vmatprep.subr.mxu0 0.0
    %6333 = vmatpush1.msra.mxu0 0.0
    %6334 = vmatprep.subr.mxu0 0.0
    %6335 = vmatpush1.msra.mxu0 0.0
    %6336 = vmatprep.subr.mxu0 0.0
    %6337 = vmatpush1.msra.mxu0 0.0
    %6338 = vmatprep.subr.mxu0 0.0
    %6339 = vmatpush1.msra.mxu0 0.0
    %6340 = vmatprep.subr.mxu0 0.0
    %6341 = vmatpush1.msra.mxu0 0.0
    %6342 = vmatprep.subr.mxu0 0.0
    %6343 = vmatpush1.msra.mxu0 0.0
    %6344 = vmatprep.subr.mxu0 0.0
    %6345 = vmatpush1.msra.mxu0 0.0
    %6346 = vmatprep.subr.mxu0 0.0
    %6347 = vmatpush1.msra.mxu0 0.0
    %6348 = vmatprep.subr.mxu0 0.0
    %6349 = vmatpush1.msra.mxu0 0.0
    %6350 = vmatprep.subr.mxu0 0.0
    %6351 = vmatpush1.msra.mxu0 0.0
    %6352 = vmatprep.mubr.f32.mxu0 0.0
    %6353 = vmatmul.mubr.f32.gmra.mrb[0].mxu0 %v6283
    %v6354 = vpop.f32.mrb[0].mxu0
    %v6355 = vadd.f32 0.0, %v6354
    %v6356 = vpop.f32.mrb[0].mxu0
    %6357 = vdwg.mxu0
    %v6359 = vlaneseq
    %v6360 = vshrl.u32 %v6359, 7
    %v6361 = vsub.s32 0, %v6360
    %v6362 = vrot.slane %v5928, %v6361
    %v6364 = vadd.f32 %v6362, %v6355
    %6365 = vrot.lane.b32.xlu0 %v5920, 124
    %v6366 = vpop.permute.xlu0 %6365
    %6367 = vrot.lane.b32.xlu0 %v5920, 108
    %v6368 = vpop.permute.xlu0 %6367
    %v6369 = vsel %vm5932, %v6366, 0
    %v6371 = vsel %vm5932, %v6368, 0
    %6373 = vmatprep.subr.mxu0 0.0
    %6374 = vmatpush1.xpose.msra.mxu0 %v6371
    %6375 = vmatprep.subr.mxu0 0.0
    %6376 = vmatpush1.xpose.msra.mxu0 0.0
    %6377 = vmatprep.subr.mxu0 0.0
    %6378 = vmatpush1.xpose.msra.mxu0 0.0
    %6379 = vmatprep.subr.mxu0 0.0
    %6380 = vmatpush1.xpose.msra.mxu0 0.0
    %6381 = vmatprep.subr.mxu0 0.0
    %6382 = vmatpush1.xpose.msra.mxu0 0.0
    %6383 = vmatprep.subr.mxu0 0.0
    %6384 = vmatpush1.xpose.msra.mxu0 0.0
    %6385 = vmatprep.subr.mxu0 0.0
    %6386 = vmatpush1.xpose.msra.mxu0 0.0
    %6387 = vmatprep.subr.mxu0 0.0
    %6388 = vmatpush1.xpose.msra.mxu0 0.0
    %6389 = vmatprep.subr.mxu0 0.0
    %6390 = vmatpush1.xpose.msra.mxu0 0.0
    %6391 = vmatprep.subr.mxu0 0.0
    %6392 = vmatpush1.xpose.msra.mxu0 0.0
    %6393 = vmatprep.subr.mxu0 0.0
    %6394 = vmatpush1.xpose.msra.mxu0 0.0
    %6395 = vmatprep.subr.mxu0 0.0
    %6396 = vmatpush1.xpose.msra.mxu0 0.0
    %6397 = vmatprep.subr.mxu0 0.0
    %6398 = vmatpush1.xpose.msra.mxu0 0.0
    %6399 = vmatprep.subr.mxu0 0.0
    %6400 = vmatpush1.xpose.msra.mxu0 0.0
    %6401 = vmatprep.subr.mxu0 0.0
    %6402 = vmatpush1.xpose.msra.mxu0 0.0
    %6403 = vmatprep.subr.mxu0 0.0
    %6404 = vmatpush1.xpose.msra.mxu0 0.0
    %6405 = vmatprep.subr.mxu0 0.0
    %6406 = vmatpush1.xpose.msra.mxu0 0.0
    %6407 = vmatprep.subr.mxu0 0.0
    %6408 = vmatpush1.xpose.msra.mxu0 0.0
    %6409 = vmatprep.subr.mxu0 0.0
    %6410 = vmatpush1.xpose.msra.mxu0 0.0
    %6411 = vmatprep.subr.mxu0 0.0
    %6412 = vmatpush1.xpose.msra.mxu0 0.0
    %6413 = vmatprep.subr.mxu0 0.0
    %6414 = vmatpush1.xpose.msra.mxu0 0.0
    %6415 = vmatprep.subr.mxu0 0.0
    %6416 = vmatpush1.xpose.msra.mxu0 0.0
    %6417 = vmatprep.subr.mxu0 0.0
    %6418 = vmatpush1.xpose.msra.mxu0 0.0
    %6419 = vmatprep.subr.mxu0 0.0
    %6420 = vmatpush1.xpose.msra.mxu0 0.0
    %6421 = vmatprep.subr.mxu0 0.0
    %6422 = vmatpush1.xpose.msra.mxu0 0.0
    %6423 = vmatprep.subr.mxu0 0.0
    %6424 = vmatpush1.xpose.msra.mxu0 0.0
    %6425 = vmatprep.subr.mxu0 0.0
    %6426 = vmatpush1.xpose.msra.mxu0 0.0
    %6427 = vmatprep.subr.mxu0 0.0
    %6428 = vmatpush1.xpose.msra.mxu0 0.0
    %6429 = vmatprep.subr.mxu0 0.0
    %6430 = vmatpush1.xpose.msra.mxu0 0.0
    %6431 = vmatprep.subr.mxu0 0.0
    %6432 = vmatpush1.xpose.msra.mxu0 0.0
    %6433 = vmatprep.subr.mxu0 0.0
    %6434 = vmatpush1.xpose.msra.mxu0 0.0
    %6435 = vmatprep.subr.mxu0 0.0
    %6436 = vmatpush1.xpose.msra.mxu0 0.0
    %6437 = vmatprep.mubr.f32.mxu0 0.0
    %6438 = vmatmul.mubr.f32.gmra.mrb[0].mxu0 %v6369
    %v6439 = vpop.f32.mrb[0].mxu0
    %v6440 = vadd.f32 0.0, %v6439
    %v6441 = vpop.f32.mrb[0].mxu0
    %6442 = vdwg.mxu0
    %6443 = vrot.lane.b32.xlu0 %v5925, 124
    %v6444 = vpop.permute.xlu0 %6443
    %6445 = vrot.lane.b32.xlu0 %v5925, 108
    %v6446 = vpop.permute.xlu0 %6445
    %v6447 = vsel %vm5932, %v6444, 0
    %v6449 = vsel %vm5932, %v6446, 0
    %6451 = vmatprep.subr.mxu0 0.0
    %6452 = vmatpush1.xpose.msra.mxu0 %v6449
    %6453 = vmatprep.subr.mxu0 0.0
    %6454 = vmatpush1.xpose.msra.mxu0 0.0
    %6455 = vmatprep.subr.mxu0 0.0
    %6456 = vmatpush1.xpose.msra.mxu0 0.0
    %6457 = vmatprep.subr.mxu0 0.0
    %6458 = vmatpush1.xpose.msra.mxu0 0.0
    %6459 = vmatprep.subr.mxu0 0.0
    %6460 = vmatpush1.xpose.msra.mxu0 0.0
    %6461 = vmatprep.subr.mxu0 0.0
    %6462 = vmatpush1.xpose.msra.mxu0 0.0
    %6463 = vmatprep.subr.mxu0 0.0
    %6464 = vmatpush1.xpose.msra.mxu0 0.0
    %6465 = vmatprep.subr.mxu0 0.0
    %6466 = vmatpush1.xpose.msra.mxu0 0.0
    %6467 = vmatprep.subr.mxu0 0.0
    %6468 = vmatpush1.xpose.msra.mxu0 0.0
    %6469 = vmatprep.subr.mxu0 0.0
    %6470 = vmatpush1.xpose.msra.mxu0 0.0
    %6471 = vmatprep.subr.mxu0 0.0
    %6472 = vmatpush1.xpose.msra.mxu0 0.0
    %6473 = vmatprep.subr.mxu0 0.0
    %6474 = vmatpush1.xpose.msra.mxu0 0.0
    %6475 = vmatprep.subr.mxu0 0.0
    %6476 = vmatpush1.xpose.msra.mxu0 0.0
    %6477 = vmatprep.subr.mxu0 0.0
    %6478 = vmatpush1.xpose.msra.mxu0 0.0
    %6479 = vmatprep.subr.mxu0 0.0
    %6480 = vmatpush1.xpose.msra.mxu0 0.0
    %6481 = vmatprep.subr.mxu0 0.0
    %6482 = vmatpush1.xpose.msra.mxu0 0.0
    %6483 = vmatprep.subr.mxu0 0.0
    %6484 = vmatpush1.xpose.msra.mxu0 0.0
    %6485 = vmatprep.subr.mxu0 0.0
    %6486 = vmatpush1.xpose.msra.mxu0 0.0
    %6487 = vmatprep.subr.mxu0 0.0
    %6488 = vmatpush1.xpose.msra.mxu0 0.0
    %6489 = vmatprep.subr.mxu0 0.0
    %6490 = vmatpush1.xpose.msra.mxu0 0.0
    %6491 = vmatprep.subr.mxu0 0.0
    %6492 = vmatpush1.xpose.msra.mxu0 0.0
    %6493 = vmatprep.subr.mxu0 0.0
    %6494 = vmatpush1.xpose.msra.mxu0 0.0
    %6495 = vmatprep.subr.mxu0 0.0
    %6496 = vmatpush1.xpose.msra.mxu0 0.0
    %6497 = vmatprep.subr.mxu0 0.0
    %6498 = vmatpush1.xpose.msra.mxu0 0.0
    %6499 = vmatprep.subr.mxu0 0.0
    %6500 = vmatpush1.xpose.msra.mxu0 0.0
    %6501 = vmatprep.subr.mxu0 0.0
    %6502 = vmatpush1.xpose.msra.mxu0 0.0
    %6503 = vmatprep.subr.mxu0 0.0
    %6504 = vmatpush1.xpose.msra.mxu0 0.0
    %6505 = vmatprep.subr.mxu0 0.0
    %6506 = vmatpush1.xpose.msra.mxu0 0.0
    %6507 = vmatprep.subr.mxu0 0.0
    %6508 = vmatpush1.xpose.msra.mxu0 0.0
    %6509 = vmatprep.subr.mxu0 0.0
    %6510 = vmatpush1.xpose.msra.mxu0 0.0
    %6511 = vmatprep.subr.mxu0 0.0
    %6512 = vmatpush1.xpose.msra.mxu0 0.0
    %6513 = vmatprep.subr.mxu0 0.0
    %6514 = vmatpush1.xpose.msra.mxu0 0.0
    %6515 = vmatprep.mubr.f32.mxu0 0.0
    %6516 = vmatmul.mubr.f32.gmra.mrb[0].mxu0 %v6447
    %v6517 = vpop.f32.mrb[0].mxu0
    %v6518 = vadd.f32 0.0, %v6517
    %v6519 = vpop.f32.mrb[0].mxu0
    %6520 = vdwg.mxu0
    %v6521 = vsel %vm6084, %v6440, -inf
    %6522 = vmax.xlane.f32.xlu0 %v6521
    %v6523 = vpop.xlane.xlu0 %6522
    %v6524 = vsel %vm6084, %v6518, -inf
    %6525 = vmax.xlane.f32.xlu0 %v6524
    %v6526 = vpop.xlane.xlu0 %6525
    %v6527 = vsub.f32 %v6440, %v6523
    %v6528 = vsub.f32 %v6518, %v6526
    %v6529 = vmul.f32 %v6527, 1.442695
    %v6530 = vpow.pop %v6529
    %v6531 = vmul.f32 %v6528, 1.442695
    %v6532 = vpow.pop %v6531
    %v6533 = vsel %vm6084, %v6530, 0.0
    %6534 = vadd.xlane.f32.xlu0 %v6533
    %v6535 = vpop.xlane.xlu0 %6534
    %v6536 = vsel %vm6084, %v6532, 0.0
    %6537 = vadd.xlane.f32.xlu0 %v6536
    %v6538 = vpop.xlane.xlu0 %6537
    %v6539 = vrcp.pop %v6535
    %v6540 = vmul.f32 %v6530, %v6539
    %v6541 = vrcp.pop %v6538
    %v6542 = vmul.f32 %v6532, %v6541
    %v6543 = vadd.f32 %v6107, %v6540
    %v6544 = vadd.f32 %v6108, %v6542
    %v6545 = vsel %vm6084, %v6540, 0.0
    %v6546 = vrot.slane %v6545, 4
    %v6547 = vadd.f32 %v6545, %v6546
    %v6548 = vrot.slane %v6547, 2
    %v6549 = vadd.f32 %v6547, %v6548
    %v6550 = vrot.slane %v6549, 1
    %v6551 = vadd.f32 %v6549, %v6550
    %v6552 = vsel %vm6084, %v6542, 0.0
    %v6553 = vrot.slane %v6552, 4
    %v6554 = vadd.f32 %v6552, %v6553
    %v6555 = vrot.slane %v6554, 2
    %v6556 = vadd.f32 %v6554, %v6555
    %v6557 = vrot.slane %v6556, 1
    %v6558 = vadd.f32 %v6556, %v6557
    %v6559 = vmul.f32 %v6551, %v6123
    %v6560 = vmul.f32 %v6558, %v6123
    %6561 = vrot.lane.b32.xlu0 %v5920, 92
    %v6562 = vpop.permute.xlu0 %6561
    %v6565 = vsel %vm6084, %v6559, 0
    %6567 = vmatprep.subr.mxu0 0.0
    %6568 = vmatpush1.msra.mxu0 %v6562
    %6569 = vmatprep.subr.mxu0 0.0
    %6570 = vmatpush1.msra.mxu0 0.0
    %6571 = vmatprep.subr.mxu0 0.0
    %6572 = vmatpush1.msra.mxu0 0.0
    %6573 = vmatprep.subr.mxu0 0.0
    %6574 = vmatpush1.msra.mxu0 0.0
    %6575 = vmatprep.subr.mxu0 0.0
    %6576 = vmatpush1.msra.mxu0 0.0
    %6577 = vmatprep.subr.mxu0 0.0
    %6578 = vmatpush1.msra.mxu0 0.0
    %6579 = vmatprep.subr.mxu0 0.0
    %6580 = vmatpush1.msra.mxu0 0.0
    %6581 = vmatprep.subr.mxu0 0.0
    %6582 = vmatpush1.msra.mxu0 0.0
    %6583 = vmatprep.subr.mxu0 0.0
    %6584 = vmatpush1.msra.mxu0 0.0
    %6585 = vmatprep.subr.mxu0 0.0
    %6586 = vmatpush1.msra.mxu0 0.0
    %6587 = vmatprep.subr.mxu0 0.0
    %6588 = vmatpush1.msra.mxu0 0.0
    %6589 = vmatprep.subr.mxu0 0.0
    %6590 = vmatpush1.msra.mxu0 0.0
    %6591 = vmatprep.subr.mxu0 0.0
    %6592 = vmatpush1.msra.mxu0 0.0
    %6593 = vmatprep.subr.mxu0 0.0
    %6594 = vmatpush1.msra.mxu0 0.0
    %6595 = vmatprep.subr.mxu0 0.0
    %6596 = vmatpush1.msra.mxu0 0.0
    %6597 = vmatprep.subr.mxu0 0.0
    %6598 = vmatpush1.msra.mxu0 0.0
    %6599 = vmatprep.subr.mxu0 0.0
    %6600 = vmatpush1.msra.mxu0 0.0
    %6601 = vmatprep.subr.mxu0 0.0
    %6602 = vmatpush1.msra.mxu0 0.0
    %6603 = vmatprep.subr.mxu0 0.0
    %6604 = vmatpush1.msra.mxu0 0.0
    %6605 = vmatprep.subr.mxu0 0.0
    %6606 = vmatpush1.msra.mxu0 0.0
    %6607 = vmatprep.subr.mxu0 0.0
    %6608 = vmatpush1.msra.mxu0 0.0
    %6609 = vmatprep.subr.mxu0 0.0
    %6610 = vmatpush1.msra.mxu0 0.0
    %6611 = vmatprep.subr.mxu0 0.0
    %6612 = vmatpush1.msra.mxu0 0.0
    %6613 = vmatprep.subr.mxu0 0.0
    %6614 = vmatpush1.msra.mxu0 0.0
    %6615 = vmatprep.subr.mxu0 0.0
    %6616 = vmatpush1.msra.mxu0 0.0
    %6617 = vmatprep.subr.mxu0 0.0
    %6618 = vmatpush1.msra.mxu0 0.0
    %6619 = vmatprep.subr.mxu0 0.0
    %6620 = vmatpush1.msra.mxu0 0.0
    %6621 = vmatprep.subr.mxu0 0.0
    %6622 = vmatpush1.msra.mxu0 0.0
    %6623 = vmatprep.subr.mxu0 0.0
    %6624 = vmatpush1.msra.mxu0 0.0
    %6625 = vmatprep.subr.mxu0 0.0
    %6626 = vmatpush1.msra.mxu0 0.0
    %6627 = vmatprep.subr.mxu0 0.0
    %6628 = vmatpush1.msra.mxu0 0.0
    %6629 = vmatprep.subr.mxu0 0.0
    %6630 = vmatpush1.msra.mxu0 0.0
    %6631 = vmatprep.mubr.f32.mxu0 0.0
    %6632 = vmatmul.mubr.f32.gmra.mrb[0].mxu0 %v6565
    %v6633 = vpop.f32.mrb[0].mxu0
    %v6634 = vadd.f32 0.0, %v6633
    %v6635 = vpop.f32.mrb[0].mxu0
    %6636 = vdwg.mxu0
    %6637 = vrot.lane.b32.xlu0 %v5925, 92
    %v6638 = vpop.permute.xlu0 %6637
    %v6641 = vsel %vm6084, %v6560, 0
    %6643 = vmatprep.subr.mxu0 0.0
    %6644 = vmatpush1.msra.mxu0 %v6638
    %6645 = vmatprep.subr.mxu0 0.0
    %6646 = vmatpush1.msra.mxu0 0.0
    %6647 = vmatprep.subr.mxu0 0.0
    %6648 = vmatpush1.msra.mxu0 0.0
    %6649 = vmatprep.subr.mxu0 0.0
    %6650 = vmatpush1.msra.mxu0 0.0
    %6651 = vmatprep.subr.mxu0 0.0
    %6652 = vmatpush1.msra.mxu0 0.0
    %6653 = vmatprep.subr.mxu0 0.0
    %6654 = vmatpush1.msra.mxu0 0.0
    %6655 = vmatprep.subr.mxu0 0.0
    %6656 = vmatpush1.msra.mxu0 0.0
    %6657 = vmatprep.subr.mxu0 0.0
    %6658 = vmatpush1.msra.mxu0 0.0
    %6659 = vmatprep.subr.mxu0 0.0
    %6660 = vmatpush1.msra.mxu0 0.0
    %6661 = vmatprep.subr.mxu0 0.0
    %6662 = vmatpush1.msra.mxu0 0.0
    %6663 = vmatprep.subr.mxu0 0.0
    %6664 = vmatpush1.msra.mxu0 0.0
    %6665 = vmatprep.subr.mxu0 0.0
    %6666 = vmatpush1.msra.mxu0 0.0
    %6667 = vmatprep.subr.mxu0 0.0
    %6668 = vmatpush1.msra.mxu0 0.0
    %6669 = vmatprep.subr.mxu0 0.0
    %6670 = vmatpush1.msra.mxu0 0.0
    %6671 = vmatprep.subr.mxu0 0.0
    %6672 = vmatpush1.msra.mxu0 0.0
    %6673 = vmatprep.subr.mxu0 0.0
    %6674 = vmatpush1.msra.mxu0 0.0
    %6675 = vmatprep.subr.mxu0 0.0
    %6676 = vmatpush1.msra.mxu0 0.0
    %6677 = vmatprep.subr.mxu0 0.0
    %6678 = vmatpush1.msra.mxu0 0.0
    %6679 = vmatprep.subr.mxu0 0.0
    %6680 = vmatpush1.msra.mxu0 0.0
    %6681 = vmatprep.subr.mxu0 0.0
    %6682 = vmatpush1.msra.mxu0 0.0
    %6683 = vmatprep.subr.mxu0 0.0
    %6684 = vmatpush1.msra.mxu0 0.0
    %6685 = vmatprep.subr.mxu0 0.0
    %6686 = vmatpush1.msra.mxu0 0.0
    %6687 = vmatprep.subr.mxu0 0.0
    %6688 = vmatpush1.msra.mxu0 0.0
    %6689 = vmatprep.subr.mxu0 0.0
    %6690 = vmatpush1.msra.mxu0 0.0
    %6691 = vmatprep.subr.mxu0 0.0
    %6692 = vmatpush1.msra.mxu0 0.0
    %6693 = vmatprep.subr.mxu0 0.0
    %6694 = vmatpush1.msra.mxu0 0.0
    %6695 = vmatprep.subr.mxu0 0.0
    %6696 = vmatpush1.msra.mxu0 0.0
    %6697 = vmatprep.subr.mxu0 0.0
    %6698 = vmatpush1.msra.mxu0 0.0
    %6699 = vmatprep.subr.mxu0 0.0
    %6700 = vmatpush1.msra.mxu0 0.0
    %6701 = vmatprep.subr.mxu0 0.0
    %6702 = vmatpush1.msra.mxu0 0.0
    %6703 = vmatprep.subr.mxu0 0.0
    %6704 = vmatpush1.msra.mxu0 0.0
    %6705 = vmatprep.subr.mxu0 0.0
    %6706 = vmatpush1.msra.mxu0 0.0
    %6707 = vmatprep.mubr.f32.mxu0 0.0
    %6708 = vmatmul.mubr.f32.gmra.mrb[0].mxu0 %v6641
    %v6709 = vpop.f32.mrb[0].mxu0
    %v6710 = vadd.f32 0.0, %v6709
    %v6711 = vpop.f32.mrb[0].mxu0
    %6712 = vdwg.mxu0
    %v6713 = vld [vmem:[%s15 + $0x4] sm:$0xf]
    %v6716 = vrot.slane %v6710, 7
    %v6717 = vsel %vm462, %v6716, %v6634
    %v6718 = vsel %vm5932, %v6717, 0
    %v6721 = vsel %vm5428, %v6713, 0
    %6723 = vmatprep.subr.mxu0 0.0
    %6724 = vmatpush1.msra.mxu0 %v6721
    %6725 = vmatprep.subr.mxu0 0.0
    %6726 = vmatpush1.msra.mxu0 0.0
    %6727 = vmatprep.subr.mxu0 0.0
    %6728 = vmatpush1.msra.mxu0 0.0
    %6729 = vmatprep.subr.mxu0 0.0
    %6730 = vmatpush1.msra.mxu0 0.0
    %6731 = vmatprep.subr.mxu0 0.0
    %6732 = vmatpush1.msra.mxu0 0.0
    %6733 = vmatprep.subr.mxu0 0.0
    %6734 = vmatpush1.msra.mxu0 0.0
    %6735 = vmatprep.subr.mxu0 0.0
    %6736 = vmatpush1.msra.mxu0 0.0
    %6737 = vmatprep.subr.mxu0 0.0
    %6738 = vmatpush1.msra.mxu0 0.0
    %6739 = vmatprep.subr.mxu0 0.0
    %6740 = vmatpush1.msra.mxu0 0.0
    %6741 = vmatprep.subr.mxu0 0.0
    %6742 = vmatpush1.msra.mxu0 0.0
    %6743 = vmatprep.subr.mxu0 0.0
    %6744 = vmatpush1.msra.mxu0 0.0
    %6745 = vmatprep.subr.mxu0 0.0
    %6746 = vmatpush1.msra.mxu0 0.0
    %6747 = vmatprep.subr.mxu0 0.0
    %6748 = vmatpush1.msra.mxu0 0.0
    %6749 = vmatprep.subr.mxu0 0.0
    %6750 = vmatpush1.msra.mxu0 0.0
    %6751 = vmatprep.subr.mxu0 0.0
    %6752 = vmatpush1.msra.mxu0 0.0
    %6753 = vmatprep.subr.mxu0 0.0
    %6754 = vmatpush1.msra.mxu0 0.0
    %6755 = vmatprep.subr.mxu0 0.0
    %6756 = vmatpush1.msra.mxu0 0.0
    %6757 = vmatprep.subr.mxu0 0.0
    %6758 = vmatpush1.msra.mxu0 0.0
    %6759 = vmatprep.subr.mxu0 0.0
    %6760 = vmatpush1.msra.mxu0 0.0
    %6761 = vmatprep.subr.mxu0 0.0
    %6762 = vmatpush1.msra.mxu0 0.0
    %6763 = vmatprep.subr.mxu0 0.0
    %6764 = vmatpush1.msra.mxu0 0.0
    %6765 = vmatprep.subr.mxu0 0.0
    %6766 = vmatpush1.msra.mxu0 0.0
    %6767 = vmatprep.subr.mxu0 0.0
    %6768 = vmatpush1.msra.mxu0 0.0
    %6769 = vmatprep.subr.mxu0 0.0
    %6770 = vmatpush1.msra.mxu0 0.0
    %6771 = vmatprep.subr.mxu0 0.0
    %6772 = vmatpush1.msra.mxu0 0.0
    %6773 = vmatprep.subr.mxu0 0.0
    %6774 = vmatpush1.msra.mxu0 0.0
    %6775 = vmatprep.subr.mxu0 0.0
    %6776 = vmatpush1.msra.mxu0 0.0
    %6777 = vmatprep.subr.mxu0 0.0
    %6778 = vmatpush1.msra.mxu0 0.0
    %6779 = vmatprep.subr.mxu0 0.0
    %6780 = vmatpush1.msra.mxu0 0.0
    %6781 = vmatprep.subr.mxu0 0.0
    %6782 = vmatpush1.msra.mxu0 0.0
    %6783 = vmatprep.subr.mxu0 0.0
    %6784 = vmatpush1.msra.mxu0 0.0
    %6785 = vmatprep.subr.mxu0 0.0
    %6786 = vmatpush1.msra.mxu0 0.0
    %6787 = vmatprep.mubr.f32.mxu0 0.0
    %6788 = vmatmul.mubr.f32.gmra.mrb[0].mxu0 %v6718
    %v6789 = vpop.f32.mrb[0].mxu0
    %v6790 = vadd.f32 0.0, %v6789
    %v6791 = vpop.f32.mrb[0].mxu0
    %6792 = vdwg.mxu0
    %v6793 = vadd.f32 %v6364, %v6790
    %6794 = vrot.lane.b32.xlu0 %v5920, 120
    %v6795 = vpop.permute.xlu0 %6794
    %6796 = vrot.lane.b32.xlu0 %v5920, 104
    %v6797 = vpop.permute.xlu0 %6796
    %v6798 = vsel %vm5932, %v6795, 0
    %v6800 = vsel %vm5932, %v6797, 0
    %6802 = vmatprep.subr.mxu0 0.0
    %6803 = vmatpush1.xpose.msra.mxu0 %v6800
    %6804 = vmatprep.subr.mxu0 0.0
    %6805 = vmatpush1.xpose.msra.mxu0 0.0
    %6806 = vmatprep.subr.mxu0 0.0
    %6807 = vmatpush1.xpose.msra.mxu0 0.0
    %6808 = vmatprep.subr.mxu0 0.0
    %6809 = vmatpush1.xpose.msra.mxu0 0.0
    %6810 = vmatprep.subr.mxu0 0.0
    %6811 = vmatpush1.xpose.msra.mxu0 0.0
    %6812 = vmatprep.subr.mxu0 0.0
    %6813 = vmatpush1.xpose.msra.mxu0 0.0
    %6814 = vmatprep.subr.mxu0 0.0
    %6815 = vmatpush1.xpose.msra.mxu0 0.0
    %6816 = vmatprep.subr.mxu0 0.0
    %6817 = vmatpush1.xpose.msra.mxu0 0.0
    %6818 = vmatprep.subr.mxu0 0.0
    %6819 = vmatpush1.xpose.msra.mxu0 0.0
    %6820 = vmatprep.subr.mxu0 0.0
    %6821 = vmatpush1.xpose.msra.mxu0 0.0
    %6822 = vmatprep.subr.mxu0 0.0
    %6823 = vmatpush1.xpose.msra.mxu0 0.0
    %6824 = vmatprep.subr.mxu0 0.0
    %6825 = vmatpush1.xpose.msra.mxu0 0.0
    %6826 = vmatprep.subr.mxu0 0.0
    %6827 = vmatpush1.xpose.msra.mxu0 0.0
    %6828 = vmatprep.subr.mxu0 0.0
    %6829 = vmatpush1.xpose.msra.mxu0 0.0
    %6830 = vmatprep.subr.mxu0 0.0
    %6831 = vmatpush1.xpose.msra.mxu0 0.0
    %6832 = vmatprep.subr.mxu0 0.0
    %6833 = vmatpush1.xpose.msra.mxu0 0.0
    %6834 = vmatprep.subr.mxu0 0.0
    %6835 = vmatpush1.xpose.msra.mxu0 0.0
    %6836 = vmatprep.subr.mxu0 0.0
    %6837 = vmatpush1.xpose.msra.mxu0 0.0
    %6838 = vmatprep.subr.mxu0 0.0
    %6839 = vmatpush1.xpose.msra.mxu0 0.0
    %6840 = vmatprep.subr.mxu0 0.0
    %6841 = vmatpush1.xpose.msra.mxu0 0.0
    %6842 = vmatprep.subr.mxu0 0.0
    %6843 = vmatpush1.xpose.msra.mxu0 0.0
    %6844 = vmatprep.subr.mxu0 0.0
    %6845 = vmatpush1.xpose.msra.mxu0 0.0
    %6846 = vmatprep.subr.mxu0 0.0
    %6847 = vmatpush1.xpose.msra.mxu0 0.0
    %6848 = vmatprep.subr.mxu0 0.0
    %6849 = vmatpush1.xpose.msra.mxu0 0.0
    %6850 = vmatprep.subr.mxu0 0.0
    %6851 = vmatpush1.xpose.msra.mxu0 0.0
    %6852 = vmatprep.subr.mxu0 0.0
    %6853 = vmatpush1.xpose.msra.mxu0 0.0
    %6854 = vmatprep.subr.mxu0 0.0
    %6855 = vmatpush1.xpose.msra.mxu0 0.0
    %6856 = vmatprep.subr.mxu0 0.0
    %6857 = vmatpush1.xpose.msra.mxu0 0.0
    %6858 = vmatprep.subr.mxu0 0.0
    %6859 = vmatpush1.xpose.msra.mxu0 0.0
    %6860 = vmatprep.subr.mxu0 0.0
    %6861 = vmatpush1.xpose.msra.mxu0 0.0
    %6862 = vmatprep.subr.mxu0 0.0
    %6863 = vmatpush1.xpose.msra.mxu0 0.0
    %6864 = vmatprep.subr.mxu0 0.0
    %6865 = vmatpush1.xpose.msra.mxu0 0.0
    %6866 = vmatprep.mubr.f32.mxu0 0.0
    %6867 = vmatmul.mubr.f32.gmra.mrb[0].mxu0 %v6798
    %v6868 = vpop.f32.mrb[0].mxu0
    %v6869 = vadd.f32 0.0, %v6868
    %v6870 = vpop.f32.mrb[0].mxu0
    %6871 = vdwg.mxu0
    %6872 = vrot.lane.b32.xlu0 %v5925, 120
    %v6873 = vpop.permute.xlu0 %6872
    %6874 = vrot.lane.b32.xlu0 %v5925, 104
    %v6875 = vpop.permute.xlu0 %6874
    %v6876 = vsel %vm5932, %v6873, 0
    %v6878 = vsel %vm5932, %v6875, 0
    %6880 = vmatprep.subr.mxu0 0.0
    %6881 = vmatpush1.xpose.msra.mxu0 %v6878
    %6882 = vmatprep.subr.mxu0 0.0
    %6883 = vmatpush1.xpose.msra.mxu0 0.0
    %6884 = vmatprep.subr.mxu0 0.0
    %6885 = vmatpush1.xpose.msra.mxu0 0.0
    %6886 = vmatprep.subr.mxu0 0.0
    %6887 = vmatpush1.xpose.msra.mxu0 0.0
    %6888 = vmatprep.subr.mxu0 0.0
    %6889 = vmatpush1.xpose.msra.mxu0 0.0
    %6890 = vmatprep.subr.mxu0 0.0
    %6891 = vmatpush1.xpose.msra.mxu0 0.0
    %6892 = vmatprep.subr.mxu0 0.0
    %6893 = vmatpush1.xpose.msra.mxu0 0.0
    %6894 = vmatprep.subr.mxu0 0.0
    %6895 = vmatpush1.xpose.msra.mxu0 0.0
    %6896 = vmatprep.subr.mxu0 0.0
    %6897 = vmatpush1.xpose.msra.mxu0 0.0
    %6898 = vmatprep.subr.mxu0 0.0
    %6899 = vmatpush1.xpose.msra.mxu0 0.0
    %6900 = vmatprep.subr.mxu0 0.0
    %6901 = vmatpush1.xpose.msra.mxu0 0.0
    %6902 = vmatprep.subr.mxu0 0.0
    %6903 = vmatpush1.xpose.msra.mxu0 0.0
    %6904 = vmatprep.subr.mxu0 0.0
    %6905 = vmatpush1.xpose.msra.mxu0 0.0
    %6906 = vmatprep.subr.mxu0 0.0
    %6907 = vmatpush1.xpose.msra.mxu0 0.0
    %6908 = vmatprep.subr.mxu0 0.0
    %6909 = vmatpush1.xpose.msra.mxu0 0.0
    %6910 = vmatprep.subr.mxu0 0.0
    %6911 = vmatpush1.xpose.msra.mxu0 0.0
    %6912 = vmatprep.subr.mxu0 0.0
    %6913 = vmatpush1.xpose.msra.mxu0 0.0
    %6914 = vmatprep.subr.mxu0 0.0
    %6915 = vmatpush1.xpose.msra.mxu0 0.0
    %6916 = vmatprep.subr.mxu0 0.0
    %6917 = vmatpush1.xpose.msra.mxu0 0.0
    %6918 = vmatprep.subr.mxu0 0.0
    %6919 = vmatpush1.xpose.msra.mxu0 0.0
    %6920 = vmatprep.subr.mxu0 0.0
    %6921 = vmatpush1.xpose.msra.mxu0 0.0
    %6922 = vmatprep.subr.mxu0 0.0
    %6923 = vmatpush1.xpose.msra.mxu0 0.0
    %6924 = vmatprep.subr.mxu0 0.0
    %6925 = vmatpush1.xpose.msra.mxu0 0.0
    %6926 = vmatprep.subr.mxu0 0.0
    %6927 = vmatpush1.xpose.msra.mxu0 0.0
    %6928 = vmatprep.subr.mxu0 0.0
    %6929 = vmatpush1.xpose.msra.mxu0 0.0
    %6930 = vmatprep.subr.mxu0 0.0
    %6931 = vmatpush1.xpose.msra.mxu0 0.0
    %6932 = vmatprep.subr.mxu0 0.0
    %6933 = vmatpush1.xpose.msra.mxu0 0.0
    %6934 = vmatprep.subr.mxu0 0.0
    %6935 = vmatpush1.xpose.msra.mxu0 0.0
    %6936 = vmatprep.subr.mxu0 0.0
    %6937 = vmatpush1.xpose.msra.mxu0 0.0
    %6938 = vmatprep.subr.mxu0 0.0
    %6939 = vmatpush1.xpose.msra.mxu0 0.0
    %6940 = vmatprep.subr.mxu0 0.0
    %6941 = vmatpush1.xpose.msra.mxu0 0.0
    %6942 = vmatprep.subr.mxu0 0.0
    %6943 = vmatpush1.xpose.msra.mxu0 0.0
    %6944 = vmatprep.mubr.f32.mxu0 0.0
    %6945 = vmatmul.mubr.f32.gmra.mrb[0].mxu0 %v6876
    %v6946 = vpop.f32.mrb[0].mxu0
    %v6947 = vadd.f32 0.0, %v6946
    %v6948 = vpop.f32.mrb[0].mxu0
    %6949 = vdwg.mxu0
    %v6950 = vsel %vm6084, %v6869, -inf
    %6951 = vmax.xlane.f32.xlu0 %v6950
    %v6952 = vpop.xlane.xlu0 %6951
    %v6953 = vsel %vm6084, %v6947, -inf
    %6954 = vmax.xlane.f32.xlu0 %v6953
    %v6955 = vpop.xlane.xlu0 %6954
    %v6956 = vsub.f32 %v6869, %v6952
    %v6957 = vsub.f32 %v6947, %v6955
    %v6958 = vmul.f32 %v6956, 1.442695
    %v6959 = vpow.pop %v6958
    %v6960 = vmul.f32 %v6957, 1.442695
    %v6961 = vpow.pop %v6960
    %v6962 = vsel %vm6084, %v6959, 0.0
    %6963 = vadd.xlane.f32.xlu0 %v6962
    %v6964 = vpop.xlane.xlu0 %6963
    %v6965 = vsel %vm6084, %v6961, 0.0
    %6966 = vadd.xlane.f32.xlu0 %v6965
    %v6967 = vpop.xlane.xlu0 %6966
    %v6968 = vrcp.pop %v6964
    %v6969 = vmul.f32 %v6959, %v6968
    %v6970 = vrcp.pop %v6967
    %v6971 = vmul.f32 %v6961, %v6970
    %v6972 = vadd.f32 %v6543, %v6969
    %v6973 = vadd.f32 %v6544, %v6971
    %v6974 = vsel %vm6084, %v6969, 0.0
    %v6975 = vrot.slane %v6974, 4
    %v6976 = vadd.f32 %v6974, %v6975
    %v6977 = vrot.slane %v6976, 2
    %v6978 = vadd.f32 %v6976, %v6977
    %v6979 = vrot.slane %v6978, 1
    %v6980 = vadd.f32 %v6978, %v6979
    %v6981 = vsel %vm6084, %v6971, 0.0
    %v6982 = vrot.slane %v6981, 4
    %v6983 = vadd.f32 %v6981, %v6982
    %v6984 = vrot.slane %v6983, 2
    %v6985 = vadd.f32 %v6983, %v6984
    %v6986 = vrot.slane %v6985, 1
    %v6987 = vadd.f32 %v6985, %v6986
    %v6988 = vmul.f32 %v6980, %v6123
    %v6989 = vmul.f32 %v6987, %v6123
    %6990 = vrot.lane.b32.xlu0 %v5920, 88
    %v6991 = vpop.permute.xlu0 %6990
    %v6994 = vsel %vm6084, %v6988, 0
    %6996 = vmatprep.subr.mxu0 0.0
    %6997 = vmatpush1.msra.mxu0 %v6991
    %6998 = vmatprep.subr.mxu0 0.0
    %6999 = vmatpush1.msra.mxu0 0.0
    %7000 = vmatprep.subr.mxu0 0.0
    %7001 = vmatpush1.msra.mxu0 0.0
    %7002 = vmatprep.subr.mxu0 0.0
    %7003 = vmatpush1.msra.mxu0 0.0
    %7004 = vmatprep.subr.mxu0 0.0
    %7005 = vmatpush1.msra.mxu0 0.0
    %7006 = vmatprep.subr.mxu0 0.0
    %7007 = vmatpush1.msra.mxu0 0.0
    %7008 = vmatprep.subr.mxu0 0.0
    %7009 = vmatpush1.msra.mxu0 0.0
    %7010 = vmatprep.subr.mxu0 0.0
    %7011 = vmatpush1.msra.mxu0 0.0
    %7012 = vmatprep.subr.mxu0 0.0
    %7013 = vmatpush1.msra.mxu0 0.0
    %7014 = vmatprep.subr.mxu0 0.0
    %7015 = vmatpush1.msra.mxu0 0.0
    %7016 = vmatprep.subr.mxu0 0.0
    %7017 = vmatpush1.msra.mxu0 0.0
    %7018 = vmatprep.subr.mxu0 0.0
    %7019 = vmatpush1.msra.mxu0 0.0
    %7020 = vmatprep.subr.mxu0 0.0
    %7021 = vmatpush1.msra.mxu0 0.0
    %7022 = vmatprep.subr.mxu0 0.0
    %7023 = vmatpush1.msra.mxu0 0.0
    %7024 = vmatprep.subr.mxu0 0.0
    %7025 = vmatpush1.msra.mxu0 0.0
    %7026 = vmatprep.subr.mxu0 0.0
    %7027 = vmatpush1.msra.mxu0 0.0
    %7028 = vmatprep.subr.mxu0 0.0
    %7029 = vmatpush1.msra.mxu0 0.0
    %7030 = vmatprep.subr.mxu0 0.0
    %7031 = vmatpush1.msra.mxu0 0.0
    %7032 = vmatprep.subr.mxu0 0.0
    %7033 = vmatpush1.msra.mxu0 0.0
    %7034 = vmatprep.subr.mxu0 0.0
    %7035 = vmatpush1.msra.mxu0 0.0
    %7036 = vmatprep.subr.mxu0 0.0
    %7037 = vmatpush1.msra.mxu0 0.0
    %7038 = vmatprep.subr.mxu0 0.0
    %7039 = vmatpush1.msra.mxu0 0.0
    %7040 = vmatprep.subr.mxu0 0.0
    %7041 = vmatpush1.msra.mxu0 0.0
    %7042 = vmatprep.subr.mxu0 0.0
    %7043 = vmatpush1.msra.mxu0 0.0
    %7044 = vmatprep.subr.mxu0 0.0
    %7045 = vmatpush1.msra.mxu0 0.0
    %7046 = vmatprep.subr.mxu0 0.0
    %7047 = vmatpush1.msra.mxu0 0.0
    %7048 = vmatprep.subr.mxu0 0.0
    %7049 = vmatpush1.msra.mxu0 0.0
    %7050 = vmatprep.subr.mxu0 0.0
    %7051 = vmatpush1.msra.mxu0 0.0
    %7052 = vmatprep.subr.mxu0 0.0
    %7053 = vmatpush1.msra.mxu0 0.0
    %7054 = vmatprep.subr.mxu0 0.0
    %7055 = vmatpush1.msra.mxu0 0.0
    %7056 = vmatprep.subr.mxu0 0.0
    %7057 = vmatpush1.msra.mxu0 0.0
    %7058 = vmatprep.subr.mxu0 0.0
    %7059 = vmatpush1.msra.mxu0 0.0
    %7060 = vmatprep.mubr.f32.mxu0 0.0
    %7061 = vmatmul.mubr.f32.gmra.mrb[0].mxu0 %v6994
    %v7062 = vpop.f32.mrb[0].mxu0
    %v7063 = vadd.f32 0.0, %v7062
    %v7064 = vpop.f32.mrb[0].mxu0
    %7065 = vdwg.mxu0
    %7066 = vrot.lane.b32.xlu0 %v5925, 88
    %v7067 = vpop.permute.xlu0 %7066
    %v7070 = vsel %vm6084, %v6989, 0
    %7072 = vmatprep.subr.mxu0 0.0
    %7073 = vmatpush1.msra.mxu0 %v7067
    %7074 = vmatprep.subr.mxu0 0.0
    %7075 = vmatpush1.msra.mxu0 0.0
    %7076 = vmatprep.subr.mxu0 0.0
    %7077 = vmatpush1.msra.mxu0 0.0
    %7078 = vmatprep.subr.mxu0 0.0
    %7079 = vmatpush1.msra.mxu0 0.0
    %7080 = vmatprep.subr.mxu0 0.0
    %7081 = vmatpush1.msra.mxu0 0.0
    %7082 = vmatprep.subr.mxu0 0.0
    %7083 = vmatpush1.msra.mxu0 0.0
    %7084 = vmatprep.subr.mxu0 0.0
    %7085 = vmatpush1.msra.mxu0 0.0
    %7086 = vmatprep.subr.mxu0 0.0
    %7087 = vmatpush1.msra.mxu0 0.0
    %7088 = vmatprep.subr.mxu0 0.0
    %7089 = vmatpush1.msra.mxu0 0.0
    %7090 = vmatprep.subr.mxu0 0.0
    %7091 = vmatpush1.msra.mxu0 0.0
    %7092 = vmatprep.subr.mxu0 0.0
    %7093 = vmatpush1.msra.mxu0 0.0
    %7094 = vmatprep.subr.mxu0 0.0
    %7095 = vmatpush1.msra.mxu0 0.0
    %7096 = vmatprep.subr.mxu0 0.0
    %7097 = vmatpush1.msra.mxu0 0.0
    %7098 = vmatprep.subr.mxu0 0.0
    %7099 = vmatpush1.msra.mxu0 0.0
    %7100 = vmatprep.subr.mxu0 0.0
    %7101 = vmatpush1.msra.mxu0 0.0
    %7102 = vmatprep.subr.mxu0 0.0
    %7103 = vmatpush1.msra.mxu0 0.0
    %7104 = vmatprep.subr.mxu0 0.0
    %7105 = vmatpush1.msra.mxu0 0.0
    %7106 = vmatprep.subr.mxu0 0.0
    %7107 = vmatpush1.msra.mxu0 0.0
    %7108 = vmatprep.subr.mxu0 0.0
    %7109 = vmatpush1.msra.mxu0 0.0
    %7110 = vmatprep.subr.mxu0 0.0
    %7111 = vmatpush1.msra.mxu0 0.0
    %7112 = vmatprep.subr.mxu0 0.0
    %7113 = vmatpush1.msra.mxu0 0.0
    %7114 = vmatprep.subr.mxu0 0.0
    %7115 = vmatpush1.msra.mxu0 0.0
    %7116 = vmatprep.subr.mxu0 0.0
    %7117 = vmatpush1.msra.mxu0 0.0
    %7118 = vmatprep.subr.mxu0 0.0
    %7119 = vmatpush1.msra.mxu0 0.0
    %7120 = vmatprep.subr.mxu0 0.0
    %7121 = vmatpush1.msra.mxu0 0.0
    %7122 = vmatprep.subr.mxu0 0.0
    %7123 = vmatpush1.msra.mxu0 0.0
    %7124 = vmatprep.subr.mxu0 0.0
    %7125 = vmatpush1.msra.mxu0 0.0
    %7126 = vmatprep.subr.mxu0 0.0
    %7127 = vmatpush1.msra.mxu0 0.0
    %7128 = vmatprep.subr.mxu0 0.0
    %7129 = vmatpush1.msra.mxu0 0.0
    %7130 = vmatprep.subr.mxu0 0.0
    %7131 = vmatpush1.msra.mxu0 0.0
    %7132 = vmatprep.subr.mxu0 0.0
    %7133 = vmatpush1.msra.mxu0 0.0
    %7134 = vmatprep.subr.mxu0 0.0
    %7135 = vmatpush1.msra.mxu0 0.0
    %7136 = vmatprep.mubr.f32.mxu0 0.0
    %7137 = vmatmul.mubr.f32.gmra.mrb[0].mxu0 %v7070
    %v7138 = vpop.f32.mrb[0].mxu0
    %v7139 = vadd.f32 0.0, %v7138
    %v7140 = vpop.f32.mrb[0].mxu0
    %7141 = vdwg.mxu0
    %v7142 = vld [vmem:[%s15 + $0x8] sm:$0xf]
    %v7145 = vrot.slane %v7139, 7
    %v7146 = vsel %vm462, %v7145, %v7063
    %v7147 = vsel %vm5932, %v7146, 0
    %v7150 = vsel %vm5428, %v7142, 0
    %7152 = vmatprep.subr.mxu0 0.0
    %7153 = vmatpush1.msra.mxu0 %v7150
    %7154 = vmatprep.subr.mxu0 0.0
    %7155 = vmatpush1.msra.mxu0 0.0
    %7156 = vmatprep.subr.mxu0 0.0
    %7157 = vmatpush1.msra.mxu0 0.0
    %7158 = vmatprep.subr.mxu0 0.0
    %7159 = vmatpush1.msra.mxu0 0.0
    %7160 = vmatprep.subr.mxu0 0.0
    %7161 = vmatpush1.msra.mxu0 0.0
    %7162 = vmatprep.subr.mxu0 0.0
    %7163 = vmatpush1.msra.mxu0 0.0
    %7164 = vmatprep.subr.mxu0 0.0
    %7165 = vmatpush1.msra.mxu0 0.0
    %7166 = vmatprep.subr.mxu0 0.0
    %7167 = vmatpush1.msra.mxu0 0.0
    %7168 = vmatprep.subr.mxu0 0.0
    %7169 = vmatpush1.msra.mxu0 0.0
    %7170 = vmatprep.subr.mxu0 0.0
    %7171 = vmatpush1.msra.mxu0 0.0
    %7172 = vmatprep.subr.mxu0 0.0
    %7173 = vmatpush1.msra.mxu0 0.0
    %7174 = vmatprep.subr.mxu0 0.0
    %7175 = vmatpush1.msra.mxu0 0.0
    %7176 = vmatprep.subr.mxu0 0.0
    %7177 = vmatpush1.msra.mxu0 0.0
    %7178 = vmatprep.subr.mxu0 0.0
    %7179 = vmatpush1.msra.mxu0 0.0
    %7180 = vmatprep.subr.mxu0 0.0
    %7181 = vmatpush1.msra.mxu0 0.0
    %7182 = vmatprep.subr.mxu0 0.0
    %7183 = vmatpush1.msra.mxu0 0.0
    %7184 = vmatprep.subr.mxu0 0.0
    %7185 = vmatpush1.msra.mxu0 0.0
    %7186 = vmatprep.subr.mxu0 0.0
    %7187 = vmatpush1.msra.mxu0 0.0
    %7188 = vmatprep.subr.mxu0 0.0
    %7189 = vmatpush1.msra.mxu0 0.0
    %7190 = vmatprep.subr.mxu0 0.0
    %7191 = vmatpush1.msra.mxu0 0.0
    %7192 = vmatprep.subr.mxu0 0.0
    %7193 = vmatpush1.msra.mxu0 0.0
    %7194 = vmatprep.subr.mxu0 0.0
    %7195 = vmatpush1.msra.mxu0 0.0
    %7196 = vmatprep.subr.mxu0 0.0
    %7197 = vmatpush1.msra.mxu0 0.0
    %7198 = vmatprep.subr.mxu0 0.0
    %7199 = vmatpush1.msra.mxu0 0.0
    %7200 = vmatprep.subr.mxu0 0.0
    %7201 = vmatpush1.msra.mxu0 0.0
    %7202 = vmatprep.subr.mxu0 0.0
    %7203 = vmatpush1.msra.mxu0 0.0
    %7204 = vmatprep.subr.mxu0 0.0
    %7205 = vmatpush1.msra.mxu0 0.0
    %7206 = vmatprep.subr.mxu0 0.0
    %7207 = vmatpush1.msra.mxu0 0.0
    %7208 = vmatprep.subr.mxu0 0.0
    %7209 = vmatpush1.msra.mxu0 0.0
    %7210 = vmatprep.subr.mxu0 0.0
    %7211 = vmatpush1.msra.mxu0 0.0
    %7212 = vmatprep.subr.mxu0 0.0
    %7213 = vmatpush1.msra.mxu0 0.0
    %7214 = vmatprep.subr.mxu0 0.0
    %7215 = vmatpush1.msra.mxu0 0.0
    %7216 = vmatprep.mubr.f32.mxu0 0.0
    %7217 = vmatmul.mubr.f32.gmra.mrb[0].mxu0 %v7147
    %v7218 = vpop.f32.mrb[0].mxu0
    %v7219 = vadd.f32 0.0, %v7218
    %v7220 = vpop.f32.mrb[0].mxu0
    %7221 = vdwg.mxu0
    %v7222 = vadd.f32 %v6793, %v7219
    %7223 = vrot.lane.b32.xlu0 %v5920, 116
    %v7224 = vpop.permute.xlu0 %7223
    %7225 = vrot.lane.b32.xlu0 %v5920, 100
    %v7226 = vpop.permute.xlu0 %7225
    %v7227 = vsel %vm5932, %v7224, 0
    %v7229 = vsel %vm5932, %v7226, 0
    %7231 = vmatprep.subr.mxu0 0.0
    %7232 = vmatpush1.xpose.msra.mxu0 %v7229
    %7233 = vmatprep.subr.mxu0 0.0
    %7234 = vmatpush1.xpose.msra.mxu0 0.0
    %7235 = vmatprep.subr.mxu0 0.0
    %7236 = vmatpush1.xpose.msra.mxu0 0.0
    %7237 = vmatprep.subr.mxu0 0.0
    %7238 = vmatpush1.xpose.msra.mxu0 0.0
    %7239 = vmatprep.subr.mxu0 0.0
    %7240 = vmatpush1.xpose.msra.mxu0 0.0
    %7241 = vmatprep.subr.mxu0 0.0
    %7242 = vmatpush1.xpose.msra.mxu0 0.0
    %7243 = vmatprep.subr.mxu0 0.0
    %7244 = vmatpush1.xpose.msra.mxu0 0.0
    %7245 = vmatprep.subr.mxu0 0.0
    %7246 = vmatpush1.xpose.msra.mxu0 0.0
    %7247 = vmatprep.subr.mxu0 0.0
    %7248 = vmatpush1.xpose.msra.mxu0 0.0
    %7249 = vmatprep.subr.mxu0 0.0
    %7250 = vmatpush1.xpose.msra.mxu0 0.0
    %7251 = vmatprep.subr.mxu0 0.0
    %7252 = vmatpush1.xpose.msra.mxu0 0.0
    %7253 = vmatprep.subr.mxu0 0.0
    %7254 = vmatpush1.xpose.msra.mxu0 0.0
    %7255 = vmatprep.subr.mxu0 0.0
    %7256 = vmatpush1.xpose.msra.mxu0 0.0
    %7257 = vmatprep.subr.mxu0 0.0
    %7258 = vmatpush1.xpose.msra.mxu0 0.0
    %7259 = vmatprep.subr.mxu0 0.0
    %7260 = vmatpush1.xpose.msra.mxu0 0.0
    %7261 = vmatprep.subr.mxu0 0.0
    %7262 = vmatpush1.xpose.msra.mxu0 0.0
    %7263 = vmatprep.subr.mxu0 0.0
    %7264 = vmatpush1.xpose.msra.mxu0 0.0
    %7265 = vmatprep.subr.mxu0 0.0
    %7266 = vmatpush1.xpose.msra.mxu0 0.0
    %7267 = vmatprep.subr.mxu0 0.0
    %7268 = vmatpush1.xpose.msra.mxu0 0.0
    %7269 = vmatprep.subr.mxu0 0.0
    %7270 = vmatpush1.xpose.msra.mxu0 0.0
    %7271 = vmatprep.subr.mxu0 0.0
    %7272 = vmatpush1.xpose.msra.mxu0 0.0
    %7273 = vmatprep.subr.mxu0 0.0
    %7274 = vmatpush1.xpose.msra.mxu0 0.0
    %7275 = vmatprep.subr.mxu0 0.0
    %7276 = vmatpush1.xpose.msra.mxu0 0.0
    %7277 = vmatprep.subr.mxu0 0.0
    %7278 = vmatpush1.xpose.msra.mxu0 0.0
    %7279 = vmatprep.subr.mxu0 0.0
    %7280 = vmatpush1.xpose.msra.mxu0 0.0
    %7281 = vmatprep.subr.mxu0 0.0
    %7282 = vmatpush1.xpose.msra.mxu0 0.0
    %7283 = vmatprep.subr.mxu0 0.0
    %7284 = vmatpush1.xpose.msra.mxu0 0.0
    %7285 = vmatprep.subr.mxu0 0.0
    %7286 = vmatpush1.xpose.msra.mxu0 0.0
    %7287 = vmatprep.subr.mxu0 0.0
    %7288 = vmatpush1.xpose.msra.mxu0 0.0
    %7289 = vmatprep.subr.mxu0 0.0
    %7290 = vmatpush1.xpose.msra.mxu0 0.0
    %7291 = vmatprep.subr.mxu0 0.0
    %7292 = vmatpush1.xpose.msra.mxu0 0.0
    %7293 = vmatprep.subr.mxu0 0.0
    %7294 = vmatpush1.xpose.msra.mxu0 0.0
    %7295 = vmatprep.mubr.f32.mxu0 0.0
    %7296 = vmatmul.mubr.f32.gmra.mrb[0].mxu0 %v7227
    %v7297 = vpop.f32.mrb[0].mxu0
    %v7298 = vadd.f32 0.0, %v7297
    %v7299 = vpop.f32.mrb[0].mxu0
    %7300 = vdwg.mxu0
    %7301 = vrot.lane.b32.xlu0 %v5925, 116
    %v7302 = vpop.permute.xlu0 %7301
    %7303 = vrot.lane.b32.xlu0 %v5925, 100
    %v7304 = vpop.permute.xlu0 %7303
    %v7305 = vsel %vm5932, %v7302, 0
    %v7307 = vsel %vm5932, %v7304, 0
    %7309 = vmatprep.subr.mxu0 0.0
    %7310 = vmatpush1.xpose.msra.mxu0 %v7307
    %7311 = vmatprep.subr.mxu0 0.0
    %7312 = vmatpush1.xpose.msra.mxu0 0.0
    %7313 = vmatprep.subr.mxu0 0.0
    %7314 = vmatpush1.xpose.msra.mxu0 0.0
    %7315 = vmatprep.subr.mxu0 0.0
    %7316 = vmatpush1.xpose.msra.mxu0 0.0
    %7317 = vmatprep.subr.mxu0 0.0
    %7318 = vmatpush1.xpose.msra.mxu0 0.0
    %7319 = vmatprep.subr.mxu0 0.0
    %7320 = vmatpush1.xpose.msra.mxu0 0.0
    %7321 = vmatprep.subr.mxu0 0.0
    %7322 = vmatpush1.xpose.msra.mxu0 0.0
    %7323 = vmatprep.subr.mxu0 0.0
    %7324 = vmatpush1.xpose.msra.mxu0 0.0
    %7325 = vmatprep.subr.mxu0 0.0
    %7326 = vmatpush1.xpose.msra.mxu0 0.0
    %7327 = vmatprep.subr.mxu0 0.0
    %7328 = vmatpush1.xpose.msra.mxu0 0.0
    %7329 = vmatprep.subr.mxu0 0.0
    %7330 = vmatpush1.xpose.msra.mxu0 0.0
    %7331 = vmatprep.subr.mxu0 0.0
    %7332 = vmatpush1.xpose.msra.mxu0 0.0
    %7333 = vmatprep.subr.mxu0 0.0
    %7334 = vmatpush1.xpose.msra.mxu0 0.0
    %7335 = vmatprep.subr.mxu0 0.0
    %7336 = vmatpush1.xpose.msra.mxu0 0.0
    %7337 = vmatprep.subr.mxu0 0.0
    %7338 = vmatpush1.xpose.msra.mxu0 0.0
    %7339 = vmatprep.subr.mxu0 0.0
    %7340 = vmatpush1.xpose.msra.mxu0 0.0
    %7341 = vmatprep.subr.mxu0 0.0
    %7342 = vmatpush1.xpose.msra.mxu0 0.0
    %7343 = vmatprep.subr.mxu0 0.0
    %7344 = vmatpush1.xpose.msra.mxu0 0.0
    %7345 = vmatprep.subr.mxu0 0.0
    %7346 = vmatpush1.xpose.msra.mxu0 0.0
    %7347 = vmatprep.subr.mxu0 0.0
    %7348 = vmatpush1.xpose.msra.mxu0 0.0
    %7349 = vmatprep.subr.mxu0 0.0
    %7350 = vmatpush1.xpose.msra.mxu0 0.0
    %7351 = vmatprep.subr.mxu0 0.0
    %7352 = vmatpush1.xpose.msra.mxu0 0.0
    %7353 = vmatprep.subr.mxu0 0.0
    %7354 = vmatpush1.xpose.msra.mxu0 0.0
    %7355 = vmatprep.subr.mxu0 0.0
    %7356 = vmatpush1.xpose.msra.mxu0 0.0
    %7357 = vmatprep.subr.mxu0 0.0
    %7358 = vmatpush1.xpose.msra.mxu0 0.0
    %7359 = vmatprep.subr.mxu0 0.0
    %7360 = vmatpush1.xpose.msra.mxu0 0.0
    %7361 = vmatprep.subr.mxu0 0.0
    %7362 = vmatpush1.xpose.msra.mxu0 0.0
    %7363 = vmatprep.subr.mxu0 0.0
    %7364 = vmatpush1.xpose.msra.mxu0 0.0
    %7365 = vmatprep.subr.mxu0 0.0
    %7366 = vmatpush1.xpose.msra.mxu0 0.0
    %7367 = vmatprep.subr.mxu0 0.0
    %7368 = vmatpush1.xpose.msra.mxu0 0.0
    %7369 = vmatprep.subr.mxu0 0.0
    %7370 = vmatpush1.xpose.msra.mxu0 0.0
    %7371 = vmatprep.subr.mxu0 0.0
    %7372 = vmatpush1.xpose.msra.mxu0 0.0
    %7373 = vmatprep.mubr.f32.mxu0 0.0
    %7374 = vmatmul.mubr.f32.gmra.mrb[0].mxu0 %v7305
    %v7375 = vpop.f32.mrb[0].mxu0
    %v7376 = vadd.f32 0.0, %v7375
    %v7377 = vpop.f32.mrb[0].mxu0
    %7378 = vdwg.mxu0
    %v7379 = vsel %vm6084, %v7298, -inf
    %7380 = vmax.xlane.f32.xlu0 %v7379
    %v7381 = vpop.xlane.xlu0 %7380
    %v7382 = vsel %vm6084, %v7376, -inf
    %7383 = vmax.xlane.f32.xlu0 %v7382
    %v7384 = vpop.xlane.xlu0 %7383
    %v7385 = vsub.f32 %v7298, %v7381
    %v7386 = vsub.f32 %v7376, %v7384
    %v7387 = vmul.f32 %v7385, 1.442695
    %v7388 = vpow.pop %v7387
    %v7389 = vmul.f32 %v7386, 1.442695
    %v7390 = vpow.pop %v7389
    %v7391 = vsel %vm6084, %v7388, 0.0
    %7392 = vadd.xlane.f32.xlu0 %v7391
    %v7393 = vpop.xlane.xlu0 %7392
    %v7394 = vsel %vm6084, %v7390, 0.0
    %7395 = vadd.xlane.f32.xlu0 %v7394
    %v7396 = vpop.xlane.xlu0 %7395
    %v7397 = vrcp.pop %v7393
    %v7398 = vmul.f32 %v7388, %v7397
    %v7399 = vrcp.pop %v7396
    %v7400 = vmul.f32 %v7390, %v7399
    %v7401 = vadd.f32 %v6972, %v7398
    %v7402 = vadd.f32 %v6973, %v7400
    %v7403 = vsel %vm6084, %v7398, 0.0
    %v7404 = vrot.slane %v7403, 4
    %v7405 = vadd.f32 %v7403, %v7404
    %v7406 = vrot.slane %v7405, 2
    %v7407 = vadd.f32 %v7405, %v7406
    %v7408 = vrot.slane %v7407, 1
    %v7409 = vadd.f32 %v7407, %v7408
    %v7410 = vsel %vm6084, %v7400, 0.0
    %v7411 = vrot.slane %v7410, 4
    %v7412 = vadd.f32 %v7410, %v7411
    %v7413 = vrot.slane %v7412, 2
    %v7414 = vadd.f32 %v7412, %v7413
    %v7415 = vrot.slane %v7414, 1
    %v7416 = vadd.f32 %v7414, %v7415
    %v7417 = vmul.f32 %v7409, %v6123
    %v7418 = vmul.f32 %v7416, %v6123
    %7419 = vrot.lane.b32.xlu0 %v5920, 84
    %v7420 = vpop.permute.xlu0 %7419
    %v7423 = vsel %vm6084, %v7417, 0
    %7425 = vmatprep.subr.mxu0 0.0
    %7426 = vmatpush1.msra.mxu0 %v7420
    %7427 = vmatprep.subr.mxu0 0.0
    %7428 = vmatpush1.msra.mxu0 0.0
    %7429 = vmatprep.subr.mxu0 0.0
    %7430 = vmatpush1.msra.mxu0 0.0
    %7431 = vmatprep.subr.mxu0 0.0
    %7432 = vmatpush1.msra.mxu0 0.0
    %7433 = vmatprep.subr.mxu0 0.0
    %7434 = vmatpush1.msra.mxu0 0.0
    %7435 = vmatprep.subr.mxu0 0.0
    %7436 = vmatpush1.msra.mxu0 0.0
    %7437 = vmatprep.subr.mxu0 0.0
    %7438 = vmatpush1.msra.mxu0 0.0
    %7439 = vmatprep.subr.mxu0 0.0
    %7440 = vmatpush1.msra.mxu0 0.0
    %7441 = vmatprep.subr.mxu0 0.0
    %7442 = vmatpush1.msra.mxu0 0.0
    %7443 = vmatprep.subr.mxu0 0.0
    %7444 = vmatpush1.msra.mxu0 0.0
    %7445 = vmatprep.subr.mxu0 0.0
    %7446 = vmatpush1.msra.mxu0 0.0
    %7447 = vmatprep.subr.mxu0 0.0
    %7448 = vmatpush1.msra.mxu0 0.0
    %7449 = vmatprep.subr.mxu0 0.0
    %7450 = vmatpush1.msra.mxu0 0.0
    %7451 = vmatprep.subr.mxu0 0.0
    %7452 = vmatpush1.msra.mxu0 0.0
    %7453 = vmatprep.subr.mxu0 0.0
    %7454 = vmatpush1.msra.mxu0 0.0
    %7455 = vmatprep.subr.mxu0 0.0
    %7456 = vmatpush1.msra.mxu0 0.0
    %7457 = vmatprep.subr.mxu0 0.0
    %7458 = vmatpush1.msra.mxu0 0.0
    %7459 = vmatprep.subr.mxu0 0.0
    %7460 = vmatpush1.msra.mxu0 0.0
    %7461 = vmatprep.subr.mxu0 0.0
    %7462 = vmatpush1.msra.mxu0 0.0
    %7463 = vmatprep.subr.mxu0 0.0
    %7464 = vmatpush1.msra.mxu0 0.0
    %7465 = vmatprep.subr.mxu0 0.0
    %7466 = vmatpush1.msra.mxu0 0.0
    %7467 = vmatprep.subr.mxu0 0.0
    %7468 = vmatpush1.msra.mxu0 0.0
    %7469 = vmatprep.subr.mxu0 0.0
    %7470 = vmatpush1.msra.mxu0 0.0
    %7471 = vmatprep.subr.mxu0 0.0
    %7472 = vmatpush1.msra.mxu0 0.0
    %7473 = vmatprep.subr.mxu0 0.0
    %7474 = vmatpush1.msra.mxu0 0.0
    %7475 = vmatprep.subr.mxu0 0.0
    %7476 = vmatpush1.msra.mxu0 0.0
    %7477 = vmatprep.subr.mxu0 0.0
    %7478 = vmatpush1.msra.mxu0 0.0
    %7479 = vmatprep.subr.mxu0 0.0
    %7480 = vmatpush1.msra.mxu0 0.0
    %7481 = vmatprep.subr.mxu0 0.0
    %7482 = vmatpush1.msra.mxu0 0.0
    %7483 = vmatprep.subr.mxu0 0.0
    %7484 = vmatpush1.msra.mxu0 0.0
    %7485 = vmatprep.subr.mxu0 0.0
    %7486 = vmatpush1.msra.mxu0 0.0
    %7487 = vmatprep.subr.mxu0 0.0
    %7488 = vmatpush1.msra.mxu0 0.0
    %7489 = vmatprep.mubr.f32.mxu0 0.0
    %7490 = vmatmul.mubr.f32.gmra.mrb[0].mxu0 %v7423
    %v7491 = vpop.f32.mrb[0].mxu0
    %v7492 = vadd.f32 0.0, %v7491
    %v7493 = vpop.f32.mrb[0].mxu0
    %7494 = vdwg.mxu0
    %7495 = vrot.lane.b32.xlu0 %v5925, 84
    %v7496 = vpop.permute.xlu0 %7495
    %v7499 = vsel %vm6084, %v7418, 0
    %7501 = vmatprep.subr.mxu0 0.0
    %7502 = vmatpush1.msra.mxu0 %v7496
    %7503 = vmatprep.subr.mxu0 0.0
    %7504 = vmatpush1.msra.mxu0 0.0
    %7505 = vmatprep.subr.mxu0 0.0
    %7506 = vmatpush1.msra.mxu0 0.0
    %7507 = vmatprep.subr.mxu0 0.0
    %7508 = vmatpush1.msra.mxu0 0.0
    %7509 = vmatprep.subr.mxu0 0.0
    %7510 = vmatpush1.msra.mxu0 0.0
    %7511 = vmatprep.subr.mxu0 0.0
    %7512 = vmatpush1.msra.mxu0 0.0
    %7513 = vmatprep.subr.mxu0 0.0
    %7514 = vmatpush1.msra.mxu0 0.0
    %7515 = vmatprep.subr.mxu0 0.0
    %7516 = vmatpush1.msra.mxu0 0.0
    %7517 = vmatprep.subr.mxu0 0.0
    %7518 = vmatpush1.msra.mxu0 0.0
    %7519 = vmatprep.subr.mxu0 0.0
    %7520 = vmatpush1.msra.mxu0 0.0
    %7521 = vmatprep.subr.mxu0 0.0
    %7522 = vmatpush1.msra.mxu0 0.0
    %7523 = vmatprep.subr.mxu0 0.0
    %7524 = vmatpush1.msra.mxu0 0.0
    %7525 = vmatprep.subr.mxu0 0.0
    %7526 = vmatpush1.msra.mxu0 0.0
    %7527 = vmatprep.subr.mxu0 0.0
    %7528 = vmatpush1.msra.mxu0 0.0
    %7529 = vmatprep.subr.mxu0 0.0
    %7530 = vmatpush1.msra.mxu0 0.0
    %7531 = vmatprep.subr.mxu0 0.0
    %7532 = vmatpush1.msra.mxu0 0.0
    %7533 = vmatprep.subr.mxu0 0.0
    %7534 = vmatpush1.msra.mxu0 0.0
    %7535 = vmatprep.subr.mxu0 0.0
    %7536 = vmatpush1.msra.mxu0 0.0
    %7537 = vmatprep.subr.mxu0 0.0
    %7538 = vmatpush1.msra.mxu0 0.0
    %7539 = vmatprep.subr.mxu0 0.0
    %7540 = vmatpush1.msra.mxu0 0.0
    %7541 = vmatprep.subr.mxu0 0.0
    %7542 = vmatpush1.msra.mxu0 0.0
    %7543 = vmatprep.subr.mxu0 0.0
    %7544 = vmatpush1.msra.mxu0 0.0
    %7545 = vmatprep.subr.mxu0 0.0
    %7546 = vmatpush1.msra.mxu0 0.0
    %7547 = vmatprep.subr.mxu0 0.0
    %7548 = vmatpush1.msra.mxu0 0.0
    %7549 = vmatprep.subr.mxu0 0.0
    %7550 = vmatpush1.msra.mxu0 0.0
    %7551 = vmatprep.subr.mxu0 0.0
    %7552 = vmatpush1.msra.mxu0 0.0
    %7553 = vmatprep.subr.mxu0 0.0
    %7554 = vmatpush1.msra.mxu0 0.0
    %7555 = vmatprep.subr.mxu0 0.0
    %7556 = vmatpush1.msra.mxu0 0.0
    %7557 = vmatprep.subr.mxu0 0.0
    %7558 = vmatpush1.msra.mxu0 0.0
    %7559 = vmatprep.subr.mxu0 0.0
    %7560 = vmatpush1.msra.mxu0 0.0
    %7561 = vmatprep.subr.mxu0 0.0
    %7562 = vmatpush1.msra.mxu0 0.0
    %7563 = vmatprep.subr.mxu0 0.0
    %7564 = vmatpush1.msra.mxu0 0.0
    %7565 = vmatprep.mubr.f32.mxu0 0.0
    %7566 = vmatmul.mubr.f32.gmra.mrb[0].mxu0 %v7499
    %v7567 = vpop.f32.mrb[0].mxu0
    %v7568 = vadd.f32 0.0, %v7567
    %v7569 = vpop.f32.mrb[0].mxu0
    %7570 = vdwg.mxu0
    %v7571 = vld [vmem:[%s15 + $0xc] sm:$0xf]
    %v7574 = vrot.slane %v7568, 7
    %v7575 = vsel %vm462, %v7574, %v7492
    %v7576 = vsel %vm5932, %v7575, 0
    %v7579 = vsel %vm5428, %v7571, 0
    %7581 = vmatprep.subr.mxu0 0.0
    %7582 = vmatpush1.msra.mxu0 %v7579
    %7583 = vmatprep.subr.mxu0 0.0
    %7584 = vmatpush1.msra.mxu0 0.0
    %7585 = vmatprep.subr.mxu0 0.0
    %7586 = vmatpush1.msra.mxu0 0.0
    %7587 = vmatprep.subr.mxu0 0.0
    %7588 = vmatpush1.msra.mxu0 0.0
    %7589 = vmatprep.subr.mxu0 0.0
    %7590 = vmatpush1.msra.mxu0 0.0
    %7591 = vmatprep.subr.mxu0 0.0
    %7592 = vmatpush1.msra.mxu0 0.0
    %7593 = vmatprep.subr.mxu0 0.0
    %7594 = vmatpush1.msra.mxu0 0.0
    %7595 = vmatprep.subr.mxu0 0.0
    %7596 = vmatpush1.msra.mxu0 0.0
    %7597 = vmatprep.subr.mxu0 0.0
    %7598 = vmatpush1.msra.mxu0 0.0
    %7599 = vmatprep.subr.mxu0 0.0
    %7600 = vmatpush1.msra.mxu0 0.0
    %7601 = vmatprep.subr.mxu0 0.0
    %7602 = vmatpush1.msra.mxu0 0.0
    %7603 = vmatprep.subr.mxu0 0.0
    %7604 = vmatpush1.msra.mxu0 0.0
    %7605 = vmatprep.subr.mxu0 0.0
    %7606 = vmatpush1.msra.mxu0 0.0
    %7607 = vmatprep.subr.mxu0 0.0
    %7608 = vmatpush1.msra.mxu0 0.0
    %7609 = vmatprep.subr.mxu0 0.0
    %7610 = vmatpush1.msra.mxu0 0.0
    %7611 = vmatprep.subr.mxu0 0.0
    %7612 = vmatpush1.msra.mxu0 0.0
    %7613 = vmatprep.subr.mxu0 0.0
    %7614 = vmatpush1.msra.mxu0 0.0
    %7615 = vmatprep.subr.mxu0 0.0
    %7616 = vmatpush1.msra.mxu0 0.0
    %7617 = vmatprep.subr.mxu0 0.0
    %7618 = vmatpush1.msra.mxu0 0.0
    %7619 = vmatprep.subr.mxu0 0.0
    %7620 = vmatpush1.msra.mxu0 0.0
    %7621 = vmatprep.subr.mxu0 0.0
    %7622 = vmatpush1.msra.mxu0 0.0
    %7623 = vmatprep.subr.mxu0 0.0
    %7624 = vmatpush1.msra.mxu0 0.0
    %7625 = vmatprep.subr.mxu0 0.0
    %7626 = vmatpush1.msra.mxu0 0.0
    %7627 = vmatprep.subr.mxu0 0.0
    %7628 = vmatpush1.msra.mxu0 0.0
    %7629 = vmatprep.subr.mxu0 0.0
    %7630 = vmatpush1.msra.mxu0 0.0
    %7631 = vmatprep.subr.mxu0 0.0
    %7632 = vmatpush1.msra.mxu0 0.0
    %7633 = vmatprep.subr.mxu0 0.0
    %7634 = vmatpush1.msra.mxu0 0.0
    %7635 = vmatprep.subr.mxu0 0.0
    %7636 = vmatpush1.msra.mxu0 0.0
    %7637 = vmatprep.subr.mxu0 0.0
    %7638 = vmatpush1.msra.mxu0 0.0
    %7639 = vmatprep.subr.mxu0 0.0
    %7640 = vmatpush1.msra.mxu0 0.0
    %7641 = vmatprep.subr.mxu0 0.0
    %7642 = vmatpush1.msra.mxu0 0.0
    %7643 = vmatprep.subr.mxu0 0.0
    %7644 = vmatpush1.msra.mxu0 0.0
    %7645 = vmatprep.mubr.f32.mxu0 0.0
    %7646 = vmatmul.mubr.f32.gmra.mrb[0].mxu0 %v7576
    %v7647 = vpop.f32.mrb[0].mxu0
    %v7648 = vadd.f32 0.0, %v7647
    %v7649 = vpop.f32.mrb[0].mxu0
    %7650 = vdwg.mxu0
    %v7651 = vadd.f32 %v7222, %v7648
    %v7652 = vmul.f32 %v7401, 0.25
    %v7653 = vmul.f32 %v7402, 0.25
    %v7654 = vcombine.high %v7652, 0.0
    %v7656 = vunpack.c.l.s4 1983009808
    %v7657 = vunpack.c.0.s8 %v7656
    %v7658 = vlaneseq
    %v7659 = vshrl.u32 %v7658, 7
    %v7660 = vsub.s32 %v7657, %v7659
    %v7661 = vrot.slane %v7652, %v7660
    %v7663 = vunpack.c.l.s4 1983009808
    %v7664 = vunpack.c.0.s8 %v7663
    %v7665 = vlaneseq
    %v7666 = vshrl.u32 %v7665, 7
    %v7667 = vsub.s32 %v7664, %v7666
    %v7668 = vrot.slane %v7654, %v7667
    %v7669 = vcombine.high %v7653, 0.0
    %v7671 = vunpack.c.l.s4 1983009808
    %v7672 = vunpack.c.0.s8 %v7671
    %v7673 = vlaneseq
    %v7674 = vshrl.u32 %v7673, 7
    %v7675 = vsub.s32 %v7672, %v7674
    %v7676 = vrot.slane %v7653, %v7675
    %v7678 = vunpack.c.l.s4 1983009808
    %v7679 = vunpack.c.0.s8 %v7678
    %v7680 = vlaneseq
    %v7681 = vshrl.u32 %v7680, 7
    %v7682 = vsub.s32 %v7679, %v7681
    %v7683 = vrot.slane %v7669, %v7682
    %v7684 = vcombine.low %v7661, %v7676
    %v7685 = vcombine.high %v7661, %v7676
    %v7687 = vunpack.c.l.s4 1934713408
    %v7688 = vunpack.c.0.s8 %v7687
    %v7689 = vlaneseq
    %v7690 = vshrl.u32 %v7689, 7
    %v7691 = vsub.s32 %v7688, %v7690
    %v7692 = vrot.slane %v7684, %v7691
    %v7694 = vunpack.c.l.s4 1934713408
    %v7695 = vunpack.c.0.s8 %v7694
    %v7696 = vlaneseq
    %v7697 = vshrl.u32 %v7696, 7
    %v7698 = vsub.s32 %v7695, %v7697
    %v7699 = vrot.slane %v7685, %v7698
    %v7700 = vcombine.low %v7668, %v7683
    %v7701 = vcombine.high %v7668, %v7683
    %v7703 = vunpack.c.l.s4 1934713408
    %v7704 = vunpack.c.0.s8 %v7703
    %v7705 = vlaneseq
    %v7706 = vshrl.u32 %v7705, 7
    %v7707 = vsub.s32 %v7704, %v7706
    %v7708 = vrot.slane %v7700, %v7707
    %v7710 = vunpack.c.l.s4 1934713408
    %v7711 = vunpack.c.0.s8 %v7710
    %v7712 = vlaneseq
    %v7713 = vshrl.u32 %v7712, 7
    %v7714 = vsub.s32 %v7711, %v7713
    %v7715 = vrot.slane %v7701, %v7714
    %v7716 = vcombine.high %v7692, 0.0
    %v7717 = vcombine.high %v7699, 0.0
    %v7718 = vcombine.high %v7708, 0.0
    %v7719 = vcombine.high %v7715, 0.0
    %7721 = vrot.lane.b32.xlu0 %v7716, 8
    %v7722 = vpop.permute.xlu0 %7721
    %7725 = vrot.lane.b32.xlu0 %v7699, 16
    %v7726 = vpop.permute.xlu0 %7725
    %7729 = vrot.lane.b32.xlu0 %v7717, 24
    %v7730 = vpop.permute.xlu0 %7729
    %7733 = vrot.lane.b32.xlu0 %v7708, 32
    %v7734 = vpop.permute.xlu0 %7733
    %7737 = vrot.lane.b32.xlu0 %v7718, 40
    %v7738 = vpop.permute.xlu0 %7737
    %7741 = vrot.lane.b32.xlu0 %v7715, 48
    %v7742 = vpop.permute.xlu0 %7741
    %7745 = vrot.lane.b32.xlu0 %v7719, 56
    %v7746 = vpop.permute.xlu0 %7745
    %v7748 = vsel %vm6084, %v7692, %v7722
    %v7749 = vsel %vm85, %v7748, %v7726
    %vm7750 = vcmask 195584
    %v7751 = vsel %vm7750, %v7749, %v7730
    %v7752 = vsel %vm183, %v7751, %v7734
    %vm7753 = vcmask 326656
    %v7754 = vsel %vm7753, %v7752, %v7738
    %vm7755 = vcmask 392192
    %v7756 = vsel %vm7755, %v7754, %v7742
    %vm7757 = vcmask 457728
    %v7758 = vsel %vm7757, %v7756, %v7746
    %vm7759 = vcmask 517120
    %7760 = vst.msk [vmem:[#allocation5] sm:$0x3] %vm7759, %v7758
    %v7761 = vmax.f32 %v7651, 0.0
    %v7762 = vld [vmem:[%s17] sm:$0xff]
    %v7763 = vld [vmem:[%s17 + $0x8] sm:$0xff]
    %v7764 = vld [vmem:[%s17 + $0x10] sm:$0xff]
    %v7765 = vld [vmem:[%s17 + $0x18] sm:$0xff]
    %v7766 = vld [vmem:[#allocation4] sm:$0x1]
    %v7768 = vlaneseq
    %v7769 = vshrl.u32 %v7768, 7
    %v7770 = vsub.s32 0, %v7769
    %v7771 = vrot.slane %v7766, %v7770
    %v7774 = vsel %vm183, %v7761, 0
    %7776 = vmatprep.subr.mxu0 0.0
    %7777 = vmatpush1.msra.mxu0 %v7762
    %7778 = vmatprep.subr.mxu0 0.0
    %7779 = vmatpush1.msra.mxu0 %v7763
    %7780 = vmatprep.subr.mxu0 0.0
    %7781 = vmatpush1.msra.mxu0 %v7764
    %7782 = vmatprep.subr.mxu0 0.0
    %7783 = vmatpush1.msra.mxu0 %v7765
    %7784 = vmatprep.subr.mxu0 0.0
    %7785 = vmatpush1.msra.mxu0 0.0
    %7786 = vmatprep.subr.mxu0 0.0
    %7787 = vmatpush1.msra.mxu0 0.0
    %7788 = vmatprep.subr.mxu0 0.0
    %7789 = vmatpush1.msra.mxu0 0.0
    %7790 = vmatprep.subr.mxu0 0.0
    %7791 = vmatpush1.msra.mxu0 0.0
    %7792 = vmatprep.subr.mxu0 0.0
    %7793 = vmatpush1.msra.mxu0 0.0
    %7794 = vmatprep.subr.mxu0 0.0
    %7795 = vmatpush1.msra.mxu0 0.0
    %7796 = vmatprep.subr.mxu0 0.0
    %7797 = vmatpush1.msra.mxu0 0.0
    %7798 = vmatprep.subr.mxu0 0.0
    %7799 = vmatpush1.msra.mxu0 0.0
    %7800 = vmatprep.subr.mxu0 0.0
    %7801 = vmatpush1.msra.mxu0 0.0
    %7802 = vmatprep.subr.mxu0 0.0
    %7803 = vmatpush1.msra.mxu0 0.0
    %7804 = vmatprep.subr.mxu0 0.0
    %7805 = vmatpush1.msra.mxu0 0.0
    %7806 = vmatprep.subr.mxu0 0.0
    %7807 = vmatpush1.msra.mxu0 0.0
    %7808 = vmatprep.subr.mxu0 0.0
    %7809 = vmatpush1.msra.mxu0 0.0
    %7810 = vmatprep.subr.mxu0 0.0
    %7811 = vmatpush1.msra.mxu0 0.0
    %7812 = vmatprep.subr.mxu0 0.0
    %7813 = vmatpush1.msra.mxu0 0.0
    %7814 = vmatprep.subr.mxu0 0.0
    %7815 = vmatpush1.msra.mxu0 0.0
    %7816 = vmatprep.subr.mxu0 0.0
    %7817 = vmatpush1.msra.mxu0 0.0
    %7818 = vmatprep.subr.mxu0 0.0
    %7819 = vmatpush1.msra.mxu0 0.0
    %7820 = vmatprep.subr.mxu0 0.0
    %7821 = vmatpush1.msra.mxu0 0.0
    %7822 = vmatprep.subr.mxu0 0.0
    %7823 = vmatpush1.msra.mxu0 0.0
    %7824 = vmatprep.subr.mxu0 0.0
    %7825 = vmatpush1.msra.mxu0 0.0
    %7826 = vmatprep.subr.mxu0 0.0
    %7827 = vmatpush1.msra.mxu0 0.0
    %7828 = vmatprep.subr.mxu0 0.0
    %7829 = vmatpush1.msra.mxu0 0.0
    %7830 = vmatprep.subr.mxu0 0.0
    %7831 = vmatpush1.msra.mxu0 0.0
    %7832 = vmatprep.subr.mxu0 0.0
    %7833 = vmatpush1.msra.mxu0 0.0
    %7834 = vmatprep.subr.mxu0 0.0
    %7835 = vmatpush1.msra.mxu0 0.0
    %7836 = vmatprep.subr.mxu0 0.0
    %7837 = vmatpush1.msra.mxu0 0.0
    %7838 = vmatprep.subr.mxu0 0.0
    %7839 = vmatpush1.msra.mxu0 0.0
    %7840 = vmatprep.mubr.f32.mxu0 0.0
    %7841 = vmatmul.mubr.f32.gmra.mrb[0].mxu0 %v7774
    %v7842 = vpop.f32.mrb[0].mxu0
    %v7843 = vadd.f32 %v7771, %v7842
    %v7844 = vpop.f32.mrb[0].mxu0
    %7845 = vdwg.mxu0
    %vm7846 = vcmask 1024
    %7847 = vst.msk [vmem:[%s19] sm:$0x3] %vm7846, %v7843
    // Predicated region
    $region78: #{tpu_custom_call.1} parent=1 // pred_check
      _
    $region79: #{tpu_custom_call.1} parent=1 // pred_check_branch
      %7849 = sbr.rel (0) target = $region81
    $region80: #{tpu_custom_call.1} parent=1 // pred_region
      _
    $region81: #{tpu_custom_call.1} parent=1 // pred_fallthru
      _
    // Predicated region
    $region82: #{tpu_custom_call.1} parent=1 // pred_check
      _
    $region83: #{tpu_custom_call.1} parent=1 // pred_check_branch
      %7851 = sbr.rel (0) target = $region85
    $region84: #{tpu_custom_call.1} parent=1 // pred_region
      %s7853 = ssub.s32 32, 32
      %7854 = vsyncadd [#allocation6], %s7853
      %s7856 = sshll.u32 [#allocation5], 4
      %s7857 = int_to_ptr.vmem [resolvable:$true] %s7856
      %7859 = dma.vmem_to_hbm [thread:$0]  %s7857, 32, %s20, [#allocation6]
    $region85: #{tpu_custom_call.1} parent=1 // pred_fallthru
      _
    // Predicated region
    $region86: #{tpu_custom_call.1} parent=1 // pred_check
      _
    $region87: #{tpu_custom_call.1} parent=1 // pred_check_branch
      %7861 = sbr.rel (0) target = $region89
    $region88: #{tpu_custom_call.1} parent=1 // pred_region
      _
    $region89: #{tpu_custom_call.1} parent=1 // pred_fallthru
      _
    // Predicated region
    $region90: #{tpu_custom_call.1} parent=1 // pred_check
      _
    $region91: #{tpu_custom_call.1} parent=1 // pred_check_branch
      %7863 = sbr.rel (0) target = $region93
    $region92: #{tpu_custom_call.1} parent=1 // pred_region
      %7864 = dma.done [#allocation6], 32
    $region93: #{tpu_custom_call.1} parent=1 // pred_fallthru
      _
    %7865 = vsyncpa [#allocation6], 1

</llo_original>
